<compile_context>
chip_gen: v5e
topology: v5e:2x2
jax: 0.10.0
libtpu: 0.0.40
codegen_flags: <defaults>
</compile_context>

<pallas_src>
import jax
import jax.numpy as jnp
from jax import lax
from jax.experimental import pallas as pl
from jax.experimental.pallas import tpu as pltpu


# ----------------------------------------------------------------------------
# Fused conv3x3 (stride 1, pad 1) + bias + ReLU + 2x2 max-pool kernel
# ----------------------------------------------------------------------------
def conv_relu_pool_kernel(p_ref, w_ref, b_ref, o_ref):
    # p_ref: (1, 4, K9p, ts)  im2col'd input; index 1 = pooling parity
    # w_ref: (Cout, K9p)      conv weights with the 9 taps merged into K
    # b_ref: (Cout, 1)
    # o_ref: (1, Cout, ts)    pooled output; lanes = pooled spatial positions
    w = w_ref[...]
    res = None
    for p in range(4):                       # 2x2 pooling-window positions
        acc = jnp.dot(w, p_ref[0, p], preferred_element_type=jnp.float32)
        res = acc if res is None else jnp.maximum(res, acc)
    # bias is parity-independent: max_p(acc_p) + b == max_p(acc_p + b),
    # and relu(max(.)) == max(relu(.)) since relu is monotonic.
    o_ref[0] = jnp.maximum(res + b_ref[...], 0.0)


def conv_relu_pool(x_nchw, wt, b_col, *, ts):
    """conv3x3(stride1,pad1) + bias + ReLU + 2x2 maxpool, fused.

    x_nchw: (N, Cin, H, W) f32   wt: (Cout, K9p) with K9p = pad8(9*Cin)
    b_col : (Cout, 1) f32        returns (N, Cout, H//2, W//2) f32 (NCHW).
    """
    N, Cin, H, W = x_nchw.shape
    Cout, K9p = wt.shape
    K9 = 9 * Cin
    Hh, Wh = H // 2, W // 2
    S = Hh * Wh
    assert S % ts == 0 and (ts % 128 == 0 or ts == S)

    # ---- glue: pad + pooling-parity split + im2col (pure data movement) ----
    xpad = jnp.pad(x_nchw, ((0, 0), (0, 0), (1, 1), (1, 1)))
    par = []
    for py in range(2):
        for px in range(2):
            taps = [
                xpad[:, :, py + dy: py + dy + 2 * Hh: 2,
                           px + dx: px + dx + 2 * Wh: 2]
                for dy in range(3) for dx in range(3)
            ]                                     # 9 x (N, Cin, Hh, Wh)
            par.append(jnp.stack(taps, axis=1))   # (N, 9, Cin, Hh, Wh)
    patches = jnp.stack(par, axis=1)              # (N, 4, 9, Cin, Hh, Wh)
    patches = patches.reshape(N, 4, K9, S)        # K order = (dy, dx, cin)
    if K9p != K9:                                 # zero-pad K to a multiple of 8
        patches = jnp.pad(patches, ((0, 0), (0, 0), (0, K9p - K9), (0, 0)))

    out = pl.pallas_call(
        conv_relu_pool_kernel,
        out_shape=jax.ShapeDtypeStruct((N, Cout, S), jnp.float32),
        grid=(N, S // ts),
        in_specs=[
            pl.BlockSpec((1, 4, K9p, ts), lambda n, s: (n, 0, 0, s)),
            pl.BlockSpec((Cout, K9p), lambda n, s: (0, 0)),
            pl.BlockSpec((Cout, 1), lambda n, s: (0, 0)),
        ],
        out_specs=pl.BlockSpec((1, Cout, ts), lambda n, s: (n, 0, s)),
        compiler_params=pltpu.CompilerParams(
            dimension_semantics=("parallel", "parallel")),
    )(patches, wt, b_col)
    return out.reshape(N, Cout, Hh, Wh)


# ----------------------------------------------------------------------------
# Fused 4-layer MLP head: fc1(+relu) K-tiled (bf16 weights), fc2..fc4 epilogue
# ----------------------------------------------------------------------------
def mlp_kernel(x_ref, w1_ref, b1_ref, w2_ref, b2_ref, w3_ref, b3_ref,
               w4_ref, b4_ref, o_ref, acc_ref):
    k = pl.program_id(0)

    @pl.when(k == 0)
    def _():
        acc_ref[...] = jnp.zeros_like(acc_ref)

    # fc1 partial product: bf16 operands, f32 accumulation.
    acc_ref[...] += jnp.dot(x_ref[...].astype(jnp.bfloat16), w1_ref[...],
                            preferred_element_type=jnp.float32)

    @pl.when(k == pl.num_programs(0) - 1)
    def _():
        h = jnp.maximum(acc_ref[...] + b1_ref[...], 0.0)
        h = jnp.maximum(
            jnp.dot(h, w2_ref[...], preferred_element_type=jnp.float32)
            + b2_ref[...], 0.0)
        h = jnp.maximum(
            jnp.dot(h, w3_ref[...], preferred_element_type=jnp.float32)
            + b3_ref[...], 0.0)
        o_ref[...] = (jnp.dot(h, w4_ref[...], preferred_element_type=jnp.float32)
                      + b4_ref[...])


def mlp_forward(x, w1, b1, w2, b2, w3, b3, w4, b4, *, tk=4096):
    N, K = x.shape
    H1, H2, H3, A = w1.shape[1], w2.shape[1], w3.shape[1], w4.shape[1]
    assert K % tk == 0
    return pl.pallas_call(
        mlp_kernel,
        out_shape=jax.ShapeDtypeStruct((N, A), jnp.float32),
        grid=(K // tk,),
        in_specs=[
            pl.BlockSpec((N, tk), lambda k: (0, k)),
            pl.BlockSpec((tk, H1), lambda k: (k, 0)),
            pl.BlockSpec((1, H1), lambda k: (0, 0)),
            pl.BlockSpec((H1, H2), lambda k: (0, 0)),
            pl.BlockSpec((1, H2), lambda k: (0, 0)),
            pl.BlockSpec((H2, H3), lambda k: (0, 0)),
            pl.BlockSpec((1, H3), lambda k: (0, 0)),
            pl.BlockSpec((H3, A), lambda k: (0, 0)),
            pl.BlockSpec((1, A), lambda k: (0, 0)),
        ],
        out_specs=pl.BlockSpec((N, A), lambda k: (0, 0)),
        scratch_shapes=[pltpu.VMEM((N, H1), jnp.float32)],
        compiler_params=pltpu.CompilerParams(dimension_semantics=("arbitrary",)),
    )(x, w1, b1, w2, b2, w3, b3, w4, b4)


# ----------------------------------------------------------------------------
# Full QNetwork forward
# ----------------------------------------------------------------------------
def qnetwork_forward(x_nchw, kp):
    x = conv_relu_pool(x_nchw, kp["wt_c1"], kp["b_c1"], ts=1024)  # (N,16,64,64)
    x = conv_relu_pool(x, kp["wt_c2"], kp["b_c2"], ts=512)        # (N,32,32,32)
    x = conv_relu_pool(x, kp["wt_c3"], kp["b_c3"], ts=256)        # (N,64,16,16)
    N = x.shape[0]
    h = x.reshape(N, -1)          # NCHW flatten == PyTorch x.view(N, -1)
    return mlp_forward(h, kp["w1"], kp["b1"], kp["w2"], kp["b2"],
                       kp["w3"], kp["b3"], kp["w4"], kp["b4"])


# ----------------------------------------------------------------------------
# Parameter init (f32, PyTorch-equivalent layout) + one-time kernel-side prep
# ----------------------------------------------------------------------------
def init_params(key):
    keys = jax.random.split(key, 14)

    def nrm(k, shape, scale):
        return (scale * jax.random.normal(k, shape)).astype(jnp.float32)

    return {
        "w_c1": nrm(keys[0], (3, 3, 3, 16), 0.05),  "b_c1": nrm(keys[1], (16,), 0.01),
        "w_c2": nrm(keys[2], (3, 3, 16, 32), 0.05), "b_c2": nrm(keys[3], (32,), 0.01),
        "w_c3": nrm(keys[4], (3, 3, 32, 64), 0.05), "b_c3": nrm(keys[5], (64,), 0.01),
        "w1": nrm(keys[6], (64 * 16 * 16, 256), 0.02), "b1": nrm(keys[7], (256,), 0.01),
        "w2": nrm(keys[8], (256, 128), 0.05),          "b2": nrm(keys[9], (128,), 0.01),
        "w3": nrm(keys[10], (128, 64), 0.05),          "b3": nrm(keys[11], (64,), 0.01),
        "w4": nrm(keys[12], (64, 4), 0.05),            "b4": nrm(keys[13], (4,), 0.01),
    }


def prepare_params(p):
    """One-time repack: conv weights -> (Cout, pad8(9*Cin)); w1 -> bf16."""
    def conv_prep(w):
        cout = w.shape[-1]
        wt = jnp.transpose(w.reshape(-1, cout))         # (Cout, 9*Cin), K=(dy,dx,cin)
        k9 = wt.shape[1]
        k9p = ((k9 + 7) // 8) * 8
        return jnp.pad(wt, ((0, 0), (0, k9p - k9)))     # zero-pad K to mult of 8

    return {
        "wt_c1": conv_prep(p["w_c1"]), "b_c1": p["b_c1"].reshape(-1, 1),
        "wt_c2": conv_prep(p["w_c2"]), "b_c2": p["b_c2"].reshape(-1, 1),
        "wt_c3": conv_prep(p["w_c3"]), "b_c3": p["b_c3"].reshape(-1, 1),
        "w1": p["w1"].astype(jnp.bfloat16), "b1": p["b1"].reshape(1, -1),
        "w2": p["w2"], "b2": p["b2"].reshape(1, -1),
        "w3": p["w3"], "b3": p["b3"].reshape(1, -1),
        "w4": p["w4"], "b4": p["b4"].reshape(1, -1),
    }


# ----------------------------------------------------------------------------
# Pure-JAX (f32) reference
# ----------------------------------------------------------------------------
def reference_forward(x_nchw, p):
    x = jnp.transpose(x_nchw, (0, 2, 3, 1))
    for wk, bk in (("w_c1", "b_c1"), ("w_c2", "b_c2"), ("w_c3", "b_c3")):
        y = lax.conv_general_dilated(
            x, p[wk], window_strides=(1, 1), padding="SAME",
            dimension_numbers=("NHWC", "HWIO", "NHWC")) + p[bk]
        y = jnp.maximum(y, 0.0)
        x = lax.reduce_window(y, -jnp.inf, lax.max,
                              (1, 2, 2, 1), (1, 2, 2, 1), "VALID")
    N = x.shape[0]
    h = jnp.transpose(x, (0, 3, 1, 2)).reshape(N, -1)   # PyTorch NCHW flatten
    h = jnp.maximum(h @ p["w1"] + p["b1"], 0.0)
    h = jnp.maximum(h @ p["w2"] + p["b2"], 0.0)
    h = jnp.maximum(h @ p["w3"] + p["b3"], 0.0)
    return h @ p["w4"] + p["b4"]


if __name__ == "__main__":
    key = jax.random.PRNGKey(0)
    kx, kp = jax.random.split(key)
    # fc1 = Linear(64*16*16, 256) pins the spatial size to 128x128 (3 pools).
    x = jax.random.normal(kx, (2, 3, 128, 128), dtype=jnp.float32)
    params = init_params(kp)
    kparams = prepare_params(params)

    fwd = jax.jit(qnetwork_forward)
    out = jax.block_until_ready(fwd(x, kparams))
    assert out.shape == (2, 4), out.shape

    ref = jax.block_until_ready(jax.jit(reference_forward)(x, params))
    err = float(jnp.max(jnp.abs(out - ref)))
    assert err < 1e-2, f"max abs error too large: {err}"

    print("KERNEL_OK")
</pallas_src>

<mosaic_0001>
module attributes {stable_mosaic.version = 11 : i64} {
  func.func @conv_relu_pool_kernel(%arg0: i32, %arg1: i32, %arg2: memref<1x4x32x1024xf32, #tpu.memory_space<vmem>>, %arg3: memref<16x32xf32, #tpu.memory_space<vmem>>, %arg4: memref<16x1xf32, #tpu.memory_space<vmem>>, %arg5: memref<1x16x1024xf32, #tpu.memory_space<vmem>>) attributes {dimension_semantics = [#tpu.dimension_semantics<parallel>, #tpu.dimension_semantics<parallel>], iteration_bounds = array<i64: 2, 4>, scalar_prefetch = 0 : i64, scratch_operands = 0 : i64, tpu.core_type = #tpu.core_type<tc>, window_params = [{transform_indices = @transform_0, window_bounds = array<i64: 1, 4, 32, 1024>}, {pipeline_mode = #tpu.pipeline_mode<synchronous>, transform_indices = @transform_1, window_bounds = array<i64: 16, 32>}, {pipeline_mode = #tpu.pipeline_mode<synchronous>, transform_indices = @transform_2, window_bounds = array<i64: 16, 1>}, {transform_indices = @transform_3, window_bounds = array<i64: 1, 16, 1024>}]} {
    %c0 = arith.constant 0 : index
    %c0_0 = arith.constant 0 : index
    %0 = vector.load %arg3[%c0, %c0_0] : memref<16x32xf32, #tpu.memory_space<vmem>>, vector<16x32xf32>
    %c0_1 = arith.constant 0 : index
    %c0_2 = arith.constant 0 : index
    %c0_3 = arith.constant 0 : index
    %c0_4 = arith.constant 0 : index
    %1 = vector.load %arg2[%c0_1, %c0_2, %c0_3, %c0_4] : memref<1x4x32x1024xf32, #tpu.memory_space<vmem>>, vector<1x1x32x1024xf32>
    %2 = vector.shape_cast %1 : vector<1x1x32x1024xf32> to vector<32x1024xf32>
    %cst = arith.constant dense<0.000000e+00> : vector<16x1024xf32>
    %3 = tpu.matmul %0, %2, %cst {dimension_numbers = #tpu.dot_dimension_numbers<[1], [0], [0], [1], [0, 0, 1, 1], [], []>} : vector<16x32xf32>, vector<32x1024xf32>, vector<16x1024xf32> -> vector<16x1024xf32>
    %c0_5 = arith.constant 0 : index
    %c1 = arith.constant 1 : index
    %c0_6 = arith.constant 0 : index
    %c0_7 = arith.constant 0 : index
    %4 = vector.load %arg2[%c0_5, %c1, %c0_6, %c0_7] : memref<1x4x32x1024xf32, #tpu.memory_space<vmem>>, vector<1x1x32x1024xf32>
    %5 = vector.shape_cast %4 : vector<1x1x32x1024xf32> to vector<32x1024xf32>
    %cst_8 = arith.constant dense<0.000000e+00> : vector<16x1024xf32>
    %6 = tpu.matmul %0, %5, %cst_8 {dimension_numbers = #tpu.dot_dimension_numbers<[1], [0], [0], [1], [0, 0, 1, 1], [], []>} : vector<16x32xf32>, vector<32x1024xf32>, vector<16x1024xf32> -> vector<16x1024xf32>
    %7 = arith.maximumf %3, %6 : vector<16x1024xf32>
    %c0_9 = arith.constant 0 : index
    %c2 = arith.constant 2 : index
    %c0_10 = arith.constant 0 : index
    %c0_11 = arith.constant 0 : index
    %8 = vector.load %arg2[%c0_9, %c2, %c0_10, %c0_11] : memref<1x4x32x1024xf32, #tpu.memory_space<vmem>>, vector<1x1x32x1024xf32>
    %9 = vector.shape_cast %8 : vector<1x1x32x1024xf32> to vector<32x1024xf32>
    %cst_12 = arith.constant dense<0.000000e+00> : vector<16x1024xf32>
    %10 = tpu.matmul %0, %9, %cst_12 {dimension_numbers = #tpu.dot_dimension_numbers<[1], [0], [0], [1], [0, 0, 1, 1], [], []>} : vector<16x32xf32>, vector<32x1024xf32>, vector<16x1024xf32> -> vector<16x1024xf32>
    %11 = arith.maximumf %7, %10 : vector<16x1024xf32>
    %c0_13 = arith.constant 0 : index
    %c3 = arith.constant 3 : index
    %c0_14 = arith.constant 0 : index
    %c0_15 = arith.constant 0 : index
    %12 = vector.load %arg2[%c0_13, %c3, %c0_14, %c0_15] : memref<1x4x32x1024xf32, #tpu.memory_space<vmem>>, vector<1x1x32x1024xf32>
    %13 = vector.shape_cast %12 : vector<1x1x32x1024xf32> to vector<32x1024xf32>
    %cst_16 = arith.constant dense<0.000000e+00> : vector<16x1024xf32>
    %14 = tpu.matmul %0, %13, %cst_16 {dimension_numbers = #tpu.dot_dimension_numbers<[1], [0], [0], [1], [0, 0, 1, 1], [], []>} : vector<16x32xf32>, vector<32x1024xf32>, vector<16x1024xf32> -> vector<16x1024xf32>
    %15 = arith.maximumf %11, %14 : vector<16x1024xf32>
    %c0_17 = arith.constant 0 : index
    %c0_18 = arith.constant 0 : index
    %16 = vector.load %arg4[%c0_17, %c0_18] : memref<16x1xf32, #tpu.memory_space<vmem>>, vector<16x1xf32>
    %17 = vector.broadcast %16 : vector<16x1xf32> to vector<16x1024xf32>
    %18 = arith.addf %15, %17 : vector<16x1024xf32>
    %cst_19 = arith.constant 0.000000e+00 : f32
    %19 = vector.broadcast %cst_19 : f32 to vector<16x1024xf32>
    %20 = arith.maximumf %18, %19 : vector<16x1024xf32>
    %c0_20 = arith.constant 0 : index
    %c0_21 = arith.constant 0 : index
    %c0_22 = arith.constant 0 : index
    %21 = vector.load %arg5[%c0_20, %c0_21, %c0_22] : memref<1x16x1024xf32, #tpu.memory_space<vmem>>, vector<1x16x1024xf32>
    %22 = vector.shape_cast %21 : vector<1x16x1024xf32> to vector<16x1024xf32>
    %23 = vector.shape_cast %20 : vector<16x1024xf32> to vector<1x16x1024xf32>
    tpu.vector_store %arg5[%c0_20, %c0_21, %c0_22], %23 {strides = array<i32>} : memref<1x16x1024xf32, #tpu.memory_space<vmem>>, vector<1x16x1024xf32>,
    return
  }
  func.func @transform_0(%arg0: i32, %arg1: i32) -> (i32, i32, i32, i32) {
    %c0_i32 = arith.constant 0 : i32
    %c0_i32_0 = arith.constant 0 : i32
    %c0_i32_1 = arith.constant 0 : i32
    return %arg0, %c0_i32, %c0_i32_0, %arg1 : i32, i32, i32, i32
  }
  func.func @transform_1(%arg0: i32, %arg1: i32) -> (i32, i32) {
    %c0_i32 = arith.constant 0 : i32
    %c0_i32_0 = arith.constant 0 : i32
    %c0_i32_1 = arith.constant 0 : i32
    return %c0_i32, %c0_i32_0 : i32, i32
  }
  func.func @transform_2(%arg0: i32, %arg1: i32) -> (i32, i32) {
    %c0_i32 = arith.constant 0 : i32
    %c0_i32_0 = arith.constant 0 : i32
    %c0_i32_1 = arith.constant 0 : i32
    return %c0_i32, %c0_i32_0 : i32, i32
  }
  func.func @transform_3(%arg0: i32, %arg1: i32) -> (i32, i32, i32) {
    %c0_i32 = arith.constant 0 : i32
    %c0_i32_0 = arith.constant 0 : i32
    return %arg0, %c0_i32, %arg1 : i32, i32, i32
  }
}

module attributes {stable_mosaic.version = 11 : i64} {
  func.func @conv_relu_pool_kernel(%arg0: i32, %arg1: i32, %arg2: memref<1x4x144x512xf32, #tpu.memory_space<vmem>>, %arg3: memref<32x144xf32, #tpu.memory_space<vmem>>, %arg4: memref<32x1xf32, #tpu.memory_space<vmem>>, %arg5: memref<1x32x512xf32, #tpu.memory_space<vmem>>) attributes {dimension_semantics = [#tpu.dimension_semantics<parallel>, #tpu.dimension_semantics<parallel>], iteration_bounds = array<i64: 2, 2>, scalar_prefetch = 0 : i64, scratch_operands = 0 : i64, tpu.core_type = #tpu.core_type<tc>, window_params = [{transform_indices = @transform_0, window_bounds = array<i64: 1, 4, 144, 512>}, {pipeline_mode = #tpu.pipeline_mode<synchronous>, transform_indices = @transform_1, window_bounds = array<i64: 32, 144>}, {pipeline_mode = #tpu.pipeline_mode<synchronous>, transform_indices = @transform_2, window_bounds = array<i64: 32, 1>}, {transform_indices = @transform_3, window_bounds = array<i64: 1, 32, 512>}]} {
    %c0 = arith.constant 0 : index
    %c0_0 = arith.constant 0 : index
    %0 = vector.load %arg3[%c0, %c0_0] : memref<32x144xf32, #tpu.memory_space<vmem>>, vector<32x144xf32>
    %c0_1 = arith.constant 0 : index
    %c0_2 = arith.constant 0 : index
    %c0_3 = arith.constant 0 : index
    %c0_4 = arith.constant 0 : index
    %1 = vector.load %arg2[%c0_1, %c0_2, %c0_3, %c0_4] : memref<1x4x144x512xf32, #tpu.memory_space<vmem>>, vector<1x1x144x512xf32>
    %2 = vector.shape_cast %1 : vector<1x1x144x512xf32> to vector<144x512xf32>
    %cst = arith.constant dense<0.000000e+00> : vector<32x512xf32>
    %3 = tpu.matmul %0, %2, %cst {dimension_numbers = #tpu.dot_dimension_numbers<[1], [0], [0], [1], [0, 0, 1, 1], [], []>} : vector<32x144xf32>, vector<144x512xf32>, vector<32x512xf32> -> vector<32x512xf32>
    %c0_5 = arith.constant 0 : index
    %c1 = arith.constant 1 : index
    %c0_6 = arith.constant 0 : index
    %c0_7 = arith.constant 0 : index
    %4 = vector.load %arg2[%c0_5, %c1, %c0_6, %c0_7] : memref<1x4x144x512xf32, #tpu.memory_space<vmem>>, vector<1x1x144x512xf32>
    %5 = vector.shape_cast %4 : vector<1x1x144x512xf32> to vector<144x512xf32>
    %cst_8 = arith.constant dense<0.000000e+00> : vector<32x512xf32>
    %6 = tpu.matmul %0, %5, %cst_8 {dimension_numbers = #tpu.dot_dimension_numbers<[1], [0], [0], [1], [0, 0, 1, 1], [], []>} : vector<32x144xf32>, vector<144x512xf32>, vector<32x512xf32> -> vector<32x512xf32>
    %7 = arith.maximumf %3, %6 : vector<32x512xf32>
    %c0_9 = arith.constant 0 : index
    %c2 = arith.constant 2 : index
    %c0_10 = arith.constant 0 : index
    %c0_11 = arith.constant 0 : index
    %8 = vector.load %arg2[%c0_9, %c2, %c0_10, %c0_11] : memref<1x4x144x512xf32, #tpu.memory_space<vmem>>, vector<1x1x144x512xf32>
    %9 = vector.shape_cast %8 : vector<1x1x144x512xf32> to vector<144x512xf32>
    %cst_12 = arith.constant dense<0.000000e+00> : vector<32x512xf32>
    %10 = tpu.matmul %0, %9, %cst_12 {dimension_numbers = #tpu.dot_dimension_numbers<[1], [0], [0], [1], [0, 0, 1, 1], [], []>} : vector<32x144xf32>, vector<144x512xf32>, vector<32x512xf32> -> vector<32x512xf32>
    %11 = arith.maximumf %7, %10 : vector<32x512xf32>
    %c0_13 = arith.constant 0 : index
    %c3 = arith.constant 3 : index
    %c0_14 = arith.constant 0 : index
    %c0_15 = arith.constant 0 : index
    %12 = vector.load %arg2[%c0_13, %c3, %c0_14, %c0_15] : memref<1x4x144x512xf32, #tpu.memory_space<vmem>>, vector<1x1x144x512xf32>
    %13 = vector.shape_cast %12 : vector<1x1x144x512xf32> to vector<144x512xf32>
    %cst_16 = arith.constant dense<0.000000e+00> : vector<32x512xf32>
    %14 = tpu.matmul %0, %13, %cst_16 {dimension_numbers = #tpu.dot_dimension_numbers<[1], [0], [0], [1], [0, 0, 1, 1], [], []>} : vector<32x144xf32>, vector<144x512xf32>, vector<32x512xf32> -> vector<32x512xf32>
    %15 = arith.maximumf %11, %14 : vector<32x512xf32>
    %c0_17 = arith.constant 0 : index
    %c0_18 = arith.constant 0 : index
    %16 = vector.load %arg4[%c0_17, %c0_18] : memref<32x1xf32, #tpu.memory_space<vmem>>, vector<32x1xf32>
    %17 = vector.broadcast %16 : vector<32x1xf32> to vector<32x512xf32>
    %18 = arith.addf %15, %17 : vector<32x512xf32>
    %cst_19 = arith.constant 0.000000e+00 : f32
    %19 = vector.broadcast %cst_19 : f32 to vector<32x512xf32>
    %20 = arith.maximumf %18, %19 : vector<32x512xf32>
    %c0_20 = arith.constant 0 : index
    %c0_21 = arith.constant 0 : index
    %c0_22 = arith.constant 0 : index
    %21 = vector.load %arg5[%c0_20, %c0_21, %c0_22] : memref<1x32x512xf32, #tpu.memory_space<vmem>>, vector<1x32x512xf32>
    %22 = vector.shape_cast %21 : vector<1x32x512xf32> to vector<32x512xf32>
    %23 = vector.shape_cast %20 : vector<32x512xf32> to vector<1x32x512xf32>
    tpu.vector_store %arg5[%c0_20, %c0_21, %c0_22], %23 {strides = array<i32>} : memref<1x32x512xf32, #tpu.memory_space<vmem>>, vector<1x32x512xf32>,
    return
  }
  func.func @transform_0(%arg0: i32, %arg1: i32) -> (i32, i32, i32, i32) {
    %c0_i32 = arith.constant 0 : i32
    %c0_i32_0 = arith.constant 0 : i32
    %c0_i32_1 = arith.constant 0 : i32
    return %arg0, %c0_i32, %c0_i32_0, %arg1 : i32, i32, i32, i32
  }
  func.func @transform_1(%arg0: i32, %arg1: i32) -> (i32, i32) {
    %c0_i32 = arith.constant 0 : i32
    %c0_i32_0 = arith.constant 0 : i32
    %c0_i32_1 = arith.constant 0 : i32
    return %c0_i32, %c0_i32_0 : i32, i32
  }
  func.func @transform_2(%arg0: i32, %arg1: i32) -> (i32, i32) {
    %c0_i32 = arith.constant 0 : i32
    %c0_i32_0 = arith.constant 0 : i32
    %c0_i32_1 = arith.constant 0 : i32
    return %c0_i32, %c0_i32_0 : i32, i32
  }
  func.func @transform_3(%arg0: i32, %arg1: i32) -> (i32, i32, i32) {
    %c0_i32 = arith.constant 0 : i32
    %c0_i32_0 = arith.constant 0 : i32
    return %arg0, %c0_i32, %arg1 : i32, i32, i32
  }
}

module attributes {stable_mosaic.version = 11 : i64} {
  func.func @conv_relu_pool_kernel(%arg0: i32, %arg1: i32, %arg2: memref<1x4x288x256xf32, #tpu.memory_space<vmem>>, %arg3: memref<64x288xf32, #tpu.memory_space<vmem>>, %arg4: memref<64x1xf32, #tpu.memory_space<vmem>>, %arg5: memref<1x64x256xf32, #tpu.memory_space<vmem>>) attributes {dimension_semantics = [#tpu.dimension_semantics<parallel>, #tpu.dimension_semantics<parallel>], iteration_bounds = array<i64: 2, 1>, scalar_prefetch = 0 : i64, scratch_operands = 0 : i64, tpu.core_type = #tpu.core_type<tc>, window_params = [{transform_indices = @transform_0, window_bounds = array<i64: 1, 4, 288, 256>}, {pipeline_mode = #tpu.pipeline_mode<synchronous>, transform_indices = @transform_1, window_bounds = array<i64: 64, 288>}, {pipeline_mode = #tpu.pipeline_mode<synchronous>, transform_indices = @transform_2, window_bounds = array<i64: 64, 1>}, {transform_indices = @transform_3, window_bounds = array<i64: 1, 64, 256>}]} {
    %c0 = arith.constant 0 : index
    %c0_0 = arith.constant 0 : index
    %0 = vector.load %arg3[%c0, %c0_0] : memref<64x288xf32, #tpu.memory_space<vmem>>, vector<64x288xf32>
    %c0_1 = arith.constant 0 : index
    %c0_2 = arith.constant 0 : index
    %c0_3 = arith.constant 0 : index
    %c0_4 = arith.constant 0 : index
    %1 = vector.load %arg2[%c0_1, %c0_2, %c0_3, %c0_4] : memref<1x4x288x256xf32, #tpu.memory_space<vmem>>, vector<1x1x288x256xf32>
    %2 = vector.shape_cast %1 : vector<1x1x288x256xf32> to vector<288x256xf32>
    %cst = arith.constant dense<0.000000e+00> : vector<64x256xf32>
    %3 = tpu.matmul %0, %2, %cst {dimension_numbers = #tpu.dot_dimension_numbers<[1], [0], [0], [1], [0, 0, 1, 1], [], []>} : vector<64x288xf32>, vector<288x256xf32>, vector<64x256xf32> -> vector<64x256xf32>
    %c0_5 = arith.constant 0 : index
    %c1 = arith.constant 1 : index
    %c0_6 = arith.constant 0 : index
    %c0_7 = arith.constant 0 : index
    %4 = vector.load %arg2[%c0_5, %c1, %c0_6, %c0_7] : memref<1x4x288x256xf32, #tpu.memory_space<vmem>>, vector<1x1x288x256xf32>
    %5 = vector.shape_cast %4 : vector<1x1x288x256xf32> to vector<288x256xf32>
    %cst_8 = arith.constant dense<0.000000e+00> : vector<64x256xf32>
    %6 = tpu.matmul %0, %5, %cst_8 {dimension_numbers = #tpu.dot_dimension_numbers<[1], [0], [0], [1], [0, 0, 1, 1], [], []>} : vector<64x288xf32>, vector<288x256xf32>, vector<64x256xf32> -> vector<64x256xf32>
    %7 = arith.maximumf %3, %6 : vector<64x256xf32>
    %c0_9 = arith.constant 0 : index
    %c2 = arith.constant 2 : index
    %c0_10 = arith.constant 0 : index
    %c0_11 = arith.constant 0 : index
    %8 = vector.load %arg2[%c0_9, %c2, %c0_10, %c0_11] : memref<1x4x288x256xf32, #tpu.memory_space<vmem>>, vector<1x1x288x256xf32>
    %9 = vector.shape_cast %8 : vector<1x1x288x256xf32> to vector<288x256xf32>
    %cst_12 = arith.constant dense<0.000000e+00> : vector<64x256xf32>
    %10 = tpu.matmul %0, %9, %cst_12 {dimension_numbers = #tpu.dot_dimension_numbers<[1], [0], [0], [1], [0, 0, 1, 1], [], []>} : vector<64x288xf32>, vector<288x256xf32>, vector<64x256xf32> -> vector<64x256xf32>
    %11 = arith.maximumf %7, %10 : vector<64x256xf32>
    %c0_13 = arith.constant 0 : index
    %c3 = arith.constant 3 : index
    %c0_14 = arith.constant 0 : index
    %c0_15 = arith.constant 0 : index
    %12 = vector.load %arg2[%c0_13, %c3, %c0_14, %c0_15] : memref<1x4x288x256xf32, #tpu.memory_space<vmem>>, vector<1x1x288x256xf32>
    %13 = vector.shape_cast %12 : vector<1x1x288x256xf32> to vector<288x256xf32>
    %cst_16 = arith.constant dense<0.000000e+00> : vector<64x256xf32>
    %14 = tpu.matmul %0, %13, %cst_16 {dimension_numbers = #tpu.dot_dimension_numbers<[1], [0], [0], [1], [0, 0, 1, 1], [], []>} : vector<64x288xf32>, vector<288x256xf32>, vector<64x256xf32> -> vector<64x256xf32>
    %15 = arith.maximumf %11, %14 : vector<64x256xf32>
    %c0_17 = arith.constant 0 : index
    %c0_18 = arith.constant 0 : index
    %16 = vector.load %arg4[%c0_17, %c0_18] : memref<64x1xf32, #tpu.memory_space<vmem>>, vector<64x1xf32>
    %17 = vector.broadcast %16 : vector<64x1xf32> to vector<64x256xf32>
    %18 = arith.addf %15, %17 : vector<64x256xf32>
    %cst_19 = arith.constant 0.000000e+00 : f32
    %19 = vector.broadcast %cst_19 : f32 to vector<64x256xf32>
    %20 = arith.maximumf %18, %19 : vector<64x256xf32>
    %c0_20 = arith.constant 0 : index
    %c0_21 = arith.constant 0 : index
    %c0_22 = arith.constant 0 : index
    %21 = vector.load %arg5[%c0_20, %c0_21, %c0_22] : memref<1x64x256xf32, #tpu.memory_space<vmem>>, vector<1x64x256xf32>
    %22 = vector.shape_cast %21 : vector<1x64x256xf32> to vector<64x256xf32>
    %23 = vector.shape_cast %20 : vector<64x256xf32> to vector<1x64x256xf32>
    tpu.vector_store %arg5[%c0_20, %c0_21, %c0_22], %23 {strides = array<i32>} : memref<1x64x256xf32, #tpu.memory_space<vmem>>, vector<1x64x256xf32>,
    return
  }
  func.func @transform_0(%arg0: i32, %arg1: i32) -> (i32, i32, i32, i32) {
    %c0_i32 = arith.constant 0 : i32
    %c0_i32_0 = arith.constant 0 : i32
    %c0_i32_1 = arith.constant 0 : i32
    return %arg0, %c0_i32, %c0_i32_0, %arg1 : i32, i32, i32, i32
  }
  func.func @transform_1(%arg0: i32, %arg1: i32) -> (i32, i32) {
    %c0_i32 = arith.constant 0 : i32
    %c0_i32_0 = arith.constant 0 : i32
    %c0_i32_1 = arith.constant 0 : i32
    return %c0_i32, %c0_i32_0 : i32, i32
  }
  func.func @transform_2(%arg0: i32, %arg1: i32) -> (i32, i32) {
    %c0_i32 = arith.constant 0 : i32
    %c0_i32_0 = arith.constant 0 : i32
    %c0_i32_1 = arith.constant 0 : i32
    return %c0_i32, %c0_i32_0 : i32, i32
  }
  func.func @transform_3(%arg0: i32, %arg1: i32) -> (i32, i32, i32) {
    %c0_i32 = arith.constant 0 : i32
    %c0_i32_0 = arith.constant 0 : i32
    return %arg0, %c0_i32, %arg1 : i32, i32, i32
  }
}

module attributes {stable_mosaic.version = 11 : i64} {
  func.func @mlp_kernel(%arg0: i32, %arg1: memref<2x4096xf32, #tpu.memory_space<vmem>>, %arg2: memref<4096x256xbf16, #tpu.memory_space<vmem>>, %arg3: memref<1x256xf32, #tpu.memory_space<vmem>>, %arg4: memref<256x128xf32, #tpu.memory_space<vmem>>, %arg5: memref<1x128xf32, #tpu.memory_space<vmem>>, %arg6: memref<128x64xf32, #tpu.memory_space<vmem>>, %arg7: memref<1x64xf32, #tpu.memory_space<vmem>>, %arg8: memref<64x4xf32, #tpu.memory_space<vmem>>, %arg9: memref<1x4xf32, #tpu.memory_space<vmem>>, %arg10: memref<2x4xf32, #tpu.memory_space<vmem>>, %arg11: memref<2x256xf32, #tpu.memory_space<vmem>>) attributes {dimension_semantics = [#tpu.dimension_semantics<arbitrary>], iteration_bounds = array<i64: 4>, scalar_prefetch = 0 : i64, scratch_operands = 1 : i64, tpu.core_type = #tpu.core_type<tc>, window_params = [{transform_indices = @transform_0, window_bounds = array<i64: 2, 4096>}, {transform_indices = @transform_1, window_bounds = array<i64: 4096, 256>}, {pipeline_mode = #tpu.pipeline_mode<synchronous>, transform_indices = @transform_2, window_bounds = array<i64: 1, 256>}, {pipeline_mode = #tpu.pipeline_mode<synchronous>, transform_indices = @transform_3, window_bounds = array<i64: 256, 128>}, {pipeline_mode = #tpu.pipeline_mode<synchronous>, transform_indices = @transform_4, window_bounds = array<i64: 1, 128>}, {pipeline_mode = #tpu.pipeline_mode<synchronous>, transform_indices = @transform_5, window_bounds = array<i64: 128, 64>}, {pipeline_mode = #tpu.pipeline_mode<synchronous>, transform_indices = @transform_6, window_bounds = array<i64: 1, 64>}, {pipeline_mode = #tpu.pipeline_mode<synchronous>, transform_indices = @transform_7, window_bounds = array<i64: 64, 4>}, {pipeline_mode = #tpu.pipeline_mode<synchronous>, transform_indices = @transform_8, window_bounds = array<i64: 1, 4>}, {pipeline_mode = #tpu.pipeline_mode<synchronous>, transform_indices = @transform_9, window_bounds = array<i64: 2, 4>}]} {
    %c0_i32 = arith.constant 0 : i32
    %0 = arith.cmpi eq, %arg0, %c0_i32 : i32
    %1 = arith.extui %0 : i1 to i32
    %c0_i32_0 = arith.constant 0 : i32
    %2 = arith.cmpi ne, %1, %c0_i32_0 : i32
    scf.if %2 {
      %cst_9 = arith.constant 0.000000e+00 : f32
      %13 = vector.broadcast %cst_9 : f32 to vector<2x256xf32>
      %c0_10 = arith.constant 0 : index
      %c0_11 = arith.constant 0 : index
      %14 = vector.load %arg11[%c0_10, %c0_11] : memref<2x256xf32, #tpu.memory_space<vmem>>, vector<2x256xf32>
      tpu.vector_store %arg11[%c0_10, %c0_11], %13 {strides = array<i32>} : memref<2x256xf32, #tpu.memory_space<vmem>>, vector<2x256xf32>,
    } else {
    }
    %c0 = arith.constant 0 : index
    %c0_1 = arith.constant 0 : index
    %3 = vector.load %arg11[%c0, %c0_1] : memref<2x256xf32, #tpu.memory_space<vmem>>, vector<2x256xf32>
    %c0_2 = arith.constant 0 : index
    %c0_3 = arith.constant 0 : index
    %4 = vector.load %arg1[%c0_2, %c0_3] : memref<2x4096xf32, #tpu.memory_space<vmem>>, vector<2x4096xf32>
    %5 = arith.truncf %4 : vector<2x4096xf32> to vector<2x4096xbf16>
    %c0_4 = arith.constant 0 : index
    %c0_5 = arith.constant 0 : index
    %6 = vector.load %arg2[%c0_4, %c0_5] : memref<4096x256xbf16, #tpu.memory_space<vmem>>, vector<4096x256xbf16>
    %cst = arith.constant dense<0.000000e+00> : vector<2x256xf32>
    %7 = tpu.matmul %5, %6, %cst {dimension_numbers = #tpu.dot_dimension_numbers<[1], [0], [0], [1], [0, 0, 1, 1], [], []>} : vector<2x4096xbf16>, vector<4096x256xbf16>, vector<2x256xf32> -> vector<2x256xf32>
    %8 = arith.addf %3, %7 : vector<2x256xf32>
    %c0_6 = arith.constant 0 : index
    %c0_7 = arith.constant 0 : index
    %9 = vector.load %arg11[%c0_6, %c0_7] : memref<2x256xf32, #tpu.memory_space<vmem>>, vector<2x256xf32>
    tpu.vector_store %arg11[%c0_6, %c0_7], %8 {strides = array<i32>} : memref<2x256xf32, #tpu.memory_space<vmem>>, vector<2x256xf32>,
    %c3_i32 = arith.constant 3 : i32
    %10 = arith.cmpi eq, %arg0, %c3_i32 : i32
    %11 = arith.extui %10 : i1 to i32
    %c0_i32_8 = arith.constant 0 : i32
    %12 = arith.cmpi ne, %11, %c0_i32_8 : i32
    scf.if %12 {
      %c0_9 = arith.constant 0 : index
      %c0_10 = arith.constant 0 : index
      %13 = vector.load %arg11[%c0_9, %c0_10] : memref<2x256xf32, #tpu.memory_space<vmem>>, vector<2x256xf32>
      %c0_11 = arith.constant 0 : index
      %c0_12 = arith.constant 0 : index
      %14 = vector.load %arg3[%c0_11, %c0_12] : memref<1x256xf32, #tpu.memory_space<vmem>>, vector<1x256xf32>
      %15 = vector.broadcast %14 : vector<1x256xf32> to vector<2x256xf32>
      %16 = arith.addf %13, %15 : vector<2x256xf32>
      %cst_13 = arith.constant 0.000000e+00 : f32
      %17 = vector.broadcast %cst_13 : f32 to vector<2x256xf32>
      %18 = arith.maximumf %16, %17 : vector<2x256xf32>
      %c0_14 = arith.constant 0 : index
      %c0_15 = arith.constant 0 : index
      %19 = vector.load %arg4[%c0_14, %c0_15] : memref<256x128xf32, #tpu.memory_space<vmem>>, vector<256x128xf32>
      %cst_16 = arith.constant dense<0.000000e+00> : vector<2x128xf32>
      %20 = tpu.matmul %18, %19, %cst_16 {dimension_numbers = #tpu.dot_dimension_numbers<[1], [0], [0], [1], [0, 0, 1, 1], [], []>} : vector<2x256xf32>, vector<256x128xf32>, vector<2x128xf32> -> vector<2x128xf32>
      %c0_17 = arith.constant 0 : index
      %c0_18 = arith.constant 0 : index
      %21 = vector.load %arg5[%c0_17, %c0_18] : memref<1x128xf32, #tpu.memory_space<vmem>>, vector<1x128xf32>
      %22 = vector.broadcast %21 : vector<1x128xf32> to vector<2x128xf32>
      %23 = arith.addf %20, %22 : vector<2x128xf32>
      %cst_19 = arith.constant 0.000000e+00 : f32
      %24 = vector.broadcast %cst_19 : f32 to vector<2x128xf32>
      %25 = arith.maximumf %23, %24 : vector<2x128xf32>
      %c0_20 = arith.constant 0 : index
      %c0_21 = arith.constant 0 : index
      %26 = vector.load %arg6[%c0_20, %c0_21] : memref<128x64xf32, #tpu.memory_space<vmem>>, vector<128x64xf32>
      %cst_22 = arith.constant dense<0.000000e+00> : vector<2x64xf32>
      %27 = tpu.matmul %25, %26, %cst_22 {dimension_numbers = #tpu.dot_dimension_numbers<[1], [0], [0], [1], [0, 0, 1, 1], [], []>} : vector<2x128xf32>, vector<128x64xf32>, vector<2x64xf32> -> vector<2x64xf32>
      %c0_23 = arith.constant 0 : index
      %c0_24 = arith.constant 0 : index
      %28 = vector.load %arg7[%c0_23, %c0_24] : memref<1x64xf32, #tpu.memory_space<vmem>>, vector<1x64xf32>
      %29 = vector.broadcast %28 : vector<1x64xf32> to vector<2x64xf32>
      %30 = arith.addf %27, %29 : vector<2x64xf32>
      %cst_25 = arith.constant 0.000000e+00 : f32
      %31 = vector.broadcast %cst_25 : f32 to vector<2x64xf32>
      %32 = arith.maximumf %30, %31 : vector<2x64xf32>
      %c0_26 = arith.constant 0 : index
      %c0_27 = arith.constant 0 : index
      %33 = vector.load %arg8[%c0_26, %c0_27] : memref<64x4xf32, #tpu.memory_space<vmem>>, vector<64x4xf32>
      %cst_28 = arith.constant dense<0.000000e+00> : vector<2x4xf32>
      %34 = tpu.matmul %32, %33, %cst_28 {dimension_numbers = #tpu.dot_dimension_numbers<[1], [0], [0], [1], [0, 0, 1, 1], [], []>} : vector<2x64xf32>, vector<64x4xf32>, vector<2x4xf32> -> vector<2x4xf32>
      %c0_29 = arith.constant 0 : index
      %c0_30 = arith.constant 0 : index
      %35 = vector.load %arg9[%c0_29, %c0_30] : memref<1x4xf32, #tpu.memory_space<vmem>>, vector<1x4xf32>
      %36 = vector.broadcast %35 : vector<1x4xf32> to vector<2x4xf32>
      %37 = arith.addf %34, %36 : vector<2x4xf32>
      %c0_31 = arith.constant 0 : index
      %c0_32 = arith.constant 0 : index
      %38 = vector.load %arg10[%c0_31, %c0_32] : memref<2x4xf32, #tpu.memory_space<vmem>>, vector<2x4xf32>
      tpu.vector_store %arg10[%c0_31, %c0_32], %37 {strides = array<i32>} : memref<2x4xf32, #tpu.memory_space<vmem>>, vector<2x4xf32>,
    } else {
    }
    return
  }
  func.func @transform_0(%arg0: i32) -> (i32, i32) {
    %c0_i32 = arith.constant 0 : i32
    %c0_i32_0 = arith.constant 0 : i32
    return %c0_i32, %arg0 : i32, i32
  }
  func.func @transform_1(%arg0: i32) -> (i32, i32) {
    %c0_i32 = arith.constant 0 : i32
    %c0_i32_0 = arith.constant 0 : i32
    return %arg0, %c0_i32 : i32, i32
  }
  func.func @transform_2(%arg0: i32) -> (i32, i32) {
    %c0_i32 = arith.constant 0 : i32
    %c0_i32_0 = arith.constant 0 : i32
    %c0_i32_1 = arith.constant 0 : i32
    return %c0_i32, %c0_i32_0 : i32, i32
  }
  func.func @transform_3(%arg0: i32) -> (i32, i32) {
    %c0_i32 = arith.constant 0 : i32
    %c0_i32_0 = arith.constant 0 : i32
    %c0_i32_1 = arith.constant 0 : i32
    return %c0_i32, %c0_i32_0 : i32, i32
  }
  func.func @transform_4(%arg0: i32) -> (i32, i32) {
    %c0_i32 = arith.constant 0 : i32
    %c0_i32_0 = arith.constant 0 : i32
    %c0_i32_1 = arith.constant 0 : i32
    return %c0_i32, %c0_i32_0 : i32, i32
  }
  func.func @transform_5(%arg0: i32) -> (i32, i32) {
    %c0_i32 = arith.constant 0 : i32
    %c0_i32_0 = arith.constant 0 : i32
    %c0_i32_1 = arith.constant 0 : i32
    return %c0_i32, %c0_i32_0 : i32, i32
  }
  func.func @transform_6(%arg0: i32) -> (i32, i32) {
    %c0_i32 = arith.constant 0 : i32
    %c0_i32_0 = arith.constant 0 : i32
    %c0_i32_1 = arith.constant 0 : i32
    return %c0_i32, %c0_i32_0 : i32, i32
  }
  func.func @transform_7(%arg0: i32) -> (i32, i32) {
    %c0_i32 = arith.constant 0 : i32
    %c0_i32_0 = arith.constant 0 : i32
    %c0_i32_1 = arith.constant 0 : i32
    return %c0_i32, %c0_i32_0 : i32, i32
  }
  func.func @transform_8(%arg0: i32) -> (i32, i32) {
    %c0_i32 = arith.constant 0 : i32
    %c0_i32_0 = arith.constant 0 : i32
    %c0_i32_1 = arith.constant 0 : i32
    return %c0_i32, %c0_i32_0 : i32, i32
  }
  func.func @transform_9(%arg0: i32) -> (i32, i32) {
    %c0_i32 = arith.constant 0 : i32
    %c0_i32_0 = arith.constant 0 : i32
    %c0_i32_1 = arith.constant 0 : i32
    return %c0_i32, %c0_i32_0 : i32, i32
  }
}

</mosaic_0001>

<llo_original>
// kernel: qnetwork_forward.4
$region0: #{qnetwork_forward.4}
  #allocation0 [shape = 'u32[]', space=smem, size = 0x4, offset = 0x4, fixed_abs, tag = 'smem constant byte address 0x4 - core index']
  #allocation1 [shape = 'u32[72,128]{1,0:T(1,128)}', space=vmem, size = 0x9000, scoped, tag = 'internal scratch']
  %s0 = inlined_call_operand.vmem [shape: f32[2,4,32,4096], index: 0, kind: input, shape index: {}]
  %s1 = inlined_call_operand.vmem [shape: f32[16,32], index: 1, kind: input, shape index: {}]
  %s2 = inlined_call_operand.vmem [shape: f32[16,1], index: 2, kind: input, shape index: {}]
  %s3 = inlined_call_operand.vmem [shape: f32[2,16,4096], index: 3, kind: output, shape index: {}]
  %s4 = sld [smem:[#allocation0]]
  $region87: #{qnetwork_forward.4} parent=0
    _
  %s6 = ssub.s32 1, %s4
  %s7 = scalar_select 0, %s6, %s4
  $region1: #{qnetwork_forward.4} parent=0
    #allocation2 [shape = 'u8[1048576]{0}', space=vmem, size = 0x100000, scoped, tag = 'input window, operand 0']
    #allocation3 [shape = 'u8[131072]{0}', space=vmem, size = 0x20000, scoped, tag = 'output window, operand 0']
    loop: start=0, step=1, limit=10
    $region2: #{qnetwork_forward.4} parent=1 // loop_pre_header
      _
    $region3: #{qnetwork_forward.4} parent=1 // loop_header
      %s9 = sphi 0, %s13
      %p10 = scmp.ge.s32.totalorder %s9, 10
      %s16 = sphi 0, %s28
      %s17 = sphi 0, %s24
      %s18 = sphi 0, %s16
      %s19 = sphi 0, %s17
      %s20 = sphi 0, %s18
      %s21 = sphi 0, %s19
      %s33 = sphi 0, %s35
      %s36 = sphi 0, %s33
      %s37 = sphi 0, %s36
      %s53 = sphi 0, %s37
      %s57 = sphi 0, %s57
      %s59 = sphi 0, %s57
      %s60 = sphi 0, %s59
      %s74 = sphi 0, %s60
      %s78 = sphi 0, %s78
      %s80 = sphi 0, %s78
      %s81 = sphi 0, %s80
      %s95 = sphi 0, %s81
      %s103 = sphi 0, %s105
      %s106 = sphi 0, %s103
      %s107 = sphi 0, %s106
      %s123 = sphi 0, %s107
    $region4: #{qnetwork_forward.4} parent=1 // loop_header_branch
      %12 = sbr.rel (%p10) target = $region8
    $region5: #{qnetwork_forward.4} parent=1 // loop_body
      %s14 = ssub.s32 %s9, 1
      %s15 = ssub.s32 %s9, 2
      %s22 = sadd.s32 1, %s17
      %p23 = scmp.ge.s32.totalorder %s22, 4
      %s24 = scalar_select %p23, 0, %s22
      %s25 = sadd.s32 1, %s16
      %s26 = scalar_select %p23, %s25, %s16
      %p27 = scmp.ge.s32.totalorder %s26, 2
      %s28 = scalar_select %p27, 0, %s26
      %s29 = ssub.s32 %s16, %s28
      %s30 = ssub.s32 %s17, %s24
      %s31 = sor.u32 %s29, %s30
      %p32 = scmp.eq.s32.totalorder %s31, 0
      %s34 = sadd.s32 %s33, 1
      %s35 = scalar_select %p32, %s33, %s34
      %p38 = pneg %p32
      %p39 = scmp.eq.s32.totalorder %s9, 7
      %p40 = por %p38, %p39
      %p41 = scmp.ne.s32.totalorder %s33, %s36
      %p42 = scmp.eq.s32.totalorder %s9, 0
      %p43 = por %p41, %p42
      %p44 = scmp.ne.s32.totalorder %s33, %s36
      %p45 = scmp.eq.s32.totalorder %s14, 7
      %p46 = por %p44, %p45
      %p47 = scmp.ne.s32.totalorder %s36, %s37
      %p48 = scmp.eq.s32.totalorder %s14, 0
      %p49 = por %p47, %p48
      %p50 = scmp.ne.s32.totalorder %s36, %s37
      %p51 = scmp.eq.s32.totalorder %s15, 7
      %p52 = por %p50, %p51
      %p54 = scmp.ne.s32.totalorder %s37, %s53
      %p55 = scmp.eq.s32.totalorder %s15, 0
      %p56 = por %p54, %p55
      %s58 = sadd.s32 %s57, 1
      %p61 = scmp.eq.s32.totalorder %s9, 7
      %p62 = scmp.ne.s32.totalorder %s57, %s59
      %p63 = scmp.eq.s32.totalorder %s9, 0
      %p64 = por %p62, %p63
      %p65 = scmp.ne.s32.totalorder %s57, %s59
      %p66 = scmp.eq.s32.totalorder %s14, 7
      %p67 = por %p65, %p66
      %p68 = scmp.ne.s32.totalorder %s59, %s60
      %p69 = scmp.eq.s32.totalorder %s14, 0
      %p70 = por %p68, %p69
      %p71 = scmp.ne.s32.totalorder %s59, %s60
      %p72 = scmp.eq.s32.totalorder %s15, 7
      %p73 = por %p71, %p72
      %p75 = scmp.ne.s32.totalorder %s60, %s74
      %p76 = scmp.eq.s32.totalorder %s15, 0
      %p77 = por %p75, %p76
      %s79 = sadd.s32 %s78, 1
      %p82 = scmp.eq.s32.totalorder %s9, 7
      %p83 = scmp.ne.s32.totalorder %s78, %s80
      %p84 = scmp.eq.s32.totalorder %s9, 0
      %p85 = por %p83, %p84
      %p86 = scmp.ne.s32.totalorder %s78, %s80
      %p87 = scmp.eq.s32.totalorder %s14, 7
      %p88 = por %p86, %p87
      %p89 = scmp.ne.s32.totalorder %s80, %s81
      %p90 = scmp.eq.s32.totalorder %s14, 0
      %p91 = por %p89, %p90
      %p92 = scmp.ne.s32.totalorder %s80, %s81
      %p93 = scmp.eq.s32.totalorder %s15, 7
      %p94 = por %p92, %p93
      %p96 = scmp.ne.s32.totalorder %s81, %s95
      %p97 = scmp.eq.s32.totalorder %s15, 0
      %p98 = por %p96, %p97
      %s99 = ssub.s32 %s16, %s28
      %s100 = ssub.s32 %s17, %s24
      %s101 = sor.u32 %s99, %s100
      %p102 = scmp.eq.s32.totalorder %s101, 0
      %s104 = sadd.s32 %s103, 1
      %s105 = scalar_select %p102, %s103, %s104
      %p108 = pneg %p102
      %p109 = scmp.eq.s32.totalorder %s9, 7
      %p110 = por %p108, %p109
      %p111 = scmp.ne.s32.totalorder %s103, %s106
      %p112 = scmp.eq.s32.totalorder %s9, 0
      %p113 = por %p111, %p112
      %p114 = scmp.ne.s32.totalorder %s103, %s106
      %p115 = scmp.eq.s32.totalorder %s14, 7
      %p116 = por %p114, %p115
      %p117 = scmp.ne.s32.totalorder %s106, %s107
      %p118 = scmp.eq.s32.totalorder %s14, 0
      %p119 = por %p117, %p118
      %p120 = scmp.ne.s32.totalorder %s106, %s107
      %p121 = scmp.eq.s32.totalorder %s15, 7
      %p122 = por %p120, %p121
      %p124 = scmp.ne.s32.totalorder %s107, %s123
      %p125 = scmp.eq.s32.totalorder %s15, 0
      %p126 = por %p124, %p125
      %p127 = scmp.le.s32.totalorder 1, %s9
      %p128 = scmp.lt.s32.totalorder %s9, 9
      %p129 = pnand %p127, %p128
      %p130 = pneg %p129
      // Predicated region
      $region9: #{qnetwork_forward.4} parent=5 // pred_check
        _
      $region10: #{qnetwork_forward.4} parent=5 // pred_check_branch
        %132 = sbr.rel (%p129) target = $region12
      $region11: #{qnetwork_forward.4} parent=5 // pred_region
        %s133 = ssub.s32 %s9, 1
        // Predicated region
        $region13: #{qnetwork_forward.4} parent=11 // pred_check
          %p134 = pneg %p70
        $region14: #{qnetwork_forward.4} parent=11 // pred_check_branch
          %136 = sbr.rel (%p134) target = $region16
        $region15: #{qnetwork_forward.4} parent=11 // pred_region
          _
        $region16: #{qnetwork_forward.4} parent=11 // pred_fallthru
          _
        // Predicated region
        $region17: #{qnetwork_forward.4} parent=11 // pred_check
          %p137 = pneg %p91
        $region18: #{qnetwork_forward.4} parent=11 // pred_check_branch
          %139 = sbr.rel (%p137) target = $region20
        $region19: #{qnetwork_forward.4} parent=11 // pred_region
          _
        $region20: #{qnetwork_forward.4} parent=11 // pred_fallthru
          _
      $region12: #{qnetwork_forward.4} parent=5 // pred_fallthru
        _
      %p140 = scmp.lt.s32.totalorder %s9, 8
      // Predicated region
      $region21: #{qnetwork_forward.4} parent=5 // pred_check
        %p141 = pneg %p140
      $region22: #{qnetwork_forward.4} parent=5 // pred_check_branch
        %143 = sbr.rel (%p141) target = $region24
      $region23: #{qnetwork_forward.4} parent=5 // pred_region
        // Predicated region
        $region25: #{qnetwork_forward.4} parent=23 // pred_check
          %p144 = pneg %p43
        $region26: #{qnetwork_forward.4} parent=23 // pred_check_branch
          %146 = sbr.rel (%p144) target = $region28
        $region27: #{qnetwork_forward.4} parent=23 // pred_region
          %s147 = sand.u32 %s33, 1
          %s148 = sand.u32 %s33, 1
          %s149 = smul.addr %s148, 1024
          %s150 = scalar_lea.vmem [#allocation2], %s149
          %s151 = smul.u32 8, %s17
          %s152 = smul.addr %s16, 512
          %s153 = sadd.s32 %s151, %s152
          %s154 = smul.addr %s153, 8
          %s155 = scalar_lea.vmem %s0, %s154
          // Predicated region
          $region29: #{qnetwork_forward.4} parent=27 // pred_check
            _
          $region30: #{qnetwork_forward.4} parent=27 // pred_check_branch
            %157 = sbr.rel (0) target = $region32
          $region31: #{qnetwork_forward.4} parent=27 // pred_region
            // Predicated region
            $region33: #{qnetwork_forward.4} parent=31 // pred_check
              _
            $region34: #{qnetwork_forward.4} parent=31 // pred_check_branch
              %159 = sbr.rel (0) target = $region36
            $region35: #{qnetwork_forward.4} parent=31 // pred_region
              loop: start=0, step=1, limit=1
              $region37: #{qnetwork_forward.4} parent=35 // loop_pre_header
                _
              $region38: #{qnetwork_forward.4} parent=35 // loop_header
                %s161 = sphi 0, %s165
                %p162 = scmp.ge.s32.totalorder %s161, 1
                %s166 = sphi %s155, %s155
                %s167 = sphi %s150, %s150
              $region39: #{qnetwork_forward.4} parent=35 // loop_header_branch
                %164 = sbr.rel (%p162) target = $region43
              $region40: #{qnetwork_forward.4} parent=35 // loop_body
                %v168 = vld [vmem:[%s166] sm:$0xff]
                %169 = vst [vmem:[%s167] sm:$0xff] %v168
                %v170 = vld [vmem:[%s166 + $0x8] sm:$0xff]
                %171 = vst [vmem:[%s167 + $0x8] sm:$0xff] %v170
                %v172 = vld [vmem:[%s166 + $0x10] sm:$0xff]
                %173 = vst [vmem:[%s167 + $0x10] sm:$0xff] %v172
                %v174 = vld [vmem:[%s166 + $0x18] sm:$0xff]
                %175 = vst [vmem:[%s167 + $0x18] sm:$0xff] %v174
                %v176 = vld [vmem:[%s166 + $0x20] sm:$0xff]
                %177 = vst [vmem:[%s167 + $0x20] sm:$0xff] %v176
                %v178 = vld [vmem:[%s166 + $0x28] sm:$0xff]
                %179 = vst [vmem:[%s167 + $0x28] sm:$0xff] %v178
                %v180 = vld [vmem:[%s166 + $0x30] sm:$0xff]
                %181 = vst [vmem:[%s167 + $0x30] sm:$0xff] %v180
                %v182 = vld [vmem:[%s166 + $0x38] sm:$0xff]
                %183 = vst [vmem:[%s167 + $0x38] sm:$0xff] %v182
                %v184 = vld [vmem:[%s166 + $0x100] sm:$0xff]
                %185 = vst [vmem:[%s167 + $0x40] sm:$0xff] %v184
                %v186 = vld [vmem:[%s166 + $0x108] sm:$0xff]
                %187 = vst [vmem:[%s167 + $0x48] sm:$0xff] %v186
                %v188 = vld [vmem:[%s166 + $0x110] sm:$0xff]
                %189 = vst [vmem:[%s167 + $0x50] sm:$0xff] %v188
                %v190 = vld [vmem:[%s166 + $0x118] sm:$0xff]
                %191 = vst [vmem:[%s167 + $0x58] sm:$0xff] %v190
                %v192 = vld [vmem:[%s166 + $0x120] sm:$0xff]
                %193 = vst [vmem:[%s167 + $0x60] sm:$0xff] %v192
                %v194 = vld [vmem:[%s166 + $0x128] sm:$0xff]
                %195 = vst [vmem:[%s167 + $0x68] sm:$0xff] %v194
                %v196 = vld [vmem:[%s166 + $0x130] sm:$0xff]
                %197 = vst [vmem:[%s167 + $0x70] sm:$0xff] %v196
                %v198 = vld [vmem:[%s166 + $0x138] sm:$0xff]
                %199 = vst [vmem:[%s167 + $0x78] sm:$0xff] %v198
                %v200 = vld [vmem:[%s166 + $0x200] sm:$0xff]
                %201 = vst [vmem:[%s167 + $0x80] sm:$0xff] %v200
                %v202 = vld [vmem:[%s166 + $0x208] sm:$0xff]
                %203 = vst [vmem:[%s167 + $0x88] sm:$0xff] %v202
                %v204 = vld [vmem:[%s166 + $0x210] sm:$0xff]
                %205 = vst [vmem:[%s167 + $0x90] sm:$0xff] %v204
                %v206 = vld [vmem:[%s166 + $0x218] sm:$0xff]
                %207 = vst [vmem:[%s167 + $0x98] sm:$0xff] %v206
                %v208 = vld [vmem:[%s166 + $0x220] sm:$0xff]
                %209 = vst [vmem:[%s167 + $0xa0] sm:$0xff] %v208
                %v210 = vld [vmem:[%s166 + $0x228] sm:$0xff]
                %211 = vst [vmem:[%s167 + $0xa8] sm:$0xff] %v210
                %v212 = vld [vmem:[%s166 + $0x230] sm:$0xff]
                %213 = vst [vmem:[%s167 + $0xb0] sm:$0xff] %v212
                %v214 = vld [vmem:[%s166 + $0x238] sm:$0xff]
                %215 = vst [vmem:[%s167 + $0xb8] sm:$0xff] %v214
                %v216 = vld [vmem:[%s166 + $0x300] sm:$0xff]
                %217 = vst [vmem:[%s167 + $0xc0] sm:$0xff] %v216
                %v218 = vld [vmem:[%s166 + $0x308] sm:$0xff]
                %219 = vst [vmem:[%s167 + $0xc8] sm:$0xff] %v218
                %v220 = vld [vmem:[%s166 + $0x310] sm:$0xff]
                %221 = vst [vmem:[%s167 + $0xd0] sm:$0xff] %v220
                %v222 = vld [vmem:[%s166 + $0x318] sm:$0xff]
                %223 = vst [vmem:[%s167 + $0xd8] sm:$0xff] %v222
                %v224 = vld [vmem:[%s166 + $0x320] sm:$0xff]
                %225 = vst [vmem:[%s167 + $0xe0] sm:$0xff] %v224
                %v226 = vld [vmem:[%s166 + $0x328] sm:$0xff]
                %227 = vst [vmem:[%s167 + $0xe8] sm:$0xff] %v226
                %v228 = vld [vmem:[%s166 + $0x330] sm:$0xff]
                %229 = vst [vmem:[%s167 + $0xf0] sm:$0xff] %v228
                %v230 = vld [vmem:[%s166 + $0x338] sm:$0xff]
                %231 = vst [vmem:[%s167 + $0xf8] sm:$0xff] %v230
                %v232 = vld [vmem:[%s166 + $0x400] sm:$0xff]
                %233 = vst [vmem:[%s167 + $0x100] sm:$0xff] %v232
                %v234 = vld [vmem:[%s166 + $0x408] sm:$0xff]
                %235 = vst [vmem:[%s167 + $0x108] sm:$0xff] %v234
                %v236 = vld [vmem:[%s166 + $0x410] sm:$0xff]
                %237 = vst [vmem:[%s167 + $0x110] sm:$0xff] %v236
                %v238 = vld [vmem:[%s166 + $0x418] sm:$0xff]
                %239 = vst [vmem:[%s167 + $0x118] sm:$0xff] %v238
                %v240 = vld [vmem:[%s166 + $0x420] sm:$0xff]
                %241 = vst [vmem:[%s167 + $0x120] sm:$0xff] %v240
                %v242 = vld [vmem:[%s166 + $0x428] sm:$0xff]
                %243 = vst [vmem:[%s167 + $0x128] sm:$0xff] %v242
                %v244 = vld [vmem:[%s166 + $0x430] sm:$0xff]
                %245 = vst [vmem:[%s167 + $0x130] sm:$0xff] %v244
                %v246 = vld [vmem:[%s166 + $0x438] sm:$0xff]
                %247 = vst [vmem:[%s167 + $0x138] sm:$0xff] %v246
                %v248 = vld [vmem:[%s166 + $0x500] sm:$0xff]
                %249 = vst [vmem:[%s167 + $0x140] sm:$0xff] %v248
                %v250 = vld [vmem:[%s166 + $0x508] sm:$0xff]
                %251 = vst [vmem:[%s167 + $0x148] sm:$0xff] %v250
                %v252 = vld [vmem:[%s166 + $0x510] sm:$0xff]
                %253 = vst [vmem:[%s167 + $0x150] sm:$0xff] %v252
                %v254 = vld [vmem:[%s166 + $0x518] sm:$0xff]
                %255 = vst [vmem:[%s167 + $0x158] sm:$0xff] %v254
                %v256 = vld [vmem:[%s166 + $0x520] sm:$0xff]
                %257 = vst [vmem:[%s167 + $0x160] sm:$0xff] %v256
                %v258 = vld [vmem:[%s166 + $0x528] sm:$0xff]
                %259 = vst [vmem:[%s167 + $0x168] sm:$0xff] %v258
                %v260 = vld [vmem:[%s166 + $0x530] sm:$0xff]
                %261 = vst [vmem:[%s167 + $0x170] sm:$0xff] %v260
                %v262 = vld [vmem:[%s166 + $0x538] sm:$0xff]
                %263 = vst [vmem:[%s167 + $0x178] sm:$0xff] %v262
                %v264 = vld [vmem:[%s166 + $0x600] sm:$0xff]
                %265 = vst [vmem:[%s167 + $0x180] sm:$0xff] %v264
                %v266 = vld [vmem:[%s166 + $0x608] sm:$0xff]
                %267 = vst [vmem:[%s167 + $0x188] sm:$0xff] %v266
                %v268 = vld [vmem:[%s166 + $0x610] sm:$0xff]
                %269 = vst [vmem:[%s167 + $0x190] sm:$0xff] %v268
                %v270 = vld [vmem:[%s166 + $0x618] sm:$0xff]
                %271 = vst [vmem:[%s167 + $0x198] sm:$0xff] %v270
                %v272 = vld [vmem:[%s166 + $0x620] sm:$0xff]
                %273 = vst [vmem:[%s167 + $0x1a0] sm:$0xff] %v272
                %v274 = vld [vmem:[%s166 + $0x628] sm:$0xff]
                %275 = vst [vmem:[%s167 + $0x1a8] sm:$0xff] %v274
                %v276 = vld [vmem:[%s166 + $0x630] sm:$0xff]
                %277 = vst [vmem:[%s167 + $0x1b0] sm:$0xff] %v276
                %v278 = vld [vmem:[%s166 + $0x638] sm:$0xff]
                %279 = vst [vmem:[%s167 + $0x1b8] sm:$0xff] %v278
                %v280 = vld [vmem:[%s166 + $0x700] sm:$0xff]
                %281 = vst [vmem:[%s167 + $0x1c0] sm:$0xff] %v280
                %v282 = vld [vmem:[%s166 + $0x708] sm:$0xff]
                %283 = vst [vmem:[%s167 + $0x1c8] sm:$0xff] %v282
                %v284 = vld [vmem:[%s166 + $0x710] sm:$0xff]
                %285 = vst [vmem:[%s167 + $0x1d0] sm:$0xff] %v284
                %v286 = vld [vmem:[%s166 + $0x718] sm:$0xff]
                %287 = vst [vmem:[%s167 + $0x1d8] sm:$0xff] %v286
                %v288 = vld [vmem:[%s166 + $0x720] sm:$0xff]
                %289 = vst [vmem:[%s167 + $0x1e0] sm:$0xff] %v288
                %v290 = vld [vmem:[%s166 + $0x728] sm:$0xff]
                %291 = vst [vmem:[%s167 + $0x1e8] sm:$0xff] %v290
                %v292 = vld [vmem:[%s166 + $0x730] sm:$0xff]
                %293 = vst [vmem:[%s167 + $0x1f0] sm:$0xff] %v292
                %v294 = vld [vmem:[%s166 + $0x738] sm:$0xff]
                %295 = vst [vmem:[%s167 + $0x1f8] sm:$0xff] %v294
                %v296 = vld [vmem:[%s166 + $0x800] sm:$0xff]
                %297 = vst [vmem:[%s167 + $0x200] sm:$0xff] %v296
                %v298 = vld [vmem:[%s166 + $0x808] sm:$0xff]
                %299 = vst [vmem:[%s167 + $0x208] sm:$0xff] %v298
                %v300 = vld [vmem:[%s166 + $0x810] sm:$0xff]
                %301 = vst [vmem:[%s167 + $0x210] sm:$0xff] %v300
                %v302 = vld [vmem:[%s166 + $0x818] sm:$0xff]
                %303 = vst [vmem:[%s167 + $0x218] sm:$0xff] %v302
                %v304 = vld [vmem:[%s166 + $0x820] sm:$0xff]
                %305 = vst [vmem:[%s167 + $0x220] sm:$0xff] %v304
                %v306 = vld [vmem:[%s166 + $0x828] sm:$0xff]
                %307 = vst [vmem:[%s167 + $0x228] sm:$0xff] %v306
                %v308 = vld [vmem:[%s166 + $0x830] sm:$0xff]
                %309 = vst [vmem:[%s167 + $0x230] sm:$0xff] %v308
                %v310 = vld [vmem:[%s166 + $0x838] sm:$0xff]
                %311 = vst [vmem:[%s167 + $0x238] sm:$0xff] %v310
                %v312 = vld [vmem:[%s166 + $0x900] sm:$0xff]
                %313 = vst [vmem:[%s167 + $0x240] sm:$0xff] %v312
                %v314 = vld [vmem:[%s166 + $0x908] sm:$0xff]
                %315 = vst [vmem:[%s167 + $0x248] sm:$0xff] %v314
                %v316 = vld [vmem:[%s166 + $0x910] sm:$0xff]
                %317 = vst [vmem:[%s167 + $0x250] sm:$0xff] %v316
                %v318 = vld [vmem:[%s166 + $0x918] sm:$0xff]
                %319 = vst [vmem:[%s167 + $0x258] sm:$0xff] %v318
                %v320 = vld [vmem:[%s166 + $0x920] sm:$0xff]
                %321 = vst [vmem:[%s167 + $0x260] sm:$0xff] %v320
                %v322 = vld [vmem:[%s166 + $0x928] sm:$0xff]
                %323 = vst [vmem:[%s167 + $0x268] sm:$0xff] %v322
                %v324 = vld [vmem:[%s166 + $0x930] sm:$0xff]
                %325 = vst [vmem:[%s167 + $0x270] sm:$0xff] %v324
                %v326 = vld [vmem:[%s166 + $0x938] sm:$0xff]
                %327 = vst [vmem:[%s167 + $0x278] sm:$0xff] %v326
                %v328 = vld [vmem:[%s166 + $0xa00] sm:$0xff]
                %329 = vst [vmem:[%s167 + $0x280] sm:$0xff] %v328
                %v330 = vld [vmem:[%s166 + $0xa08] sm:$0xff]
                %331 = vst [vmem:[%s167 + $0x288] sm:$0xff] %v330
                %v332 = vld [vmem:[%s166 + $0xa10] sm:$0xff]
                %333 = vst [vmem:[%s167 + $0x290] sm:$0xff] %v332
                %v334 = vld [vmem:[%s166 + $0xa18] sm:$0xff]
                %335 = vst [vmem:[%s167 + $0x298] sm:$0xff] %v334
                %v336 = vld [vmem:[%s166 + $0xa20] sm:$0xff]
                %337 = vst [vmem:[%s167 + $0x2a0] sm:$0xff] %v336
                %v338 = vld [vmem:[%s166 + $0xa28] sm:$0xff]
                %339 = vst [vmem:[%s167 + $0x2a8] sm:$0xff] %v338
                %v340 = vld [vmem:[%s166 + $0xa30] sm:$0xff]
                %341 = vst [vmem:[%s167 + $0x2b0] sm:$0xff] %v340
                %v342 = vld [vmem:[%s166 + $0xa38] sm:$0xff]
                %343 = vst [vmem:[%s167 + $0x2b8] sm:$0xff] %v342
                %v344 = vld [vmem:[%s166 + $0xb00] sm:$0xff]
                %345 = vst [vmem:[%s167 + $0x2c0] sm:$0xff] %v344
                %v346 = vld [vmem:[%s166 + $0xb08] sm:$0xff]
                %347 = vst [vmem:[%s167 + $0x2c8] sm:$0xff] %v346
                %v348 = vld [vmem:[%s166 + $0xb10] sm:$0xff]
                %349 = vst [vmem:[%s167 + $0x2d0] sm:$0xff] %v348
                %v350 = vld [vmem:[%s166 + $0xb18] sm:$0xff]
                %351 = vst [vmem:[%s167 + $0x2d8] sm:$0xff] %v350
                %v352 = vld [vmem:[%s166 + $0xb20] sm:$0xff]
                %353 = vst [vmem:[%s167 + $0x2e0] sm:$0xff] %v352
                %v354 = vld [vmem:[%s166 + $0xb28] sm:$0xff]
                %355 = vst [vmem:[%s167 + $0x2e8] sm:$0xff] %v354
                %v356 = vld [vmem:[%s166 + $0xb30] sm:$0xff]
                %357 = vst [vmem:[%s167 + $0x2f0] sm:$0xff] %v356
                %v358 = vld [vmem:[%s166 + $0xb38] sm:$0xff]
                %359 = vst [vmem:[%s167 + $0x2f8] sm:$0xff] %v358
                %v360 = vld [vmem:[%s166 + $0xc00] sm:$0xff]
                %361 = vst [vmem:[%s167 + $0x300] sm:$0xff] %v360
                %v362 = vld [vmem:[%s166 + $0xc08] sm:$0xff]
                %363 = vst [vmem:[%s167 + $0x308] sm:$0xff] %v362
                %v364 = vld [vmem:[%s166 + $0xc10] sm:$0xff]
                %365 = vst [vmem:[%s167 + $0x310] sm:$0xff] %v364
                %v366 = vld [vmem:[%s166 + $0xc18] sm:$0xff]
                %367 = vst [vmem:[%s167 + $0x318] sm:$0xff] %v366
                %v368 = vld [vmem:[%s166 + $0xc20] sm:$0xff]
                %369 = vst [vmem:[%s167 + $0x320] sm:$0xff] %v368
                %v370 = vld [vmem:[%s166 + $0xc28] sm:$0xff]
                %371 = vst [vmem:[%s167 + $0x328] sm:$0xff] %v370
                %v372 = vld [vmem:[%s166 + $0xc30] sm:$0xff]
                %373 = vst [vmem:[%s167 + $0x330] sm:$0xff] %v372
                %v374 = vld [vmem:[%s166 + $0xc38] sm:$0xff]
                %375 = vst [vmem:[%s167 + $0x338] sm:$0xff] %v374
                %v376 = vld [vmem:[%s166 + $0xd00] sm:$0xff]
                %377 = vst [vmem:[%s167 + $0x340] sm:$0xff] %v376
                %v378 = vld [vmem:[%s166 + $0xd08] sm:$0xff]
                %379 = vst [vmem:[%s167 + $0x348] sm:$0xff] %v378
                %v380 = vld [vmem:[%s166 + $0xd10] sm:$0xff]
                %381 = vst [vmem:[%s167 + $0x350] sm:$0xff] %v380
                %v382 = vld [vmem:[%s166 + $0xd18] sm:$0xff]
                %383 = vst [vmem:[%s167 + $0x358] sm:$0xff] %v382
                %v384 = vld [vmem:[%s166 + $0xd20] sm:$0xff]
                %385 = vst [vmem:[%s167 + $0x360] sm:$0xff] %v384
                %v386 = vld [vmem:[%s166 + $0xd28] sm:$0xff]
                %387 = vst [vmem:[%s167 + $0x368] sm:$0xff] %v386
                %v388 = vld [vmem:[%s166 + $0xd30] sm:$0xff]
                %389 = vst [vmem:[%s167 + $0x370] sm:$0xff] %v388
                %v390 = vld [vmem:[%s166 + $0xd38] sm:$0xff]
                %391 = vst [vmem:[%s167 + $0x378] sm:$0xff] %v390
                %v392 = vld [vmem:[%s166 + $0xe00] sm:$0xff]
                %393 = vst [vmem:[%s167 + $0x380] sm:$0xff] %v392
                %v394 = vld [vmem:[%s166 + $0xe08] sm:$0xff]
                %395 = vst [vmem:[%s167 + $0x388] sm:$0xff] %v394
                %v396 = vld [vmem:[%s166 + $0xe10] sm:$0xff]
                %397 = vst [vmem:[%s167 + $0x390] sm:$0xff] %v396
                %v398 = vld [vmem:[%s166 + $0xe18] sm:$0xff]
                %399 = vst [vmem:[%s167 + $0x398] sm:$0xff] %v398
                %v400 = vld [vmem:[%s166 + $0xe20] sm:$0xff]
                %401 = vst [vmem:[%s167 + $0x3a0] sm:$0xff] %v400
                %v402 = vld [vmem:[%s166 + $0xe28] sm:$0xff]
                %403 = vst [vmem:[%s167 + $0x3a8] sm:$0xff] %v402
                %v404 = vld [vmem:[%s166 + $0xe30] sm:$0xff]
                %405 = vst [vmem:[%s167 + $0x3b0] sm:$0xff] %v404
                %v406 = vld [vmem:[%s166 + $0xe38] sm:$0xff]
                %407 = vst [vmem:[%s167 + $0x3b8] sm:$0xff] %v406
                %v408 = vld [vmem:[%s166 + $0xf00] sm:$0xff]
                %409 = vst [vmem:[%s167 + $0x3c0] sm:$0xff] %v408
                %v410 = vld [vmem:[%s166 + $0xf08] sm:$0xff]
                %411 = vst [vmem:[%s167 + $0x3c8] sm:$0xff] %v410
                %v412 = vld [vmem:[%s166 + $0xf10] sm:$0xff]
                %413 = vst [vmem:[%s167 + $0x3d0] sm:$0xff] %v412
                %v414 = vld [vmem:[%s166 + $0xf18] sm:$0xff]
                %415 = vst [vmem:[%s167 + $0x3d8] sm:$0xff] %v414
                %v416 = vld [vmem:[%s166 + $0xf20] sm:$0xff]
                %417 = vst [vmem:[%s167 + $0x3e0] sm:$0xff] %v416
                %v418 = vld [vmem:[%s166 + $0xf28] sm:$0xff]
                %419 = vst [vmem:[%s167 + $0x3e8] sm:$0xff] %v418
                %v420 = vld [vmem:[%s166 + $0xf30] sm:$0xff]
                %421 = vst [vmem:[%s167 + $0x3f0] sm:$0xff] %v420
                %v422 = vld [vmem:[%s166 + $0xf38] sm:$0xff]
                %423 = vst [vmem:[%s167 + $0x3f8] sm:$0xff] %v422
              $region41: #{qnetwork_forward.4} parent=35 // loop_footer
                %s165 = sadd.s32 1, %s161
              $region42: #{qnetwork_forward.4} parent=35 // loop_footer_branch
                %160 = sbr.rel target = $region38
              $region43: #{qnetwork_forward.4} parent=35 // loop_exit
                _
            $region36: #{qnetwork_forward.4} parent=31 // pred_fallthru
              _
            // Predicated region
            $region44: #{qnetwork_forward.4} parent=31 // pred_check
              _
            $region45: #{qnetwork_forward.4} parent=31 // pred_check_branch
              %425 = sbr.rel target = $region47
            $region46: #{qnetwork_forward.4} parent=31 // pred_region
              _
            $region47: #{qnetwork_forward.4} parent=31 // pred_fallthru
              _
          $region32: #{qnetwork_forward.4} parent=27 // pred_fallthru
            _
          %426 = vnop
        $region28: #{qnetwork_forward.4} parent=23 // pred_fallthru
          _
      $region24: #{qnetwork_forward.4} parent=5 // pred_fallthru
        _
      %p427 = scmp.le.s32.totalorder 1, %s9
      %p428 = scmp.lt.s32.totalorder %s9, 9
      %p429 = pnand %p427, %p428
      %p430 = pneg %p429
      // Predicated region
      $region48: #{qnetwork_forward.4} parent=5 // pred_check
        _
      $region49: #{qnetwork_forward.4} parent=5 // pred_check_branch
        %432 = sbr.rel (%p429) target = $region51
      $region50: #{qnetwork_forward.4} parent=5 // pred_region
        %s433 = ssub.s32 %s9, 1
        %s434 = sand.u32 %s36, 1
        %s435 = sand.u32 %s36, 1
        %s436 = smul.addr %s435, 1024
        %s437 = scalar_lea.vmem [#allocation2], %s436
        // Predicated region
        $region52: #{qnetwork_forward.4} parent=50 // pred_check
          %p438 = pneg %p49
        $region53: #{qnetwork_forward.4} parent=50 // pred_check_branch
          %440 = sbr.rel (%p438) target = $region55
        $region54: #{qnetwork_forward.4} parent=50 // pred_region
          _
        $region55: #{qnetwork_forward.4} parent=50 // pred_fallthru
          _
        %s441 = sand.u32 %s36, 1
        %s442 = sand.u32 %s36, 1
        %s443 = smul.addr %s442, 1024
        %s444 = scalar_lea.vmem [#allocation2], %s443
        %p445 = pneg %p49
        %p446 = pneg %p46
        %p447 = pneg %p70
        %p448 = pneg %p67
        %p449 = pneg %p91
        %p450 = pneg %p88
        %p451 = pneg %p119
        %p452 = pneg %p116
        %s453 = sand.u32 %s106, 1
        %s454 = sand.u32 %s106, 1
        %s455 = smul.addr %s454, 128
        %s456 = scalar_lea.vmem [#allocation3], %s455
        %s457 = smul.u32 8, %s19
        %s458 = smul.u32 8, %s19
        %v459 = vld [vmem:[%s1] sm:$0xff]
        %v460 = vld [vmem:[%s1 + $0x8] sm:$0xff]
        %v461 = vld [vmem:[%s437] sm:$0xff]
        %v462 = vld [vmem:[%s437 + $0x8] sm:$0xff]
        %v463 = vld [vmem:[%s437 + $0x10] sm:$0xff]
        %v464 = vld [vmem:[%s437 + $0x18] sm:$0xff]
        %v465 = vld [vmem:[%s437 + $0x20] sm:$0xff]
        %v466 = vld [vmem:[%s437 + $0x28] sm:$0xff]
        %v467 = vld [vmem:[%s437 + $0x30] sm:$0xff]
        %v468 = vld [vmem:[%s437 + $0x38] sm:$0xff]
        %v469 = vld [vmem:[%s437 + $0x40] sm:$0xff]
        %v470 = vld [vmem:[%s437 + $0x48] sm:$0xff]
        %v471 = vld [vmem:[%s437 + $0x50] sm:$0xff]
        %v472 = vld [vmem:[%s437 + $0x58] sm:$0xff]
        %v473 = vld [vmem:[%s437 + $0x60] sm:$0xff]
        %v474 = vld [vmem:[%s437 + $0x68] sm:$0xff]
        %v475 = vld [vmem:[%s437 + $0x70] sm:$0xff]
        %v476 = vld [vmem:[%s437 + $0x78] sm:$0xff]
        %v477 = vld [vmem:[%s437 + $0x80] sm:$0xff]
        %v478 = vld [vmem:[%s437 + $0x88] sm:$0xff]
        %v479 = vld [vmem:[%s437 + $0x90] sm:$0xff]
        %v480 = vld [vmem:[%s437 + $0x98] sm:$0xff]
        %v481 = vld [vmem:[%s437 + $0xa0] sm:$0xff]
        %v482 = vld [vmem:[%s437 + $0xa8] sm:$0xff]
        %v483 = vld [vmem:[%s437 + $0xb0] sm:$0xff]
        %v484 = vld [vmem:[%s437 + $0xb8] sm:$0xff]
        %v485 = vld [vmem:[%s437 + $0xc0] sm:$0xff]
        %v486 = vld [vmem:[%s437 + $0xc8] sm:$0xff]
        %v487 = vld [vmem:[%s437 + $0xd0] sm:$0xff]
        %v488 = vld [vmem:[%s437 + $0xd8] sm:$0xff]
        %v489 = vld [vmem:[%s437 + $0xe0] sm:$0xff]
        %v490 = vld [vmem:[%s437 + $0xe8] sm:$0xff]
        %v491 = vld [vmem:[%s437 + $0xf0] sm:$0xff]
        %v492 = vld [vmem:[%s437 + $0xf8] sm:$0xff]
        %vm493 = vcmask 261120
        %v495 = vsel %vm493, %v459, 0
        %v498 = vsel %vm493, %v460, 0
        %500 = vmatpush.msra.mxu0 0.0
        %501 = vmatpush.msra.mxu0 0.0
        %502 = vmatpush.msra.mxu0 0.0
        %503 = vmatpush.msra.mxu0 0.0
        %504 = vmatpush.msra.mxu0 0.0
        %505 = vmatpush.msra.mxu0 0.0
        %506 = vmatpush.msra.mxu0 0.0
        %507 = vmatpush.msra.mxu0 0.0
        %508 = vmatpush.msra.mxu0 0.0
        %509 = vmatpush.msra.mxu0 0.0
        %510 = vmatpush.msra.mxu0 0.0
        %511 = vmatpush.msra.mxu0 0.0
        %512 = vmatpush.msra.mxu0 %v485
        %513 = vmatpush.msra.mxu0 %v477
        %514 = vmatpush.msra.mxu0 %v469
        %515 = vmatpush.msra.mxu0 %v461
        %516 = vmatmul.f32.gmra.mxu0 %v495
        %v517 = vpop.f32.mrf.mxu0
        %v518 = vadd.f32 0.0, %v517
        %519 = vmatmul.f32.gmra.mxu0 %v498
        %v520 = vpop.f32.mrf.mxu0
        %v521 = vadd.f32 0.0, %v520
        %522 = vdwg.mxu0
        %523 = vmatpush.msra.mxu0 0.0
        %524 = vmatpush.msra.mxu0 0.0
        %525 = vmatpush.msra.mxu0 0.0
        %526 = vmatpush.msra.mxu0 0.0
        %527 = vmatpush.msra.mxu0 0.0
        %528 = vmatpush.msra.mxu0 0.0
        %529 = vmatpush.msra.mxu0 0.0
        %530 = vmatpush.msra.mxu0 0.0
        %531 = vmatpush.msra.mxu0 0.0
        %532 = vmatpush.msra.mxu0 0.0
        %533 = vmatpush.msra.mxu0 0.0
        %534 = vmatpush.msra.mxu0 0.0
        %535 = vmatpush.msra.mxu0 %v486
        %536 = vmatpush.msra.mxu0 %v478
        %537 = vmatpush.msra.mxu0 %v470
        %538 = vmatpush.msra.mxu0 %v462
        %539 = vmatmul.f32.gmra.mxu0 %v495
        %v540 = vpop.f32.mrf.mxu0
        %v541 = vadd.f32 0.0, %v540
        %542 = vmatmul.f32.gmra.mxu0 %v498
        %v543 = vpop.f32.mrf.mxu0
        %v544 = vadd.f32 0.0, %v543
        %545 = vdwg.mxu0
        %546 = vmatpush.msra.mxu0 0.0
        %547 = vmatpush.msra.mxu0 0.0
        %548 = vmatpush.msra.mxu0 0.0
        %549 = vmatpush.msra.mxu0 0.0
        %550 = vmatpush.msra.mxu0 0.0
        %551 = vmatpush.msra.mxu0 0.0
        %552 = vmatpush.msra.mxu0 0.0
        %553 = vmatpush.msra.mxu0 0.0
        %554 = vmatpush.msra.mxu0 0.0
        %555 = vmatpush.msra.mxu0 0.0
        %556 = vmatpush.msra.mxu0 0.0
        %557 = vmatpush.msra.mxu0 0.0
        %558 = vmatpush.msra.mxu0 %v487
        %559 = vmatpush.msra.mxu0 %v479
        %560 = vmatpush.msra.mxu0 %v471
        %561 = vmatpush.msra.mxu0 %v463
        %562 = vmatmul.f32.gmra.mxu0 %v495
        %v563 = vpop.f32.mrf.mxu0
        %v564 = vadd.f32 0.0, %v563
        %565 = vmatmul.f32.gmra.mxu0 %v498
        %v566 = vpop.f32.mrf.mxu0
        %v567 = vadd.f32 0.0, %v566
        %568 = vdwg.mxu0
        %569 = vmatpush.msra.mxu0 0.0
        %570 = vmatpush.msra.mxu0 0.0
        %571 = vmatpush.msra.mxu0 0.0
        %572 = vmatpush.msra.mxu0 0.0
        %573 = vmatpush.msra.mxu0 0.0
        %574 = vmatpush.msra.mxu0 0.0
        %575 = vmatpush.msra.mxu0 0.0
        %576 = vmatpush.msra.mxu0 0.0
        %577 = vmatpush.msra.mxu0 0.0
        %578 = vmatpush.msra.mxu0 0.0
        %579 = vmatpush.msra.mxu0 0.0
        %580 = vmatpush.msra.mxu0 0.0
        %581 = vmatpush.msra.mxu0 %v488
        %582 = vmatpush.msra.mxu0 %v480
        %583 = vmatpush.msra.mxu0 %v472
        %584 = vmatpush.msra.mxu0 %v464
        %585 = vmatmul.f32.gmra.mxu0 %v495
        %v586 = vpop.f32.mrf.mxu0
        %v587 = vadd.f32 0.0, %v586
        %588 = vmatmul.f32.gmra.mxu0 %v498
        %v589 = vpop.f32.mrf.mxu0
        %v590 = vadd.f32 0.0, %v589
        %591 = vdwg.mxu0
        %592 = vmatpush.msra.mxu0 0.0
        %593 = vmatpush.msra.mxu0 0.0
        %594 = vmatpush.msra.mxu0 0.0
        %595 = vmatpush.msra.mxu0 0.0
        %596 = vmatpush.msra.mxu0 0.0
        %597 = vmatpush.msra.mxu0 0.0
        %598 = vmatpush.msra.mxu0 0.0
        %599 = vmatpush.msra.mxu0 0.0
        %600 = vmatpush.msra.mxu0 0.0
        %601 = vmatpush.msra.mxu0 0.0
        %602 = vmatpush.msra.mxu0 0.0
        %603 = vmatpush.msra.mxu0 0.0
        %604 = vmatpush.msra.mxu0 %v489
        %605 = vmatpush.msra.mxu0 %v481
        %606 = vmatpush.msra.mxu0 %v473
        %607 = vmatpush.msra.mxu0 %v465
        %608 = vmatmul.f32.gmra.mxu0 %v495
        %v609 = vpop.f32.mrf.mxu0
        %v610 = vadd.f32 0.0, %v609
        %611 = vmatmul.f32.gmra.mxu0 %v498
        %v612 = vpop.f32.mrf.mxu0
        %v613 = vadd.f32 0.0, %v612
        %614 = vdwg.mxu0
        %615 = vmatpush.msra.mxu0 0.0
        %616 = vmatpush.msra.mxu0 0.0
        %617 = vmatpush.msra.mxu0 0.0
        %618 = vmatpush.msra.mxu0 0.0
        %619 = vmatpush.msra.mxu0 0.0
        %620 = vmatpush.msra.mxu0 0.0
        %621 = vmatpush.msra.mxu0 0.0
        %622 = vmatpush.msra.mxu0 0.0
        %623 = vmatpush.msra.mxu0 0.0
        %624 = vmatpush.msra.mxu0 0.0
        %625 = vmatpush.msra.mxu0 0.0
        %626 = vmatpush.msra.mxu0 0.0
        %627 = vmatpush.msra.mxu0 %v490
        %628 = vmatpush.msra.mxu0 %v482
        %629 = vmatpush.msra.mxu0 %v474
        %630 = vmatpush.msra.mxu0 %v466
        %631 = vmatmul.f32.gmra.mxu0 %v495
        %v632 = vpop.f32.mrf.mxu0
        %v633 = vadd.f32 0.0, %v632
        %634 = vmatmul.f32.gmra.mxu0 %v498
        %v635 = vpop.f32.mrf.mxu0
        %v636 = vadd.f32 0.0, %v635
        %637 = vdwg.mxu0
        %638 = vmatpush.msra.mxu0 0.0
        %639 = vmatpush.msra.mxu0 0.0
        %640 = vmatpush.msra.mxu0 0.0
        %641 = vmatpush.msra.mxu0 0.0
        %642 = vmatpush.msra.mxu0 0.0
        %643 = vmatpush.msra.mxu0 0.0
        %644 = vmatpush.msra.mxu0 0.0
        %645 = vmatpush.msra.mxu0 0.0
        %646 = vmatpush.msra.mxu0 0.0
        %647 = vmatpush.msra.mxu0 0.0
        %648 = vmatpush.msra.mxu0 0.0
        %649 = vmatpush.msra.mxu0 0.0
        %650 = vmatpush.msra.mxu0 %v491
        %651 = vmatpush.msra.mxu0 %v483
        %652 = vmatpush.msra.mxu0 %v475
        %653 = vmatpush.msra.mxu0 %v467
        %654 = vmatmul.f32.gmra.mxu0 %v495
        %v655 = vpop.f32.mrf.mxu0
        %v656 = vadd.f32 0.0, %v655
        %657 = vmatmul.f32.gmra.mxu0 %v498
        %v658 = vpop.f32.mrf.mxu0
        %v659 = vadd.f32 0.0, %v658
        %660 = vdwg.mxu0
        %661 = vmatpush.msra.mxu0 0.0
        %662 = vmatpush.msra.mxu0 0.0
        %663 = vmatpush.msra.mxu0 0.0
        %664 = vmatpush.msra.mxu0 0.0
        %665 = vmatpush.msra.mxu0 0.0
        %666 = vmatpush.msra.mxu0 0.0
        %667 = vmatpush.msra.mxu0 0.0
        %668 = vmatpush.msra.mxu0 0.0
        %669 = vmatpush.msra.mxu0 0.0
        %670 = vmatpush.msra.mxu0 0.0
        %671 = vmatpush.msra.mxu0 0.0
        %672 = vmatpush.msra.mxu0 0.0
        %673 = vmatpush.msra.mxu0 %v492
        %674 = vmatpush.msra.mxu0 %v484
        %675 = vmatpush.msra.mxu0 %v476
        %676 = vmatpush.msra.mxu0 %v468
        %677 = vmatmul.f32.gmra.mxu0 %v495
        %v678 = vpop.f32.mrf.mxu0
        %v679 = vadd.f32 0.0, %v678
        %680 = vmatmul.f32.gmra.mxu0 %v498
        %v681 = vpop.f32.mrf.mxu0
        %v682 = vadd.f32 0.0, %v681
        %683 = vdwg.mxu0
        %s684 = scalar_lea.vmem %s437, 256 [#allocation2]
        %v685 = vld [vmem:[%s684] sm:$0xff]
        %v686 = vld [vmem:[%s684 + $0x8] sm:$0xff]
        %v687 = vld [vmem:[%s684 + $0x10] sm:$0xff]
        %v688 = vld [vmem:[%s684 + $0x18] sm:$0xff]
        %v689 = vld [vmem:[%s684 + $0x20] sm:$0xff]
        %v690 = vld [vmem:[%s684 + $0x28] sm:$0xff]
        %v691 = vld [vmem:[%s684 + $0x30] sm:$0xff]
        %v692 = vld [vmem:[%s684 + $0x38] sm:$0xff]
        %v693 = vld [vmem:[%s684 + $0x40] sm:$0xff]
        %v694 = vld [vmem:[%s684 + $0x48] sm:$0xff]
        %v695 = vld [vmem:[%s684 + $0x50] sm:$0xff]
        %v696 = vld [vmem:[%s684 + $0x58] sm:$0xff]
        %v697 = vld [vmem:[%s684 + $0x60] sm:$0xff]
        %v698 = vld [vmem:[%s684 + $0x68] sm:$0xff]
        %v699 = vld [vmem:[%s684 + $0x70] sm:$0xff]
        %v700 = vld [vmem:[%s684 + $0x78] sm:$0xff]
        %v701 = vld [vmem:[%s684 + $0x80] sm:$0xff]
        %v702 = vld [vmem:[%s684 + $0x88] sm:$0xff]
        %v703 = vld [vmem:[%s684 + $0x90] sm:$0xff]
        %v704 = vld [vmem:[%s684 + $0x98] sm:$0xff]
        %v705 = vld [vmem:[%s684 + $0xa0] sm:$0xff]
        %v706 = vld [vmem:[%s684 + $0xa8] sm:$0xff]
        %v707 = vld [vmem:[%s684 + $0xb0] sm:$0xff]
        %v708 = vld [vmem:[%s684 + $0xb8] sm:$0xff]
        %v709 = vld [vmem:[%s684 + $0xc0] sm:$0xff]
        %v710 = vld [vmem:[%s684 + $0xc8] sm:$0xff]
        %v711 = vld [vmem:[%s684 + $0xd0] sm:$0xff]
        %v712 = vld [vmem:[%s684 + $0xd8] sm:$0xff]
        %v713 = vld [vmem:[%s684 + $0xe0] sm:$0xff]
        %v714 = vld [vmem:[%s684 + $0xe8] sm:$0xff]
        %v715 = vld [vmem:[%s684 + $0xf0] sm:$0xff]
        %v716 = vld [vmem:[%s684 + $0xf8] sm:$0xff]
        %717 = vmatpush.msra.mxu0 0.0
        %718 = vmatpush.msra.mxu0 0.0
        %719 = vmatpush.msra.mxu0 0.0
        %720 = vmatpush.msra.mxu0 0.0
        %721 = vmatpush.msra.mxu0 0.0
        %722 = vmatpush.msra.mxu0 0.0
        %723 = vmatpush.msra.mxu0 0.0
        %724 = vmatpush.msra.mxu0 0.0
        %725 = vmatpush.msra.mxu0 0.0
        %726 = vmatpush.msra.mxu0 0.0
        %727 = vmatpush.msra.mxu0 0.0
        %728 = vmatpush.msra.mxu0 0.0
        %729 = vmatpush.msra.mxu0 %v709
        %730 = vmatpush.msra.mxu0 %v701
        %731 = vmatpush.msra.mxu0 %v693
        %732 = vmatpush.msra.mxu0 %v685
        %733 = vmatmul.f32.gmra.mxu0 %v495
        %v734 = vpop.f32.mrf.mxu0
        %v735 = vadd.f32 0.0, %v734
        %736 = vmatmul.f32.gmra.mxu0 %v498
        %v737 = vpop.f32.mrf.mxu0
        %v738 = vadd.f32 0.0, %v737
        %739 = vdwg.mxu0
        %740 = vmatpush.msra.mxu0 0.0
        %741 = vmatpush.msra.mxu0 0.0
        %742 = vmatpush.msra.mxu0 0.0
        %743 = vmatpush.msra.mxu0 0.0
        %744 = vmatpush.msra.mxu0 0.0
        %745 = vmatpush.msra.mxu0 0.0
        %746 = vmatpush.msra.mxu0 0.0
        %747 = vmatpush.msra.mxu0 0.0
        %748 = vmatpush.msra.mxu0 0.0
        %749 = vmatpush.msra.mxu0 0.0
        %750 = vmatpush.msra.mxu0 0.0
        %751 = vmatpush.msra.mxu0 0.0
        %752 = vmatpush.msra.mxu0 %v710
        %753 = vmatpush.msra.mxu0 %v702
        %754 = vmatpush.msra.mxu0 %v694
        %755 = vmatpush.msra.mxu0 %v686
        %756 = vmatmul.f32.gmra.mxu0 %v495
        %v757 = vpop.f32.mrf.mxu0
        %v758 = vadd.f32 0.0, %v757
        %759 = vmatmul.f32.gmra.mxu0 %v498
        %v760 = vpop.f32.mrf.mxu0
        %v761 = vadd.f32 0.0, %v760
        %762 = vdwg.mxu0
        %763 = vmatpush.msra.mxu0 0.0
        %764 = vmatpush.msra.mxu0 0.0
        %765 = vmatpush.msra.mxu0 0.0
        %766 = vmatpush.msra.mxu0 0.0
        %767 = vmatpush.msra.mxu0 0.0
        %768 = vmatpush.msra.mxu0 0.0
        %769 = vmatpush.msra.mxu0 0.0
        %770 = vmatpush.msra.mxu0 0.0
        %771 = vmatpush.msra.mxu0 0.0
        %772 = vmatpush.msra.mxu0 0.0
        %773 = vmatpush.msra.mxu0 0.0
        %774 = vmatpush.msra.mxu0 0.0
        %775 = vmatpush.msra.mxu0 %v711
        %776 = vmatpush.msra.mxu0 %v703
        %777 = vmatpush.msra.mxu0 %v695
        %778 = vmatpush.msra.mxu0 %v687
        %779 = vmatmul.f32.gmra.mxu0 %v495
        %v780 = vpop.f32.mrf.mxu0
        %v781 = vadd.f32 0.0, %v780
        %782 = vmatmul.f32.gmra.mxu0 %v498
        %v783 = vpop.f32.mrf.mxu0
        %v784 = vadd.f32 0.0, %v783
        %785 = vdwg.mxu0
        %786 = vmatpush.msra.mxu0 0.0
        %787 = vmatpush.msra.mxu0 0.0
        %788 = vmatpush.msra.mxu0 0.0
        %789 = vmatpush.msra.mxu0 0.0
        %790 = vmatpush.msra.mxu0 0.0
        %791 = vmatpush.msra.mxu0 0.0
        %792 = vmatpush.msra.mxu0 0.0
        %793 = vmatpush.msra.mxu0 0.0
        %794 = vmatpush.msra.mxu0 0.0
        %795 = vmatpush.msra.mxu0 0.0
        %796 = vmatpush.msra.mxu0 0.0
        %797 = vmatpush.msra.mxu0 0.0
        %798 = vmatpush.msra.mxu0 %v712
        %799 = vmatpush.msra.mxu0 %v704
        %800 = vmatpush.msra.mxu0 %v696
        %801 = vmatpush.msra.mxu0 %v688
        %802 = vmatmul.f32.gmra.mxu0 %v495
        %v803 = vpop.f32.mrf.mxu0
        %v804 = vadd.f32 0.0, %v803
        %805 = vmatmul.f32.gmra.mxu0 %v498
        %v806 = vpop.f32.mrf.mxu0
        %v807 = vadd.f32 0.0, %v806
        %808 = vdwg.mxu0
        %809 = vmatpush.msra.mxu0 0.0
        %810 = vmatpush.msra.mxu0 0.0
        %811 = vmatpush.msra.mxu0 0.0
        %812 = vmatpush.msra.mxu0 0.0
        %813 = vmatpush.msra.mxu0 0.0
        %814 = vmatpush.msra.mxu0 0.0
        %815 = vmatpush.msra.mxu0 0.0
        %816 = vmatpush.msra.mxu0 0.0
        %817 = vmatpush.msra.mxu0 0.0
        %818 = vmatpush.msra.mxu0 0.0
        %819 = vmatpush.msra.mxu0 0.0
        %820 = vmatpush.msra.mxu0 0.0
        %821 = vmatpush.msra.mxu0 %v713
        %822 = vmatpush.msra.mxu0 %v705
        %823 = vmatpush.msra.mxu0 %v697
        %824 = vmatpush.msra.mxu0 %v689
        %825 = vmatmul.f32.gmra.mxu0 %v495
        %v826 = vpop.f32.mrf.mxu0
        %v827 = vadd.f32 0.0, %v826
        %828 = vmatmul.f32.gmra.mxu0 %v498
        %v829 = vpop.f32.mrf.mxu0
        %v830 = vadd.f32 0.0, %v829
        %831 = vdwg.mxu0
        %832 = vmatpush.msra.mxu0 0.0
        %833 = vmatpush.msra.mxu0 0.0
        %834 = vmatpush.msra.mxu0 0.0
        %835 = vmatpush.msra.mxu0 0.0
        %836 = vmatpush.msra.mxu0 0.0
        %837 = vmatpush.msra.mxu0 0.0
        %838 = vmatpush.msra.mxu0 0.0
        %839 = vmatpush.msra.mxu0 0.0
        %840 = vmatpush.msra.mxu0 0.0
        %841 = vmatpush.msra.mxu0 0.0
        %842 = vmatpush.msra.mxu0 0.0
        %843 = vmatpush.msra.mxu0 0.0
        %844 = vmatpush.msra.mxu0 %v714
        %845 = vmatpush.msra.mxu0 %v706
        %846 = vmatpush.msra.mxu0 %v698
        %847 = vmatpush.msra.mxu0 %v690
        %848 = vmatmul.f32.gmra.mxu0 %v495
        %v849 = vpop.f32.mrf.mxu0
        %v850 = vadd.f32 0.0, %v849
        %851 = vmatmul.f32.gmra.mxu0 %v498
        %v852 = vpop.f32.mrf.mxu0
        %v853 = vadd.f32 0.0, %v852
        %854 = vdwg.mxu0
        %855 = vmatpush.msra.mxu0 0.0
        %856 = vmatpush.msra.mxu0 0.0
        %857 = vmatpush.msra.mxu0 0.0
        %858 = vmatpush.msra.mxu0 0.0
        %859 = vmatpush.msra.mxu0 0.0
        %860 = vmatpush.msra.mxu0 0.0
        %861 = vmatpush.msra.mxu0 0.0
        %862 = vmatpush.msra.mxu0 0.0
        %863 = vmatpush.msra.mxu0 0.0
        %864 = vmatpush.msra.mxu0 0.0
        %865 = vmatpush.msra.mxu0 0.0
        %866 = vmatpush.msra.mxu0 0.0
        %867 = vmatpush.msra.mxu0 %v715
        %868 = vmatpush.msra.mxu0 %v707
        %869 = vmatpush.msra.mxu0 %v699
        %870 = vmatpush.msra.mxu0 %v691
        %871 = vmatmul.f32.gmra.mxu0 %v495
        %v872 = vpop.f32.mrf.mxu0
        %v873 = vadd.f32 0.0, %v872
        %874 = vmatmul.f32.gmra.mxu0 %v498
        %v875 = vpop.f32.mrf.mxu0
        %v876 = vadd.f32 0.0, %v875
        %877 = vdwg.mxu0
        %878 = vmatpush.msra.mxu0 0.0
        %879 = vmatpush.msra.mxu0 0.0
        %880 = vmatpush.msra.mxu0 0.0
        %881 = vmatpush.msra.mxu0 0.0
        %882 = vmatpush.msra.mxu0 0.0
        %883 = vmatpush.msra.mxu0 0.0
        %884 = vmatpush.msra.mxu0 0.0
        %885 = vmatpush.msra.mxu0 0.0
        %886 = vmatpush.msra.mxu0 0.0
        %887 = vmatpush.msra.mxu0 0.0
        %888 = vmatpush.msra.mxu0 0.0
        %889 = vmatpush.msra.mxu0 0.0
        %890 = vmatpush.msra.mxu0 %v716
        %891 = vmatpush.msra.mxu0 %v708
        %892 = vmatpush.msra.mxu0 %v700
        %893 = vmatpush.msra.mxu0 %v692
        %894 = vmatmul.f32.gmra.mxu0 %v495
        %v895 = vpop.f32.mrf.mxu0
        %v896 = vadd.f32 0.0, %v895
        %897 = vmatmul.f32.gmra.mxu0 %v498
        %v898 = vpop.f32.mrf.mxu0
        %v899 = vadd.f32 0.0, %v898
        %900 = vdwg.mxu0
        %v901 = vmax.f32 %v518, %v735
        %v902 = vmax.f32 %v541, %v758
        %v903 = vmax.f32 %v564, %v781
        %v904 = vmax.f32 %v587, %v804
        %v905 = vmax.f32 %v610, %v827
        %v906 = vmax.f32 %v633, %v850
        %v907 = vmax.f32 %v656, %v873
        %v908 = vmax.f32 %v679, %v896
        %v909 = vmax.f32 %v521, %v738
        %v910 = vmax.f32 %v544, %v761
        %v911 = vmax.f32 %v567, %v784
        %v912 = vmax.f32 %v590, %v807
        %v913 = vmax.f32 %v613, %v830
        %v914 = vmax.f32 %v636, %v853
        %v915 = vmax.f32 %v659, %v876
        %v916 = vmax.f32 %v682, %v899
        %s917 = scalar_lea.vmem %s437, 512 [#allocation2]
        %v918 = vld [vmem:[%s917] sm:$0xff]
        %v919 = vld [vmem:[%s917 + $0x8] sm:$0xff]
        %v920 = vld [vmem:[%s917 + $0x10] sm:$0xff]
        %v921 = vld [vmem:[%s917 + $0x18] sm:$0xff]
        %v922 = vld [vmem:[%s917 + $0x20] sm:$0xff]
        %v923 = vld [vmem:[%s917 + $0x28] sm:$0xff]
        %v924 = vld [vmem:[%s917 + $0x30] sm:$0xff]
        %v925 = vld [vmem:[%s917 + $0x38] sm:$0xff]
        %v926 = vld [vmem:[%s917 + $0x40] sm:$0xff]
        %v927 = vld [vmem:[%s917 + $0x48] sm:$0xff]
        %v928 = vld [vmem:[%s917 + $0x50] sm:$0xff]
        %v929 = vld [vmem:[%s917 + $0x58] sm:$0xff]
        %v930 = vld [vmem:[%s917 + $0x60] sm:$0xff]
        %v931 = vld [vmem:[%s917 + $0x68] sm:$0xff]
        %v932 = vld [vmem:[%s917 + $0x70] sm:$0xff]
        %v933 = vld [vmem:[%s917 + $0x78] sm:$0xff]
        %v934 = vld [vmem:[%s917 + $0x80] sm:$0xff]
        %v935 = vld [vmem:[%s917 + $0x88] sm:$0xff]
        %v936 = vld [vmem:[%s917 + $0x90] sm:$0xff]
        %v937 = vld [vmem:[%s917 + $0x98] sm:$0xff]
        %v938 = vld [vmem:[%s917 + $0xa0] sm:$0xff]
        %v939 = vld [vmem:[%s917 + $0xa8] sm:$0xff]
        %v940 = vld [vmem:[%s917 + $0xb0] sm:$0xff]
        %v941 = vld [vmem:[%s917 + $0xb8] sm:$0xff]
        %v942 = vld [vmem:[%s917 + $0xc0] sm:$0xff]
        %v943 = vld [vmem:[%s917 + $0xc8] sm:$0xff]
        %v944 = vld [vmem:[%s917 + $0xd0] sm:$0xff]
        %v945 = vld [vmem:[%s917 + $0xd8] sm:$0xff]
        %v946 = vld [vmem:[%s917 + $0xe0] sm:$0xff]
        %v947 = vld [vmem:[%s917 + $0xe8] sm:$0xff]
        %v948 = vld [vmem:[%s917 + $0xf0] sm:$0xff]
        %v949 = vld [vmem:[%s917 + $0xf8] sm:$0xff]
        %950 = vmatpush.msra.mxu0 0.0
        %951 = vmatpush.msra.mxu0 0.0
        %952 = vmatpush.msra.mxu0 0.0
        %953 = vmatpush.msra.mxu0 0.0
        %954 = vmatpush.msra.mxu0 0.0
        %955 = vmatpush.msra.mxu0 0.0
        %956 = vmatpush.msra.mxu0 0.0
        %957 = vmatpush.msra.mxu0 0.0
        %958 = vmatpush.msra.mxu0 0.0
        %959 = vmatpush.msra.mxu0 0.0
        %960 = vmatpush.msra.mxu0 0.0
        %961 = vmatpush.msra.mxu0 0.0
        %962 = vmatpush.msra.mxu0 %v942
        %963 = vmatpush.msra.mxu0 %v934
        %964 = vmatpush.msra.mxu0 %v926
        %965 = vmatpush.msra.mxu0 %v918
        %966 = vmatmul.f32.gmra.mxu0 %v495
        %v967 = vpop.f32.mrf.mxu0
        %v968 = vadd.f32 0.0, %v967
        %969 = vmatmul.f32.gmra.mxu0 %v498
        %v970 = vpop.f32.mrf.mxu0
        %v971 = vadd.f32 0.0, %v970
        %972 = vdwg.mxu0
        %973 = vmatpush.msra.mxu0 0.0
        %974 = vmatpush.msra.mxu0 0.0
        %975 = vmatpush.msra.mxu0 0.0
        %976 = vmatpush.msra.mxu0 0.0
        %977 = vmatpush.msra.mxu0 0.0
        %978 = vmatpush.msra.mxu0 0.0
        %979 = vmatpush.msra.mxu0 0.0
        %980 = vmatpush.msra.mxu0 0.0
        %981 = vmatpush.msra.mxu0 0.0
        %982 = vmatpush.msra.mxu0 0.0
        %983 = vmatpush.msra.mxu0 0.0
        %984 = vmatpush.msra.mxu0 0.0
        %985 = vmatpush.msra.mxu0 %v943
        %986 = vmatpush.msra.mxu0 %v935
        %987 = vmatpush.msra.mxu0 %v927
        %988 = vmatpush.msra.mxu0 %v919
        %989 = vmatmul.f32.gmra.mxu0 %v495
        %v990 = vpop.f32.mrf.mxu0
        %v991 = vadd.f32 0.0, %v990
        %992 = vmatmul.f32.gmra.mxu0 %v498
        %v993 = vpop.f32.mrf.mxu0
        %v994 = vadd.f32 0.0, %v993
        %995 = vdwg.mxu0
        %996 = vmatpush.msra.mxu0 0.0
        %997 = vmatpush.msra.mxu0 0.0
        %998 = vmatpush.msra.mxu0 0.0
        %999 = vmatpush.msra.mxu0 0.0
        %1000 = vmatpush.msra.mxu0 0.0
        %1001 = vmatpush.msra.mxu0 0.0
        %1002 = vmatpush.msra.mxu0 0.0
        %1003 = vmatpush.msra.mxu0 0.0
        %1004 = vmatpush.msra.mxu0 0.0
        %1005 = vmatpush.msra.mxu0 0.0
        %1006 = vmatpush.msra.mxu0 0.0
        %1007 = vmatpush.msra.mxu0 0.0
        %1008 = vmatpush.msra.mxu0 %v944
        %1009 = vmatpush.msra.mxu0 %v936
        %1010 = vmatpush.msra.mxu0 %v928
        %1011 = vmatpush.msra.mxu0 %v920
        %1012 = vmatmul.f32.gmra.mxu0 %v495
        %v1013 = vpop.f32.mrf.mxu0
        %v1014 = vadd.f32 0.0, %v1013
        %1015 = vmatmul.f32.gmra.mxu0 %v498
        %v1016 = vpop.f32.mrf.mxu0
        %v1017 = vadd.f32 0.0, %v1016
        %1018 = vdwg.mxu0
        %1019 = vmatpush.msra.mxu0 0.0
        %1020 = vmatpush.msra.mxu0 0.0
        %1021 = vmatpush.msra.mxu0 0.0
        %1022 = vmatpush.msra.mxu0 0.0
        %1023 = vmatpush.msra.mxu0 0.0
        %1024 = vmatpush.msra.mxu0 0.0
        %1025 = vmatpush.msra.mxu0 0.0
        %1026 = vmatpush.msra.mxu0 0.0
        %1027 = vmatpush.msra.mxu0 0.0
        %1028 = vmatpush.msra.mxu0 0.0
        %1029 = vmatpush.msra.mxu0 0.0
        %1030 = vmatpush.msra.mxu0 0.0
        %1031 = vmatpush.msra.mxu0 %v945
        %1032 = vmatpush.msra.mxu0 %v937
        %1033 = vmatpush.msra.mxu0 %v929
        %1034 = vmatpush.msra.mxu0 %v921
        %1035 = vmatmul.f32.gmra.mxu0 %v495
        %v1036 = vpop.f32.mrf.mxu0
        %v1037 = vadd.f32 0.0, %v1036
        %1038 = vmatmul.f32.gmra.mxu0 %v498
        %v1039 = vpop.f32.mrf.mxu0
        %v1040 = vadd.f32 0.0, %v1039
        %1041 = vdwg.mxu0
        %1042 = vmatpush.msra.mxu0 0.0
        %1043 = vmatpush.msra.mxu0 0.0
        %1044 = vmatpush.msra.mxu0 0.0
        %1045 = vmatpush.msra.mxu0 0.0
        %1046 = vmatpush.msra.mxu0 0.0
        %1047 = vmatpush.msra.mxu0 0.0
        %1048 = vmatpush.msra.mxu0 0.0
        %1049 = vmatpush.msra.mxu0 0.0
        %1050 = vmatpush.msra.mxu0 0.0
        %1051 = vmatpush.msra.mxu0 0.0
        %1052 = vmatpush.msra.mxu0 0.0
        %1053 = vmatpush.msra.mxu0 0.0
        %1054 = vmatpush.msra.mxu0 %v946
        %1055 = vmatpush.msra.mxu0 %v938
        %1056 = vmatpush.msra.mxu0 %v930
        %1057 = vmatpush.msra.mxu0 %v922
        %1058 = vmatmul.f32.gmra.mxu0 %v495
        %v1059 = vpop.f32.mrf.mxu0
        %v1060 = vadd.f32 0.0, %v1059
        %1061 = vmatmul.f32.gmra.mxu0 %v498
        %v1062 = vpop.f32.mrf.mxu0
        %v1063 = vadd.f32 0.0, %v1062
        %1064 = vdwg.mxu0
        %1065 = vmatpush.msra.mxu0 0.0
        %1066 = vmatpush.msra.mxu0 0.0
        %1067 = vmatpush.msra.mxu0 0.0
        %1068 = vmatpush.msra.mxu0 0.0
        %1069 = vmatpush.msra.mxu0 0.0
        %1070 = vmatpush.msra.mxu0 0.0
        %1071 = vmatpush.msra.mxu0 0.0
        %1072 = vmatpush.msra.mxu0 0.0
        %1073 = vmatpush.msra.mxu0 0.0
        %1074 = vmatpush.msra.mxu0 0.0
        %1075 = vmatpush.msra.mxu0 0.0
        %1076 = vmatpush.msra.mxu0 0.0
        %1077 = vmatpush.msra.mxu0 %v947
        %1078 = vmatpush.msra.mxu0 %v939
        %1079 = vmatpush.msra.mxu0 %v931
        %1080 = vmatpush.msra.mxu0 %v923
        %1081 = vmatmul.f32.gmra.mxu0 %v495
        %v1082 = vpop.f32.mrf.mxu0
        %v1083 = vadd.f32 0.0, %v1082
        %1084 = vmatmul.f32.gmra.mxu0 %v498
        %v1085 = vpop.f32.mrf.mxu0
        %v1086 = vadd.f32 0.0, %v1085
        %1087 = vdwg.mxu0
        %1088 = vmatpush.msra.mxu0 0.0
        %1089 = vmatpush.msra.mxu0 0.0
        %1090 = vmatpush.msra.mxu0 0.0
        %1091 = vmatpush.msra.mxu0 0.0
        %1092 = vmatpush.msra.mxu0 0.0
        %1093 = vmatpush.msra.mxu0 0.0
        %1094 = vmatpush.msra.mxu0 0.0
        %1095 = vmatpush.msra.mxu0 0.0
        %1096 = vmatpush.msra.mxu0 0.0
        %1097 = vmatpush.msra.mxu0 0.0
        %1098 = vmatpush.msra.mxu0 0.0
        %1099 = vmatpush.msra.mxu0 0.0
        %1100 = vmatpush.msra.mxu0 %v948
        %1101 = vmatpush.msra.mxu0 %v940
        %1102 = vmatpush.msra.mxu0 %v932
        %1103 = vmatpush.msra.mxu0 %v924
        %1104 = vmatmul.f32.gmra.mxu0 %v495
        %v1105 = vpop.f32.mrf.mxu0
        %v1106 = vadd.f32 0.0, %v1105
        %1107 = vmatmul.f32.gmra.mxu0 %v498
        %v1108 = vpop.f32.mrf.mxu0
        %v1109 = vadd.f32 0.0, %v1108
        %1110 = vdwg.mxu0
        %1111 = vmatpush.msra.mxu0 0.0
        %1112 = vmatpush.msra.mxu0 0.0
        %1113 = vmatpush.msra.mxu0 0.0
        %1114 = vmatpush.msra.mxu0 0.0
        %1115 = vmatpush.msra.mxu0 0.0
        %1116 = vmatpush.msra.mxu0 0.0
        %1117 = vmatpush.msra.mxu0 0.0
        %1118 = vmatpush.msra.mxu0 0.0
        %1119 = vmatpush.msra.mxu0 0.0
        %1120 = vmatpush.msra.mxu0 0.0
        %1121 = vmatpush.msra.mxu0 0.0
        %1122 = vmatpush.msra.mxu0 0.0
        %1123 = vmatpush.msra.mxu0 %v949
        %1124 = vmatpush.msra.mxu0 %v941
        %1125 = vmatpush.msra.mxu0 %v933
        %1126 = vmatpush.msra.mxu0 %v925
        %1127 = vmatmul.f32.gmra.mxu0 %v495
        %v1128 = vpop.f32.mrf.mxu0
        %v1129 = vadd.f32 0.0, %v1128
        %1130 = vmatmul.f32.gmra.mxu0 %v498
        %v1131 = vpop.f32.mrf.mxu0
        %v1132 = vadd.f32 0.0, %v1131
        %1133 = vdwg.mxu0
        %v1134 = vmax.f32 %v901, %v968
        %v1135 = vmax.f32 %v902, %v991
        %v1136 = vmax.f32 %v903, %v1014
        %v1137 = vmax.f32 %v904, %v1037
        %v1138 = vmax.f32 %v905, %v1060
        %v1139 = vmax.f32 %v906, %v1083
        %v1140 = vmax.f32 %v907, %v1106
        %v1141 = vmax.f32 %v908, %v1129
        %v1142 = vmax.f32 %v909, %v971
        %v1143 = vmax.f32 %v910, %v994
        %v1144 = vmax.f32 %v911, %v1017
        %v1145 = vmax.f32 %v912, %v1040
        %v1146 = vmax.f32 %v913, %v1063
        %v1147 = vmax.f32 %v914, %v1086
        %v1148 = vmax.f32 %v915, %v1109
        %v1149 = vmax.f32 %v916, %v1132
        %s1150 = scalar_lea.vmem %s437, 768 [#allocation2]
        %v1151 = vld [vmem:[%s1150] sm:$0xff]
        %v1152 = vld [vmem:[%s1150 + $0x8] sm:$0xff]
        %v1153 = vld [vmem:[%s1150 + $0x10] sm:$0xff]
        %v1154 = vld [vmem:[%s1150 + $0x18] sm:$0xff]
        %v1155 = vld [vmem:[%s1150 + $0x20] sm:$0xff]
        %v1156 = vld [vmem:[%s1150 + $0x28] sm:$0xff]
        %v1157 = vld [vmem:[%s1150 + $0x30] sm:$0xff]
        %v1158 = vld [vmem:[%s1150 + $0x38] sm:$0xff]
        %v1159 = vld [vmem:[%s1150 + $0x40] sm:$0xff]
        %v1160 = vld [vmem:[%s1150 + $0x48] sm:$0xff]
        %v1161 = vld [vmem:[%s1150 + $0x50] sm:$0xff]
        %v1162 = vld [vmem:[%s1150 + $0x58] sm:$0xff]
        %v1163 = vld [vmem:[%s1150 + $0x60] sm:$0xff]
        %v1164 = vld [vmem:[%s1150 + $0x68] sm:$0xff]
        %v1165 = vld [vmem:[%s1150 + $0x70] sm:$0xff]
        %v1166 = vld [vmem:[%s1150 + $0x78] sm:$0xff]
        %v1167 = vld [vmem:[%s1150 + $0x80] sm:$0xff]
        %v1168 = vld [vmem:[%s1150 + $0x88] sm:$0xff]
        %v1169 = vld [vmem:[%s1150 + $0x90] sm:$0xff]
        %v1170 = vld [vmem:[%s1150 + $0x98] sm:$0xff]
        %v1171 = vld [vmem:[%s1150 + $0xa0] sm:$0xff]
        %v1172 = vld [vmem:[%s1150 + $0xa8] sm:$0xff]
        %v1173 = vld [vmem:[%s1150 + $0xb0] sm:$0xff]
        %v1174 = vld [vmem:[%s1150 + $0xb8] sm:$0xff]
        %v1175 = vld [vmem:[%s1150 + $0xc0] sm:$0xff]
        %v1176 = vld [vmem:[%s1150 + $0xc8] sm:$0xff]
        %v1177 = vld [vmem:[%s1150 + $0xd0] sm:$0xff]
        %v1178 = vld [vmem:[%s1150 + $0xd8] sm:$0xff]
        %v1179 = vld [vmem:[%s1150 + $0xe0] sm:$0xff]
        %v1180 = vld [vmem:[%s1150 + $0xe8] sm:$0xff]
        %v1181 = vld [vmem:[%s1150 + $0xf0] sm:$0xff]
        %v1182 = vld [vmem:[%s1150 + $0xf8] sm:$0xff]
        %1183 = vmatpush.msra.mxu0 0.0
        %1184 = vmatpush.msra.mxu0 0.0
        %1185 = vmatpush.msra.mxu0 0.0
        %1186 = vmatpush.msra.mxu0 0.0
        %1187 = vmatpush.msra.mxu0 0.0
        %1188 = vmatpush.msra.mxu0 0.0
        %1189 = vmatpush.msra.mxu0 0.0
        %1190 = vmatpush.msra.mxu0 0.0
        %1191 = vmatpush.msra.mxu0 0.0
        %1192 = vmatpush.msra.mxu0 0.0
        %1193 = vmatpush.msra.mxu0 0.0
        %1194 = vmatpush.msra.mxu0 0.0
        %1195 = vmatpush.msra.mxu0 %v1175
        %1196 = vmatpush.msra.mxu0 %v1167
        %1197 = vmatpush.msra.mxu0 %v1159
        %1198 = vmatpush.msra.mxu0 %v1151
        %1199 = vmatmul.f32.gmra.mxu0 %v495
        %v1200 = vpop.f32.mrf.mxu0
        %v1201 = vadd.f32 0.0, %v1200
        %1202 = vmatmul.f32.gmra.mxu0 %v498
        %v1203 = vpop.f32.mrf.mxu0
        %v1204 = vadd.f32 0.0, %v1203
        %1205 = vdwg.mxu0
        %1206 = vmatpush.msra.mxu0 0.0
        %1207 = vmatpush.msra.mxu0 0.0
        %1208 = vmatpush.msra.mxu0 0.0
        %1209 = vmatpush.msra.mxu0 0.0
        %1210 = vmatpush.msra.mxu0 0.0
        %1211 = vmatpush.msra.mxu0 0.0
        %1212 = vmatpush.msra.mxu0 0.0
        %1213 = vmatpush.msra.mxu0 0.0
        %1214 = vmatpush.msra.mxu0 0.0
        %1215 = vmatpush.msra.mxu0 0.0
        %1216 = vmatpush.msra.mxu0 0.0
        %1217 = vmatpush.msra.mxu0 0.0
        %1218 = vmatpush.msra.mxu0 %v1176
        %1219 = vmatpush.msra.mxu0 %v1168
        %1220 = vmatpush.msra.mxu0 %v1160
        %1221 = vmatpush.msra.mxu0 %v1152
        %1222 = vmatmul.f32.gmra.mxu0 %v495
        %v1223 = vpop.f32.mrf.mxu0
        %v1224 = vadd.f32 0.0, %v1223
        %1225 = vmatmul.f32.gmra.mxu0 %v498
        %v1226 = vpop.f32.mrf.mxu0
        %v1227 = vadd.f32 0.0, %v1226
        %1228 = vdwg.mxu0
        %1229 = vmatpush.msra.mxu0 0.0
        %1230 = vmatpush.msra.mxu0 0.0
        %1231 = vmatpush.msra.mxu0 0.0
        %1232 = vmatpush.msra.mxu0 0.0
        %1233 = vmatpush.msra.mxu0 0.0
        %1234 = vmatpush.msra.mxu0 0.0
        %1235 = vmatpush.msra.mxu0 0.0
        %1236 = vmatpush.msra.mxu0 0.0
        %1237 = vmatpush.msra.mxu0 0.0
        %1238 = vmatpush.msra.mxu0 0.0
        %1239 = vmatpush.msra.mxu0 0.0
        %1240 = vmatpush.msra.mxu0 0.0
        %1241 = vmatpush.msra.mxu0 %v1177
        %1242 = vmatpush.msra.mxu0 %v1169
        %1243 = vmatpush.msra.mxu0 %v1161
        %1244 = vmatpush.msra.mxu0 %v1153
        %1245 = vmatmul.f32.gmra.mxu0 %v495
        %v1246 = vpop.f32.mrf.mxu0
        %v1247 = vadd.f32 0.0, %v1246
        %1248 = vmatmul.f32.gmra.mxu0 %v498
        %v1249 = vpop.f32.mrf.mxu0
        %v1250 = vadd.f32 0.0, %v1249
        %1251 = vdwg.mxu0
        %1252 = vmatpush.msra.mxu0 0.0
        %1253 = vmatpush.msra.mxu0 0.0
        %1254 = vmatpush.msra.mxu0 0.0
        %1255 = vmatpush.msra.mxu0 0.0
        %1256 = vmatpush.msra.mxu0 0.0
        %1257 = vmatpush.msra.mxu0 0.0
        %1258 = vmatpush.msra.mxu0 0.0
        %1259 = vmatpush.msra.mxu0 0.0
        %1260 = vmatpush.msra.mxu0 0.0
        %1261 = vmatpush.msra.mxu0 0.0
        %1262 = vmatpush.msra.mxu0 0.0
        %1263 = vmatpush.msra.mxu0 0.0
        %1264 = vmatpush.msra.mxu0 %v1178
        %1265 = vmatpush.msra.mxu0 %v1170
        %1266 = vmatpush.msra.mxu0 %v1162
        %1267 = vmatpush.msra.mxu0 %v1154
        %1268 = vmatmul.f32.gmra.mxu0 %v495
        %v1269 = vpop.f32.mrf.mxu0
        %v1270 = vadd.f32 0.0, %v1269
        %1271 = vmatmul.f32.gmra.mxu0 %v498
        %v1272 = vpop.f32.mrf.mxu0
        %v1273 = vadd.f32 0.0, %v1272
        %1274 = vdwg.mxu0
        %1275 = vmatpush.msra.mxu0 0.0
        %1276 = vmatpush.msra.mxu0 0.0
        %1277 = vmatpush.msra.mxu0 0.0
        %1278 = vmatpush.msra.mxu0 0.0
        %1279 = vmatpush.msra.mxu0 0.0
        %1280 = vmatpush.msra.mxu0 0.0
        %1281 = vmatpush.msra.mxu0 0.0
        %1282 = vmatpush.msra.mxu0 0.0
        %1283 = vmatpush.msra.mxu0 0.0
        %1284 = vmatpush.msra.mxu0 0.0
        %1285 = vmatpush.msra.mxu0 0.0
        %1286 = vmatpush.msra.mxu0 0.0
        %1287 = vmatpush.msra.mxu0 %v1179
        %1288 = vmatpush.msra.mxu0 %v1171
        %1289 = vmatpush.msra.mxu0 %v1163
        %1290 = vmatpush.msra.mxu0 %v1155
        %1291 = vmatmul.f32.gmra.mxu0 %v495
        %v1292 = vpop.f32.mrf.mxu0
        %v1293 = vadd.f32 0.0, %v1292
        %1294 = vmatmul.f32.gmra.mxu0 %v498
        %v1295 = vpop.f32.mrf.mxu0
        %v1296 = vadd.f32 0.0, %v1295
        %1297 = vdwg.mxu0
        %1298 = vmatpush.msra.mxu0 0.0
        %1299 = vmatpush.msra.mxu0 0.0
        %1300 = vmatpush.msra.mxu0 0.0
        %1301 = vmatpush.msra.mxu0 0.0
        %1302 = vmatpush.msra.mxu0 0.0
        %1303 = vmatpush.msra.mxu0 0.0
        %1304 = vmatpush.msra.mxu0 0.0
        %1305 = vmatpush.msra.mxu0 0.0
        %1306 = vmatpush.msra.mxu0 0.0
        %1307 = vmatpush.msra.mxu0 0.0
        %1308 = vmatpush.msra.mxu0 0.0
        %1309 = vmatpush.msra.mxu0 0.0
        %1310 = vmatpush.msra.mxu0 %v1180
        %1311 = vmatpush.msra.mxu0 %v1172
        %1312 = vmatpush.msra.mxu0 %v1164
        %1313 = vmatpush.msra.mxu0 %v1156
        %1314 = vmatmul.f32.gmra.mxu0 %v495
        %v1315 = vpop.f32.mrf.mxu0
        %v1316 = vadd.f32 0.0, %v1315
        %1317 = vmatmul.f32.gmra.mxu0 %v498
        %v1318 = vpop.f32.mrf.mxu0
        %v1319 = vadd.f32 0.0, %v1318
        %1320 = vdwg.mxu0
        %1321 = vmatpush.msra.mxu0 0.0
        %1322 = vmatpush.msra.mxu0 0.0
        %1323 = vmatpush.msra.mxu0 0.0
        %1324 = vmatpush.msra.mxu0 0.0
        %1325 = vmatpush.msra.mxu0 0.0
        %1326 = vmatpush.msra.mxu0 0.0
        %1327 = vmatpush.msra.mxu0 0.0
        %1328 = vmatpush.msra.mxu0 0.0
        %1329 = vmatpush.msra.mxu0 0.0
        %1330 = vmatpush.msra.mxu0 0.0
        %1331 = vmatpush.msra.mxu0 0.0
        %1332 = vmatpush.msra.mxu0 0.0
        %1333 = vmatpush.msra.mxu0 %v1181
        %1334 = vmatpush.msra.mxu0 %v1173
        %1335 = vmatpush.msra.mxu0 %v1165
        %1336 = vmatpush.msra.mxu0 %v1157
        %1337 = vmatmul.f32.gmra.mxu0 %v495
        %v1338 = vpop.f32.mrf.mxu0
        %v1339 = vadd.f32 0.0, %v1338
        %1340 = vmatmul.f32.gmra.mxu0 %v498
        %v1341 = vpop.f32.mrf.mxu0
        %v1342 = vadd.f32 0.0, %v1341
        %1343 = vdwg.mxu0
        %1344 = vmatpush.msra.mxu0 0.0
        %1345 = vmatpush.msra.mxu0 0.0
        %1346 = vmatpush.msra.mxu0 0.0
        %1347 = vmatpush.msra.mxu0 0.0
        %1348 = vmatpush.msra.mxu0 0.0
        %1349 = vmatpush.msra.mxu0 0.0
        %1350 = vmatpush.msra.mxu0 0.0
        %1351 = vmatpush.msra.mxu0 0.0
        %1352 = vmatpush.msra.mxu0 0.0
        %1353 = vmatpush.msra.mxu0 0.0
        %1354 = vmatpush.msra.mxu0 0.0
        %1355 = vmatpush.msra.mxu0 0.0
        %1356 = vmatpush.msra.mxu0 %v1182
        %1357 = vmatpush.msra.mxu0 %v1174
        %1358 = vmatpush.msra.mxu0 %v1166
        %1359 = vmatpush.msra.mxu0 %v1158
        %1360 = vmatmul.f32.gmra.mxu0 %v495
        %v1361 = vpop.f32.mrf.mxu0
        %v1362 = vadd.f32 0.0, %v1361
        %1363 = vmatmul.f32.gmra.mxu0 %v498
        %v1364 = vpop.f32.mrf.mxu0
        %v1365 = vadd.f32 0.0, %v1364
        %1366 = vdwg.mxu0
        %v1367 = vmax.f32 %v1134, %v1201
        %v1368 = vmax.f32 %v1135, %v1224
        %v1369 = vmax.f32 %v1136, %v1247
        %v1370 = vmax.f32 %v1137, %v1270
        %v1371 = vmax.f32 %v1138, %v1293
        %v1372 = vmax.f32 %v1139, %v1316
        %v1373 = vmax.f32 %v1140, %v1339
        %v1374 = vmax.f32 %v1141, %v1362
        %v1375 = vmax.f32 %v1142, %v1204
        %v1376 = vmax.f32 %v1143, %v1227
        %v1377 = vmax.f32 %v1144, %v1250
        %v1378 = vmax.f32 %v1145, %v1273
        %v1379 = vmax.f32 %v1146, %v1296
        %v1380 = vmax.f32 %v1147, %v1319
        %v1381 = vmax.f32 %v1148, %v1342
        %v1382 = vmax.f32 %v1149, %v1365
        %v1383 = vld [vmem:[%s2] sm:$0xff]
        %v1384 = vld [vmem:[%s2 + $0x8] sm:$0xff]
        %1386 = vset.pattern.permute.xlu0 0
        %1387 = vperm.xlu0 %1386, %v1383
        %v1388 = vpop.permute.xlu0 %1387
        %1391 = vset.pattern.permute.xlu0 0
        %1392 = vperm.xlu0 %1391, %v1384
        %v1393 = vpop.permute.xlu0 %1392
        %v1395 = vadd.f32 %v1367, %v1388
        %v1396 = vadd.f32 %v1368, %v1388
        %v1397 = vadd.f32 %v1369, %v1388
        %v1398 = vadd.f32 %v1370, %v1388
        %v1399 = vadd.f32 %v1371, %v1388
        %v1400 = vadd.f32 %v1372, %v1388
        %v1401 = vadd.f32 %v1373, %v1388
        %v1402 = vadd.f32 %v1374, %v1388
        %v1403 = vadd.f32 %v1375, %v1393
        %v1404 = vadd.f32 %v1376, %v1393
        %v1405 = vadd.f32 %v1377, %v1393
        %v1406 = vadd.f32 %v1378, %v1393
        %v1407 = vadd.f32 %v1379, %v1393
        %v1408 = vadd.f32 %v1380, %v1393
        %v1409 = vadd.f32 %v1381, %v1393
        %v1410 = vadd.f32 %v1382, %v1393
        %v1411 = vmax.f32 %v1395, 0.0
        %v1412 = vmax.f32 %v1396, 0.0
        %v1413 = vmax.f32 %v1397, 0.0
        %v1414 = vmax.f32 %v1398, 0.0
        %v1415 = vmax.f32 %v1399, 0.0
        %v1416 = vmax.f32 %v1400, 0.0
        %v1417 = vmax.f32 %v1401, 0.0
        %v1418 = vmax.f32 %v1402, 0.0
        %v1419 = vmax.f32 %v1403, 0.0
        %v1420 = vmax.f32 %v1404, 0.0
        %v1421 = vmax.f32 %v1405, 0.0
        %v1422 = vmax.f32 %v1406, 0.0
        %v1423 = vmax.f32 %v1407, 0.0
        %v1424 = vmax.f32 %v1408, 0.0
        %v1425 = vmax.f32 %v1409, 0.0
        %v1426 = vmax.f32 %v1410, 0.0
        %1427 = vst [vmem:[%s456] sm:$0xff] %v1411
        %1428 = vst [vmem:[%s456 + $0x8] sm:$0xff] %v1412
        %1429 = vst [vmem:[%s456 + $0x10] sm:$0xff] %v1413
        %1430 = vst [vmem:[%s456 + $0x18] sm:$0xff] %v1414
        %1431 = vst [vmem:[%s456 + $0x20] sm:$0xff] %v1415
        %1432 = vst [vmem:[%s456 + $0x28] sm:$0xff] %v1416
        %1433 = vst [vmem:[%s456 + $0x30] sm:$0xff] %v1417
        %1434 = vst [vmem:[%s456 + $0x38] sm:$0xff] %v1418
        %1435 = vst [vmem:[%s456 + $0x40] sm:$0xff] %v1419
        %1436 = vst [vmem:[%s456 + $0x48] sm:$0xff] %v1420
        %1437 = vst [vmem:[%s456 + $0x50] sm:$0xff] %v1421
        %1438 = vst [vmem:[%s456 + $0x58] sm:$0xff] %v1422
        %1439 = vst [vmem:[%s456 + $0x60] sm:$0xff] %v1423
        %1440 = vst [vmem:[%s456 + $0x68] sm:$0xff] %v1424
        %1441 = vst [vmem:[%s456 + $0x70] sm:$0xff] %v1425
        %1442 = vst [vmem:[%s456 + $0x78] sm:$0xff] %v1426
        %s1443 = sand.u32 %s106, 1
        %s1444 = sand.u32 %s106, 1
        %s1445 = smul.addr %s1444, 128
        %s1446 = scalar_lea.vmem [#allocation3], %s1445
        // Predicated region
        $region56: #{qnetwork_forward.4} parent=50 // pred_check
          %p1447 = pneg %p116
        $region57: #{qnetwork_forward.4} parent=50 // pred_check_branch
          %1449 = sbr.rel (%p1447) target = $region59
        $region58: #{qnetwork_forward.4} parent=50 // pred_region
          %s1450 = smul.u32 8, %s19
          %s1451 = smul.addr %s18, 64
          %s1452 = sadd.s32 %s1450, %s1451
          %s1453 = smul.addr %s1452, 8
          %s1454 = scalar_lea.vmem %s3, %s1453
          // Predicated region
          $region60: #{qnetwork_forward.4} parent=58 // pred_check
            _
          $region61: #{qnetwork_forward.4} parent=58 // pred_check_branch
            %1456 = sbr.rel (0) target = $region63
          $region62: #{qnetwork_forward.4} parent=58 // pred_region
            // Predicated region
            $region64: #{qnetwork_forward.4} parent=62 // pred_check
              _
            $region65: #{qnetwork_forward.4} parent=62 // pred_check_branch
              %1458 = sbr.rel (0) target = $region67
            $region66: #{qnetwork_forward.4} parent=62 // pred_region
              loop: start=0, step=1, limit=1
              $region68: #{qnetwork_forward.4} parent=66 // loop_pre_header
                _
              $region69: #{qnetwork_forward.4} parent=66 // loop_header
                %s1460 = sphi 0, %s1464
                %p1461 = scmp.ge.s32.totalorder %s1460, 1
                %s1465 = sphi %s1446, %s1446
                %s1466 = sphi %s1454, %s1454
              $region70: #{qnetwork_forward.4} parent=66 // loop_header_branch
                %1463 = sbr.rel (%p1461) target = $region74
              $region71: #{qnetwork_forward.4} parent=66 // loop_body
                %v1467 = vld [vmem:[%s1465] sm:$0xff]
                %1468 = vst [vmem:[%s1466] sm:$0xff] %v1467
                %v1469 = vld [vmem:[%s1465 + $0x8] sm:$0xff]
                %1470 = vst [vmem:[%s1466 + $0x8] sm:$0xff] %v1469
                %v1471 = vld [vmem:[%s1465 + $0x10] sm:$0xff]
                %1472 = vst [vmem:[%s1466 + $0x10] sm:$0xff] %v1471
                %v1473 = vld [vmem:[%s1465 + $0x18] sm:$0xff]
                %1474 = vst [vmem:[%s1466 + $0x18] sm:$0xff] %v1473
                %v1475 = vld [vmem:[%s1465 + $0x20] sm:$0xff]
                %1476 = vst [vmem:[%s1466 + $0x20] sm:$0xff] %v1475
                %v1477 = vld [vmem:[%s1465 + $0x28] sm:$0xff]
                %1478 = vst [vmem:[%s1466 + $0x28] sm:$0xff] %v1477
                %v1479 = vld [vmem:[%s1465 + $0x30] sm:$0xff]
                %1480 = vst [vmem:[%s1466 + $0x30] sm:$0xff] %v1479
                %v1481 = vld [vmem:[%s1465 + $0x38] sm:$0xff]
                %1482 = vst [vmem:[%s1466 + $0x38] sm:$0xff] %v1481
                %v1483 = vld [vmem:[%s1465 + $0x40] sm:$0xff]
                %1484 = vst [vmem:[%s1466 + $0x100] sm:$0xff] %v1483
                %v1485 = vld [vmem:[%s1465 + $0x48] sm:$0xff]
                %1486 = vst [vmem:[%s1466 + $0x108] sm:$0xff] %v1485
                %v1487 = vld [vmem:[%s1465 + $0x50] sm:$0xff]
                %1488 = vst [vmem:[%s1466 + $0x110] sm:$0xff] %v1487
                %v1489 = vld [vmem:[%s1465 + $0x58] sm:$0xff]
                %1490 = vst [vmem:[%s1466 + $0x118] sm:$0xff] %v1489
                %v1491 = vld [vmem:[%s1465 + $0x60] sm:$0xff]
                %1492 = vst [vmem:[%s1466 + $0x120] sm:$0xff] %v1491
                %v1493 = vld [vmem:[%s1465 + $0x68] sm:$0xff]
                %1494 = vst [vmem:[%s1466 + $0x128] sm:$0xff] %v1493
                %v1495 = vld [vmem:[%s1465 + $0x70] sm:$0xff]
                %1496 = vst [vmem:[%s1466 + $0x130] sm:$0xff] %v1495
                %v1497 = vld [vmem:[%s1465 + $0x78] sm:$0xff]
                %1498 = vst [vmem:[%s1466 + $0x138] sm:$0xff] %v1497
              $region72: #{qnetwork_forward.4} parent=66 // loop_footer
                %s1464 = sadd.s32 1, %s1460
              $region73: #{qnetwork_forward.4} parent=66 // loop_footer_branch
                %1459 = sbr.rel target = $region69
              $region74: #{qnetwork_forward.4} parent=66 // loop_exit
                _
            $region67: #{qnetwork_forward.4} parent=62 // pred_fallthru
              _
            // Predicated region
            $region75: #{qnetwork_forward.4} parent=62 // pred_check
              _
            $region76: #{qnetwork_forward.4} parent=62 // pred_check_branch
              %1500 = sbr.rel target = $region78
            $region77: #{qnetwork_forward.4} parent=62 // pred_region
              _
            $region78: #{qnetwork_forward.4} parent=62 // pred_fallthru
              _
          $region63: #{qnetwork_forward.4} parent=58 // pred_fallthru
            _
          %1501 = vnop
        $region59: #{qnetwork_forward.4} parent=50 // pred_fallthru
          _
      $region51: #{qnetwork_forward.4} parent=5 // pred_fallthru
        _
      %p1502 = scmp.le.s32.totalorder 2, %s9
      // Predicated region
      $region79: #{qnetwork_forward.4} parent=5 // pred_check
        %p1503 = pneg %p1502
      $region80: #{qnetwork_forward.4} parent=5 // pred_check_branch
        %1505 = sbr.rel (%p1503) target = $region82
      $region81: #{qnetwork_forward.4} parent=5 // pred_region
        %s1506 = ssub.s32 %s9, 2
        // Predicated region
        $region83: #{qnetwork_forward.4} parent=81 // pred_check
          %p1507 = pneg %p122
        $region84: #{qnetwork_forward.4} parent=81 // pred_check_branch
          %1509 = sbr.rel (%p1507) target = $region86
        $region85: #{qnetwork_forward.4} parent=81 // pred_region
          %s1510 = sand.u32 %s107, 1
          %s1511 = sand.u32 %s107, 1
          %s1512 = smul.addr %s1511, 128
          %s1513 = scalar_lea.vmem [#allocation3], %s1512
        $region86: #{qnetwork_forward.4} parent=81 // pred_fallthru
          _
      $region82: #{qnetwork_forward.4} parent=5 // pred_fallthru
        _
    $region6: #{qnetwork_forward.4} parent=1 // loop_footer
      %s13 = sadd.s32 1, %s9
    $region7: #{qnetwork_forward.4} parent=1 // loop_footer_branch
      %8 = sbr.rel target = $region3
    $region8: #{qnetwork_forward.4} parent=1 // loop_exit
      _

// kernel: qnetwork_forward.5
$region0: #{qnetwork_forward.5}
  #allocation0 [shape = 'u32[]', space=smem, size = 0x4, offset = 0x4, fixed_abs, tag = 'smem constant byte address 0x4 - core index']
  #allocation1 [shape = 'u32[72,128]{1,0:T(1,128)}', space=vmem, size = 0x9000, scoped, tag = 'internal scratch']
  %s0 = inlined_call_operand.vmem [shape: f32[2,4,144,1024], index: 0, kind: input, shape index: {}]
  %s1 = inlined_call_operand.vmem [shape: f32[32,144], index: 1, kind: input, shape index: {}]
  %s2 = inlined_call_operand.vmem [shape: f32[32,1], index: 2, kind: input, shape index: {}]
  %s3 = inlined_call_operand.vmem [shape: f32[2,32,1024], index: 3, kind: output, shape index: {}]
  %s4 = sld [smem:[#allocation0]]
  $region87: #{qnetwork_forward.5} parent=0
    _
  %s6 = ssub.s32 1, %s4
  %s7 = scalar_select 0, %s6, %s4
  $region1: #{qnetwork_forward.5} parent=0
    #allocation2 [shape = 'u8[2359296]{0}', space=vmem, size = 0x240000, scoped, tag = 'input window, operand 0']
    #allocation3 [shape = 'u8[131072]{0}', space=vmem, size = 0x20000, scoped, tag = 'output window, operand 0']
    loop: start=0, step=1, limit=6
    $region2: #{qnetwork_forward.5} parent=1 // loop_pre_header
      _
    $region3: #{qnetwork_forward.5} parent=1 // loop_header
      %s9 = sphi 0, %s13
      %p10 = scmp.ge.s32.totalorder %s9, 6
      %s16 = sphi 0, %s28
      %s17 = sphi 0, %s24
      %s18 = sphi 0, %s16
      %s19 = sphi 0, %s17
      %s20 = sphi 0, %s18
      %s21 = sphi 0, %s19
      %s33 = sphi 0, %s35
      %s36 = sphi 0, %s33
      %s37 = sphi 0, %s36
      %s53 = sphi 0, %s37
      %s57 = sphi 0, %s57
      %s59 = sphi 0, %s57
      %s60 = sphi 0, %s59
      %s74 = sphi 0, %s60
      %s78 = sphi 0, %s78
      %s80 = sphi 0, %s78
      %s81 = sphi 0, %s80
      %s95 = sphi 0, %s81
      %s103 = sphi 0, %s105
      %s106 = sphi 0, %s103
      %s107 = sphi 0, %s106
      %s123 = sphi 0, %s107
    $region4: #{qnetwork_forward.5} parent=1 // loop_header_branch
      %12 = sbr.rel (%p10) target = $region8
    $region5: #{qnetwork_forward.5} parent=1 // loop_body
      %s14 = ssub.s32 %s9, 1
      %s15 = ssub.s32 %s9, 2
      %s22 = sadd.s32 1, %s17
      %p23 = scmp.ge.s32.totalorder %s22, 2
      %s24 = scalar_select %p23, 0, %s22
      %s25 = sadd.s32 1, %s16
      %s26 = scalar_select %p23, %s25, %s16
      %p27 = scmp.ge.s32.totalorder %s26, 2
      %s28 = scalar_select %p27, 0, %s26
      %s29 = ssub.s32 %s16, %s28
      %s30 = ssub.s32 %s17, %s24
      %s31 = sor.u32 %s29, %s30
      %p32 = scmp.eq.s32.totalorder %s31, 0
      %s34 = sadd.s32 %s33, 1
      %s35 = scalar_select %p32, %s33, %s34
      %p38 = pneg %p32
      %p39 = scmp.eq.s32.totalorder %s9, 3
      %p40 = por %p38, %p39
      %p41 = scmp.ne.s32.totalorder %s33, %s36
      %p42 = scmp.eq.s32.totalorder %s9, 0
      %p43 = por %p41, %p42
      %p44 = scmp.ne.s32.totalorder %s33, %s36
      %p45 = scmp.eq.s32.totalorder %s14, 3
      %p46 = por %p44, %p45
      %p47 = scmp.ne.s32.totalorder %s36, %s37
      %p48 = scmp.eq.s32.totalorder %s14, 0
      %p49 = por %p47, %p48
      %p50 = scmp.ne.s32.totalorder %s36, %s37
      %p51 = scmp.eq.s32.totalorder %s15, 3
      %p52 = por %p50, %p51
      %p54 = scmp.ne.s32.totalorder %s37, %s53
      %p55 = scmp.eq.s32.totalorder %s15, 0
      %p56 = por %p54, %p55
      %s58 = sadd.s32 %s57, 1
      %p61 = scmp.eq.s32.totalorder %s9, 3
      %p62 = scmp.ne.s32.totalorder %s57, %s59
      %p63 = scmp.eq.s32.totalorder %s9, 0
      %p64 = por %p62, %p63
      %p65 = scmp.ne.s32.totalorder %s57, %s59
      %p66 = scmp.eq.s32.totalorder %s14, 3
      %p67 = por %p65, %p66
      %p68 = scmp.ne.s32.totalorder %s59, %s60
      %p69 = scmp.eq.s32.totalorder %s14, 0
      %p70 = por %p68, %p69
      %p71 = scmp.ne.s32.totalorder %s59, %s60
      %p72 = scmp.eq.s32.totalorder %s15, 3
      %p73 = por %p71, %p72
      %p75 = scmp.ne.s32.totalorder %s60, %s74
      %p76 = scmp.eq.s32.totalorder %s15, 0
      %p77 = por %p75, %p76
      %s79 = sadd.s32 %s78, 1
      %p82 = scmp.eq.s32.totalorder %s9, 3
      %p83 = scmp.ne.s32.totalorder %s78, %s80
      %p84 = scmp.eq.s32.totalorder %s9, 0
      %p85 = por %p83, %p84
      %p86 = scmp.ne.s32.totalorder %s78, %s80
      %p87 = scmp.eq.s32.totalorder %s14, 3
      %p88 = por %p86, %p87
      %p89 = scmp.ne.s32.totalorder %s80, %s81
      %p90 = scmp.eq.s32.totalorder %s14, 0
      %p91 = por %p89, %p90
      %p92 = scmp.ne.s32.totalorder %s80, %s81
      %p93 = scmp.eq.s32.totalorder %s15, 3
      %p94 = por %p92, %p93
      %p96 = scmp.ne.s32.totalorder %s81, %s95
      %p97 = scmp.eq.s32.totalorder %s15, 0
      %p98 = por %p96, %p97
      %s99 = ssub.s32 %s16, %s28
      %s100 = ssub.s32 %s17, %s24
      %s101 = sor.u32 %s99, %s100
      %p102 = scmp.eq.s32.totalorder %s101, 0
      %s104 = sadd.s32 %s103, 1
      %s105 = scalar_select %p102, %s103, %s104
      %p108 = pneg %p102
      %p109 = scmp.eq.s32.totalorder %s9, 3
      %p110 = por %p108, %p109
      %p111 = scmp.ne.s32.totalorder %s103, %s106
      %p112 = scmp.eq.s32.totalorder %s9, 0
      %p113 = por %p111, %p112
      %p114 = scmp.ne.s32.totalorder %s103, %s106
      %p115 = scmp.eq.s32.totalorder %s14, 3
      %p116 = por %p114, %p115
      %p117 = scmp.ne.s32.totalorder %s106, %s107
      %p118 = scmp.eq.s32.totalorder %s14, 0
      %p119 = por %p117, %p118
      %p120 = scmp.ne.s32.totalorder %s106, %s107
      %p121 = scmp.eq.s32.totalorder %s15, 3
      %p122 = por %p120, %p121
      %p124 = scmp.ne.s32.totalorder %s107, %s123
      %p125 = scmp.eq.s32.totalorder %s15, 0
      %p126 = por %p124, %p125
      %p127 = scmp.le.s32.totalorder 1, %s9
      %p128 = scmp.lt.s32.totalorder %s9, 5
      %p129 = pnand %p127, %p128
      %p130 = pneg %p129
      // Predicated region
      $region9: #{qnetwork_forward.5} parent=5 // pred_check
        _
      $region10: #{qnetwork_forward.5} parent=5 // pred_check_branch
        %132 = sbr.rel (%p129) target = $region12
      $region11: #{qnetwork_forward.5} parent=5 // pred_region
        %s133 = ssub.s32 %s9, 1
        // Predicated region
        $region13: #{qnetwork_forward.5} parent=11 // pred_check
          %p134 = pneg %p70
        $region14: #{qnetwork_forward.5} parent=11 // pred_check_branch
          %136 = sbr.rel (%p134) target = $region16
        $region15: #{qnetwork_forward.5} parent=11 // pred_region
          _
        $region16: #{qnetwork_forward.5} parent=11 // pred_fallthru
          _
        // Predicated region
        $region17: #{qnetwork_forward.5} parent=11 // pred_check
          %p137 = pneg %p91
        $region18: #{qnetwork_forward.5} parent=11 // pred_check_branch
          %139 = sbr.rel (%p137) target = $region20
        $region19: #{qnetwork_forward.5} parent=11 // pred_region
          _
        $region20: #{qnetwork_forward.5} parent=11 // pred_fallthru
          _
      $region12: #{qnetwork_forward.5} parent=5 // pred_fallthru
        _
      %p140 = scmp.lt.s32.totalorder %s9, 4
      // Predicated region
      $region21: #{qnetwork_forward.5} parent=5 // pred_check
        %p141 = pneg %p140
      $region22: #{qnetwork_forward.5} parent=5 // pred_check_branch
        %143 = sbr.rel (%p141) target = $region24
      $region23: #{qnetwork_forward.5} parent=5 // pred_region
        // Predicated region
        $region25: #{qnetwork_forward.5} parent=23 // pred_check
          %p144 = pneg %p43
        $region26: #{qnetwork_forward.5} parent=23 // pred_check_branch
          %146 = sbr.rel (%p144) target = $region28
        $region27: #{qnetwork_forward.5} parent=23 // pred_region
          %s147 = sand.u32 %s33, 1
          %s148 = sand.u32 %s33, 1
          %s149 = smul.addr %s148, 2304
          %s150 = scalar_lea.vmem [#allocation2], %s149
          %s151 = smul.u32 4, %s17
          %s152 = smul.addr %s16, 576
          %s153 = sadd.s32 %s151, %s152
          %s154 = smul.addr %s153, 8
          %s155 = scalar_lea.vmem %s0, %s154
          // Predicated region
          $region29: #{qnetwork_forward.5} parent=27 // pred_check
            _
          $region30: #{qnetwork_forward.5} parent=27 // pred_check_branch
            %157 = sbr.rel (0) target = $region32
          $region31: #{qnetwork_forward.5} parent=27 // pred_region
            // Predicated region
            $region33: #{qnetwork_forward.5} parent=31 // pred_check
              _
            $region34: #{qnetwork_forward.5} parent=31 // pred_check_branch
              %159 = sbr.rel (0) target = $region36
            $region35: #{qnetwork_forward.5} parent=31 // pred_region
              loop: start=0, step=1, limit=1
              $region37: #{qnetwork_forward.5} parent=35 // loop_pre_header
                _
              $region38: #{qnetwork_forward.5} parent=35 // loop_header
                %s161 = sphi 0, %s165
                %p162 = scmp.ge.s32.totalorder %s161, 1
                %s166 = sphi %s155, %s155
                %s167 = sphi %s150, %s150
              $region39: #{qnetwork_forward.5} parent=35 // loop_header_branch
                %164 = sbr.rel (%p162) target = $region43
              $region40: #{qnetwork_forward.5} parent=35 // loop_body
                %v168 = vld [vmem:[%s166] sm:$0xff]
                %169 = vst [vmem:[%s167] sm:$0xff] %v168
                %v170 = vld [vmem:[%s166 + $0x8] sm:$0xff]
                %171 = vst [vmem:[%s167 + $0x8] sm:$0xff] %v170
                %v172 = vld [vmem:[%s166 + $0x10] sm:$0xff]
                %173 = vst [vmem:[%s167 + $0x10] sm:$0xff] %v172
                %v174 = vld [vmem:[%s166 + $0x18] sm:$0xff]
                %175 = vst [vmem:[%s167 + $0x18] sm:$0xff] %v174
                %v176 = vld [vmem:[%s166 + $0x40] sm:$0xff]
                %177 = vst [vmem:[%s167 + $0x20] sm:$0xff] %v176
                %v178 = vld [vmem:[%s166 + $0x48] sm:$0xff]
                %179 = vst [vmem:[%s167 + $0x28] sm:$0xff] %v178
                %v180 = vld [vmem:[%s166 + $0x50] sm:$0xff]
                %181 = vst [vmem:[%s167 + $0x30] sm:$0xff] %v180
                %v182 = vld [vmem:[%s166 + $0x58] sm:$0xff]
                %183 = vst [vmem:[%s167 + $0x38] sm:$0xff] %v182
                %v184 = vld [vmem:[%s166 + $0x80] sm:$0xff]
                %185 = vst [vmem:[%s167 + $0x40] sm:$0xff] %v184
                %v186 = vld [vmem:[%s166 + $0x88] sm:$0xff]
                %187 = vst [vmem:[%s167 + $0x48] sm:$0xff] %v186
                %v188 = vld [vmem:[%s166 + $0x90] sm:$0xff]
                %189 = vst [vmem:[%s167 + $0x50] sm:$0xff] %v188
                %v190 = vld [vmem:[%s166 + $0x98] sm:$0xff]
                %191 = vst [vmem:[%s167 + $0x58] sm:$0xff] %v190
                %v192 = vld [vmem:[%s166 + $0xc0] sm:$0xff]
                %193 = vst [vmem:[%s167 + $0x60] sm:$0xff] %v192
                %v194 = vld [vmem:[%s166 + $0xc8] sm:$0xff]
                %195 = vst [vmem:[%s167 + $0x68] sm:$0xff] %v194
                %v196 = vld [vmem:[%s166 + $0xd0] sm:$0xff]
                %197 = vst [vmem:[%s167 + $0x70] sm:$0xff] %v196
                %v198 = vld [vmem:[%s166 + $0xd8] sm:$0xff]
                %199 = vst [vmem:[%s167 + $0x78] sm:$0xff] %v198
                %v200 = vld [vmem:[%s166 + $0x100] sm:$0xff]
                %201 = vst [vmem:[%s167 + $0x80] sm:$0xff] %v200
                %v202 = vld [vmem:[%s166 + $0x108] sm:$0xff]
                %203 = vst [vmem:[%s167 + $0x88] sm:$0xff] %v202
                %v204 = vld [vmem:[%s166 + $0x110] sm:$0xff]
                %205 = vst [vmem:[%s167 + $0x90] sm:$0xff] %v204
                %v206 = vld [vmem:[%s166 + $0x118] sm:$0xff]
                %207 = vst [vmem:[%s167 + $0x98] sm:$0xff] %v206
                %v208 = vld [vmem:[%s166 + $0x140] sm:$0xff]
                %209 = vst [vmem:[%s167 + $0xa0] sm:$0xff] %v208
                %v210 = vld [vmem:[%s166 + $0x148] sm:$0xff]
                %211 = vst [vmem:[%s167 + $0xa8] sm:$0xff] %v210
                %v212 = vld [vmem:[%s166 + $0x150] sm:$0xff]
                %213 = vst [vmem:[%s167 + $0xb0] sm:$0xff] %v212
                %v214 = vld [vmem:[%s166 + $0x158] sm:$0xff]
                %215 = vst [vmem:[%s167 + $0xb8] sm:$0xff] %v214
                %v216 = vld [vmem:[%s166 + $0x180] sm:$0xff]
                %217 = vst [vmem:[%s167 + $0xc0] sm:$0xff] %v216
                %v218 = vld [vmem:[%s166 + $0x188] sm:$0xff]
                %219 = vst [vmem:[%s167 + $0xc8] sm:$0xff] %v218
                %v220 = vld [vmem:[%s166 + $0x190] sm:$0xff]
                %221 = vst [vmem:[%s167 + $0xd0] sm:$0xff] %v220
                %v222 = vld [vmem:[%s166 + $0x198] sm:$0xff]
                %223 = vst [vmem:[%s167 + $0xd8] sm:$0xff] %v222
                %v224 = vld [vmem:[%s166 + $0x1c0] sm:$0xff]
                %225 = vst [vmem:[%s167 + $0xe0] sm:$0xff] %v224
                %v226 = vld [vmem:[%s166 + $0x1c8] sm:$0xff]
                %227 = vst [vmem:[%s167 + $0xe8] sm:$0xff] %v226
                %v228 = vld [vmem:[%s166 + $0x1d0] sm:$0xff]
                %229 = vst [vmem:[%s167 + $0xf0] sm:$0xff] %v228
                %v230 = vld [vmem:[%s166 + $0x1d8] sm:$0xff]
                %231 = vst [vmem:[%s167 + $0xf8] sm:$0xff] %v230
                %v232 = vld [vmem:[%s166 + $0x200] sm:$0xff]
                %233 = vst [vmem:[%s167 + $0x100] sm:$0xff] %v232
                %v234 = vld [vmem:[%s166 + $0x208] sm:$0xff]
                %235 = vst [vmem:[%s167 + $0x108] sm:$0xff] %v234
                %v236 = vld [vmem:[%s166 + $0x210] sm:$0xff]
                %237 = vst [vmem:[%s167 + $0x110] sm:$0xff] %v236
                %v238 = vld [vmem:[%s166 + $0x218] sm:$0xff]
                %239 = vst [vmem:[%s167 + $0x118] sm:$0xff] %v238
                %v240 = vld [vmem:[%s166 + $0x240] sm:$0xff]
                %241 = vst [vmem:[%s167 + $0x120] sm:$0xff] %v240
                %v242 = vld [vmem:[%s166 + $0x248] sm:$0xff]
                %243 = vst [vmem:[%s167 + $0x128] sm:$0xff] %v242
                %v244 = vld [vmem:[%s166 + $0x250] sm:$0xff]
                %245 = vst [vmem:[%s167 + $0x130] sm:$0xff] %v244
                %v246 = vld [vmem:[%s166 + $0x258] sm:$0xff]
                %247 = vst [vmem:[%s167 + $0x138] sm:$0xff] %v246
                %v248 = vld [vmem:[%s166 + $0x280] sm:$0xff]
                %249 = vst [vmem:[%s167 + $0x140] sm:$0xff] %v248
                %v250 = vld [vmem:[%s166 + $0x288] sm:$0xff]
                %251 = vst [vmem:[%s167 + $0x148] sm:$0xff] %v250
                %v252 = vld [vmem:[%s166 + $0x290] sm:$0xff]
                %253 = vst [vmem:[%s167 + $0x150] sm:$0xff] %v252
                %v254 = vld [vmem:[%s166 + $0x298] sm:$0xff]
                %255 = vst [vmem:[%s167 + $0x158] sm:$0xff] %v254
                %v256 = vld [vmem:[%s166 + $0x2c0] sm:$0xff]
                %257 = vst [vmem:[%s167 + $0x160] sm:$0xff] %v256
                %v258 = vld [vmem:[%s166 + $0x2c8] sm:$0xff]
                %259 = vst [vmem:[%s167 + $0x168] sm:$0xff] %v258
                %v260 = vld [vmem:[%s166 + $0x2d0] sm:$0xff]
                %261 = vst [vmem:[%s167 + $0x170] sm:$0xff] %v260
                %v262 = vld [vmem:[%s166 + $0x2d8] sm:$0xff]
                %263 = vst [vmem:[%s167 + $0x178] sm:$0xff] %v262
                %v264 = vld [vmem:[%s166 + $0x300] sm:$0xff]
                %265 = vst [vmem:[%s167 + $0x180] sm:$0xff] %v264
                %v266 = vld [vmem:[%s166 + $0x308] sm:$0xff]
                %267 = vst [vmem:[%s167 + $0x188] sm:$0xff] %v266
                %v268 = vld [vmem:[%s166 + $0x310] sm:$0xff]
                %269 = vst [vmem:[%s167 + $0x190] sm:$0xff] %v268
                %v270 = vld [vmem:[%s166 + $0x318] sm:$0xff]
                %271 = vst [vmem:[%s167 + $0x198] sm:$0xff] %v270
                %v272 = vld [vmem:[%s166 + $0x340] sm:$0xff]
                %273 = vst [vmem:[%s167 + $0x1a0] sm:$0xff] %v272
                %v274 = vld [vmem:[%s166 + $0x348] sm:$0xff]
                %275 = vst [vmem:[%s167 + $0x1a8] sm:$0xff] %v274
                %v276 = vld [vmem:[%s166 + $0x350] sm:$0xff]
                %277 = vst [vmem:[%s167 + $0x1b0] sm:$0xff] %v276
                %v278 = vld [vmem:[%s166 + $0x358] sm:$0xff]
                %279 = vst [vmem:[%s167 + $0x1b8] sm:$0xff] %v278
                %v280 = vld [vmem:[%s166 + $0x380] sm:$0xff]
                %281 = vst [vmem:[%s167 + $0x1c0] sm:$0xff] %v280
                %v282 = vld [vmem:[%s166 + $0x388] sm:$0xff]
                %283 = vst [vmem:[%s167 + $0x1c8] sm:$0xff] %v282
                %v284 = vld [vmem:[%s166 + $0x390] sm:$0xff]
                %285 = vst [vmem:[%s167 + $0x1d0] sm:$0xff] %v284
                %v286 = vld [vmem:[%s166 + $0x398] sm:$0xff]
                %287 = vst [vmem:[%s167 + $0x1d8] sm:$0xff] %v286
                %v288 = vld [vmem:[%s166 + $0x3c0] sm:$0xff]
                %289 = vst [vmem:[%s167 + $0x1e0] sm:$0xff] %v288
                %v290 = vld [vmem:[%s166 + $0x3c8] sm:$0xff]
                %291 = vst [vmem:[%s167 + $0x1e8] sm:$0xff] %v290
                %v292 = vld [vmem:[%s166 + $0x3d0] sm:$0xff]
                %293 = vst [vmem:[%s167 + $0x1f0] sm:$0xff] %v292
                %v294 = vld [vmem:[%s166 + $0x3d8] sm:$0xff]
                %295 = vst [vmem:[%s167 + $0x1f8] sm:$0xff] %v294
                %v296 = vld [vmem:[%s166 + $0x400] sm:$0xff]
                %297 = vst [vmem:[%s167 + $0x200] sm:$0xff] %v296
                %v298 = vld [vmem:[%s166 + $0x408] sm:$0xff]
                %299 = vst [vmem:[%s167 + $0x208] sm:$0xff] %v298
                %v300 = vld [vmem:[%s166 + $0x410] sm:$0xff]
                %301 = vst [vmem:[%s167 + $0x210] sm:$0xff] %v300
                %v302 = vld [vmem:[%s166 + $0x418] sm:$0xff]
                %303 = vst [vmem:[%s167 + $0x218] sm:$0xff] %v302
                %v304 = vld [vmem:[%s166 + $0x440] sm:$0xff]
                %305 = vst [vmem:[%s167 + $0x220] sm:$0xff] %v304
                %v306 = vld [vmem:[%s166 + $0x448] sm:$0xff]
                %307 = vst [vmem:[%s167 + $0x228] sm:$0xff] %v306
                %v308 = vld [vmem:[%s166 + $0x450] sm:$0xff]
                %309 = vst [vmem:[%s167 + $0x230] sm:$0xff] %v308
                %v310 = vld [vmem:[%s166 + $0x458] sm:$0xff]
                %311 = vst [vmem:[%s167 + $0x238] sm:$0xff] %v310
                %v312 = vld [vmem:[%s166 + $0x480] sm:$0xff]
                %313 = vst [vmem:[%s167 + $0x240] sm:$0xff] %v312
                %v314 = vld [vmem:[%s166 + $0x488] sm:$0xff]
                %315 = vst [vmem:[%s167 + $0x248] sm:$0xff] %v314
                %v316 = vld [vmem:[%s166 + $0x490] sm:$0xff]
                %317 = vst [vmem:[%s167 + $0x250] sm:$0xff] %v316
                %v318 = vld [vmem:[%s166 + $0x498] sm:$0xff]
                %319 = vst [vmem:[%s167 + $0x258] sm:$0xff] %v318
                %v320 = vld [vmem:[%s166 + $0x4c0] sm:$0xff]
                %321 = vst [vmem:[%s167 + $0x260] sm:$0xff] %v320
                %v322 = vld [vmem:[%s166 + $0x4c8] sm:$0xff]
                %323 = vst [vmem:[%s167 + $0x268] sm:$0xff] %v322
                %v324 = vld [vmem:[%s166 + $0x4d0] sm:$0xff]
                %325 = vst [vmem:[%s167 + $0x270] sm:$0xff] %v324
                %v326 = vld [vmem:[%s166 + $0x4d8] sm:$0xff]
                %327 = vst [vmem:[%s167 + $0x278] sm:$0xff] %v326
                %v328 = vld [vmem:[%s166 + $0x500] sm:$0xff]
                %329 = vst [vmem:[%s167 + $0x280] sm:$0xff] %v328
                %v330 = vld [vmem:[%s166 + $0x508] sm:$0xff]
                %331 = vst [vmem:[%s167 + $0x288] sm:$0xff] %v330
                %v332 = vld [vmem:[%s166 + $0x510] sm:$0xff]
                %333 = vst [vmem:[%s167 + $0x290] sm:$0xff] %v332
                %v334 = vld [vmem:[%s166 + $0x518] sm:$0xff]
                %335 = vst [vmem:[%s167 + $0x298] sm:$0xff] %v334
                %v336 = vld [vmem:[%s166 + $0x540] sm:$0xff]
                %337 = vst [vmem:[%s167 + $0x2a0] sm:$0xff] %v336
                %v338 = vld [vmem:[%s166 + $0x548] sm:$0xff]
                %339 = vst [vmem:[%s167 + $0x2a8] sm:$0xff] %v338
                %v340 = vld [vmem:[%s166 + $0x550] sm:$0xff]
                %341 = vst [vmem:[%s167 + $0x2b0] sm:$0xff] %v340
                %v342 = vld [vmem:[%s166 + $0x558] sm:$0xff]
                %343 = vst [vmem:[%s167 + $0x2b8] sm:$0xff] %v342
                %v344 = vld [vmem:[%s166 + $0x580] sm:$0xff]
                %345 = vst [vmem:[%s167 + $0x2c0] sm:$0xff] %v344
                %v346 = vld [vmem:[%s166 + $0x588] sm:$0xff]
                %347 = vst [vmem:[%s167 + $0x2c8] sm:$0xff] %v346
                %v348 = vld [vmem:[%s166 + $0x590] sm:$0xff]
                %349 = vst [vmem:[%s167 + $0x2d0] sm:$0xff] %v348
                %v350 = vld [vmem:[%s166 + $0x598] sm:$0xff]
                %351 = vst [vmem:[%s167 + $0x2d8] sm:$0xff] %v350
                %v352 = vld [vmem:[%s166 + $0x5c0] sm:$0xff]
                %353 = vst [vmem:[%s167 + $0x2e0] sm:$0xff] %v352
                %v354 = vld [vmem:[%s166 + $0x5c8] sm:$0xff]
                %355 = vst [vmem:[%s167 + $0x2e8] sm:$0xff] %v354
                %v356 = vld [vmem:[%s166 + $0x5d0] sm:$0xff]
                %357 = vst [vmem:[%s167 + $0x2f0] sm:$0xff] %v356
                %v358 = vld [vmem:[%s166 + $0x5d8] sm:$0xff]
                %359 = vst [vmem:[%s167 + $0x2f8] sm:$0xff] %v358
                %v360 = vld [vmem:[%s166 + $0x600] sm:$0xff]
                %361 = vst [vmem:[%s167 + $0x300] sm:$0xff] %v360
                %v362 = vld [vmem:[%s166 + $0x608] sm:$0xff]
                %363 = vst [vmem:[%s167 + $0x308] sm:$0xff] %v362
                %v364 = vld [vmem:[%s166 + $0x610] sm:$0xff]
                %365 = vst [vmem:[%s167 + $0x310] sm:$0xff] %v364
                %v366 = vld [vmem:[%s166 + $0x618] sm:$0xff]
                %367 = vst [vmem:[%s167 + $0x318] sm:$0xff] %v366
                %v368 = vld [vmem:[%s166 + $0x640] sm:$0xff]
                %369 = vst [vmem:[%s167 + $0x320] sm:$0xff] %v368
                %v370 = vld [vmem:[%s166 + $0x648] sm:$0xff]
                %371 = vst [vmem:[%s167 + $0x328] sm:$0xff] %v370
                %v372 = vld [vmem:[%s166 + $0x650] sm:$0xff]
                %373 = vst [vmem:[%s167 + $0x330] sm:$0xff] %v372
                %v374 = vld [vmem:[%s166 + $0x658] sm:$0xff]
                %375 = vst [vmem:[%s167 + $0x338] sm:$0xff] %v374
                %v376 = vld [vmem:[%s166 + $0x680] sm:$0xff]
                %377 = vst [vmem:[%s167 + $0x340] sm:$0xff] %v376
                %v378 = vld [vmem:[%s166 + $0x688] sm:$0xff]
                %379 = vst [vmem:[%s167 + $0x348] sm:$0xff] %v378
                %v380 = vld [vmem:[%s166 + $0x690] sm:$0xff]
                %381 = vst [vmem:[%s167 + $0x350] sm:$0xff] %v380
                %v382 = vld [vmem:[%s166 + $0x698] sm:$0xff]
                %383 = vst [vmem:[%s167 + $0x358] sm:$0xff] %v382
                %v384 = vld [vmem:[%s166 + $0x6c0] sm:$0xff]
                %385 = vst [vmem:[%s167 + $0x360] sm:$0xff] %v384
                %v386 = vld [vmem:[%s166 + $0x6c8] sm:$0xff]
                %387 = vst [vmem:[%s167 + $0x368] sm:$0xff] %v386
                %v388 = vld [vmem:[%s166 + $0x6d0] sm:$0xff]
                %389 = vst [vmem:[%s167 + $0x370] sm:$0xff] %v388
                %v390 = vld [vmem:[%s166 + $0x6d8] sm:$0xff]
                %391 = vst [vmem:[%s167 + $0x378] sm:$0xff] %v390
                %v392 = vld [vmem:[%s166 + $0x700] sm:$0xff]
                %393 = vst [vmem:[%s167 + $0x380] sm:$0xff] %v392
                %v394 = vld [vmem:[%s166 + $0x708] sm:$0xff]
                %395 = vst [vmem:[%s167 + $0x388] sm:$0xff] %v394
                %v396 = vld [vmem:[%s166 + $0x710] sm:$0xff]
                %397 = vst [vmem:[%s167 + $0x390] sm:$0xff] %v396
                %v398 = vld [vmem:[%s166 + $0x718] sm:$0xff]
                %399 = vst [vmem:[%s167 + $0x398] sm:$0xff] %v398
                %v400 = vld [vmem:[%s166 + $0x740] sm:$0xff]
                %401 = vst [vmem:[%s167 + $0x3a0] sm:$0xff] %v400
                %v402 = vld [vmem:[%s166 + $0x748] sm:$0xff]
                %403 = vst [vmem:[%s167 + $0x3a8] sm:$0xff] %v402
                %v404 = vld [vmem:[%s166 + $0x750] sm:$0xff]
                %405 = vst [vmem:[%s167 + $0x3b0] sm:$0xff] %v404
                %v406 = vld [vmem:[%s166 + $0x758] sm:$0xff]
                %407 = vst [vmem:[%s167 + $0x3b8] sm:$0xff] %v406
                %v408 = vld [vmem:[%s166 + $0x780] sm:$0xff]
                %409 = vst [vmem:[%s167 + $0x3c0] sm:$0xff] %v408
                %v410 = vld [vmem:[%s166 + $0x788] sm:$0xff]
                %411 = vst [vmem:[%s167 + $0x3c8] sm:$0xff] %v410
                %v412 = vld [vmem:[%s166 + $0x790] sm:$0xff]
                %413 = vst [vmem:[%s167 + $0x3d0] sm:$0xff] %v412
                %v414 = vld [vmem:[%s166 + $0x798] sm:$0xff]
                %415 = vst [vmem:[%s167 + $0x3d8] sm:$0xff] %v414
                %v416 = vld [vmem:[%s166 + $0x7c0] sm:$0xff]
                %417 = vst [vmem:[%s167 + $0x3e0] sm:$0xff] %v416
                %v418 = vld [vmem:[%s166 + $0x7c8] sm:$0xff]
                %419 = vst [vmem:[%s167 + $0x3e8] sm:$0xff] %v418
                %v420 = vld [vmem:[%s166 + $0x7d0] sm:$0xff]
                %421 = vst [vmem:[%s167 + $0x3f0] sm:$0xff] %v420
                %v422 = vld [vmem:[%s166 + $0x7d8] sm:$0xff]
                %423 = vst [vmem:[%s167 + $0x3f8] sm:$0xff] %v422
                %v424 = vld [vmem:[%s166 + $0x800] sm:$0xff]
                %425 = vst [vmem:[%s167 + $0x400] sm:$0xff] %v424
                %v426 = vld [vmem:[%s166 + $0x808] sm:$0xff]
                %427 = vst [vmem:[%s167 + $0x408] sm:$0xff] %v426
                %v428 = vld [vmem:[%s166 + $0x810] sm:$0xff]
                %429 = vst [vmem:[%s167 + $0x410] sm:$0xff] %v428
                %v430 = vld [vmem:[%s166 + $0x818] sm:$0xff]
                %431 = vst [vmem:[%s167 + $0x418] sm:$0xff] %v430
                %v432 = vld [vmem:[%s166 + $0x840] sm:$0xff]
                %433 = vst [vmem:[%s167 + $0x420] sm:$0xff] %v432
                %v434 = vld [vmem:[%s166 + $0x848] sm:$0xff]
                %435 = vst [vmem:[%s167 + $0x428] sm:$0xff] %v434
                %v436 = vld [vmem:[%s166 + $0x850] sm:$0xff]
                %437 = vst [vmem:[%s167 + $0x430] sm:$0xff] %v436
                %v438 = vld [vmem:[%s166 + $0x858] sm:$0xff]
                %439 = vst [vmem:[%s167 + $0x438] sm:$0xff] %v438
                %v440 = vld [vmem:[%s166 + $0x880] sm:$0xff]
                %441 = vst [vmem:[%s167 + $0x440] sm:$0xff] %v440
                %v442 = vld [vmem:[%s166 + $0x888] sm:$0xff]
                %443 = vst [vmem:[%s167 + $0x448] sm:$0xff] %v442
                %v444 = vld [vmem:[%s166 + $0x890] sm:$0xff]
                %445 = vst [vmem:[%s167 + $0x450] sm:$0xff] %v444
                %v446 = vld [vmem:[%s166 + $0x898] sm:$0xff]
                %447 = vst [vmem:[%s167 + $0x458] sm:$0xff] %v446
                %v448 = vld [vmem:[%s166 + $0x8c0] sm:$0xff]
                %449 = vst [vmem:[%s167 + $0x460] sm:$0xff] %v448
                %v450 = vld [vmem:[%s166 + $0x8c8] sm:$0xff]
                %451 = vst [vmem:[%s167 + $0x468] sm:$0xff] %v450
                %v452 = vld [vmem:[%s166 + $0x8d0] sm:$0xff]
                %453 = vst [vmem:[%s167 + $0x470] sm:$0xff] %v452
                %v454 = vld [vmem:[%s166 + $0x8d8] sm:$0xff]
                %455 = vst [vmem:[%s167 + $0x478] sm:$0xff] %v454
                %v456 = vld [vmem:[%s166 + $0x900] sm:$0xff]
                %457 = vst [vmem:[%s167 + $0x480] sm:$0xff] %v456
                %v458 = vld [vmem:[%s166 + $0x908] sm:$0xff]
                %459 = vst [vmem:[%s167 + $0x488] sm:$0xff] %v458
                %v460 = vld [vmem:[%s166 + $0x910] sm:$0xff]
                %461 = vst [vmem:[%s167 + $0x490] sm:$0xff] %v460
                %v462 = vld [vmem:[%s166 + $0x918] sm:$0xff]
                %463 = vst [vmem:[%s167 + $0x498] sm:$0xff] %v462
                %v464 = vld [vmem:[%s166 + $0x940] sm:$0xff]
                %465 = vst [vmem:[%s167 + $0x4a0] sm:$0xff] %v464
                %v466 = vld [vmem:[%s166 + $0x948] sm:$0xff]
                %467 = vst [vmem:[%s167 + $0x4a8] sm:$0xff] %v466
                %v468 = vld [vmem:[%s166 + $0x950] sm:$0xff]
                %469 = vst [vmem:[%s167 + $0x4b0] sm:$0xff] %v468
                %v470 = vld [vmem:[%s166 + $0x958] sm:$0xff]
                %471 = vst [vmem:[%s167 + $0x4b8] sm:$0xff] %v470
                %v472 = vld [vmem:[%s166 + $0x980] sm:$0xff]
                %473 = vst [vmem:[%s167 + $0x4c0] sm:$0xff] %v472
                %v474 = vld [vmem:[%s166 + $0x988] sm:$0xff]
                %475 = vst [vmem:[%s167 + $0x4c8] sm:$0xff] %v474
                %v476 = vld [vmem:[%s166 + $0x990] sm:$0xff]
                %477 = vst [vmem:[%s167 + $0x4d0] sm:$0xff] %v476
                %v478 = vld [vmem:[%s166 + $0x998] sm:$0xff]
                %479 = vst [vmem:[%s167 + $0x4d8] sm:$0xff] %v478
                %v480 = vld [vmem:[%s166 + $0x9c0] sm:$0xff]
                %481 = vst [vmem:[%s167 + $0x4e0] sm:$0xff] %v480
                %v482 = vld [vmem:[%s166 + $0x9c8] sm:$0xff]
                %483 = vst [vmem:[%s167 + $0x4e8] sm:$0xff] %v482
                %v484 = vld [vmem:[%s166 + $0x9d0] sm:$0xff]
                %485 = vst [vmem:[%s167 + $0x4f0] sm:$0xff] %v484
                %v486 = vld [vmem:[%s166 + $0x9d8] sm:$0xff]
                %487 = vst [vmem:[%s167 + $0x4f8] sm:$0xff] %v486
                %v488 = vld [vmem:[%s166 + $0xa00] sm:$0xff]
                %489 = vst [vmem:[%s167 + $0x500] sm:$0xff] %v488
                %v490 = vld [vmem:[%s166 + $0xa08] sm:$0xff]
                %491 = vst [vmem:[%s167 + $0x508] sm:$0xff] %v490
                %v492 = vld [vmem:[%s166 + $0xa10] sm:$0xff]
                %493 = vst [vmem:[%s167 + $0x510] sm:$0xff] %v492
                %v494 = vld [vmem:[%s166 + $0xa18] sm:$0xff]
                %495 = vst [vmem:[%s167 + $0x518] sm:$0xff] %v494
                %v496 = vld [vmem:[%s166 + $0xa40] sm:$0xff]
                %497 = vst [vmem:[%s167 + $0x520] sm:$0xff] %v496
                %v498 = vld [vmem:[%s166 + $0xa48] sm:$0xff]
                %499 = vst [vmem:[%s167 + $0x528] sm:$0xff] %v498
                %v500 = vld [vmem:[%s166 + $0xa50] sm:$0xff]
                %501 = vst [vmem:[%s167 + $0x530] sm:$0xff] %v500
                %v502 = vld [vmem:[%s166 + $0xa58] sm:$0xff]
                %503 = vst [vmem:[%s167 + $0x538] sm:$0xff] %v502
                %v504 = vld [vmem:[%s166 + $0xa80] sm:$0xff]
                %505 = vst [vmem:[%s167 + $0x540] sm:$0xff] %v504
                %v506 = vld [vmem:[%s166 + $0xa88] sm:$0xff]
                %507 = vst [vmem:[%s167 + $0x548] sm:$0xff] %v506
                %v508 = vld [vmem:[%s166 + $0xa90] sm:$0xff]
                %509 = vst [vmem:[%s167 + $0x550] sm:$0xff] %v508
                %v510 = vld [vmem:[%s166 + $0xa98] sm:$0xff]
                %511 = vst [vmem:[%s167 + $0x558] sm:$0xff] %v510
                %v512 = vld [vmem:[%s166 + $0xac0] sm:$0xff]
                %513 = vst [vmem:[%s167 + $0x560] sm:$0xff] %v512
                %v514 = vld [vmem:[%s166 + $0xac8] sm:$0xff]
                %515 = vst [vmem:[%s167 + $0x568] sm:$0xff] %v514
                %v516 = vld [vmem:[%s166 + $0xad0] sm:$0xff]
                %517 = vst [vmem:[%s167 + $0x570] sm:$0xff] %v516
                %v518 = vld [vmem:[%s166 + $0xad8] sm:$0xff]
                %519 = vst [vmem:[%s167 + $0x578] sm:$0xff] %v518
                %v520 = vld [vmem:[%s166 + $0xb00] sm:$0xff]
                %521 = vst [vmem:[%s167 + $0x580] sm:$0xff] %v520
                %v522 = vld [vmem:[%s166 + $0xb08] sm:$0xff]
                %523 = vst [vmem:[%s167 + $0x588] sm:$0xff] %v522
                %v524 = vld [vmem:[%s166 + $0xb10] sm:$0xff]
                %525 = vst [vmem:[%s167 + $0x590] sm:$0xff] %v524
                %v526 = vld [vmem:[%s166 + $0xb18] sm:$0xff]
                %527 = vst [vmem:[%s167 + $0x598] sm:$0xff] %v526
                %v528 = vld [vmem:[%s166 + $0xb40] sm:$0xff]
                %529 = vst [vmem:[%s167 + $0x5a0] sm:$0xff] %v528
                %v530 = vld [vmem:[%s166 + $0xb48] sm:$0xff]
                %531 = vst [vmem:[%s167 + $0x5a8] sm:$0xff] %v530
                %v532 = vld [vmem:[%s166 + $0xb50] sm:$0xff]
                %533 = vst [vmem:[%s167 + $0x5b0] sm:$0xff] %v532
                %v534 = vld [vmem:[%s166 + $0xb58] sm:$0xff]
                %535 = vst [vmem:[%s167 + $0x5b8] sm:$0xff] %v534
                %v536 = vld [vmem:[%s166 + $0xb80] sm:$0xff]
                %537 = vst [vmem:[%s167 + $0x5c0] sm:$0xff] %v536
                %v538 = vld [vmem:[%s166 + $0xb88] sm:$0xff]
                %539 = vst [vmem:[%s167 + $0x5c8] sm:$0xff] %v538
                %v540 = vld [vmem:[%s166 + $0xb90] sm:$0xff]
                %541 = vst [vmem:[%s167 + $0x5d0] sm:$0xff] %v540
                %v542 = vld [vmem:[%s166 + $0xb98] sm:$0xff]
                %543 = vst [vmem:[%s167 + $0x5d8] sm:$0xff] %v542
                %v544 = vld [vmem:[%s166 + $0xbc0] sm:$0xff]
                %545 = vst [vmem:[%s167 + $0x5e0] sm:$0xff] %v544
                %v546 = vld [vmem:[%s166 + $0xbc8] sm:$0xff]
                %547 = vst [vmem:[%s167 + $0x5e8] sm:$0xff] %v546
                %v548 = vld [vmem:[%s166 + $0xbd0] sm:$0xff]
                %549 = vst [vmem:[%s167 + $0x5f0] sm:$0xff] %v548
                %v550 = vld [vmem:[%s166 + $0xbd8] sm:$0xff]
                %551 = vst [vmem:[%s167 + $0x5f8] sm:$0xff] %v550
                %v552 = vld [vmem:[%s166 + $0xc00] sm:$0xff]
                %553 = vst [vmem:[%s167 + $0x600] sm:$0xff] %v552
                %v554 = vld [vmem:[%s166 + $0xc08] sm:$0xff]
                %555 = vst [vmem:[%s167 + $0x608] sm:$0xff] %v554
                %v556 = vld [vmem:[%s166 + $0xc10] sm:$0xff]
                %557 = vst [vmem:[%s167 + $0x610] sm:$0xff] %v556
                %v558 = vld [vmem:[%s166 + $0xc18] sm:$0xff]
                %559 = vst [vmem:[%s167 + $0x618] sm:$0xff] %v558
                %v560 = vld [vmem:[%s166 + $0xc40] sm:$0xff]
                %561 = vst [vmem:[%s167 + $0x620] sm:$0xff] %v560
                %v562 = vld [vmem:[%s166 + $0xc48] sm:$0xff]
                %563 = vst [vmem:[%s167 + $0x628] sm:$0xff] %v562
                %v564 = vld [vmem:[%s166 + $0xc50] sm:$0xff]
                %565 = vst [vmem:[%s167 + $0x630] sm:$0xff] %v564
                %v566 = vld [vmem:[%s166 + $0xc58] sm:$0xff]
                %567 = vst [vmem:[%s167 + $0x638] sm:$0xff] %v566
                %v568 = vld [vmem:[%s166 + $0xc80] sm:$0xff]
                %569 = vst [vmem:[%s167 + $0x640] sm:$0xff] %v568
                %v570 = vld [vmem:[%s166 + $0xc88] sm:$0xff]
                %571 = vst [vmem:[%s167 + $0x648] sm:$0xff] %v570
                %v572 = vld [vmem:[%s166 + $0xc90] sm:$0xff]
                %573 = vst [vmem:[%s167 + $0x650] sm:$0xff] %v572
                %v574 = vld [vmem:[%s166 + $0xc98] sm:$0xff]
                %575 = vst [vmem:[%s167 + $0x658] sm:$0xff] %v574
                %v576 = vld [vmem:[%s166 + $0xcc0] sm:$0xff]
                %577 = vst [vmem:[%s167 + $0x660] sm:$0xff] %v576
                %v578 = vld [vmem:[%s166 + $0xcc8] sm:$0xff]
                %579 = vst [vmem:[%s167 + $0x668] sm:$0xff] %v578
                %v580 = vld [vmem:[%s166 + $0xcd0] sm:$0xff]
                %581 = vst [vmem:[%s167 + $0x670] sm:$0xff] %v580
                %v582 = vld [vmem:[%s166 + $0xcd8] sm:$0xff]
                %583 = vst [vmem:[%s167 + $0x678] sm:$0xff] %v582
                %v584 = vld [vmem:[%s166 + $0xd00] sm:$0xff]
                %585 = vst [vmem:[%s167 + $0x680] sm:$0xff] %v584
                %v586 = vld [vmem:[%s166 + $0xd08] sm:$0xff]
                %587 = vst [vmem:[%s167 + $0x688] sm:$0xff] %v586
                %v588 = vld [vmem:[%s166 + $0xd10] sm:$0xff]
                %589 = vst [vmem:[%s167 + $0x690] sm:$0xff] %v588
                %v590 = vld [vmem:[%s166 + $0xd18] sm:$0xff]
                %591 = vst [vmem:[%s167 + $0x698] sm:$0xff] %v590
                %v592 = vld [vmem:[%s166 + $0xd40] sm:$0xff]
                %593 = vst [vmem:[%s167 + $0x6a0] sm:$0xff] %v592
                %v594 = vld [vmem:[%s166 + $0xd48] sm:$0xff]
                %595 = vst [vmem:[%s167 + $0x6a8] sm:$0xff] %v594
                %v596 = vld [vmem:[%s166 + $0xd50] sm:$0xff]
                %597 = vst [vmem:[%s167 + $0x6b0] sm:$0xff] %v596
                %v598 = vld [vmem:[%s166 + $0xd58] sm:$0xff]
                %599 = vst [vmem:[%s167 + $0x6b8] sm:$0xff] %v598
                %v600 = vld [vmem:[%s166 + $0xd80] sm:$0xff]
                %601 = vst [vmem:[%s167 + $0x6c0] sm:$0xff] %v600
                %v602 = vld [vmem:[%s166 + $0xd88] sm:$0xff]
                %603 = vst [vmem:[%s167 + $0x6c8] sm:$0xff] %v602
                %v604 = vld [vmem:[%s166 + $0xd90] sm:$0xff]
                %605 = vst [vmem:[%s167 + $0x6d0] sm:$0xff] %v604
                %v606 = vld [vmem:[%s166 + $0xd98] sm:$0xff]
                %607 = vst [vmem:[%s167 + $0x6d8] sm:$0xff] %v606
                %v608 = vld [vmem:[%s166 + $0xdc0] sm:$0xff]
                %609 = vst [vmem:[%s167 + $0x6e0] sm:$0xff] %v608
                %v610 = vld [vmem:[%s166 + $0xdc8] sm:$0xff]
                %611 = vst [vmem:[%s167 + $0x6e8] sm:$0xff] %v610
                %v612 = vld [vmem:[%s166 + $0xdd0] sm:$0xff]
                %613 = vst [vmem:[%s167 + $0x6f0] sm:$0xff] %v612
                %v614 = vld [vmem:[%s166 + $0xdd8] sm:$0xff]
                %615 = vst [vmem:[%s167 + $0x6f8] sm:$0xff] %v614
                %v616 = vld [vmem:[%s166 + $0xe00] sm:$0xff]
                %617 = vst [vmem:[%s167 + $0x700] sm:$0xff] %v616
                %v618 = vld [vmem:[%s166 + $0xe08] sm:$0xff]
                %619 = vst [vmem:[%s167 + $0x708] sm:$0xff] %v618
                %v620 = vld [vmem:[%s166 + $0xe10] sm:$0xff]
                %621 = vst [vmem:[%s167 + $0x710] sm:$0xff] %v620
                %v622 = vld [vmem:[%s166 + $0xe18] sm:$0xff]
                %623 = vst [vmem:[%s167 + $0x718] sm:$0xff] %v622
                %v624 = vld [vmem:[%s166 + $0xe40] sm:$0xff]
                %625 = vst [vmem:[%s167 + $0x720] sm:$0xff] %v624
                %v626 = vld [vmem:[%s166 + $0xe48] sm:$0xff]
                %627 = vst [vmem:[%s167 + $0x728] sm:$0xff] %v626
                %v628 = vld [vmem:[%s166 + $0xe50] sm:$0xff]
                %629 = vst [vmem:[%s167 + $0x730] sm:$0xff] %v628
                %v630 = vld [vmem:[%s166 + $0xe58] sm:$0xff]
                %631 = vst [vmem:[%s167 + $0x738] sm:$0xff] %v630
                %v632 = vld [vmem:[%s166 + $0xe80] sm:$0xff]
                %633 = vst [vmem:[%s167 + $0x740] sm:$0xff] %v632
                %v634 = vld [vmem:[%s166 + $0xe88] sm:$0xff]
                %635 = vst [vmem:[%s167 + $0x748] sm:$0xff] %v634
                %v636 = vld [vmem:[%s166 + $0xe90] sm:$0xff]
                %637 = vst [vmem:[%s167 + $0x750] sm:$0xff] %v636
                %v638 = vld [vmem:[%s166 + $0xe98] sm:$0xff]
                %639 = vst [vmem:[%s167 + $0x758] sm:$0xff] %v638
                %v640 = vld [vmem:[%s166 + $0xec0] sm:$0xff]
                %641 = vst [vmem:[%s167 + $0x760] sm:$0xff] %v640
                %v642 = vld [vmem:[%s166 + $0xec8] sm:$0xff]
                %643 = vst [vmem:[%s167 + $0x768] sm:$0xff] %v642
                %v644 = vld [vmem:[%s166 + $0xed0] sm:$0xff]
                %645 = vst [vmem:[%s167 + $0x770] sm:$0xff] %v644
                %v646 = vld [vmem:[%s166 + $0xed8] sm:$0xff]
                %647 = vst [vmem:[%s167 + $0x778] sm:$0xff] %v646
                %v648 = vld [vmem:[%s166 + $0xf00] sm:$0xff]
                %649 = vst [vmem:[%s167 + $0x780] sm:$0xff] %v648
                %v650 = vld [vmem:[%s166 + $0xf08] sm:$0xff]
                %651 = vst [vmem:[%s167 + $0x788] sm:$0xff] %v650
                %v652 = vld [vmem:[%s166 + $0xf10] sm:$0xff]
                %653 = vst [vmem:[%s167 + $0x790] sm:$0xff] %v652
                %v654 = vld [vmem:[%s166 + $0xf18] sm:$0xff]
                %655 = vst [vmem:[%s167 + $0x798] sm:$0xff] %v654
                %v656 = vld [vmem:[%s166 + $0xf40] sm:$0xff]
                %657 = vst [vmem:[%s167 + $0x7a0] sm:$0xff] %v656
                %v658 = vld [vmem:[%s166 + $0xf48] sm:$0xff]
                %659 = vst [vmem:[%s167 + $0x7a8] sm:$0xff] %v658
                %v660 = vld [vmem:[%s166 + $0xf50] sm:$0xff]
                %661 = vst [vmem:[%s167 + $0x7b0] sm:$0xff] %v660
                %v662 = vld [vmem:[%s166 + $0xf58] sm:$0xff]
                %663 = vst [vmem:[%s167 + $0x7b8] sm:$0xff] %v662
                %v664 = vld [vmem:[%s166 + $0xf80] sm:$0xff]
                %665 = vst [vmem:[%s167 + $0x7c0] sm:$0xff] %v664
                %v666 = vld [vmem:[%s166 + $0xf88] sm:$0xff]
                %667 = vst [vmem:[%s167 + $0x7c8] sm:$0xff] %v666
                %v668 = vld [vmem:[%s166 + $0xf90] sm:$0xff]
                %669 = vst [vmem:[%s167 + $0x7d0] sm:$0xff] %v668
                %v670 = vld [vmem:[%s166 + $0xf98] sm:$0xff]
                %671 = vst [vmem:[%s167 + $0x7d8] sm:$0xff] %v670
                %v672 = vld [vmem:[%s166 + $0xfc0] sm:$0xff]
                %673 = vst [vmem:[%s167 + $0x7e0] sm:$0xff] %v672
                %v674 = vld [vmem:[%s166 + $0xfc8] sm:$0xff]
                %675 = vst [vmem:[%s167 + $0x7e8] sm:$0xff] %v674
                %v676 = vld [vmem:[%s166 + $0xfd0] sm:$0xff]
                %677 = vst [vmem:[%s167 + $0x7f0] sm:$0xff] %v676
                %v678 = vld [vmem:[%s166 + $0xfd8] sm:$0xff]
                %679 = vst [vmem:[%s167 + $0x7f8] sm:$0xff] %v678
                %v680 = vld [vmem:[%s166 + $0x1000] sm:$0xff]
                %681 = vst [vmem:[%s167 + $0x800] sm:$0xff] %v680
                %v682 = vld [vmem:[%s166 + $0x1008] sm:$0xff]
                %683 = vst [vmem:[%s167 + $0x808] sm:$0xff] %v682
                %v684 = vld [vmem:[%s166 + $0x1010] sm:$0xff]
                %685 = vst [vmem:[%s167 + $0x810] sm:$0xff] %v684
                %v686 = vld [vmem:[%s166 + $0x1018] sm:$0xff]
                %687 = vst [vmem:[%s167 + $0x818] sm:$0xff] %v686
                %v688 = vld [vmem:[%s166 + $0x1040] sm:$0xff]
                %689 = vst [vmem:[%s167 + $0x820] sm:$0xff] %v688
                %v690 = vld [vmem:[%s166 + $0x1048] sm:$0xff]
                %691 = vst [vmem:[%s167 + $0x828] sm:$0xff] %v690
                %v692 = vld [vmem:[%s166 + $0x1050] sm:$0xff]
                %693 = vst [vmem:[%s167 + $0x830] sm:$0xff] %v692
                %v694 = vld [vmem:[%s166 + $0x1058] sm:$0xff]
                %695 = vst [vmem:[%s167 + $0x838] sm:$0xff] %v694
                %v696 = vld [vmem:[%s166 + $0x1080] sm:$0xff]
                %697 = vst [vmem:[%s167 + $0x840] sm:$0xff] %v696
                %v698 = vld [vmem:[%s166 + $0x1088] sm:$0xff]
                %699 = vst [vmem:[%s167 + $0x848] sm:$0xff] %v698
                %v700 = vld [vmem:[%s166 + $0x1090] sm:$0xff]
                %701 = vst [vmem:[%s167 + $0x850] sm:$0xff] %v700
                %v702 = vld [vmem:[%s166 + $0x1098] sm:$0xff]
                %703 = vst [vmem:[%s167 + $0x858] sm:$0xff] %v702
                %v704 = vld [vmem:[%s166 + $0x10c0] sm:$0xff]
                %705 = vst [vmem:[%s167 + $0x860] sm:$0xff] %v704
                %v706 = vld [vmem:[%s166 + $0x10c8] sm:$0xff]
                %707 = vst [vmem:[%s167 + $0x868] sm:$0xff] %v706
                %v708 = vld [vmem:[%s166 + $0x10d0] sm:$0xff]
                %709 = vst [vmem:[%s167 + $0x870] sm:$0xff] %v708
                %v710 = vld [vmem:[%s166 + $0x10d8] sm:$0xff]
                %711 = vst [vmem:[%s167 + $0x878] sm:$0xff] %v710
                %v712 = vld [vmem:[%s166 + $0x1100] sm:$0xff]
                %713 = vst [vmem:[%s167 + $0x880] sm:$0xff] %v712
                %v714 = vld [vmem:[%s166 + $0x1108] sm:$0xff]
                %715 = vst [vmem:[%s167 + $0x888] sm:$0xff] %v714
                %v716 = vld [vmem:[%s166 + $0x1110] sm:$0xff]
                %717 = vst [vmem:[%s167 + $0x890] sm:$0xff] %v716
                %v718 = vld [vmem:[%s166 + $0x1118] sm:$0xff]
                %719 = vst [vmem:[%s167 + $0x898] sm:$0xff] %v718
                %v720 = vld [vmem:[%s166 + $0x1140] sm:$0xff]
                %721 = vst [vmem:[%s167 + $0x8a0] sm:$0xff] %v720
                %v722 = vld [vmem:[%s166 + $0x1148] sm:$0xff]
                %723 = vst [vmem:[%s167 + $0x8a8] sm:$0xff] %v722
                %v724 = vld [vmem:[%s166 + $0x1150] sm:$0xff]
                %725 = vst [vmem:[%s167 + $0x8b0] sm:$0xff] %v724
                %v726 = vld [vmem:[%s166 + $0x1158] sm:$0xff]
                %727 = vst [vmem:[%s167 + $0x8b8] sm:$0xff] %v726
                %v728 = vld [vmem:[%s166 + $0x1180] sm:$0xff]
                %729 = vst [vmem:[%s167 + $0x8c0] sm:$0xff] %v728
                %v730 = vld [vmem:[%s166 + $0x1188] sm:$0xff]
                %731 = vst [vmem:[%s167 + $0x8c8] sm:$0xff] %v730
                %v732 = vld [vmem:[%s166 + $0x1190] sm:$0xff]
                %733 = vst [vmem:[%s167 + $0x8d0] sm:$0xff] %v732
                %v734 = vld [vmem:[%s166 + $0x1198] sm:$0xff]
                %735 = vst [vmem:[%s167 + $0x8d8] sm:$0xff] %v734
                %v736 = vld [vmem:[%s166 + $0x11c0] sm:$0xff]
                %737 = vst [vmem:[%s167 + $0x8e0] sm:$0xff] %v736
                %v738 = vld [vmem:[%s166 + $0x11c8] sm:$0xff]
                %739 = vst [vmem:[%s167 + $0x8e8] sm:$0xff] %v738
                %v740 = vld [vmem:[%s166 + $0x11d0] sm:$0xff]
                %741 = vst [vmem:[%s167 + $0x8f0] sm:$0xff] %v740
                %v742 = vld [vmem:[%s166 + $0x11d8] sm:$0xff]
                %743 = vst [vmem:[%s167 + $0x8f8] sm:$0xff] %v742
              $region41: #{qnetwork_forward.5} parent=35 // loop_footer
                %s165 = sadd.s32 1, %s161
              $region42: #{qnetwork_forward.5} parent=35 // loop_footer_branch
                %160 = sbr.rel target = $region38
              $region43: #{qnetwork_forward.5} parent=35 // loop_exit
                _
            $region36: #{qnetwork_forward.5} parent=31 // pred_fallthru
              _
            // Predicated region
            $region44: #{qnetwork_forward.5} parent=31 // pred_check
              _
            $region45: #{qnetwork_forward.5} parent=31 // pred_check_branch
              %745 = sbr.rel target = $region47
            $region46: #{qnetwork_forward.5} parent=31 // pred_region
              _
            $region47: #{qnetwork_forward.5} parent=31 // pred_fallthru
              _
          $region32: #{qnetwork_forward.5} parent=27 // pred_fallthru
            _
          %746 = vnop
        $region28: #{qnetwork_forward.5} parent=23 // pred_fallthru
          _
      $region24: #{qnetwork_forward.5} parent=5 // pred_fallthru
        _
      %p747 = scmp.le.s32.totalorder 1, %s9
      %p748 = scmp.lt.s32.totalorder %s9, 5
      %p749 = pnand %p747, %p748
      %p750 = pneg %p749
      // Predicated region
      $region48: #{qnetwork_forward.5} parent=5 // pred_check
        _
      $region49: #{qnetwork_forward.5} parent=5 // pred_check_branch
        %752 = sbr.rel (%p749) target = $region51
      $region50: #{qnetwork_forward.5} parent=5 // pred_region
        %s753 = ssub.s32 %s9, 1
        %s754 = sand.u32 %s36, 1
        %s755 = sand.u32 %s36, 1
        %s756 = smul.addr %s755, 2304
        %s757 = scalar_lea.vmem [#allocation2], %s756
        // Predicated region
        $region52: #{qnetwork_forward.5} parent=50 // pred_check
          %p758 = pneg %p49
        $region53: #{qnetwork_forward.5} parent=50 // pred_check_branch
          %760 = sbr.rel (%p758) target = $region55
        $region54: #{qnetwork_forward.5} parent=50 // pred_region
          _
        $region55: #{qnetwork_forward.5} parent=50 // pred_fallthru
          _
        %s761 = sand.u32 %s36, 1
        %s762 = sand.u32 %s36, 1
        %s763 = smul.addr %s762, 2304
        %s764 = scalar_lea.vmem [#allocation2], %s763
        %p765 = pneg %p49
        %p766 = pneg %p46
        %p767 = pneg %p70
        %p768 = pneg %p67
        %p769 = pneg %p91
        %p770 = pneg %p88
        %p771 = pneg %p119
        %p772 = pneg %p116
        %s773 = sand.u32 %s106, 1
        %s774 = sand.u32 %s106, 1
        %s775 = smul.addr %s774, 128
        %s776 = scalar_lea.vmem [#allocation3], %s775
        %s777 = smul.u32 4, %s19
        %s778 = smul.u32 4, %s19
        %v779 = vld [vmem:[%s1] sm:$0xff]
        %v780 = vld [vmem:[%s1 + $0x8] sm:$0xff]
        %v781 = vld [vmem:[%s1 + $0x10] sm:$0xff]
        %v782 = vld [vmem:[%s1 + $0x18] sm:$0xff]
        %v783 = vld [vmem:[%s1 + $0x20] sm:$0xff]
        %v784 = vld [vmem:[%s1 + $0x28] sm:$0xff]
        %v785 = vld [vmem:[%s1 + $0x30] sm:$0xff]
        %v786 = vld [vmem:[%s1 + $0x38] sm:$0xff]
        %v787 = vld [vmem:[%s757] sm:$0xff]
        %v788 = vld [vmem:[%s757 + $0x8] sm:$0xff]
        %v789 = vld [vmem:[%s757 + $0x10] sm:$0xff]
        %v790 = vld [vmem:[%s757 + $0x18] sm:$0xff]
        %v791 = vld [vmem:[%s757 + $0x20] sm:$0xff]
        %v792 = vld [vmem:[%s757 + $0x28] sm:$0xff]
        %v793 = vld [vmem:[%s757 + $0x30] sm:$0xff]
        %v794 = vld [vmem:[%s757 + $0x38] sm:$0xff]
        %v795 = vld [vmem:[%s757 + $0x40] sm:$0xff]
        %v796 = vld [vmem:[%s757 + $0x48] sm:$0xff]
        %v797 = vld [vmem:[%s757 + $0x50] sm:$0xff]
        %v798 = vld [vmem:[%s757 + $0x58] sm:$0xff]
        %v799 = vld [vmem:[%s757 + $0x60] sm:$0xff]
        %v800 = vld [vmem:[%s757 + $0x68] sm:$0xff]
        %v801 = vld [vmem:[%s757 + $0x70] sm:$0xff]
        %v802 = vld [vmem:[%s757 + $0x78] sm:$0xff]
        %v803 = vld [vmem:[%s757 + $0x80] sm:$0xff]
        %v804 = vld [vmem:[%s757 + $0x88] sm:$0xff]
        %v805 = vld [vmem:[%s757 + $0x90] sm:$0xff]
        %v806 = vld [vmem:[%s757 + $0x98] sm:$0xff]
        %v807 = vld [vmem:[%s757 + $0xa0] sm:$0xff]
        %v808 = vld [vmem:[%s757 + $0xa8] sm:$0xff]
        %v809 = vld [vmem:[%s757 + $0xb0] sm:$0xff]
        %v810 = vld [vmem:[%s757 + $0xb8] sm:$0xff]
        %v811 = vld [vmem:[%s757 + $0xc0] sm:$0xff]
        %v812 = vld [vmem:[%s757 + $0xc8] sm:$0xff]
        %v813 = vld [vmem:[%s757 + $0xd0] sm:$0xff]
        %v814 = vld [vmem:[%s757 + $0xd8] sm:$0xff]
        %v815 = vld [vmem:[%s757 + $0xe0] sm:$0xff]
        %v816 = vld [vmem:[%s757 + $0xe8] sm:$0xff]
        %v817 = vld [vmem:[%s757 + $0xf0] sm:$0xff]
        %v818 = vld [vmem:[%s757 + $0xf8] sm:$0xff]
        %v819 = vld [vmem:[%s757 + $0x100] sm:$0xff]
        %v820 = vld [vmem:[%s757 + $0x108] sm:$0xff]
        %v821 = vld [vmem:[%s757 + $0x110] sm:$0xff]
        %v822 = vld [vmem:[%s757 + $0x118] sm:$0xff]
        %v823 = vld [vmem:[%s757 + $0x120] sm:$0xff]
        %v824 = vld [vmem:[%s757 + $0x128] sm:$0xff]
        %v825 = vld [vmem:[%s757 + $0x130] sm:$0xff]
        %v826 = vld [vmem:[%s757 + $0x138] sm:$0xff]
        %v827 = vld [vmem:[%s757 + $0x140] sm:$0xff]
        %v828 = vld [vmem:[%s757 + $0x148] sm:$0xff]
        %v829 = vld [vmem:[%s757 + $0x150] sm:$0xff]
        %v830 = vld [vmem:[%s757 + $0x158] sm:$0xff]
        %v831 = vld [vmem:[%s757 + $0x160] sm:$0xff]
        %v832 = vld [vmem:[%s757 + $0x168] sm:$0xff]
        %v833 = vld [vmem:[%s757 + $0x170] sm:$0xff]
        %v834 = vld [vmem:[%s757 + $0x178] sm:$0xff]
        %v835 = vld [vmem:[%s757 + $0x180] sm:$0xff]
        %v836 = vld [vmem:[%s757 + $0x188] sm:$0xff]
        %v837 = vld [vmem:[%s757 + $0x190] sm:$0xff]
        %v838 = vld [vmem:[%s757 + $0x198] sm:$0xff]
        %v839 = vld [vmem:[%s757 + $0x1a0] sm:$0xff]
        %v840 = vld [vmem:[%s757 + $0x1a8] sm:$0xff]
        %v841 = vld [vmem:[%s757 + $0x1b0] sm:$0xff]
        %v842 = vld [vmem:[%s757 + $0x1b8] sm:$0xff]
        %v843 = vld [vmem:[%s757 + $0x1c0] sm:$0xff]
        %v844 = vld [vmem:[%s757 + $0x1c8] sm:$0xff]
        %v845 = vld [vmem:[%s757 + $0x1d0] sm:$0xff]
        %v846 = vld [vmem:[%s757 + $0x1d8] sm:$0xff]
        %v847 = vld [vmem:[%s757 + $0x1e0] sm:$0xff]
        %v848 = vld [vmem:[%s757 + $0x1e8] sm:$0xff]
        %v849 = vld [vmem:[%s757 + $0x1f0] sm:$0xff]
        %v850 = vld [vmem:[%s757 + $0x1f8] sm:$0xff]
        %v851 = vld [vmem:[%s757 + $0x200] sm:$0xff]
        %v852 = vld [vmem:[%s757 + $0x208] sm:$0xff]
        %v853 = vld [vmem:[%s757 + $0x210] sm:$0xff]
        %v854 = vld [vmem:[%s757 + $0x218] sm:$0xff]
        %v855 = vld [vmem:[%s757 + $0x220] sm:$0xff]
        %v856 = vld [vmem:[%s757 + $0x228] sm:$0xff]
        %v857 = vld [vmem:[%s757 + $0x230] sm:$0xff]
        %v858 = vld [vmem:[%s757 + $0x238] sm:$0xff]
        %vm859 = vcmask 130048
        %v861 = vsel %vm859, %v780, 0
        %v864 = vsel %vm859, %v782, 0
        %v867 = vsel %vm859, %v784, 0
        %v870 = vsel %vm859, %v786, 0
        %872 = vmatpush.msra.mxu0 %v847
        %873 = vmatpush.msra.mxu0 %v843
        %874 = vmatpush.msra.mxu0 %v839
        %875 = vmatpush.msra.mxu0 %v835
        %876 = vmatpush.msra.mxu0 %v831
        %877 = vmatpush.msra.mxu0 %v827
        %878 = vmatpush.msra.mxu0 %v823
        %879 = vmatpush.msra.mxu0 %v819
        %880 = vmatpush.msra.mxu0 %v815
        %881 = vmatpush.msra.mxu0 %v811
        %882 = vmatpush.msra.mxu0 %v807
        %883 = vmatpush.msra.mxu0 %v803
        %884 = vmatpush.msra.mxu0 %v799
        %885 = vmatpush.msra.mxu0 %v795
        %886 = vmatpush.msra.mxu0 %v791
        %887 = vmatpush.msra.mxu0 %v787
        %888 = vmatmul.f32.gmra.mxu0 %v779
        %v889 = vpop.f32.mrf.mxu0
        %v890 = vadd.f32 0.0, %v889
        %891 = vmatmul.f32.gmra.mxu0 %v781
        %v892 = vpop.f32.mrf.mxu0
        %v893 = vadd.f32 0.0, %v892
        %894 = vmatmul.f32.gmra.mxu0 %v783
        %v895 = vpop.f32.mrf.mxu0
        %v896 = vadd.f32 0.0, %v895
        %897 = vmatmul.f32.gmra.mxu0 %v785
        %v898 = vpop.f32.mrf.mxu0
        %v899 = vadd.f32 0.0, %v898
        %900 = vdwg.mxu0
        %901 = vmatpush.msra.mxu0 0.0
        %902 = vmatpush.msra.mxu0 0.0
        %903 = vmatpush.msra.mxu0 0.0
        %904 = vmatpush.msra.mxu0 0.0
        %905 = vmatpush.msra.mxu0 0.0
        %906 = vmatpush.msra.mxu0 0.0
        %907 = vmatpush.msra.mxu0 0.0
        %908 = vmatpush.msra.mxu0 0.0
        %909 = vmatpush.msra.mxu0 0.0
        %910 = vmatpush.msra.mxu0 0.0
        %911 = vmatpush.msra.mxu0 0.0
        %912 = vmatpush.msra.mxu0 0.0
        %913 = vmatpush.msra.mxu0 0.0
        %914 = vmatpush.msra.mxu0 0.0
        %915 = vmatpush.msra.mxu0 %v855
        %916 = vmatpush.msra.mxu0 %v851
        %917 = vmatmul.f32.gmra.mxu0 %v861
        %v918 = vpop.f32.mrf.mxu0
        %v919 = vadd.f32 %v890, %v918
        %920 = vmatmul.f32.gmra.mxu0 %v864
        %v921 = vpop.f32.mrf.mxu0
        %v922 = vadd.f32 %v893, %v921
        %923 = vmatmul.f32.gmra.mxu0 %v867
        %v924 = vpop.f32.mrf.mxu0
        %v925 = vadd.f32 %v896, %v924
        %926 = vmatmul.f32.gmra.mxu0 %v870
        %v927 = vpop.f32.mrf.mxu0
        %v928 = vadd.f32 %v899, %v927
        %929 = vdwg.mxu0
        %930 = vmatpush.msra.mxu0 %v848
        %931 = vmatpush.msra.mxu0 %v844
        %932 = vmatpush.msra.mxu0 %v840
        %933 = vmatpush.msra.mxu0 %v836
        %934 = vmatpush.msra.mxu0 %v832
        %935 = vmatpush.msra.mxu0 %v828
        %936 = vmatpush.msra.mxu0 %v824
        %937 = vmatpush.msra.mxu0 %v820
        %938 = vmatpush.msra.mxu0 %v816
        %939 = vmatpush.msra.mxu0 %v812
        %940 = vmatpush.msra.mxu0 %v808
        %941 = vmatpush.msra.mxu0 %v804
        %942 = vmatpush.msra.mxu0 %v800
        %943 = vmatpush.msra.mxu0 %v796
        %944 = vmatpush.msra.mxu0 %v792
        %945 = vmatpush.msra.mxu0 %v788
        %946 = vmatmul.f32.gmra.mxu0 %v779
        %v947 = vpop.f32.mrf.mxu0
        %v948 = vadd.f32 0.0, %v947
        %949 = vmatmul.f32.gmra.mxu0 %v781
        %v950 = vpop.f32.mrf.mxu0
        %v951 = vadd.f32 0.0, %v950
        %952 = vmatmul.f32.gmra.mxu0 %v783
        %v953 = vpop.f32.mrf.mxu0
        %v954 = vadd.f32 0.0, %v953
        %955 = vmatmul.f32.gmra.mxu0 %v785
        %v956 = vpop.f32.mrf.mxu0
        %v957 = vadd.f32 0.0, %v956
        %958 = vdwg.mxu0
        %959 = vmatpush.msra.mxu0 0.0
        %960 = vmatpush.msra.mxu0 0.0
        %961 = vmatpush.msra.mxu0 0.0
        %962 = vmatpush.msra.mxu0 0.0
        %963 = vmatpush.msra.mxu0 0.0
        %964 = vmatpush.msra.mxu0 0.0
        %965 = vmatpush.msra.mxu0 0.0
        %966 = vmatpush.msra.mxu0 0.0
        %967 = vmatpush.msra.mxu0 0.0
        %968 = vmatpush.msra.mxu0 0.0
        %969 = vmatpush.msra.mxu0 0.0
        %970 = vmatpush.msra.mxu0 0.0
        %971 = vmatpush.msra.mxu0 0.0
        %972 = vmatpush.msra.mxu0 0.0
        %973 = vmatpush.msra.mxu0 %v856
        %974 = vmatpush.msra.mxu0 %v852
        %975 = vmatmul.f32.gmra.mxu0 %v861
        %v976 = vpop.f32.mrf.mxu0
        %v977 = vadd.f32 %v948, %v976
        %978 = vmatmul.f32.gmra.mxu0 %v864
        %v979 = vpop.f32.mrf.mxu0
        %v980 = vadd.f32 %v951, %v979
        %981 = vmatmul.f32.gmra.mxu0 %v867
        %v982 = vpop.f32.mrf.mxu0
        %v983 = vadd.f32 %v954, %v982
        %984 = vmatmul.f32.gmra.mxu0 %v870
        %v985 = vpop.f32.mrf.mxu0
        %v986 = vadd.f32 %v957, %v985
        %987 = vdwg.mxu0
        %988 = vmatpush.msra.mxu0 %v849
        %989 = vmatpush.msra.mxu0 %v845
        %990 = vmatpush.msra.mxu0 %v841
        %991 = vmatpush.msra.mxu0 %v837
        %992 = vmatpush.msra.mxu0 %v833
        %993 = vmatpush.msra.mxu0 %v829
        %994 = vmatpush.msra.mxu0 %v825
        %995 = vmatpush.msra.mxu0 %v821
        %996 = vmatpush.msra.mxu0 %v817
        %997 = vmatpush.msra.mxu0 %v813
        %998 = vmatpush.msra.mxu0 %v809
        %999 = vmatpush.msra.mxu0 %v805
        %1000 = vmatpush.msra.mxu0 %v801
        %1001 = vmatpush.msra.mxu0 %v797
        %1002 = vmatpush.msra.mxu0 %v793
        %1003 = vmatpush.msra.mxu0 %v789
        %1004 = vmatmul.f32.gmra.mxu0 %v779
        %v1005 = vpop.f32.mrf.mxu0
        %v1006 = vadd.f32 0.0, %v1005
        %1007 = vmatmul.f32.gmra.mxu0 %v781
        %v1008 = vpop.f32.mrf.mxu0
        %v1009 = vadd.f32 0.0, %v1008
        %1010 = vmatmul.f32.gmra.mxu0 %v783
        %v1011 = vpop.f32.mrf.mxu0
        %v1012 = vadd.f32 0.0, %v1011
        %1013 = vmatmul.f32.gmra.mxu0 %v785
        %v1014 = vpop.f32.mrf.mxu0
        %v1015 = vadd.f32 0.0, %v1014
        %1016 = vdwg.mxu0
        %1017 = vmatpush.msra.mxu0 0.0
        %1018 = vmatpush.msra.mxu0 0.0
        %1019 = vmatpush.msra.mxu0 0.0
        %1020 = vmatpush.msra.mxu0 0.0
        %1021 = vmatpush.msra.mxu0 0.0
        %1022 = vmatpush.msra.mxu0 0.0
        %1023 = vmatpush.msra.mxu0 0.0
        %1024 = vmatpush.msra.mxu0 0.0
        %1025 = vmatpush.msra.mxu0 0.0
        %1026 = vmatpush.msra.mxu0 0.0
        %1027 = vmatpush.msra.mxu0 0.0
        %1028 = vmatpush.msra.mxu0 0.0
        %1029 = vmatpush.msra.mxu0 0.0
        %1030 = vmatpush.msra.mxu0 0.0
        %1031 = vmatpush.msra.mxu0 %v857
        %1032 = vmatpush.msra.mxu0 %v853
        %1033 = vmatmul.f32.gmra.mxu0 %v861
        %v1034 = vpop.f32.mrf.mxu0
        %v1035 = vadd.f32 %v1006, %v1034
        %1036 = vmatmul.f32.gmra.mxu0 %v864
        %v1037 = vpop.f32.mrf.mxu0
        %v1038 = vadd.f32 %v1009, %v1037
        %1039 = vmatmul.f32.gmra.mxu0 %v867
        %v1040 = vpop.f32.mrf.mxu0
        %v1041 = vadd.f32 %v1012, %v1040
        %1042 = vmatmul.f32.gmra.mxu0 %v870
        %v1043 = vpop.f32.mrf.mxu0
        %v1044 = vadd.f32 %v1015, %v1043
        %1045 = vdwg.mxu0
        %1046 = vmatpush.msra.mxu0 %v850
        %1047 = vmatpush.msra.mxu0 %v846
        %1048 = vmatpush.msra.mxu0 %v842
        %1049 = vmatpush.msra.mxu0 %v838
        %1050 = vmatpush.msra.mxu0 %v834
        %1051 = vmatpush.msra.mxu0 %v830
        %1052 = vmatpush.msra.mxu0 %v826
        %1053 = vmatpush.msra.mxu0 %v822
        %1054 = vmatpush.msra.mxu0 %v818
        %1055 = vmatpush.msra.mxu0 %v814
        %1056 = vmatpush.msra.mxu0 %v810
        %1057 = vmatpush.msra.mxu0 %v806
        %1058 = vmatpush.msra.mxu0 %v802
        %1059 = vmatpush.msra.mxu0 %v798
        %1060 = vmatpush.msra.mxu0 %v794
        %1061 = vmatpush.msra.mxu0 %v790
        %1062 = vmatmul.f32.gmra.mxu0 %v779
        %v1063 = vpop.f32.mrf.mxu0
        %v1064 = vadd.f32 0.0, %v1063
        %1065 = vmatmul.f32.gmra.mxu0 %v781
        %v1066 = vpop.f32.mrf.mxu0
        %v1067 = vadd.f32 0.0, %v1066
        %1068 = vmatmul.f32.gmra.mxu0 %v783
        %v1069 = vpop.f32.mrf.mxu0
        %v1070 = vadd.f32 0.0, %v1069
        %1071 = vmatmul.f32.gmra.mxu0 %v785
        %v1072 = vpop.f32.mrf.mxu0
        %v1073 = vadd.f32 0.0, %v1072
        %1074 = vdwg.mxu0
        %1075 = vmatpush.msra.mxu0 0.0
        %1076 = vmatpush.msra.mxu0 0.0
        %1077 = vmatpush.msra.mxu0 0.0
        %1078 = vmatpush.msra.mxu0 0.0
        %1079 = vmatpush.msra.mxu0 0.0
        %1080 = vmatpush.msra.mxu0 0.0
        %1081 = vmatpush.msra.mxu0 0.0
        %1082 = vmatpush.msra.mxu0 0.0
        %1083 = vmatpush.msra.mxu0 0.0
        %1084 = vmatpush.msra.mxu0 0.0
        %1085 = vmatpush.msra.mxu0 0.0
        %1086 = vmatpush.msra.mxu0 0.0
        %1087 = vmatpush.msra.mxu0 0.0
        %1088 = vmatpush.msra.mxu0 0.0
        %1089 = vmatpush.msra.mxu0 %v858
        %1090 = vmatpush.msra.mxu0 %v854
        %1091 = vmatmul.f32.gmra.mxu0 %v861
        %v1092 = vpop.f32.mrf.mxu0
        %v1093 = vadd.f32 %v1064, %v1092
        %1094 = vmatmul.f32.gmra.mxu0 %v864
        %v1095 = vpop.f32.mrf.mxu0
        %v1096 = vadd.f32 %v1067, %v1095
        %1097 = vmatmul.f32.gmra.mxu0 %v867
        %v1098 = vpop.f32.mrf.mxu0
        %v1099 = vadd.f32 %v1070, %v1098
        %1100 = vmatmul.f32.gmra.mxu0 %v870
        %v1101 = vpop.f32.mrf.mxu0
        %v1102 = vadd.f32 %v1073, %v1101
        %1103 = vdwg.mxu0
        %s1104 = scalar_lea.vmem %s757, 576 [#allocation2]
        %v1105 = vld [vmem:[%s1104] sm:$0xff]
        %v1106 = vld [vmem:[%s1104 + $0x8] sm:$0xff]
        %v1107 = vld [vmem:[%s1104 + $0x10] sm:$0xff]
        %v1108 = vld [vmem:[%s1104 + $0x18] sm:$0xff]
        %v1109 = vld [vmem:[%s1104 + $0x20] sm:$0xff]
        %v1110 = vld [vmem:[%s1104 + $0x28] sm:$0xff]
        %v1111 = vld [vmem:[%s1104 + $0x30] sm:$0xff]
        %v1112 = vld [vmem:[%s1104 + $0x38] sm:$0xff]
        %v1113 = vld [vmem:[%s1104 + $0x40] sm:$0xff]
        %v1114 = vld [vmem:[%s1104 + $0x48] sm:$0xff]
        %v1115 = vld [vmem:[%s1104 + $0x50] sm:$0xff]
        %v1116 = vld [vmem:[%s1104 + $0x58] sm:$0xff]
        %v1117 = vld [vmem:[%s1104 + $0x60] sm:$0xff]
        %v1118 = vld [vmem:[%s1104 + $0x68] sm:$0xff]
        %v1119 = vld [vmem:[%s1104 + $0x70] sm:$0xff]
        %v1120 = vld [vmem:[%s1104 + $0x78] sm:$0xff]
        %v1121 = vld [vmem:[%s1104 + $0x80] sm:$0xff]
        %v1122 = vld [vmem:[%s1104 + $0x88] sm:$0xff]
        %v1123 = vld [vmem:[%s1104 + $0x90] sm:$0xff]
        %v1124 = vld [vmem:[%s1104 + $0x98] sm:$0xff]
        %v1125 = vld [vmem:[%s1104 + $0xa0] sm:$0xff]
        %v1126 = vld [vmem:[%s1104 + $0xa8] sm:$0xff]
        %v1127 = vld [vmem:[%s1104 + $0xb0] sm:$0xff]
        %v1128 = vld [vmem:[%s1104 + $0xb8] sm:$0xff]
        %v1129 = vld [vmem:[%s1104 + $0xc0] sm:$0xff]
        %v1130 = vld [vmem:[%s1104 + $0xc8] sm:$0xff]
        %v1131 = vld [vmem:[%s1104 + $0xd0] sm:$0xff]
        %v1132 = vld [vmem:[%s1104 + $0xd8] sm:$0xff]
        %v1133 = vld [vmem:[%s1104 + $0xe0] sm:$0xff]
        %v1134 = vld [vmem:[%s1104 + $0xe8] sm:$0xff]
        %v1135 = vld [vmem:[%s1104 + $0xf0] sm:$0xff]
        %v1136 = vld [vmem:[%s1104 + $0xf8] sm:$0xff]
        %v1137 = vld [vmem:[%s1104 + $0x100] sm:$0xff]
        %v1138 = vld [vmem:[%s1104 + $0x108] sm:$0xff]
        %v1139 = vld [vmem:[%s1104 + $0x110] sm:$0xff]
        %v1140 = vld [vmem:[%s1104 + $0x118] sm:$0xff]
        %v1141 = vld [vmem:[%s1104 + $0x120] sm:$0xff]
        %v1142 = vld [vmem:[%s1104 + $0x128] sm:$0xff]
        %v1143 = vld [vmem:[%s1104 + $0x130] sm:$0xff]
        %v1144 = vld [vmem:[%s1104 + $0x138] sm:$0xff]
        %v1145 = vld [vmem:[%s1104 + $0x140] sm:$0xff]
        %v1146 = vld [vmem:[%s1104 + $0x148] sm:$0xff]
        %v1147 = vld [vmem:[%s1104 + $0x150] sm:$0xff]
        %v1148 = vld [vmem:[%s1104 + $0x158] sm:$0xff]
        %v1149 = vld [vmem:[%s1104 + $0x160] sm:$0xff]
        %v1150 = vld [vmem:[%s1104 + $0x168] sm:$0xff]
        %v1151 = vld [vmem:[%s1104 + $0x170] sm:$0xff]
        %v1152 = vld [vmem:[%s1104 + $0x178] sm:$0xff]
        %v1153 = vld [vmem:[%s1104 + $0x180] sm:$0xff]
        %v1154 = vld [vmem:[%s1104 + $0x188] sm:$0xff]
        %v1155 = vld [vmem:[%s1104 + $0x190] sm:$0xff]
        %v1156 = vld [vmem:[%s1104 + $0x198] sm:$0xff]
        %v1157 = vld [vmem:[%s1104 + $0x1a0] sm:$0xff]
        %v1158 = vld [vmem:[%s1104 + $0x1a8] sm:$0xff]
        %v1159 = vld [vmem:[%s1104 + $0x1b0] sm:$0xff]
        %v1160 = vld [vmem:[%s1104 + $0x1b8] sm:$0xff]
        %v1161 = vld [vmem:[%s1104 + $0x1c0] sm:$0xff]
        %v1162 = vld [vmem:[%s1104 + $0x1c8] sm:$0xff]
        %v1163 = vld [vmem:[%s1104 + $0x1d0] sm:$0xff]
        %v1164 = vld [vmem:[%s1104 + $0x1d8] sm:$0xff]
        %v1165 = vld [vmem:[%s1104 + $0x1e0] sm:$0xff]
        %v1166 = vld [vmem:[%s1104 + $0x1e8] sm:$0xff]
        %v1167 = vld [vmem:[%s1104 + $0x1f0] sm:$0xff]
        %v1168 = vld [vmem:[%s1104 + $0x1f8] sm:$0xff]
        %v1169 = vld [vmem:[%s1104 + $0x200] sm:$0xff]
        %v1170 = vld [vmem:[%s1104 + $0x208] sm:$0xff]
        %v1171 = vld [vmem:[%s1104 + $0x210] sm:$0xff]
        %v1172 = vld [vmem:[%s1104 + $0x218] sm:$0xff]
        %v1173 = vld [vmem:[%s1104 + $0x220] sm:$0xff]
        %v1174 = vld [vmem:[%s1104 + $0x228] sm:$0xff]
        %v1175 = vld [vmem:[%s1104 + $0x230] sm:$0xff]
        %v1176 = vld [vmem:[%s1104 + $0x238] sm:$0xff]
        %1177 = vmatpush.msra.mxu0 %v1165
        %1178 = vmatpush.msra.mxu0 %v1161
        %1179 = vmatpush.msra.mxu0 %v1157
        %1180 = vmatpush.msra.mxu0 %v1153
        %1181 = vmatpush.msra.mxu0 %v1149
        %1182 = vmatpush.msra.mxu0 %v1145
        %1183 = vmatpush.msra.mxu0 %v1141
        %1184 = vmatpush.msra.mxu0 %v1137
        %1185 = vmatpush.msra.mxu0 %v1133
        %1186 = vmatpush.msra.mxu0 %v1129
        %1187 = vmatpush.msra.mxu0 %v1125
        %1188 = vmatpush.msra.mxu0 %v1121
        %1189 = vmatpush.msra.mxu0 %v1117
        %1190 = vmatpush.msra.mxu0 %v1113
        %1191 = vmatpush.msra.mxu0 %v1109
        %1192 = vmatpush.msra.mxu0 %v1105
        %1193 = vmatmul.f32.gmra.mxu0 %v779
        %v1194 = vpop.f32.mrf.mxu0
        %v1195 = vadd.f32 0.0, %v1194
        %1196 = vmatmul.f32.gmra.mxu0 %v781
        %v1197 = vpop.f32.mrf.mxu0
        %v1198 = vadd.f32 0.0, %v1197
        %1199 = vmatmul.f32.gmra.mxu0 %v783
        %v1200 = vpop.f32.mrf.mxu0
        %v1201 = vadd.f32 0.0, %v1200
        %1202 = vmatmul.f32.gmra.mxu0 %v785
        %v1203 = vpop.f32.mrf.mxu0
        %v1204 = vadd.f32 0.0, %v1203
        %1205 = vdwg.mxu0
        %1206 = vmatpush.msra.mxu0 0.0
        %1207 = vmatpush.msra.mxu0 0.0
        %1208 = vmatpush.msra.mxu0 0.0
        %1209 = vmatpush.msra.mxu0 0.0
        %1210 = vmatpush.msra.mxu0 0.0
        %1211 = vmatpush.msra.mxu0 0.0
        %1212 = vmatpush.msra.mxu0 0.0
        %1213 = vmatpush.msra.mxu0 0.0
        %1214 = vmatpush.msra.mxu0 0.0
        %1215 = vmatpush.msra.mxu0 0.0
        %1216 = vmatpush.msra.mxu0 0.0
        %1217 = vmatpush.msra.mxu0 0.0
        %1218 = vmatpush.msra.mxu0 0.0
        %1219 = vmatpush.msra.mxu0 0.0
        %1220 = vmatpush.msra.mxu0 %v1173
        %1221 = vmatpush.msra.mxu0 %v1169
        %1222 = vmatmul.f32.gmra.mxu0 %v861
        %v1223 = vpop.f32.mrf.mxu0
        %v1224 = vadd.f32 %v1195, %v1223
        %1225 = vmatmul.f32.gmra.mxu0 %v864
        %v1226 = vpop.f32.mrf.mxu0
        %v1227 = vadd.f32 %v1198, %v1226
        %1228 = vmatmul.f32.gmra.mxu0 %v867
        %v1229 = vpop.f32.mrf.mxu0
        %v1230 = vadd.f32 %v1201, %v1229
        %1231 = vmatmul.f32.gmra.mxu0 %v870
        %v1232 = vpop.f32.mrf.mxu0
        %v1233 = vadd.f32 %v1204, %v1232
        %1234 = vdwg.mxu0
        %1235 = vmatpush.msra.mxu0 %v1166
        %1236 = vmatpush.msra.mxu0 %v1162
        %1237 = vmatpush.msra.mxu0 %v1158
        %1238 = vmatpush.msra.mxu0 %v1154
        %1239 = vmatpush.msra.mxu0 %v1150
        %1240 = vmatpush.msra.mxu0 %v1146
        %1241 = vmatpush.msra.mxu0 %v1142
        %1242 = vmatpush.msra.mxu0 %v1138
        %1243 = vmatpush.msra.mxu0 %v1134
        %1244 = vmatpush.msra.mxu0 %v1130
        %1245 = vmatpush.msra.mxu0 %v1126
        %1246 = vmatpush.msra.mxu0 %v1122
        %1247 = vmatpush.msra.mxu0 %v1118
        %1248 = vmatpush.msra.mxu0 %v1114
        %1249 = vmatpush.msra.mxu0 %v1110
        %1250 = vmatpush.msra.mxu0 %v1106
        %1251 = vmatmul.f32.gmra.mxu0 %v779
        %v1252 = vpop.f32.mrf.mxu0
        %v1253 = vadd.f32 0.0, %v1252
        %1254 = vmatmul.f32.gmra.mxu0 %v781
        %v1255 = vpop.f32.mrf.mxu0
        %v1256 = vadd.f32 0.0, %v1255
        %1257 = vmatmul.f32.gmra.mxu0 %v783
        %v1258 = vpop.f32.mrf.mxu0
        %v1259 = vadd.f32 0.0, %v1258
        %1260 = vmatmul.f32.gmra.mxu0 %v785
        %v1261 = vpop.f32.mrf.mxu0
        %v1262 = vadd.f32 0.0, %v1261
        %1263 = vdwg.mxu0
        %1264 = vmatpush.msra.mxu0 0.0
        %1265 = vmatpush.msra.mxu0 0.0
        %1266 = vmatpush.msra.mxu0 0.0
        %1267 = vmatpush.msra.mxu0 0.0
        %1268 = vmatpush.msra.mxu0 0.0
        %1269 = vmatpush.msra.mxu0 0.0
        %1270 = vmatpush.msra.mxu0 0.0
        %1271 = vmatpush.msra.mxu0 0.0
        %1272 = vmatpush.msra.mxu0 0.0
        %1273 = vmatpush.msra.mxu0 0.0
        %1274 = vmatpush.msra.mxu0 0.0
        %1275 = vmatpush.msra.mxu0 0.0
        %1276 = vmatpush.msra.mxu0 0.0
        %1277 = vmatpush.msra.mxu0 0.0
        %1278 = vmatpush.msra.mxu0 %v1174
        %1279 = vmatpush.msra.mxu0 %v1170
        %1280 = vmatmul.f32.gmra.mxu0 %v861
        %v1281 = vpop.f32.mrf.mxu0
        %v1282 = vadd.f32 %v1253, %v1281
        %1283 = vmatmul.f32.gmra.mxu0 %v864
        %v1284 = vpop.f32.mrf.mxu0
        %v1285 = vadd.f32 %v1256, %v1284
        %1286 = vmatmul.f32.gmra.mxu0 %v867
        %v1287 = vpop.f32.mrf.mxu0
        %v1288 = vadd.f32 %v1259, %v1287
        %1289 = vmatmul.f32.gmra.mxu0 %v870
        %v1290 = vpop.f32.mrf.mxu0
        %v1291 = vadd.f32 %v1262, %v1290
        %1292 = vdwg.mxu0
        %1293 = vmatpush.msra.mxu0 %v1167
        %1294 = vmatpush.msra.mxu0 %v1163
        %1295 = vmatpush.msra.mxu0 %v1159
        %1296 = vmatpush.msra.mxu0 %v1155
        %1297 = vmatpush.msra.mxu0 %v1151
        %1298 = vmatpush.msra.mxu0 %v1147
        %1299 = vmatpush.msra.mxu0 %v1143
        %1300 = vmatpush.msra.mxu0 %v1139
        %1301 = vmatpush.msra.mxu0 %v1135
        %1302 = vmatpush.msra.mxu0 %v1131
        %1303 = vmatpush.msra.mxu0 %v1127
        %1304 = vmatpush.msra.mxu0 %v1123
        %1305 = vmatpush.msra.mxu0 %v1119
        %1306 = vmatpush.msra.mxu0 %v1115
        %1307 = vmatpush.msra.mxu0 %v1111
        %1308 = vmatpush.msra.mxu0 %v1107
        %1309 = vmatmul.f32.gmra.mxu0 %v779
        %v1310 = vpop.f32.mrf.mxu0
        %v1311 = vadd.f32 0.0, %v1310
        %1312 = vmatmul.f32.gmra.mxu0 %v781
        %v1313 = vpop.f32.mrf.mxu0
        %v1314 = vadd.f32 0.0, %v1313
        %1315 = vmatmul.f32.gmra.mxu0 %v783
        %v1316 = vpop.f32.mrf.mxu0
        %v1317 = vadd.f32 0.0, %v1316
        %1318 = vmatmul.f32.gmra.mxu0 %v785
        %v1319 = vpop.f32.mrf.mxu0
        %v1320 = vadd.f32 0.0, %v1319
        %1321 = vdwg.mxu0
        %1322 = vmatpush.msra.mxu0 0.0
        %1323 = vmatpush.msra.mxu0 0.0
        %1324 = vmatpush.msra.mxu0 0.0
        %1325 = vmatpush.msra.mxu0 0.0
        %1326 = vmatpush.msra.mxu0 0.0
        %1327 = vmatpush.msra.mxu0 0.0
        %1328 = vmatpush.msra.mxu0 0.0
        %1329 = vmatpush.msra.mxu0 0.0
        %1330 = vmatpush.msra.mxu0 0.0
        %1331 = vmatpush.msra.mxu0 0.0
        %1332 = vmatpush.msra.mxu0 0.0
        %1333 = vmatpush.msra.mxu0 0.0
        %1334 = vmatpush.msra.mxu0 0.0
        %1335 = vmatpush.msra.mxu0 0.0
        %1336 = vmatpush.msra.mxu0 %v1175
        %1337 = vmatpush.msra.mxu0 %v1171
        %1338 = vmatmul.f32.gmra.mxu0 %v861
        %v1339 = vpop.f32.mrf.mxu0
        %v1340 = vadd.f32 %v1311, %v1339
        %1341 = vmatmul.f32.gmra.mxu0 %v864
        %v1342 = vpop.f32.mrf.mxu0
        %v1343 = vadd.f32 %v1314, %v1342
        %1344 = vmatmul.f32.gmra.mxu0 %v867
        %v1345 = vpop.f32.mrf.mxu0
        %v1346 = vadd.f32 %v1317, %v1345
        %1347 = vmatmul.f32.gmra.mxu0 %v870
        %v1348 = vpop.f32.mrf.mxu0
        %v1349 = vadd.f32 %v1320, %v1348
        %1350 = vdwg.mxu0
        %1351 = vmatpush.msra.mxu0 %v1168
        %1352 = vmatpush.msra.mxu0 %v1164
        %1353 = vmatpush.msra.mxu0 %v1160
        %1354 = vmatpush.msra.mxu0 %v1156
        %1355 = vmatpush.msra.mxu0 %v1152
        %1356 = vmatpush.msra.mxu0 %v1148
        %1357 = vmatpush.msra.mxu0 %v1144
        %1358 = vmatpush.msra.mxu0 %v1140
        %1359 = vmatpush.msra.mxu0 %v1136
        %1360 = vmatpush.msra.mxu0 %v1132
        %1361 = vmatpush.msra.mxu0 %v1128
        %1362 = vmatpush.msra.mxu0 %v1124
        %1363 = vmatpush.msra.mxu0 %v1120
        %1364 = vmatpush.msra.mxu0 %v1116
        %1365 = vmatpush.msra.mxu0 %v1112
        %1366 = vmatpush.msra.mxu0 %v1108
        %1367 = vmatmul.f32.gmra.mxu0 %v779
        %v1368 = vpop.f32.mrf.mxu0
        %v1369 = vadd.f32 0.0, %v1368
        %1370 = vmatmul.f32.gmra.mxu0 %v781
        %v1371 = vpop.f32.mrf.mxu0
        %v1372 = vadd.f32 0.0, %v1371
        %1373 = vmatmul.f32.gmra.mxu0 %v783
        %v1374 = vpop.f32.mrf.mxu0
        %v1375 = vadd.f32 0.0, %v1374
        %1376 = vmatmul.f32.gmra.mxu0 %v785
        %v1377 = vpop.f32.mrf.mxu0
        %v1378 = vadd.f32 0.0, %v1377
        %1379 = vdwg.mxu0
        %1380 = vmatpush.msra.mxu0 0.0
        %1381 = vmatpush.msra.mxu0 0.0
        %1382 = vmatpush.msra.mxu0 0.0
        %1383 = vmatpush.msra.mxu0 0.0
        %1384 = vmatpush.msra.mxu0 0.0
        %1385 = vmatpush.msra.mxu0 0.0
        %1386 = vmatpush.msra.mxu0 0.0
        %1387 = vmatpush.msra.mxu0 0.0
        %1388 = vmatpush.msra.mxu0 0.0
        %1389 = vmatpush.msra.mxu0 0.0
        %1390 = vmatpush.msra.mxu0 0.0
        %1391 = vmatpush.msra.mxu0 0.0
        %1392 = vmatpush.msra.mxu0 0.0
        %1393 = vmatpush.msra.mxu0 0.0
        %1394 = vmatpush.msra.mxu0 %v1176
        %1395 = vmatpush.msra.mxu0 %v1172
        %1396 = vmatmul.f32.gmra.mxu0 %v861
        %v1397 = vpop.f32.mrf.mxu0
        %v1398 = vadd.f32 %v1369, %v1397
        %1399 = vmatmul.f32.gmra.mxu0 %v864
        %v1400 = vpop.f32.mrf.mxu0
        %v1401 = vadd.f32 %v1372, %v1400
        %1402 = vmatmul.f32.gmra.mxu0 %v867
        %v1403 = vpop.f32.mrf.mxu0
        %v1404 = vadd.f32 %v1375, %v1403
        %1405 = vmatmul.f32.gmra.mxu0 %v870
        %v1406 = vpop.f32.mrf.mxu0
        %v1407 = vadd.f32 %v1378, %v1406
        %1408 = vdwg.mxu0
        %v1409 = vmax.f32 %v919, %v1224
        %v1410 = vmax.f32 %v977, %v1282
        %v1411 = vmax.f32 %v1035, %v1340
        %v1412 = vmax.f32 %v1093, %v1398
        %v1413 = vmax.f32 %v922, %v1227
        %v1414 = vmax.f32 %v980, %v1285
        %v1415 = vmax.f32 %v1038, %v1343
        %v1416 = vmax.f32 %v1096, %v1401
        %v1417 = vmax.f32 %v925, %v1230
        %v1418 = vmax.f32 %v983, %v1288
        %v1419 = vmax.f32 %v1041, %v1346
        %v1420 = vmax.f32 %v1099, %v1404
        %v1421 = vmax.f32 %v928, %v1233
        %v1422 = vmax.f32 %v986, %v1291
        %v1423 = vmax.f32 %v1044, %v1349
        %v1424 = vmax.f32 %v1102, %v1407
        %s1425 = scalar_lea.vmem %s757, 1152 [#allocation2]
        %v1426 = vld [vmem:[%s1425] sm:$0xff]
        %v1427 = vld [vmem:[%s1425 + $0x8] sm:$0xff]
        %v1428 = vld [vmem:[%s1425 + $0x10] sm:$0xff]
        %v1429 = vld [vmem:[%s1425 + $0x18] sm:$0xff]
        %v1430 = vld [vmem:[%s1425 + $0x20] sm:$0xff]
        %v1431 = vld [vmem:[%s1425 + $0x28] sm:$0xff]
        %v1432 = vld [vmem:[%s1425 + $0x30] sm:$0xff]
        %v1433 = vld [vmem:[%s1425 + $0x38] sm:$0xff]
        %v1434 = vld [vmem:[%s1425 + $0x40] sm:$0xff]
        %v1435 = vld [vmem:[%s1425 + $0x48] sm:$0xff]
        %v1436 = vld [vmem:[%s1425 + $0x50] sm:$0xff]
        %v1437 = vld [vmem:[%s1425 + $0x58] sm:$0xff]
        %v1438 = vld [vmem:[%s1425 + $0x60] sm:$0xff]
        %v1439 = vld [vmem:[%s1425 + $0x68] sm:$0xff]
        %v1440 = vld [vmem:[%s1425 + $0x70] sm:$0xff]
        %v1441 = vld [vmem:[%s1425 + $0x78] sm:$0xff]
        %v1442 = vld [vmem:[%s1425 + $0x80] sm:$0xff]
        %v1443 = vld [vmem:[%s1425 + $0x88] sm:$0xff]
        %v1444 = vld [vmem:[%s1425 + $0x90] sm:$0xff]
        %v1445 = vld [vmem:[%s1425 + $0x98] sm:$0xff]
        %v1446 = vld [vmem:[%s1425 + $0xa0] sm:$0xff]
        %v1447 = vld [vmem:[%s1425 + $0xa8] sm:$0xff]
        %v1448 = vld [vmem:[%s1425 + $0xb0] sm:$0xff]
        %v1449 = vld [vmem:[%s1425 + $0xb8] sm:$0xff]
        %v1450 = vld [vmem:[%s1425 + $0xc0] sm:$0xff]
        %v1451 = vld [vmem:[%s1425 + $0xc8] sm:$0xff]
        %v1452 = vld [vmem:[%s1425 + $0xd0] sm:$0xff]
        %v1453 = vld [vmem:[%s1425 + $0xd8] sm:$0xff]
        %v1454 = vld [vmem:[%s1425 + $0xe0] sm:$0xff]
        %v1455 = vld [vmem:[%s1425 + $0xe8] sm:$0xff]
        %v1456 = vld [vmem:[%s1425 + $0xf0] sm:$0xff]
        %v1457 = vld [vmem:[%s1425 + $0xf8] sm:$0xff]
        %v1458 = vld [vmem:[%s1425 + $0x100] sm:$0xff]
        %v1459 = vld [vmem:[%s1425 + $0x108] sm:$0xff]
        %v1460 = vld [vmem:[%s1425 + $0x110] sm:$0xff]
        %v1461 = vld [vmem:[%s1425 + $0x118] sm:$0xff]
        %v1462 = vld [vmem:[%s1425 + $0x120] sm:$0xff]
        %v1463 = vld [vmem:[%s1425 + $0x128] sm:$0xff]
        %v1464 = vld [vmem:[%s1425 + $0x130] sm:$0xff]
        %v1465 = vld [vmem:[%s1425 + $0x138] sm:$0xff]
        %v1466 = vld [vmem:[%s1425 + $0x140] sm:$0xff]
        %v1467 = vld [vmem:[%s1425 + $0x148] sm:$0xff]
        %v1468 = vld [vmem:[%s1425 + $0x150] sm:$0xff]
        %v1469 = vld [vmem:[%s1425 + $0x158] sm:$0xff]
        %v1470 = vld [vmem:[%s1425 + $0x160] sm:$0xff]
        %v1471 = vld [vmem:[%s1425 + $0x168] sm:$0xff]
        %v1472 = vld [vmem:[%s1425 + $0x170] sm:$0xff]
        %v1473 = vld [vmem:[%s1425 + $0x178] sm:$0xff]
        %v1474 = vld [vmem:[%s1425 + $0x180] sm:$0xff]
        %v1475 = vld [vmem:[%s1425 + $0x188] sm:$0xff]
        %v1476 = vld [vmem:[%s1425 + $0x190] sm:$0xff]
        %v1477 = vld [vmem:[%s1425 + $0x198] sm:$0xff]
        %v1478 = vld [vmem:[%s1425 + $0x1a0] sm:$0xff]
        %v1479 = vld [vmem:[%s1425 + $0x1a8] sm:$0xff]
        %v1480 = vld [vmem:[%s1425 + $0x1b0] sm:$0xff]
        %v1481 = vld [vmem:[%s1425 + $0x1b8] sm:$0xff]
        %v1482 = vld [vmem:[%s1425 + $0x1c0] sm:$0xff]
        %v1483 = vld [vmem:[%s1425 + $0x1c8] sm:$0xff]
        %v1484 = vld [vmem:[%s1425 + $0x1d0] sm:$0xff]
        %v1485 = vld [vmem:[%s1425 + $0x1d8] sm:$0xff]
        %v1486 = vld [vmem:[%s1425 + $0x1e0] sm:$0xff]
        %v1487 = vld [vmem:[%s1425 + $0x1e8] sm:$0xff]
        %v1488 = vld [vmem:[%s1425 + $0x1f0] sm:$0xff]
        %v1489 = vld [vmem:[%s1425 + $0x1f8] sm:$0xff]
        %v1490 = vld [vmem:[%s1425 + $0x200] sm:$0xff]
        %v1491 = vld [vmem:[%s1425 + $0x208] sm:$0xff]
        %v1492 = vld [vmem:[%s1425 + $0x210] sm:$0xff]
        %v1493 = vld [vmem:[%s1425 + $0x218] sm:$0xff]
        %v1494 = vld [vmem:[%s1425 + $0x220] sm:$0xff]
        %v1495 = vld [vmem:[%s1425 + $0x228] sm:$0xff]
        %v1496 = vld [vmem:[%s1425 + $0x230] sm:$0xff]
        %v1497 = vld [vmem:[%s1425 + $0x238] sm:$0xff]
        %1498 = vmatpush.msra.mxu0 %v1486
        %1499 = vmatpush.msra.mxu0 %v1482
        %1500 = vmatpush.msra.mxu0 %v1478
        %1501 = vmatpush.msra.mxu0 %v1474
        %1502 = vmatpush.msra.mxu0 %v1470
        %1503 = vmatpush.msra.mxu0 %v1466
        %1504 = vmatpush.msra.mxu0 %v1462
        %1505 = vmatpush.msra.mxu0 %v1458
        %1506 = vmatpush.msra.mxu0 %v1454
        %1507 = vmatpush.msra.mxu0 %v1450
        %1508 = vmatpush.msra.mxu0 %v1446
        %1509 = vmatpush.msra.mxu0 %v1442
        %1510 = vmatpush.msra.mxu0 %v1438
        %1511 = vmatpush.msra.mxu0 %v1434
        %1512 = vmatpush.msra.mxu0 %v1430
        %1513 = vmatpush.msra.mxu0 %v1426
        %1514 = vmatmul.f32.gmra.mxu0 %v779
        %v1515 = vpop.f32.mrf.mxu0
        %v1516 = vadd.f32 0.0, %v1515
        %1517 = vmatmul.f32.gmra.mxu0 %v781
        %v1518 = vpop.f32.mrf.mxu0
        %v1519 = vadd.f32 0.0, %v1518
        %1520 = vmatmul.f32.gmra.mxu0 %v783
        %v1521 = vpop.f32.mrf.mxu0
        %v1522 = vadd.f32 0.0, %v1521
        %1523 = vmatmul.f32.gmra.mxu0 %v785
        %v1524 = vpop.f32.mrf.mxu0
        %v1525 = vadd.f32 0.0, %v1524
        %1526 = vdwg.mxu0
        %1527 = vmatpush.msra.mxu0 0.0
        %1528 = vmatpush.msra.mxu0 0.0
        %1529 = vmatpush.msra.mxu0 0.0
        %1530 = vmatpush.msra.mxu0 0.0
        %1531 = vmatpush.msra.mxu0 0.0
        %1532 = vmatpush.msra.mxu0 0.0
        %1533 = vmatpush.msra.mxu0 0.0
        %1534 = vmatpush.msra.mxu0 0.0
        %1535 = vmatpush.msra.mxu0 0.0
        %1536 = vmatpush.msra.mxu0 0.0
        %1537 = vmatpush.msra.mxu0 0.0
        %1538 = vmatpush.msra.mxu0 0.0
        %1539 = vmatpush.msra.mxu0 0.0
        %1540 = vmatpush.msra.mxu0 0.0
        %1541 = vmatpush.msra.mxu0 %v1494
        %1542 = vmatpush.msra.mxu0 %v1490
        %1543 = vmatmul.f32.gmra.mxu0 %v861
        %v1544 = vpop.f32.mrf.mxu0
        %v1545 = vadd.f32 %v1516, %v1544
        %1546 = vmatmul.f32.gmra.mxu0 %v864
        %v1547 = vpop.f32.mrf.mxu0
        %v1548 = vadd.f32 %v1519, %v1547
        %1549 = vmatmul.f32.gmra.mxu0 %v867
        %v1550 = vpop.f32.mrf.mxu0
        %v1551 = vadd.f32 %v1522, %v1550
        %1552 = vmatmul.f32.gmra.mxu0 %v870
        %v1553 = vpop.f32.mrf.mxu0
        %v1554 = vadd.f32 %v1525, %v1553
        %1555 = vdwg.mxu0
        %1556 = vmatpush.msra.mxu0 %v1487
        %1557 = vmatpush.msra.mxu0 %v1483
        %1558 = vmatpush.msra.mxu0 %v1479
        %1559 = vmatpush.msra.mxu0 %v1475
        %1560 = vmatpush.msra.mxu0 %v1471
        %1561 = vmatpush.msra.mxu0 %v1467
        %1562 = vmatpush.msra.mxu0 %v1463
        %1563 = vmatpush.msra.mxu0 %v1459
        %1564 = vmatpush.msra.mxu0 %v1455
        %1565 = vmatpush.msra.mxu0 %v1451
        %1566 = vmatpush.msra.mxu0 %v1447
        %1567 = vmatpush.msra.mxu0 %v1443
        %1568 = vmatpush.msra.mxu0 %v1439
        %1569 = vmatpush.msra.mxu0 %v1435
        %1570 = vmatpush.msra.mxu0 %v1431
        %1571 = vmatpush.msra.mxu0 %v1427
        %1572 = vmatmul.f32.gmra.mxu0 %v779
        %v1573 = vpop.f32.mrf.mxu0
        %v1574 = vadd.f32 0.0, %v1573
        %1575 = vmatmul.f32.gmra.mxu0 %v781
        %v1576 = vpop.f32.mrf.mxu0
        %v1577 = vadd.f32 0.0, %v1576
        %1578 = vmatmul.f32.gmra.mxu0 %v783
        %v1579 = vpop.f32.mrf.mxu0
        %v1580 = vadd.f32 0.0, %v1579
        %1581 = vmatmul.f32.gmra.mxu0 %v785
        %v1582 = vpop.f32.mrf.mxu0
        %v1583 = vadd.f32 0.0, %v1582
        %1584 = vdwg.mxu0
        %1585 = vmatpush.msra.mxu0 0.0
        %1586 = vmatpush.msra.mxu0 0.0
        %1587 = vmatpush.msra.mxu0 0.0
        %1588 = vmatpush.msra.mxu0 0.0
        %1589 = vmatpush.msra.mxu0 0.0
        %1590 = vmatpush.msra.mxu0 0.0
        %1591 = vmatpush.msra.mxu0 0.0
        %1592 = vmatpush.msra.mxu0 0.0
        %1593 = vmatpush.msra.mxu0 0.0
        %1594 = vmatpush.msra.mxu0 0.0
        %1595 = vmatpush.msra.mxu0 0.0
        %1596 = vmatpush.msra.mxu0 0.0
        %1597 = vmatpush.msra.mxu0 0.0
        %1598 = vmatpush.msra.mxu0 0.0
        %1599 = vmatpush.msra.mxu0 %v1495
        %1600 = vmatpush.msra.mxu0 %v1491
        %1601 = vmatmul.f32.gmra.mxu0 %v861
        %v1602 = vpop.f32.mrf.mxu0
        %v1603 = vadd.f32 %v1574, %v1602
        %1604 = vmatmul.f32.gmra.mxu0 %v864
        %v1605 = vpop.f32.mrf.mxu0
        %v1606 = vadd.f32 %v1577, %v1605
        %1607 = vmatmul.f32.gmra.mxu0 %v867
        %v1608 = vpop.f32.mrf.mxu0
        %v1609 = vadd.f32 %v1580, %v1608
        %1610 = vmatmul.f32.gmra.mxu0 %v870
        %v1611 = vpop.f32.mrf.mxu0
        %v1612 = vadd.f32 %v1583, %v1611
        %1613 = vdwg.mxu0
        %1614 = vmatpush.msra.mxu0 %v1488
        %1615 = vmatpush.msra.mxu0 %v1484
        %1616 = vmatpush.msra.mxu0 %v1480
        %1617 = vmatpush.msra.mxu0 %v1476
        %1618 = vmatpush.msra.mxu0 %v1472
        %1619 = vmatpush.msra.mxu0 %v1468
        %1620 = vmatpush.msra.mxu0 %v1464
        %1621 = vmatpush.msra.mxu0 %v1460
        %1622 = vmatpush.msra.mxu0 %v1456
        %1623 = vmatpush.msra.mxu0 %v1452
        %1624 = vmatpush.msra.mxu0 %v1448
        %1625 = vmatpush.msra.mxu0 %v1444
        %1626 = vmatpush.msra.mxu0 %v1440
        %1627 = vmatpush.msra.mxu0 %v1436
        %1628 = vmatpush.msra.mxu0 %v1432
        %1629 = vmatpush.msra.mxu0 %v1428
        %1630 = vmatmul.f32.gmra.mxu0 %v779
        %v1631 = vpop.f32.mrf.mxu0
        %v1632 = vadd.f32 0.0, %v1631
        %1633 = vmatmul.f32.gmra.mxu0 %v781
        %v1634 = vpop.f32.mrf.mxu0
        %v1635 = vadd.f32 0.0, %v1634
        %1636 = vmatmul.f32.gmra.mxu0 %v783
        %v1637 = vpop.f32.mrf.mxu0
        %v1638 = vadd.f32 0.0, %v1637
        %1639 = vmatmul.f32.gmra.mxu0 %v785
        %v1640 = vpop.f32.mrf.mxu0
        %v1641 = vadd.f32 0.0, %v1640
        %1642 = vdwg.mxu0
        %1643 = vmatpush.msra.mxu0 0.0
        %1644 = vmatpush.msra.mxu0 0.0
        %1645 = vmatpush.msra.mxu0 0.0
        %1646 = vmatpush.msra.mxu0 0.0
        %1647 = vmatpush.msra.mxu0 0.0
        %1648 = vmatpush.msra.mxu0 0.0
        %1649 = vmatpush.msra.mxu0 0.0
        %1650 = vmatpush.msra.mxu0 0.0
        %1651 = vmatpush.msra.mxu0 0.0
        %1652 = vmatpush.msra.mxu0 0.0
        %1653 = vmatpush.msra.mxu0 0.0
        %1654 = vmatpush.msra.mxu0 0.0
        %1655 = vmatpush.msra.mxu0 0.0
        %1656 = vmatpush.msra.mxu0 0.0
        %1657 = vmatpush.msra.mxu0 %v1496
        %1658 = vmatpush.msra.mxu0 %v1492
        %1659 = vmatmul.f32.gmra.mxu0 %v861
        %v1660 = vpop.f32.mrf.mxu0
        %v1661 = vadd.f32 %v1632, %v1660
        %1662 = vmatmul.f32.gmra.mxu0 %v864
        %v1663 = vpop.f32.mrf.mxu0
        %v1664 = vadd.f32 %v1635, %v1663
        %1665 = vmatmul.f32.gmra.mxu0 %v867
        %v1666 = vpop.f32.mrf.mxu0
        %v1667 = vadd.f32 %v1638, %v1666
        %1668 = vmatmul.f32.gmra.mxu0 %v870
        %v1669 = vpop.f32.mrf.mxu0
        %v1670 = vadd.f32 %v1641, %v1669
        %1671 = vdwg.mxu0
        %1672 = vmatpush.msra.mxu0 %v1489
        %1673 = vmatpush.msra.mxu0 %v1485
        %1674 = vmatpush.msra.mxu0 %v1481
        %1675 = vmatpush.msra.mxu0 %v1477
        %1676 = vmatpush.msra.mxu0 %v1473
        %1677 = vmatpush.msra.mxu0 %v1469
        %1678 = vmatpush.msra.mxu0 %v1465
        %1679 = vmatpush.msra.mxu0 %v1461
        %1680 = vmatpush.msra.mxu0 %v1457
        %1681 = vmatpush.msra.mxu0 %v1453
        %1682 = vmatpush.msra.mxu0 %v1449
        %1683 = vmatpush.msra.mxu0 %v1445
        %1684 = vmatpush.msra.mxu0 %v1441
        %1685 = vmatpush.msra.mxu0 %v1437
        %1686 = vmatpush.msra.mxu0 %v1433
        %1687 = vmatpush.msra.mxu0 %v1429
        %1688 = vmatmul.f32.gmra.mxu0 %v779
        %v1689 = vpop.f32.mrf.mxu0
        %v1690 = vadd.f32 0.0, %v1689
        %1691 = vmatmul.f32.gmra.mxu0 %v781
        %v1692 = vpop.f32.mrf.mxu0
        %v1693 = vadd.f32 0.0, %v1692
        %1694 = vmatmul.f32.gmra.mxu0 %v783
        %v1695 = vpop.f32.mrf.mxu0
        %v1696 = vadd.f32 0.0, %v1695
        %1697 = vmatmul.f32.gmra.mxu0 %v785
        %v1698 = vpop.f32.mrf.mxu0
        %v1699 = vadd.f32 0.0, %v1698
        %1700 = vdwg.mxu0
        %1701 = vmatpush.msra.mxu0 0.0
        %1702 = vmatpush.msra.mxu0 0.0
        %1703 = vmatpush.msra.mxu0 0.0
        %1704 = vmatpush.msra.mxu0 0.0
        %1705 = vmatpush.msra.mxu0 0.0
        %1706 = vmatpush.msra.mxu0 0.0
        %1707 = vmatpush.msra.mxu0 0.0
        %1708 = vmatpush.msra.mxu0 0.0
        %1709 = vmatpush.msra.mxu0 0.0
        %1710 = vmatpush.msra.mxu0 0.0
        %1711 = vmatpush.msra.mxu0 0.0
        %1712 = vmatpush.msra.mxu0 0.0
        %1713 = vmatpush.msra.mxu0 0.0
        %1714 = vmatpush.msra.mxu0 0.0
        %1715 = vmatpush.msra.mxu0 %v1497
        %1716 = vmatpush.msra.mxu0 %v1493
        %1717 = vmatmul.f32.gmra.mxu0 %v861
        %v1718 = vpop.f32.mrf.mxu0
        %v1719 = vadd.f32 %v1690, %v1718
        %1720 = vmatmul.f32.gmra.mxu0 %v864
        %v1721 = vpop.f32.mrf.mxu0
        %v1722 = vadd.f32 %v1693, %v1721
        %1723 = vmatmul.f32.gmra.mxu0 %v867
        %v1724 = vpop.f32.mrf.mxu0
        %v1725 = vadd.f32 %v1696, %v1724
        %1726 = vmatmul.f32.gmra.mxu0 %v870
        %v1727 = vpop.f32.mrf.mxu0
        %v1728 = vadd.f32 %v1699, %v1727
        %1729 = vdwg.mxu0
        %v1730 = vmax.f32 %v1409, %v1545
        %v1731 = vmax.f32 %v1410, %v1603
        %v1732 = vmax.f32 %v1411, %v1661
        %v1733 = vmax.f32 %v1412, %v1719
        %v1734 = vmax.f32 %v1413, %v1548
        %v1735 = vmax.f32 %v1414, %v1606
        %v1736 = vmax.f32 %v1415, %v1664
        %v1737 = vmax.f32 %v1416, %v1722
        %v1738 = vmax.f32 %v1417, %v1551
        %v1739 = vmax.f32 %v1418, %v1609
        %v1740 = vmax.f32 %v1419, %v1667
        %v1741 = vmax.f32 %v1420, %v1725
        %v1742 = vmax.f32 %v1421, %v1554
        %v1743 = vmax.f32 %v1422, %v1612
        %v1744 = vmax.f32 %v1423, %v1670
        %v1745 = vmax.f32 %v1424, %v1728
        %s1746 = scalar_lea.vmem %s757, 1728 [#allocation2]
        %v1747 = vld [vmem:[%s1746] sm:$0xff]
        %v1748 = vld [vmem:[%s1746 + $0x8] sm:$0xff]
        %v1749 = vld [vmem:[%s1746 + $0x10] sm:$0xff]
        %v1750 = vld [vmem:[%s1746 + $0x18] sm:$0xff]
        %v1751 = vld [vmem:[%s1746 + $0x20] sm:$0xff]
        %v1752 = vld [vmem:[%s1746 + $0x28] sm:$0xff]
        %v1753 = vld [vmem:[%s1746 + $0x30] sm:$0xff]
        %v1754 = vld [vmem:[%s1746 + $0x38] sm:$0xff]
        %v1755 = vld [vmem:[%s1746 + $0x40] sm:$0xff]
        %v1756 = vld [vmem:[%s1746 + $0x48] sm:$0xff]
        %v1757 = vld [vmem:[%s1746 + $0x50] sm:$0xff]
        %v1758 = vld [vmem:[%s1746 + $0x58] sm:$0xff]
        %v1759 = vld [vmem:[%s1746 + $0x60] sm:$0xff]
        %v1760 = vld [vmem:[%s1746 + $0x68] sm:$0xff]
        %v1761 = vld [vmem:[%s1746 + $0x70] sm:$0xff]
        %v1762 = vld [vmem:[%s1746 + $0x78] sm:$0xff]
        %v1763 = vld [vmem:[%s1746 + $0x80] sm:$0xff]
        %v1764 = vld [vmem:[%s1746 + $0x88] sm:$0xff]
        %v1765 = vld [vmem:[%s1746 + $0x90] sm:$0xff]
        %v1766 = vld [vmem:[%s1746 + $0x98] sm:$0xff]
        %v1767 = vld [vmem:[%s1746 + $0xa0] sm:$0xff]
        %v1768 = vld [vmem:[%s1746 + $0xa8] sm:$0xff]
        %v1769 = vld [vmem:[%s1746 + $0xb0] sm:$0xff]
        %v1770 = vld [vmem:[%s1746 + $0xb8] sm:$0xff]
        %v1771 = vld [vmem:[%s1746 + $0xc0] sm:$0xff]
        %v1772 = vld [vmem:[%s1746 + $0xc8] sm:$0xff]
        %v1773 = vld [vmem:[%s1746 + $0xd0] sm:$0xff]
        %v1774 = vld [vmem:[%s1746 + $0xd8] sm:$0xff]
        %v1775 = vld [vmem:[%s1746 + $0xe0] sm:$0xff]
        %v1776 = vld [vmem:[%s1746 + $0xe8] sm:$0xff]
        %v1777 = vld [vmem:[%s1746 + $0xf0] sm:$0xff]
        %v1778 = vld [vmem:[%s1746 + $0xf8] sm:$0xff]
        %v1779 = vld [vmem:[%s1746 + $0x100] sm:$0xff]
        %v1780 = vld [vmem:[%s1746 + $0x108] sm:$0xff]
        %v1781 = vld [vmem:[%s1746 + $0x110] sm:$0xff]
        %v1782 = vld [vmem:[%s1746 + $0x118] sm:$0xff]
        %v1783 = vld [vmem:[%s1746 + $0x120] sm:$0xff]
        %v1784 = vld [vmem:[%s1746 + $0x128] sm:$0xff]
        %v1785 = vld [vmem:[%s1746 + $0x130] sm:$0xff]
        %v1786 = vld [vmem:[%s1746 + $0x138] sm:$0xff]
        %v1787 = vld [vmem:[%s1746 + $0x140] sm:$0xff]
        %v1788 = vld [vmem:[%s1746 + $0x148] sm:$0xff]
        %v1789 = vld [vmem:[%s1746 + $0x150] sm:$0xff]
        %v1790 = vld [vmem:[%s1746 + $0x158] sm:$0xff]
        %v1791 = vld [vmem:[%s1746 + $0x160] sm:$0xff]
        %v1792 = vld [vmem:[%s1746 + $0x168] sm:$0xff]
        %v1793 = vld [vmem:[%s1746 + $0x170] sm:$0xff]
        %v1794 = vld [vmem:[%s1746 + $0x178] sm:$0xff]
        %v1795 = vld [vmem:[%s1746 + $0x180] sm:$0xff]
        %v1796 = vld [vmem:[%s1746 + $0x188] sm:$0xff]
        %v1797 = vld [vmem:[%s1746 + $0x190] sm:$0xff]
        %v1798 = vld [vmem:[%s1746 + $0x198] sm:$0xff]
        %v1799 = vld [vmem:[%s1746 + $0x1a0] sm:$0xff]
        %v1800 = vld [vmem:[%s1746 + $0x1a8] sm:$0xff]
        %v1801 = vld [vmem:[%s1746 + $0x1b0] sm:$0xff]
        %v1802 = vld [vmem:[%s1746 + $0x1b8] sm:$0xff]
        %v1803 = vld [vmem:[%s1746 + $0x1c0] sm:$0xff]
        %v1804 = vld [vmem:[%s1746 + $0x1c8] sm:$0xff]
        %v1805 = vld [vmem:[%s1746 + $0x1d0] sm:$0xff]
        %v1806 = vld [vmem:[%s1746 + $0x1d8] sm:$0xff]
        %v1807 = vld [vmem:[%s1746 + $0x1e0] sm:$0xff]
        %v1808 = vld [vmem:[%s1746 + $0x1e8] sm:$0xff]
        %v1809 = vld [vmem:[%s1746 + $0x1f0] sm:$0xff]
        %v1810 = vld [vmem:[%s1746 + $0x1f8] sm:$0xff]
        %v1811 = vld [vmem:[%s1746 + $0x200] sm:$0xff]
        %v1812 = vld [vmem:[%s1746 + $0x208] sm:$0xff]
        %v1813 = vld [vmem:[%s1746 + $0x210] sm:$0xff]
        %v1814 = vld [vmem:[%s1746 + $0x218] sm:$0xff]
        %v1815 = vld [vmem:[%s1746 + $0x220] sm:$0xff]
        %v1816 = vld [vmem:[%s1746 + $0x228] sm:$0xff]
        %v1817 = vld [vmem:[%s1746 + $0x230] sm:$0xff]
        %v1818 = vld [vmem:[%s1746 + $0x238] sm:$0xff]
        %1819 = vmatpush.msra.mxu0 %v1807
        %1820 = vmatpush.msra.mxu0 %v1803
        %1821 = vmatpush.msra.mxu0 %v1799
        %1822 = vmatpush.msra.mxu0 %v1795
        %1823 = vmatpush.msra.mxu0 %v1791
        %1824 = vmatpush.msra.mxu0 %v1787
        %1825 = vmatpush.msra.mxu0 %v1783
        %1826 = vmatpush.msra.mxu0 %v1779
        %1827 = vmatpush.msra.mxu0 %v1775
        %1828 = vmatpush.msra.mxu0 %v1771
        %1829 = vmatpush.msra.mxu0 %v1767
        %1830 = vmatpush.msra.mxu0 %v1763
        %1831 = vmatpush.msra.mxu0 %v1759
        %1832 = vmatpush.msra.mxu0 %v1755
        %1833 = vmatpush.msra.mxu0 %v1751
        %1834 = vmatpush.msra.mxu0 %v1747
        %1835 = vmatmul.f32.gmra.mxu0 %v779
        %v1836 = vpop.f32.mrf.mxu0
        %v1837 = vadd.f32 0.0, %v1836
        %1838 = vmatmul.f32.gmra.mxu0 %v781
        %v1839 = vpop.f32.mrf.mxu0
        %v1840 = vadd.f32 0.0, %v1839
        %1841 = vmatmul.f32.gmra.mxu0 %v783
        %v1842 = vpop.f32.mrf.mxu0
        %v1843 = vadd.f32 0.0, %v1842
        %1844 = vmatmul.f32.gmra.mxu0 %v785
        %v1845 = vpop.f32.mrf.mxu0
        %v1846 = vadd.f32 0.0, %v1845
        %1847 = vdwg.mxu0
        %1848 = vmatpush.msra.mxu0 0.0
        %1849 = vmatpush.msra.mxu0 0.0
        %1850 = vmatpush.msra.mxu0 0.0
        %1851 = vmatpush.msra.mxu0 0.0
        %1852 = vmatpush.msra.mxu0 0.0
        %1853 = vmatpush.msra.mxu0 0.0
        %1854 = vmatpush.msra.mxu0 0.0
        %1855 = vmatpush.msra.mxu0 0.0
        %1856 = vmatpush.msra.mxu0 0.0
        %1857 = vmatpush.msra.mxu0 0.0
        %1858 = vmatpush.msra.mxu0 0.0
        %1859 = vmatpush.msra.mxu0 0.0
        %1860 = vmatpush.msra.mxu0 0.0
        %1861 = vmatpush.msra.mxu0 0.0
        %1862 = vmatpush.msra.mxu0 %v1815
        %1863 = vmatpush.msra.mxu0 %v1811
        %1864 = vmatmul.f32.gmra.mxu0 %v861
        %v1865 = vpop.f32.mrf.mxu0
        %v1866 = vadd.f32 %v1837, %v1865
        %1867 = vmatmul.f32.gmra.mxu0 %v864
        %v1868 = vpop.f32.mrf.mxu0
        %v1869 = vadd.f32 %v1840, %v1868
        %1870 = vmatmul.f32.gmra.mxu0 %v867
        %v1871 = vpop.f32.mrf.mxu0
        %v1872 = vadd.f32 %v1843, %v1871
        %1873 = vmatmul.f32.gmra.mxu0 %v870
        %v1874 = vpop.f32.mrf.mxu0
        %v1875 = vadd.f32 %v1846, %v1874
        %1876 = vdwg.mxu0
        %1877 = vmatpush.msra.mxu0 %v1808
        %1878 = vmatpush.msra.mxu0 %v1804
        %1879 = vmatpush.msra.mxu0 %v1800
        %1880 = vmatpush.msra.mxu0 %v1796
        %1881 = vmatpush.msra.mxu0 %v1792
        %1882 = vmatpush.msra.mxu0 %v1788
        %1883 = vmatpush.msra.mxu0 %v1784
        %1884 = vmatpush.msra.mxu0 %v1780
        %1885 = vmatpush.msra.mxu0 %v1776
        %1886 = vmatpush.msra.mxu0 %v1772
        %1887 = vmatpush.msra.mxu0 %v1768
        %1888 = vmatpush.msra.mxu0 %v1764
        %1889 = vmatpush.msra.mxu0 %v1760
        %1890 = vmatpush.msra.mxu0 %v1756
        %1891 = vmatpush.msra.mxu0 %v1752
        %1892 = vmatpush.msra.mxu0 %v1748
        %1893 = vmatmul.f32.gmra.mxu0 %v779
        %v1894 = vpop.f32.mrf.mxu0
        %v1895 = vadd.f32 0.0, %v1894
        %1896 = vmatmul.f32.gmra.mxu0 %v781
        %v1897 = vpop.f32.mrf.mxu0
        %v1898 = vadd.f32 0.0, %v1897
        %1899 = vmatmul.f32.gmra.mxu0 %v783
        %v1900 = vpop.f32.mrf.mxu0
        %v1901 = vadd.f32 0.0, %v1900
        %1902 = vmatmul.f32.gmra.mxu0 %v785
        %v1903 = vpop.f32.mrf.mxu0
        %v1904 = vadd.f32 0.0, %v1903
        %1905 = vdwg.mxu0
        %1906 = vmatpush.msra.mxu0 0.0
        %1907 = vmatpush.msra.mxu0 0.0
        %1908 = vmatpush.msra.mxu0 0.0
        %1909 = vmatpush.msra.mxu0 0.0
        %1910 = vmatpush.msra.mxu0 0.0
        %1911 = vmatpush.msra.mxu0 0.0
        %1912 = vmatpush.msra.mxu0 0.0
        %1913 = vmatpush.msra.mxu0 0.0
        %1914 = vmatpush.msra.mxu0 0.0
        %1915 = vmatpush.msra.mxu0 0.0
        %1916 = vmatpush.msra.mxu0 0.0
        %1917 = vmatpush.msra.mxu0 0.0
        %1918 = vmatpush.msra.mxu0 0.0
        %1919 = vmatpush.msra.mxu0 0.0
        %1920 = vmatpush.msra.mxu0 %v1816
        %1921 = vmatpush.msra.mxu0 %v1812
        %1922 = vmatmul.f32.gmra.mxu0 %v861
        %v1923 = vpop.f32.mrf.mxu0
        %v1924 = vadd.f32 %v1895, %v1923
        %1925 = vmatmul.f32.gmra.mxu0 %v864
        %v1926 = vpop.f32.mrf.mxu0
        %v1927 = vadd.f32 %v1898, %v1926
        %1928 = vmatmul.f32.gmra.mxu0 %v867
        %v1929 = vpop.f32.mrf.mxu0
        %v1930 = vadd.f32 %v1901, %v1929
        %1931 = vmatmul.f32.gmra.mxu0 %v870
        %v1932 = vpop.f32.mrf.mxu0
        %v1933 = vadd.f32 %v1904, %v1932
        %1934 = vdwg.mxu0
        %1935 = vmatpush.msra.mxu0 %v1809
        %1936 = vmatpush.msra.mxu0 %v1805
        %1937 = vmatpush.msra.mxu0 %v1801
        %1938 = vmatpush.msra.mxu0 %v1797
        %1939 = vmatpush.msra.mxu0 %v1793
        %1940 = vmatpush.msra.mxu0 %v1789
        %1941 = vmatpush.msra.mxu0 %v1785
        %1942 = vmatpush.msra.mxu0 %v1781
        %1943 = vmatpush.msra.mxu0 %v1777
        %1944 = vmatpush.msra.mxu0 %v1773
        %1945 = vmatpush.msra.mxu0 %v1769
        %1946 = vmatpush.msra.mxu0 %v1765
        %1947 = vmatpush.msra.mxu0 %v1761
        %1948 = vmatpush.msra.mxu0 %v1757
        %1949 = vmatpush.msra.mxu0 %v1753
        %1950 = vmatpush.msra.mxu0 %v1749
        %1951 = vmatmul.f32.gmra.mxu0 %v779
        %v1952 = vpop.f32.mrf.mxu0
        %v1953 = vadd.f32 0.0, %v1952
        %1954 = vmatmul.f32.gmra.mxu0 %v781
        %v1955 = vpop.f32.mrf.mxu0
        %v1956 = vadd.f32 0.0, %v1955
        %1957 = vmatmul.f32.gmra.mxu0 %v783
        %v1958 = vpop.f32.mrf.mxu0
        %v1959 = vadd.f32 0.0, %v1958
        %1960 = vmatmul.f32.gmra.mxu0 %v785
        %v1961 = vpop.f32.mrf.mxu0
        %v1962 = vadd.f32 0.0, %v1961
        %1963 = vdwg.mxu0
        %1964 = vmatpush.msra.mxu0 0.0
        %1965 = vmatpush.msra.mxu0 0.0
        %1966 = vmatpush.msra.mxu0 0.0
        %1967 = vmatpush.msra.mxu0 0.0
        %1968 = vmatpush.msra.mxu0 0.0
        %1969 = vmatpush.msra.mxu0 0.0
        %1970 = vmatpush.msra.mxu0 0.0
        %1971 = vmatpush.msra.mxu0 0.0
        %1972 = vmatpush.msra.mxu0 0.0
        %1973 = vmatpush.msra.mxu0 0.0
        %1974 = vmatpush.msra.mxu0 0.0
        %1975 = vmatpush.msra.mxu0 0.0
        %1976 = vmatpush.msra.mxu0 0.0
        %1977 = vmatpush.msra.mxu0 0.0
        %1978 = vmatpush.msra.mxu0 %v1817
        %1979 = vmatpush.msra.mxu0 %v1813
        %1980 = vmatmul.f32.gmra.mxu0 %v861
        %v1981 = vpop.f32.mrf.mxu0
        %v1982 = vadd.f32 %v1953, %v1981
        %1983 = vmatmul.f32.gmra.mxu0 %v864
        %v1984 = vpop.f32.mrf.mxu0
        %v1985 = vadd.f32 %v1956, %v1984
        %1986 = vmatmul.f32.gmra.mxu0 %v867
        %v1987 = vpop.f32.mrf.mxu0
        %v1988 = vadd.f32 %v1959, %v1987
        %1989 = vmatmul.f32.gmra.mxu0 %v870
        %v1990 = vpop.f32.mrf.mxu0
        %v1991 = vadd.f32 %v1962, %v1990
        %1992 = vdwg.mxu0
        %1993 = vmatpush.msra.mxu0 %v1810
        %1994 = vmatpush.msra.mxu0 %v1806
        %1995 = vmatpush.msra.mxu0 %v1802
        %1996 = vmatpush.msra.mxu0 %v1798
        %1997 = vmatpush.msra.mxu0 %v1794
        %1998 = vmatpush.msra.mxu0 %v1790
        %1999 = vmatpush.msra.mxu0 %v1786
        %2000 = vmatpush.msra.mxu0 %v1782
        %2001 = vmatpush.msra.mxu0 %v1778
        %2002 = vmatpush.msra.mxu0 %v1774
        %2003 = vmatpush.msra.mxu0 %v1770
        %2004 = vmatpush.msra.mxu0 %v1766
        %2005 = vmatpush.msra.mxu0 %v1762
        %2006 = vmatpush.msra.mxu0 %v1758
        %2007 = vmatpush.msra.mxu0 %v1754
        %2008 = vmatpush.msra.mxu0 %v1750
        %2009 = vmatmul.f32.gmra.mxu0 %v779
        %v2010 = vpop.f32.mrf.mxu0
        %v2011 = vadd.f32 0.0, %v2010
        %2012 = vmatmul.f32.gmra.mxu0 %v781
        %v2013 = vpop.f32.mrf.mxu0
        %v2014 = vadd.f32 0.0, %v2013
        %2015 = vmatmul.f32.gmra.mxu0 %v783
        %v2016 = vpop.f32.mrf.mxu0
        %v2017 = vadd.f32 0.0, %v2016
        %2018 = vmatmul.f32.gmra.mxu0 %v785
        %v2019 = vpop.f32.mrf.mxu0
        %v2020 = vadd.f32 0.0, %v2019
        %2021 = vdwg.mxu0
        %2022 = vmatpush.msra.mxu0 0.0
        %2023 = vmatpush.msra.mxu0 0.0
        %2024 = vmatpush.msra.mxu0 0.0
        %2025 = vmatpush.msra.mxu0 0.0
        %2026 = vmatpush.msra.mxu0 0.0
        %2027 = vmatpush.msra.mxu0 0.0
        %2028 = vmatpush.msra.mxu0 0.0
        %2029 = vmatpush.msra.mxu0 0.0
        %2030 = vmatpush.msra.mxu0 0.0
        %2031 = vmatpush.msra.mxu0 0.0
        %2032 = vmatpush.msra.mxu0 0.0
        %2033 = vmatpush.msra.mxu0 0.0
        %2034 = vmatpush.msra.mxu0 0.0
        %2035 = vmatpush.msra.mxu0 0.0
        %2036 = vmatpush.msra.mxu0 %v1818
        %2037 = vmatpush.msra.mxu0 %v1814
        %2038 = vmatmul.f32.gmra.mxu0 %v861
        %v2039 = vpop.f32.mrf.mxu0
        %v2040 = vadd.f32 %v2011, %v2039
        %2041 = vmatmul.f32.gmra.mxu0 %v864
        %v2042 = vpop.f32.mrf.mxu0
        %v2043 = vadd.f32 %v2014, %v2042
        %2044 = vmatmul.f32.gmra.mxu0 %v867
        %v2045 = vpop.f32.mrf.mxu0
        %v2046 = vadd.f32 %v2017, %v2045
        %2047 = vmatmul.f32.gmra.mxu0 %v870
        %v2048 = vpop.f32.mrf.mxu0
        %v2049 = vadd.f32 %v2020, %v2048
        %2050 = vdwg.mxu0
        %v2051 = vmax.f32 %v1730, %v1866
        %v2052 = vmax.f32 %v1731, %v1924
        %v2053 = vmax.f32 %v1732, %v1982
        %v2054 = vmax.f32 %v1733, %v2040
        %v2055 = vmax.f32 %v1734, %v1869
        %v2056 = vmax.f32 %v1735, %v1927
        %v2057 = vmax.f32 %v1736, %v1985
        %v2058 = vmax.f32 %v1737, %v2043
        %v2059 = vmax.f32 %v1738, %v1872
        %v2060 = vmax.f32 %v1739, %v1930
        %v2061 = vmax.f32 %v1740, %v1988
        %v2062 = vmax.f32 %v1741, %v2046
        %v2063 = vmax.f32 %v1742, %v1875
        %v2064 = vmax.f32 %v1743, %v1933
        %v2065 = vmax.f32 %v1744, %v1991
        %v2066 = vmax.f32 %v1745, %v2049
        %v2067 = vld [vmem:[%s2] sm:$0xff]
        %v2068 = vld [vmem:[%s2 + $0x8] sm:$0xff]
        %v2069 = vld [vmem:[%s2 + $0x10] sm:$0xff]
        %v2070 = vld [vmem:[%s2 + $0x18] sm:$0xff]
        %2072 = vset.pattern.permute.xlu0 0
        %2073 = vperm.xlu0 %2072, %v2067
        %v2074 = vpop.permute.xlu0 %2073
        %2077 = vset.pattern.permute.xlu0 0
        %2078 = vperm.xlu0 %2077, %v2068
        %v2079 = vpop.permute.xlu0 %2078
        %2082 = vset.pattern.permute.xlu0 0
        %2083 = vperm.xlu0 %2082, %v2069
        %v2084 = vpop.permute.xlu0 %2083
        %2087 = vset.pattern.permute.xlu0 0
        %2088 = vperm.xlu0 %2087, %v2070
        %v2089 = vpop.permute.xlu0 %2088
        %v2091 = vadd.f32 %v2051, %v2074
        %v2092 = vadd.f32 %v2052, %v2074
        %v2093 = vadd.f32 %v2053, %v2074
        %v2094 = vadd.f32 %v2054, %v2074
        %v2095 = vadd.f32 %v2055, %v2079
        %v2096 = vadd.f32 %v2056, %v2079
        %v2097 = vadd.f32 %v2057, %v2079
        %v2098 = vadd.f32 %v2058, %v2079
        %v2099 = vadd.f32 %v2059, %v2084
        %v2100 = vadd.f32 %v2060, %v2084
        %v2101 = vadd.f32 %v2061, %v2084
        %v2102 = vadd.f32 %v2062, %v2084
        %v2103 = vadd.f32 %v2063, %v2089
        %v2104 = vadd.f32 %v2064, %v2089
        %v2105 = vadd.f32 %v2065, %v2089
        %v2106 = vadd.f32 %v2066, %v2089
        %v2107 = vmax.f32 %v2091, 0.0
        %v2108 = vmax.f32 %v2092, 0.0
        %v2109 = vmax.f32 %v2093, 0.0
        %v2110 = vmax.f32 %v2094, 0.0
        %v2111 = vmax.f32 %v2095, 0.0
        %v2112 = vmax.f32 %v2096, 0.0
        %v2113 = vmax.f32 %v2097, 0.0
        %v2114 = vmax.f32 %v2098, 0.0
        %v2115 = vmax.f32 %v2099, 0.0
        %v2116 = vmax.f32 %v2100, 0.0
        %v2117 = vmax.f32 %v2101, 0.0
        %v2118 = vmax.f32 %v2102, 0.0
        %v2119 = vmax.f32 %v2103, 0.0
        %v2120 = vmax.f32 %v2104, 0.0
        %v2121 = vmax.f32 %v2105, 0.0
        %v2122 = vmax.f32 %v2106, 0.0
        %2123 = vst [vmem:[%s776] sm:$0xff] %v2107
        %2124 = vst [vmem:[%s776 + $0x8] sm:$0xff] %v2108
        %2125 = vst [vmem:[%s776 + $0x10] sm:$0xff] %v2109
        %2126 = vst [vmem:[%s776 + $0x18] sm:$0xff] %v2110
        %2127 = vst [vmem:[%s776 + $0x20] sm:$0xff] %v2111
        %2128 = vst [vmem:[%s776 + $0x28] sm:$0xff] %v2112
        %2129 = vst [vmem:[%s776 + $0x30] sm:$0xff] %v2113
        %2130 = vst [vmem:[%s776 + $0x38] sm:$0xff] %v2114
        %2131 = vst [vmem:[%s776 + $0x40] sm:$0xff] %v2115
        %2132 = vst [vmem:[%s776 + $0x48] sm:$0xff] %v2116
        %2133 = vst [vmem:[%s776 + $0x50] sm:$0xff] %v2117
        %2134 = vst [vmem:[%s776 + $0x58] sm:$0xff] %v2118
        %2135 = vst [vmem:[%s776 + $0x60] sm:$0xff] %v2119
        %2136 = vst [vmem:[%s776 + $0x68] sm:$0xff] %v2120
        %2137 = vst [vmem:[%s776 + $0x70] sm:$0xff] %v2121
        %2138 = vst [vmem:[%s776 + $0x78] sm:$0xff] %v2122
        %s2139 = sand.u32 %s106, 1
        %s2140 = sand.u32 %s106, 1
        %s2141 = smul.addr %s2140, 128
        %s2142 = scalar_lea.vmem [#allocation3], %s2141
        // Predicated region
        $region56: #{qnetwork_forward.5} parent=50 // pred_check
          %p2143 = pneg %p116
        $region57: #{qnetwork_forward.5} parent=50 // pred_check_branch
          %2145 = sbr.rel (%p2143) target = $region59
        $region58: #{qnetwork_forward.5} parent=50 // pred_region
          %s2146 = smul.u32 4, %s19
          %s2147 = smul.addr %s18, 32
          %s2148 = sadd.s32 %s2146, %s2147
          %s2149 = smul.addr %s2148, 8
          %s2150 = scalar_lea.vmem %s3, %s2149
          // Predicated region
          $region60: #{qnetwork_forward.5} parent=58 // pred_check
            _
          $region61: #{qnetwork_forward.5} parent=58 // pred_check_branch
            %2152 = sbr.rel (0) target = $region63
          $region62: #{qnetwork_forward.5} parent=58 // pred_region
            // Predicated region
            $region64: #{qnetwork_forward.5} parent=62 // pred_check
              _
            $region65: #{qnetwork_forward.5} parent=62 // pred_check_branch
              %2154 = sbr.rel (0) target = $region67
            $region66: #{qnetwork_forward.5} parent=62 // pred_region
              loop: start=0, step=1, limit=1
              $region68: #{qnetwork_forward.5} parent=66 // loop_pre_header
                _
              $region69: #{qnetwork_forward.5} parent=66 // loop_header
                %s2156 = sphi 0, %s2160
                %p2157 = scmp.ge.s32.totalorder %s2156, 1
                %s2161 = sphi %s2142, %s2142
                %s2162 = sphi %s2150, %s2150
              $region70: #{qnetwork_forward.5} parent=66 // loop_header_branch
                %2159 = sbr.rel (%p2157) target = $region74
              $region71: #{qnetwork_forward.5} parent=66 // loop_body
                %v2163 = vld [vmem:[%s2161] sm:$0xff]
                %2164 = vst [vmem:[%s2162] sm:$0xff] %v2163
                %v2165 = vld [vmem:[%s2161 + $0x8] sm:$0xff]
                %2166 = vst [vmem:[%s2162 + $0x8] sm:$0xff] %v2165
                %v2167 = vld [vmem:[%s2161 + $0x10] sm:$0xff]
                %2168 = vst [vmem:[%s2162 + $0x10] sm:$0xff] %v2167
                %v2169 = vld [vmem:[%s2161 + $0x18] sm:$0xff]
                %2170 = vst [vmem:[%s2162 + $0x18] sm:$0xff] %v2169
                %v2171 = vld [vmem:[%s2161 + $0x20] sm:$0xff]
                %2172 = vst [vmem:[%s2162 + $0x40] sm:$0xff] %v2171
                %v2173 = vld [vmem:[%s2161 + $0x28] sm:$0xff]
                %2174 = vst [vmem:[%s2162 + $0x48] sm:$0xff] %v2173
                %v2175 = vld [vmem:[%s2161 + $0x30] sm:$0xff]
                %2176 = vst [vmem:[%s2162 + $0x50] sm:$0xff] %v2175
                %v2177 = vld [vmem:[%s2161 + $0x38] sm:$0xff]
                %2178 = vst [vmem:[%s2162 + $0x58] sm:$0xff] %v2177
                %v2179 = vld [vmem:[%s2161 + $0x40] sm:$0xff]
                %2180 = vst [vmem:[%s2162 + $0x80] sm:$0xff] %v2179
                %v2181 = vld [vmem:[%s2161 + $0x48] sm:$0xff]
                %2182 = vst [vmem:[%s2162 + $0x88] sm:$0xff] %v2181
                %v2183 = vld [vmem:[%s2161 + $0x50] sm:$0xff]
                %2184 = vst [vmem:[%s2162 + $0x90] sm:$0xff] %v2183
                %v2185 = vld [vmem:[%s2161 + $0x58] sm:$0xff]
                %2186 = vst [vmem:[%s2162 + $0x98] sm:$0xff] %v2185
                %v2187 = vld [vmem:[%s2161 + $0x60] sm:$0xff]
                %2188 = vst [vmem:[%s2162 + $0xc0] sm:$0xff] %v2187
                %v2189 = vld [vmem:[%s2161 + $0x68] sm:$0xff]
                %2190 = vst [vmem:[%s2162 + $0xc8] sm:$0xff] %v2189
                %v2191 = vld [vmem:[%s2161 + $0x70] sm:$0xff]
                %2192 = vst [vmem:[%s2162 + $0xd0] sm:$0xff] %v2191
                %v2193 = vld [vmem:[%s2161 + $0x78] sm:$0xff]
                %2194 = vst [vmem:[%s2162 + $0xd8] sm:$0xff] %v2193
              $region72: #{qnetwork_forward.5} parent=66 // loop_footer
                %s2160 = sadd.s32 1, %s2156
              $region73: #{qnetwork_forward.5} parent=66 // loop_footer_branch
                %2155 = sbr.rel target = $region69
              $region74: #{qnetwork_forward.5} parent=66 // loop_exit
                _
            $region67: #{qnetwork_forward.5} parent=62 // pred_fallthru
              _
            // Predicated region
            $region75: #{qnetwork_forward.5} parent=62 // pred_check
              _
            $region76: #{qnetwork_forward.5} parent=62 // pred_check_branch
              %2196 = sbr.rel target = $region78
            $region77: #{qnetwork_forward.5} parent=62 // pred_region
              _
            $region78: #{qnetwork_forward.5} parent=62 // pred_fallthru
              _
          $region63: #{qnetwork_forward.5} parent=58 // pred_fallthru
            _
          %2197 = vnop
        $region59: #{qnetwork_forward.5} parent=50 // pred_fallthru
          _
      $region51: #{qnetwork_forward.5} parent=5 // pred_fallthru
        _
      %p2198 = scmp.le.s32.totalorder 2, %s9
      // Predicated region
      $region79: #{qnetwork_forward.5} parent=5 // pred_check
        %p2199 = pneg %p2198
      $region80: #{qnetwork_forward.5} parent=5 // pred_check_branch
        %2201 = sbr.rel (%p2199) target = $region82
      $region81: #{qnetwork_forward.5} parent=5 // pred_region
        %s2202 = ssub.s32 %s9, 2
        // Predicated region
        $region83: #{qnetwork_forward.5} parent=81 // pred_check
          %p2203 = pneg %p122
        $region84: #{qnetwork_forward.5} parent=81 // pred_check_branch
          %2205 = sbr.rel (%p2203) target = $region86
        $region85: #{qnetwork_forward.5} parent=81 // pred_region
          %s2206 = sand.u32 %s107, 1
          %s2207 = sand.u32 %s107, 1
          %s2208 = smul.addr %s2207, 128
          %s2209 = scalar_lea.vmem [#allocation3], %s2208
        $region86: #{qnetwork_forward.5} parent=81 // pred_fallthru
          _
      $region82: #{qnetwork_forward.5} parent=5 // pred_fallthru
        _
    $region6: #{qnetwork_forward.5} parent=1 // loop_footer
      %s13 = sadd.s32 1, %s9
    $region7: #{qnetwork_forward.5} parent=1 // loop_footer_branch
      %8 = sbr.rel target = $region3
    $region8: #{qnetwork_forward.5} parent=1 // loop_exit
      _

// kernel: qnetwork_forward.6
$region0: #{qnetwork_forward.6}
  #allocation0 [shape = 'u32[]', space=smem, size = 0x4, offset = 0x4, fixed_abs, tag = 'smem constant byte address 0x4 - core index']
  #allocation1 [shape = 'u32[72,128]{1,0:T(1,128)}', space=vmem, size = 0x9000, scoped, tag = 'internal scratch']
  %s0 = inlined_call_operand.vmem [shape: f32[2,4,288,256], index: 0, kind: input, shape index: {}]
  %s1 = inlined_call_operand.vmem [shape: f32[64,288], index: 1, kind: input, shape index: {}]
  %s2 = inlined_call_operand.vmem [shape: f32[64,1], index: 2, kind: input, shape index: {}]
  %s3 = inlined_call_operand.vmem [shape: f32[2,64,256], index: 3, kind: output, shape index: {}]
  %s4 = sld [smem:[#allocation0]]
  $region45: #{qnetwork_forward.6} parent=0
    _
  %s6 = ssub.s32 1, %s4
  %s7 = scalar_select 0, %s6, %s4
  loop: start=0, step=1, limit=4
  $region2: #{qnetwork_forward.6} parent=0 // loop_pre_header
    _
  $region3: #{qnetwork_forward.6} parent=0 // loop_header
    %s9 = sphi 0, %s13
    %p10 = scmp.ge.s32.totalorder %s9, 4
    %s16 = sphi 0, %s28
    %s17 = sphi 0, %s24
    %s18 = sphi 0, %s16
    %s19 = sphi 0, %s17
    %s20 = sphi 0, %s18
    %s21 = sphi 0, %s19
    %s33 = sphi 0, %s35
    %s36 = sphi 0, %s33
    %s37 = sphi 0, %s36
    %s53 = sphi 0, %s37
    %s57 = sphi 0, %s57
    %s59 = sphi 0, %s57
    %s60 = sphi 0, %s59
    %s74 = sphi 0, %s60
    %s78 = sphi 0, %s78
    %s80 = sphi 0, %s78
    %s81 = sphi 0, %s80
    %s95 = sphi 0, %s81
    %s103 = sphi 0, %s105
    %s106 = sphi 0, %s103
    %s107 = sphi 0, %s106
    %s123 = sphi 0, %s107
  $region4: #{qnetwork_forward.6} parent=0 // loop_header_branch
    %12 = sbr.rel (%p10) target = $region8
  $region5: #{qnetwork_forward.6} parent=0 // loop_body
    %s14 = ssub.s32 %s9, 1
    %s15 = ssub.s32 %s9, 2
    %s22 = sadd.s32 1, %s17
    %p23 = scmp.ge.s32.totalorder %s22, 1
    %s24 = scalar_select %p23, 0, %s22
    %s25 = sadd.s32 1, %s16
    %s26 = scalar_select %p23, %s25, %s16
    %p27 = scmp.ge.s32.totalorder %s26, 2
    %s28 = scalar_select %p27, 0, %s26
    %s29 = ssub.s32 %s16, %s28
    %s30 = ssub.s32 %s17, %s24
    %s31 = sor.u32 %s29, %s30
    %p32 = scmp.eq.s32.totalorder %s31, 0
    %s34 = sadd.s32 %s33, 1
    %s35 = scalar_select %p32, %s33, %s34
    %p38 = pneg %p32
    %p39 = scmp.eq.s32.totalorder %s9, 1
    %p40 = por %p38, %p39
    %p41 = scmp.ne.s32.totalorder %s33, %s36
    %p42 = scmp.eq.s32.totalorder %s9, 0
    %p43 = por %p41, %p42
    %p44 = scmp.ne.s32.totalorder %s33, %s36
    %p45 = scmp.eq.s32.totalorder %s14, 1
    %p46 = por %p44, %p45
    %p47 = scmp.ne.s32.totalorder %s36, %s37
    %p48 = scmp.eq.s32.totalorder %s14, 0
    %p49 = por %p47, %p48
    %p50 = scmp.ne.s32.totalorder %s36, %s37
    %p51 = scmp.eq.s32.totalorder %s15, 1
    %p52 = por %p50, %p51
    %p54 = scmp.ne.s32.totalorder %s37, %s53
    %p55 = scmp.eq.s32.totalorder %s15, 0
    %p56 = por %p54, %p55
    %s58 = sadd.s32 %s57, 1
    %p61 = scmp.eq.s32.totalorder %s9, 1
    %p62 = scmp.ne.s32.totalorder %s57, %s59
    %p63 = scmp.eq.s32.totalorder %s9, 0
    %p64 = por %p62, %p63
    %p65 = scmp.ne.s32.totalorder %s57, %s59
    %p66 = scmp.eq.s32.totalorder %s14, 1
    %p67 = por %p65, %p66
    %p68 = scmp.ne.s32.totalorder %s59, %s60
    %p69 = scmp.eq.s32.totalorder %s14, 0
    %p70 = por %p68, %p69
    %p71 = scmp.ne.s32.totalorder %s59, %s60
    %p72 = scmp.eq.s32.totalorder %s15, 1
    %p73 = por %p71, %p72
    %p75 = scmp.ne.s32.totalorder %s60, %s74
    %p76 = scmp.eq.s32.totalorder %s15, 0
    %p77 = por %p75, %p76
    %s79 = sadd.s32 %s78, 1
    %p82 = scmp.eq.s32.totalorder %s9, 1
    %p83 = scmp.ne.s32.totalorder %s78, %s80
    %p84 = scmp.eq.s32.totalorder %s9, 0
    %p85 = por %p83, %p84
    %p86 = scmp.ne.s32.totalorder %s78, %s80
    %p87 = scmp.eq.s32.totalorder %s14, 1
    %p88 = por %p86, %p87
    %p89 = scmp.ne.s32.totalorder %s80, %s81
    %p90 = scmp.eq.s32.totalorder %s14, 0
    %p91 = por %p89, %p90
    %p92 = scmp.ne.s32.totalorder %s80, %s81
    %p93 = scmp.eq.s32.totalorder %s15, 1
    %p94 = por %p92, %p93
    %p96 = scmp.ne.s32.totalorder %s81, %s95
    %p97 = scmp.eq.s32.totalorder %s15, 0
    %p98 = por %p96, %p97
    %s99 = ssub.s32 %s16, %s28
    %s100 = ssub.s32 %s17, %s24
    %s101 = sor.u32 %s99, %s100
    %p102 = scmp.eq.s32.totalorder %s101, 0
    %s104 = sadd.s32 %s103, 1
    %s105 = scalar_select %p102, %s103, %s104
    %p108 = pneg %p102
    %p109 = scmp.eq.s32.totalorder %s9, 1
    %p110 = por %p108, %p109
    %p111 = scmp.ne.s32.totalorder %s103, %s106
    %p112 = scmp.eq.s32.totalorder %s9, 0
    %p113 = por %p111, %p112
    %p114 = scmp.ne.s32.totalorder %s103, %s106
    %p115 = scmp.eq.s32.totalorder %s14, 1
    %p116 = por %p114, %p115
    %p117 = scmp.ne.s32.totalorder %s106, %s107
    %p118 = scmp.eq.s32.totalorder %s14, 0
    %p119 = por %p117, %p118
    %p120 = scmp.ne.s32.totalorder %s106, %s107
    %p121 = scmp.eq.s32.totalorder %s15, 1
    %p122 = por %p120, %p121
    %p124 = scmp.ne.s32.totalorder %s107, %s123
    %p125 = scmp.eq.s32.totalorder %s15, 0
    %p126 = por %p124, %p125
    %p127 = scmp.le.s32.totalorder 1, %s9
    %p128 = scmp.lt.s32.totalorder %s9, 3
    %p129 = pnand %p127, %p128
    %p130 = pneg %p129
    // Predicated region
    $region9: #{qnetwork_forward.6} parent=5 // pred_check
      _
    $region10: #{qnetwork_forward.6} parent=5 // pred_check_branch
      %132 = sbr.rel (%p129) target = $region12
    $region11: #{qnetwork_forward.6} parent=5 // pred_region
      %s133 = ssub.s32 %s9, 1
      // Predicated region
      $region13: #{qnetwork_forward.6} parent=11 // pred_check
        %p134 = pneg %p70
      $region14: #{qnetwork_forward.6} parent=11 // pred_check_branch
        %136 = sbr.rel (%p134) target = $region16
      $region15: #{qnetwork_forward.6} parent=11 // pred_region
        _
      $region16: #{qnetwork_forward.6} parent=11 // pred_fallthru
        _
      // Predicated region
      $region17: #{qnetwork_forward.6} parent=11 // pred_check
        %p137 = pneg %p91
      $region18: #{qnetwork_forward.6} parent=11 // pred_check_branch
        %139 = sbr.rel (%p137) target = $region20
      $region19: #{qnetwork_forward.6} parent=11 // pred_region
        _
      $region20: #{qnetwork_forward.6} parent=11 // pred_fallthru
        _
    $region12: #{qnetwork_forward.6} parent=5 // pred_fallthru
      _
    %p140 = scmp.lt.s32.totalorder %s9, 2
    // Predicated region
    $region21: #{qnetwork_forward.6} parent=5 // pred_check
      %p141 = pneg %p140
    $region22: #{qnetwork_forward.6} parent=5 // pred_check_branch
      %143 = sbr.rel (%p141) target = $region24
    $region23: #{qnetwork_forward.6} parent=5 // pred_region
      // Predicated region
      $region25: #{qnetwork_forward.6} parent=23 // pred_check
        %p144 = pneg %p43
      $region26: #{qnetwork_forward.6} parent=23 // pred_check_branch
        %146 = sbr.rel (%p144) target = $region28
      $region27: #{qnetwork_forward.6} parent=23 // pred_region
        %s147 = smul.u32 2, %s17
        %p148 = scmp.lt.s32.totalorder %s16, 1
        %s149 = scalar_select %p148, %s16, 1
        %p150 = scmp.lt.s32.totalorder %s147, 1
        %s151 = scalar_select %p150, %s147, 1
        %s152 = smul.addr %s149, 288
        %s153 = sadd.s32 %s151, %s152
        %s154 = smul.addr %s153, 8
        %s155 = scalar_lea.vmem %s0, %s154
        %s156 = smul.u32 2, %s17
      $region28: #{qnetwork_forward.6} parent=23 // pred_fallthru
        _
    $region24: #{qnetwork_forward.6} parent=5 // pred_fallthru
      _
    %p157 = scmp.le.s32.totalorder 1, %s9
    %p158 = scmp.lt.s32.totalorder %s9, 3
    %p159 = pnand %p157, %p158
    %p160 = pneg %p159
    // Predicated region
    $region29: #{qnetwork_forward.6} parent=5 // pred_check
      _
    $region30: #{qnetwork_forward.6} parent=5 // pred_check_branch
      %162 = sbr.rel (%p159) target = $region32
    $region31: #{qnetwork_forward.6} parent=5 // pred_region
      %s163 = ssub.s32 %s9, 1
      %s164 = smul.u32 2, %s19
      %p165 = scmp.lt.s32.totalorder %s18, 1
      %s166 = scalar_select %p165, %s18, 1
      %p167 = scmp.lt.s32.totalorder %s164, 1
      %s168 = scalar_select %p167, %s164, 1
      %s169 = smul.addr %s166, 288
      %s170 = sadd.s32 %s168, %s169
      %s171 = smul.addr %s170, 8
      %s172 = scalar_lea.vmem %s0, %s171
      %p173 = pneg %p49
      %p174 = pneg %p46
      %p175 = pneg %p70
      %p176 = pneg %p67
      %p177 = pneg %p91
      %p178 = pneg %p88
      %p179 = pneg %p119
      %p180 = pneg %p116
      %s181 = smul.u32 2, %s19
      %p182 = scmp.lt.s32.totalorder %s18, 1
      %s183 = scalar_select %p182, %s18, 1
      %p184 = scmp.lt.s32.totalorder %s181, 1
      %s185 = scalar_select %p184, %s181, 1
      %s186 = smul.addr %s183, 16
      %s187 = sadd.s32 %s185, %s186
      %s188 = smul.addr %s187, 8
      %s189 = scalar_lea.vmem %s3, %s188
      %s190 = smul.u32 2, %s19
      %p191 = scmp.lt.s32.totalorder %s18, 1
      %s192 = scalar_select %p191, %s18, 1
      %p193 = scmp.lt.s32.totalorder %s190, 1
      %s194 = scalar_select %p193, %s190, 1
      %s195 = smul.addr %s192, 288
      %s196 = sadd.s32 %s194, %s195
      %s197 = smul.addr %s196, 8
      %s198 = scalar_lea.vmem %s0, %s197
      %s199 = smul.u32 2, %s19
      %s200 = smul.u32 2, %s19
      %p201 = scmp.lt.s32.totalorder %s18, 1
      %s202 = scalar_select %p201, %s18, 1
      %p203 = scmp.lt.s32.totalorder %s200, 1
      %s204 = scalar_select %p203, %s200, 1
      %s205 = smul.addr %s202, 16
      %s206 = sadd.s32 %s204, %s205
      %s207 = smul.addr %s206, 8
      %s208 = scalar_lea.vmem %s3, %s207
      %s209 = smul.u32 2, %s19
      %v210 = vld [vmem:[%s1] sm:$0xff]
      %v211 = vld [vmem:[%s1 + $0x8] sm:$0xff]
      %v212 = vld [vmem:[%s1 + $0x10] sm:$0xff]
      %v213 = vld [vmem:[%s1 + $0x18] sm:$0xff]
      %v214 = vld [vmem:[%s1 + $0x20] sm:$0xff]
      %v215 = vld [vmem:[%s1 + $0x28] sm:$0xff]
      %v216 = vld [vmem:[%s1 + $0x30] sm:$0xff]
      %v217 = vld [vmem:[%s1 + $0x38] sm:$0xff]
      %v218 = vld [vmem:[%s1 + $0x40] sm:$0xff]
      %v219 = vld [vmem:[%s1 + $0x48] sm:$0xff]
      %v220 = vld [vmem:[%s1 + $0x50] sm:$0xff]
      %v221 = vld [vmem:[%s1 + $0x58] sm:$0xff]
      %v222 = vld [vmem:[%s1 + $0x60] sm:$0xff]
      %v223 = vld [vmem:[%s1 + $0x68] sm:$0xff]
      %v224 = vld [vmem:[%s1 + $0x70] sm:$0xff]
      %v225 = vld [vmem:[%s1 + $0x78] sm:$0xff]
      %v226 = vld [vmem:[%s1 + $0x80] sm:$0xff]
      %v227 = vld [vmem:[%s1 + $0x88] sm:$0xff]
      %v228 = vld [vmem:[%s1 + $0x90] sm:$0xff]
      %v229 = vld [vmem:[%s1 + $0x98] sm:$0xff]
      %v230 = vld [vmem:[%s1 + $0xa0] sm:$0xff]
      %v231 = vld [vmem:[%s1 + $0xa8] sm:$0xff]
      %v232 = vld [vmem:[%s1 + $0xb0] sm:$0xff]
      %v233 = vld [vmem:[%s1 + $0xb8] sm:$0xff]
      %v234 = vld [vmem:[%s198] sm:$0xff]
      %v235 = vld [vmem:[%s198 + $0x8] sm:$0xff]
      %v236 = vld [vmem:[%s198 + $0x10] sm:$0xff]
      %v237 = vld [vmem:[%s198 + $0x18] sm:$0xff]
      %v238 = vld [vmem:[%s198 + $0x20] sm:$0xff]
      %v239 = vld [vmem:[%s198 + $0x28] sm:$0xff]
      %v240 = vld [vmem:[%s198 + $0x30] sm:$0xff]
      %v241 = vld [vmem:[%s198 + $0x38] sm:$0xff]
      %v242 = vld [vmem:[%s198 + $0x40] sm:$0xff]
      %v243 = vld [vmem:[%s198 + $0x48] sm:$0xff]
      %v244 = vld [vmem:[%s198 + $0x50] sm:$0xff]
      %v245 = vld [vmem:[%s198 + $0x58] sm:$0xff]
      %v246 = vld [vmem:[%s198 + $0x60] sm:$0xff]
      %v247 = vld [vmem:[%s198 + $0x68] sm:$0xff]
      %v248 = vld [vmem:[%s198 + $0x70] sm:$0xff]
      %v249 = vld [vmem:[%s198 + $0x78] sm:$0xff]
      %v250 = vld [vmem:[%s198 + $0x80] sm:$0xff]
      %v251 = vld [vmem:[%s198 + $0x88] sm:$0xff]
      %v252 = vld [vmem:[%s198 + $0x90] sm:$0xff]
      %v253 = vld [vmem:[%s198 + $0x98] sm:$0xff]
      %v254 = vld [vmem:[%s198 + $0xa0] sm:$0xff]
      %v255 = vld [vmem:[%s198 + $0xa8] sm:$0xff]
      %v256 = vld [vmem:[%s198 + $0xb0] sm:$0xff]
      %v257 = vld [vmem:[%s198 + $0xb8] sm:$0xff]
      %v258 = vld [vmem:[%s198 + $0xc0] sm:$0xff]
      %v259 = vld [vmem:[%s198 + $0xc8] sm:$0xff]
      %v260 = vld [vmem:[%s198 + $0xd0] sm:$0xff]
      %v261 = vld [vmem:[%s198 + $0xd8] sm:$0xff]
      %v262 = vld [vmem:[%s198 + $0xe0] sm:$0xff]
      %v263 = vld [vmem:[%s198 + $0xe8] sm:$0xff]
      %v264 = vld [vmem:[%s198 + $0xf0] sm:$0xff]
      %v265 = vld [vmem:[%s198 + $0xf8] sm:$0xff]
      %v266 = vld [vmem:[%s198 + $0x100] sm:$0xff]
      %v267 = vld [vmem:[%s198 + $0x108] sm:$0xff]
      %v268 = vld [vmem:[%s198 + $0x110] sm:$0xff]
      %v269 = vld [vmem:[%s198 + $0x118] sm:$0xff]
      %v270 = vld [vmem:[%s198 + $0x120] sm:$0xff]
      %v271 = vld [vmem:[%s198 + $0x128] sm:$0xff]
      %v272 = vld [vmem:[%s198 + $0x130] sm:$0xff]
      %v273 = vld [vmem:[%s198 + $0x138] sm:$0xff]
      %v274 = vld [vmem:[%s198 + $0x140] sm:$0xff]
      %v275 = vld [vmem:[%s198 + $0x148] sm:$0xff]
      %v276 = vld [vmem:[%s198 + $0x150] sm:$0xff]
      %v277 = vld [vmem:[%s198 + $0x158] sm:$0xff]
      %v278 = vld [vmem:[%s198 + $0x160] sm:$0xff]
      %v279 = vld [vmem:[%s198 + $0x168] sm:$0xff]
      %v280 = vld [vmem:[%s198 + $0x170] sm:$0xff]
      %v281 = vld [vmem:[%s198 + $0x178] sm:$0xff]
      %v282 = vld [vmem:[%s198 + $0x180] sm:$0xff]
      %v283 = vld [vmem:[%s198 + $0x188] sm:$0xff]
      %v284 = vld [vmem:[%s198 + $0x190] sm:$0xff]
      %v285 = vld [vmem:[%s198 + $0x198] sm:$0xff]
      %v286 = vld [vmem:[%s198 + $0x1a0] sm:$0xff]
      %v287 = vld [vmem:[%s198 + $0x1a8] sm:$0xff]
      %v288 = vld [vmem:[%s198 + $0x1b0] sm:$0xff]
      %v289 = vld [vmem:[%s198 + $0x1b8] sm:$0xff]
      %v290 = vld [vmem:[%s198 + $0x1c0] sm:$0xff]
      %v291 = vld [vmem:[%s198 + $0x1c8] sm:$0xff]
      %v292 = vld [vmem:[%s198 + $0x1d0] sm:$0xff]
      %v293 = vld [vmem:[%s198 + $0x1d8] sm:$0xff]
      %v294 = vld [vmem:[%s198 + $0x1e0] sm:$0xff]
      %v295 = vld [vmem:[%s198 + $0x1e8] sm:$0xff]
      %v296 = vld [vmem:[%s198 + $0x1f0] sm:$0xff]
      %v297 = vld [vmem:[%s198 + $0x1f8] sm:$0xff]
      %v298 = vld [vmem:[%s198 + $0x200] sm:$0xff]
      %v299 = vld [vmem:[%s198 + $0x208] sm:$0xff]
      %v300 = vld [vmem:[%s198 + $0x210] sm:$0xff]
      %v301 = vld [vmem:[%s198 + $0x218] sm:$0xff]
      %v302 = vld [vmem:[%s198 + $0x220] sm:$0xff]
      %v303 = vld [vmem:[%s198 + $0x228] sm:$0xff]
      %v304 = vld [vmem:[%s198 + $0x230] sm:$0xff]
      %v305 = vld [vmem:[%s198 + $0x238] sm:$0xff]
      %vm306 = vcmask 261120
      %v308 = vsel %vm306, %v212, 0
      %v311 = vsel %vm306, %v215, 0
      %v314 = vsel %vm306, %v218, 0
      %v317 = vsel %vm306, %v221, 0
      %v320 = vsel %vm306, %v224, 0
      %v323 = vsel %vm306, %v227, 0
      %v326 = vsel %vm306, %v230, 0
      %v329 = vsel %vm306, %v233, 0
      %331 = vmatpush.msra.mxu0 %v264
      %332 = vmatpush.msra.mxu0 %v262
      %333 = vmatpush.msra.mxu0 %v260
      %334 = vmatpush.msra.mxu0 %v258
      %335 = vmatpush.msra.mxu0 %v256
      %336 = vmatpush.msra.mxu0 %v254
      %337 = vmatpush.msra.mxu0 %v252
      %338 = vmatpush.msra.mxu0 %v250
      %339 = vmatpush.msra.mxu0 %v248
      %340 = vmatpush.msra.mxu0 %v246
      %341 = vmatpush.msra.mxu0 %v244
      %342 = vmatpush.msra.mxu0 %v242
      %343 = vmatpush.msra.mxu0 %v240
      %344 = vmatpush.msra.mxu0 %v238
      %345 = vmatpush.msra.mxu0 %v236
      %346 = vmatpush.msra.mxu0 %v234
      %347 = vmatmul.f32.gmra.mxu0 %v210
      %v348 = vpop.f32.mrf.mxu0
      %v349 = vadd.f32 0.0, %v348
      %350 = vmatmul.f32.gmra.mxu0 %v213
      %v351 = vpop.f32.mrf.mxu0
      %v352 = vadd.f32 0.0, %v351
      %353 = vmatmul.f32.gmra.mxu0 %v216
      %v354 = vpop.f32.mrf.mxu0
      %v355 = vadd.f32 0.0, %v354
      %356 = vmatmul.f32.gmra.mxu0 %v219
      %v357 = vpop.f32.mrf.mxu0
      %v358 = vadd.f32 0.0, %v357
      %359 = vmatmul.f32.gmra.mxu0 %v222
      %v360 = vpop.f32.mrf.mxu0
      %v361 = vadd.f32 0.0, %v360
      %362 = vmatmul.f32.gmra.mxu0 %v225
      %v363 = vpop.f32.mrf.mxu0
      %v364 = vadd.f32 0.0, %v363
      %365 = vmatmul.f32.gmra.mxu0 %v228
      %v366 = vpop.f32.mrf.mxu0
      %v367 = vadd.f32 0.0, %v366
      %368 = vmatmul.f32.gmra.mxu0 %v231
      %v369 = vpop.f32.mrf.mxu0
      %v370 = vadd.f32 0.0, %v369
      %371 = vdwg.mxu0
      %372 = vmatpush.msra.mxu0 %v296
      %373 = vmatpush.msra.mxu0 %v294
      %374 = vmatpush.msra.mxu0 %v292
      %375 = vmatpush.msra.mxu0 %v290
      %376 = vmatpush.msra.mxu0 %v288
      %377 = vmatpush.msra.mxu0 %v286
      %378 = vmatpush.msra.mxu0 %v284
      %379 = vmatpush.msra.mxu0 %v282
      %380 = vmatpush.msra.mxu0 %v280
      %381 = vmatpush.msra.mxu0 %v278
      %382 = vmatpush.msra.mxu0 %v276
      %383 = vmatpush.msra.mxu0 %v274
      %384 = vmatpush.msra.mxu0 %v272
      %385 = vmatpush.msra.mxu0 %v270
      %386 = vmatpush.msra.mxu0 %v268
      %387 = vmatpush.msra.mxu0 %v266
      %388 = vmatmul.f32.gmra.mxu0 %v211
      %v389 = vpop.f32.mrf.mxu0
      %v390 = vadd.f32 %v349, %v389
      %391 = vmatmul.f32.gmra.mxu0 %v214
      %v392 = vpop.f32.mrf.mxu0
      %v393 = vadd.f32 %v352, %v392
      %394 = vmatmul.f32.gmra.mxu0 %v217
      %v395 = vpop.f32.mrf.mxu0
      %v396 = vadd.f32 %v355, %v395
      %397 = vmatmul.f32.gmra.mxu0 %v220
      %v398 = vpop.f32.mrf.mxu0
      %v399 = vadd.f32 %v358, %v398
      %400 = vmatmul.f32.gmra.mxu0 %v223
      %v401 = vpop.f32.mrf.mxu0
      %v402 = vadd.f32 %v361, %v401
      %403 = vmatmul.f32.gmra.mxu0 %v226
      %v404 = vpop.f32.mrf.mxu0
      %v405 = vadd.f32 %v364, %v404
      %406 = vmatmul.f32.gmra.mxu0 %v229
      %v407 = vpop.f32.mrf.mxu0
      %v408 = vadd.f32 %v367, %v407
      %409 = vmatmul.f32.gmra.mxu0 %v232
      %v410 = vpop.f32.mrf.mxu0
      %v411 = vadd.f32 %v370, %v410
      %412 = vdwg.mxu0
      %413 = vmatpush.msra.mxu0 0.0
      %414 = vmatpush.msra.mxu0 0.0
      %415 = vmatpush.msra.mxu0 0.0
      %416 = vmatpush.msra.mxu0 0.0
      %417 = vmatpush.msra.mxu0 0.0
      %418 = vmatpush.msra.mxu0 0.0
      %419 = vmatpush.msra.mxu0 0.0
      %420 = vmatpush.msra.mxu0 0.0
      %421 = vmatpush.msra.mxu0 0.0
      %422 = vmatpush.msra.mxu0 0.0
      %423 = vmatpush.msra.mxu0 0.0
      %424 = vmatpush.msra.mxu0 0.0
      %425 = vmatpush.msra.mxu0 %v304
      %426 = vmatpush.msra.mxu0 %v302
      %427 = vmatpush.msra.mxu0 %v300
      %428 = vmatpush.msra.mxu0 %v298
      %429 = vmatmul.f32.gmra.mxu0 %v308
      %v430 = vpop.f32.mrf.mxu0
      %v431 = vadd.f32 %v390, %v430
      %432 = vmatmul.f32.gmra.mxu0 %v311
      %v433 = vpop.f32.mrf.mxu0
      %v434 = vadd.f32 %v393, %v433
      %435 = vmatmul.f32.gmra.mxu0 %v314
      %v436 = vpop.f32.mrf.mxu0
      %v437 = vadd.f32 %v396, %v436
      %438 = vmatmul.f32.gmra.mxu0 %v317
      %v439 = vpop.f32.mrf.mxu0
      %v440 = vadd.f32 %v399, %v439
      %441 = vmatmul.f32.gmra.mxu0 %v320
      %v442 = vpop.f32.mrf.mxu0
      %v443 = vadd.f32 %v402, %v442
      %444 = vmatmul.f32.gmra.mxu0 %v323
      %v445 = vpop.f32.mrf.mxu0
      %v446 = vadd.f32 %v405, %v445
      %447 = vmatmul.f32.gmra.mxu0 %v326
      %v448 = vpop.f32.mrf.mxu0
      %v449 = vadd.f32 %v408, %v448
      %450 = vmatmul.f32.gmra.mxu0 %v329
      %v451 = vpop.f32.mrf.mxu0
      %v452 = vadd.f32 %v411, %v451
      %453 = vdwg.mxu0
      %454 = vmatpush.msra.mxu0 %v265
      %455 = vmatpush.msra.mxu0 %v263
      %456 = vmatpush.msra.mxu0 %v261
      %457 = vmatpush.msra.mxu0 %v259
      %458 = vmatpush.msra.mxu0 %v257
      %459 = vmatpush.msra.mxu0 %v255
      %460 = vmatpush.msra.mxu0 %v253
      %461 = vmatpush.msra.mxu0 %v251
      %462 = vmatpush.msra.mxu0 %v249
      %463 = vmatpush.msra.mxu0 %v247
      %464 = vmatpush.msra.mxu0 %v245
      %465 = vmatpush.msra.mxu0 %v243
      %466 = vmatpush.msra.mxu0 %v241
      %467 = vmatpush.msra.mxu0 %v239
      %468 = vmatpush.msra.mxu0 %v237
      %469 = vmatpush.msra.mxu0 %v235
      %470 = vmatmul.f32.gmra.mxu0 %v210
      %v471 = vpop.f32.mrf.mxu0
      %v472 = vadd.f32 0.0, %v471
      %473 = vmatmul.f32.gmra.mxu0 %v213
      %v474 = vpop.f32.mrf.mxu0
      %v475 = vadd.f32 0.0, %v474
      %476 = vmatmul.f32.gmra.mxu0 %v216
      %v477 = vpop.f32.mrf.mxu0
      %v478 = vadd.f32 0.0, %v477
      %479 = vmatmul.f32.gmra.mxu0 %v219
      %v480 = vpop.f32.mrf.mxu0
      %v481 = vadd.f32 0.0, %v480
      %482 = vmatmul.f32.gmra.mxu0 %v222
      %v483 = vpop.f32.mrf.mxu0
      %v484 = vadd.f32 0.0, %v483
      %485 = vmatmul.f32.gmra.mxu0 %v225
      %v486 = vpop.f32.mrf.mxu0
      %v487 = vadd.f32 0.0, %v486
      %488 = vmatmul.f32.gmra.mxu0 %v228
      %v489 = vpop.f32.mrf.mxu0
      %v490 = vadd.f32 0.0, %v489
      %491 = vmatmul.f32.gmra.mxu0 %v231
      %v492 = vpop.f32.mrf.mxu0
      %v493 = vadd.f32 0.0, %v492
      %494 = vdwg.mxu0
      %495 = vmatpush.msra.mxu0 %v297
      %496 = vmatpush.msra.mxu0 %v295
      %497 = vmatpush.msra.mxu0 %v293
      %498 = vmatpush.msra.mxu0 %v291
      %499 = vmatpush.msra.mxu0 %v289
      %500 = vmatpush.msra.mxu0 %v287
      %501 = vmatpush.msra.mxu0 %v285
      %502 = vmatpush.msra.mxu0 %v283
      %503 = vmatpush.msra.mxu0 %v281
      %504 = vmatpush.msra.mxu0 %v279
      %505 = vmatpush.msra.mxu0 %v277
      %506 = vmatpush.msra.mxu0 %v275
      %507 = vmatpush.msra.mxu0 %v273
      %508 = vmatpush.msra.mxu0 %v271
      %509 = vmatpush.msra.mxu0 %v269
      %510 = vmatpush.msra.mxu0 %v267
      %511 = vmatmul.f32.gmra.mxu0 %v211
      %v512 = vpop.f32.mrf.mxu0
      %v513 = vadd.f32 %v472, %v512
      %514 = vmatmul.f32.gmra.mxu0 %v214
      %v515 = vpop.f32.mrf.mxu0
      %v516 = vadd.f32 %v475, %v515
      %517 = vmatmul.f32.gmra.mxu0 %v217
      %v518 = vpop.f32.mrf.mxu0
      %v519 = vadd.f32 %v478, %v518
      %520 = vmatmul.f32.gmra.mxu0 %v220
      %v521 = vpop.f32.mrf.mxu0
      %v522 = vadd.f32 %v481, %v521
      %523 = vmatmul.f32.gmra.mxu0 %v223
      %v524 = vpop.f32.mrf.mxu0
      %v525 = vadd.f32 %v484, %v524
      %526 = vmatmul.f32.gmra.mxu0 %v226
      %v527 = vpop.f32.mrf.mxu0
      %v528 = vadd.f32 %v487, %v527
      %529 = vmatmul.f32.gmra.mxu0 %v229
      %v530 = vpop.f32.mrf.mxu0
      %v531 = vadd.f32 %v490, %v530
      %532 = vmatmul.f32.gmra.mxu0 %v232
      %v533 = vpop.f32.mrf.mxu0
      %v534 = vadd.f32 %v493, %v533
      %535 = vdwg.mxu0
      %536 = vmatpush.msra.mxu0 0.0
      %537 = vmatpush.msra.mxu0 0.0
      %538 = vmatpush.msra.mxu0 0.0
      %539 = vmatpush.msra.mxu0 0.0
      %540 = vmatpush.msra.mxu0 0.0
      %541 = vmatpush.msra.mxu0 0.0
      %542 = vmatpush.msra.mxu0 0.0
      %543 = vmatpush.msra.mxu0 0.0
      %544 = vmatpush.msra.mxu0 0.0
      %545 = vmatpush.msra.mxu0 0.0
      %546 = vmatpush.msra.mxu0 0.0
      %547 = vmatpush.msra.mxu0 0.0
      %548 = vmatpush.msra.mxu0 %v305
      %549 = vmatpush.msra.mxu0 %v303
      %550 = vmatpush.msra.mxu0 %v301
      %551 = vmatpush.msra.mxu0 %v299
      %552 = vmatmul.f32.gmra.mxu0 %v308
      %v553 = vpop.f32.mrf.mxu0
      %v554 = vadd.f32 %v513, %v553
      %555 = vmatmul.f32.gmra.mxu0 %v311
      %v556 = vpop.f32.mrf.mxu0
      %v557 = vadd.f32 %v516, %v556
      %558 = vmatmul.f32.gmra.mxu0 %v314
      %v559 = vpop.f32.mrf.mxu0
      %v560 = vadd.f32 %v519, %v559
      %561 = vmatmul.f32.gmra.mxu0 %v317
      %v562 = vpop.f32.mrf.mxu0
      %v563 = vadd.f32 %v522, %v562
      %564 = vmatmul.f32.gmra.mxu0 %v320
      %v565 = vpop.f32.mrf.mxu0
      %v566 = vadd.f32 %v525, %v565
      %567 = vmatmul.f32.gmra.mxu0 %v323
      %v568 = vpop.f32.mrf.mxu0
      %v569 = vadd.f32 %v528, %v568
      %570 = vmatmul.f32.gmra.mxu0 %v326
      %v571 = vpop.f32.mrf.mxu0
      %v572 = vadd.f32 %v531, %v571
      %573 = vmatmul.f32.gmra.mxu0 %v329
      %v574 = vpop.f32.mrf.mxu0
      %v575 = vadd.f32 %v534, %v574
      %576 = vdwg.mxu0
      %s577 = scalar_lea.vmem %s198, 576
      %v578 = vld [vmem:[%s577] sm:$0xff]
      %v579 = vld [vmem:[%s577 + $0x8] sm:$0xff]
      %v580 = vld [vmem:[%s577 + $0x10] sm:$0xff]
      %v581 = vld [vmem:[%s577 + $0x18] sm:$0xff]
      %v582 = vld [vmem:[%s577 + $0x20] sm:$0xff]
      %v583 = vld [vmem:[%s577 + $0x28] sm:$0xff]
      %v584 = vld [vmem:[%s577 + $0x30] sm:$0xff]
      %v585 = vld [vmem:[%s577 + $0x38] sm:$0xff]
      %v586 = vld [vmem:[%s577 + $0x40] sm:$0xff]
      %v587 = vld [vmem:[%s577 + $0x48] sm:$0xff]
      %v588 = vld [vmem:[%s577 + $0x50] sm:$0xff]
      %v589 = vld [vmem:[%s577 + $0x58] sm:$0xff]
      %v590 = vld [vmem:[%s577 + $0x60] sm:$0xff]
      %v591 = vld [vmem:[%s577 + $0x68] sm:$0xff]
      %v592 = vld [vmem:[%s577 + $0x70] sm:$0xff]
      %v593 = vld [vmem:[%s577 + $0x78] sm:$0xff]
      %v594 = vld [vmem:[%s577 + $0x80] sm:$0xff]
      %v595 = vld [vmem:[%s577 + $0x88] sm:$0xff]
      %v596 = vld [vmem:[%s577 + $0x90] sm:$0xff]
      %v597 = vld [vmem:[%s577 + $0x98] sm:$0xff]
      %v598 = vld [vmem:[%s577 + $0xa0] sm:$0xff]
      %v599 = vld [vmem:[%s577 + $0xa8] sm:$0xff]
      %v600 = vld [vmem:[%s577 + $0xb0] sm:$0xff]
      %v601 = vld [vmem:[%s577 + $0xb8] sm:$0xff]
      %v602 = vld [vmem:[%s577 + $0xc0] sm:$0xff]
      %v603 = vld [vmem:[%s577 + $0xc8] sm:$0xff]
      %v604 = vld [vmem:[%s577 + $0xd0] sm:$0xff]
      %v605 = vld [vmem:[%s577 + $0xd8] sm:$0xff]
      %v606 = vld [vmem:[%s577 + $0xe0] sm:$0xff]
      %v607 = vld [vmem:[%s577 + $0xe8] sm:$0xff]
      %v608 = vld [vmem:[%s577 + $0xf0] sm:$0xff]
      %v609 = vld [vmem:[%s577 + $0xf8] sm:$0xff]
      %v610 = vld [vmem:[%s577 + $0x100] sm:$0xff]
      %v611 = vld [vmem:[%s577 + $0x108] sm:$0xff]
      %v612 = vld [vmem:[%s577 + $0x110] sm:$0xff]
      %v613 = vld [vmem:[%s577 + $0x118] sm:$0xff]
      %v614 = vld [vmem:[%s577 + $0x120] sm:$0xff]
      %v615 = vld [vmem:[%s577 + $0x128] sm:$0xff]
      %v616 = vld [vmem:[%s577 + $0x130] sm:$0xff]
      %v617 = vld [vmem:[%s577 + $0x138] sm:$0xff]
      %v618 = vld [vmem:[%s577 + $0x140] sm:$0xff]
      %v619 = vld [vmem:[%s577 + $0x148] sm:$0xff]
      %v620 = vld [vmem:[%s577 + $0x150] sm:$0xff]
      %v621 = vld [vmem:[%s577 + $0x158] sm:$0xff]
      %v622 = vld [vmem:[%s577 + $0x160] sm:$0xff]
      %v623 = vld [vmem:[%s577 + $0x168] sm:$0xff]
      %v624 = vld [vmem:[%s577 + $0x170] sm:$0xff]
      %v625 = vld [vmem:[%s577 + $0x178] sm:$0xff]
      %v626 = vld [vmem:[%s577 + $0x180] sm:$0xff]
      %v627 = vld [vmem:[%s577 + $0x188] sm:$0xff]
      %v628 = vld [vmem:[%s577 + $0x190] sm:$0xff]
      %v629 = vld [vmem:[%s577 + $0x198] sm:$0xff]
      %v630 = vld [vmem:[%s577 + $0x1a0] sm:$0xff]
      %v631 = vld [vmem:[%s577 + $0x1a8] sm:$0xff]
      %v632 = vld [vmem:[%s577 + $0x1b0] sm:$0xff]
      %v633 = vld [vmem:[%s577 + $0x1b8] sm:$0xff]
      %v634 = vld [vmem:[%s577 + $0x1c0] sm:$0xff]
      %v635 = vld [vmem:[%s577 + $0x1c8] sm:$0xff]
      %v636 = vld [vmem:[%s577 + $0x1d0] sm:$0xff]
      %v637 = vld [vmem:[%s577 + $0x1d8] sm:$0xff]
      %v638 = vld [vmem:[%s577 + $0x1e0] sm:$0xff]
      %v639 = vld [vmem:[%s577 + $0x1e8] sm:$0xff]
      %v640 = vld [vmem:[%s577 + $0x1f0] sm:$0xff]
      %v641 = vld [vmem:[%s577 + $0x1f8] sm:$0xff]
      %v642 = vld [vmem:[%s577 + $0x200] sm:$0xff]
      %v643 = vld [vmem:[%s577 + $0x208] sm:$0xff]
      %v644 = vld [vmem:[%s577 + $0x210] sm:$0xff]
      %v645 = vld [vmem:[%s577 + $0x218] sm:$0xff]
      %v646 = vld [vmem:[%s577 + $0x220] sm:$0xff]
      %v647 = vld [vmem:[%s577 + $0x228] sm:$0xff]
      %v648 = vld [vmem:[%s577 + $0x230] sm:$0xff]
      %v649 = vld [vmem:[%s577 + $0x238] sm:$0xff]
      %650 = vmatpush.msra.mxu0 %v608
      %651 = vmatpush.msra.mxu0 %v606
      %652 = vmatpush.msra.mxu0 %v604
      %653 = vmatpush.msra.mxu0 %v602
      %654 = vmatpush.msra.mxu0 %v600
      %655 = vmatpush.msra.mxu0 %v598
      %656 = vmatpush.msra.mxu0 %v596
      %657 = vmatpush.msra.mxu0 %v594
      %658 = vmatpush.msra.mxu0 %v592
      %659 = vmatpush.msra.mxu0 %v590
      %660 = vmatpush.msra.mxu0 %v588
      %661 = vmatpush.msra.mxu0 %v586
      %662 = vmatpush.msra.mxu0 %v584
      %663 = vmatpush.msra.mxu0 %v582
      %664 = vmatpush.msra.mxu0 %v580
      %665 = vmatpush.msra.mxu0 %v578
      %666 = vmatmul.f32.gmra.mxu0 %v210
      %v667 = vpop.f32.mrf.mxu0
      %v668 = vadd.f32 0.0, %v667
      %669 = vmatmul.f32.gmra.mxu0 %v213
      %v670 = vpop.f32.mrf.mxu0
      %v671 = vadd.f32 0.0, %v670
      %672 = vmatmul.f32.gmra.mxu0 %v216
      %v673 = vpop.f32.mrf.mxu0
      %v674 = vadd.f32 0.0, %v673
      %675 = vmatmul.f32.gmra.mxu0 %v219
      %v676 = vpop.f32.mrf.mxu0
      %v677 = vadd.f32 0.0, %v676
      %678 = vmatmul.f32.gmra.mxu0 %v222
      %v679 = vpop.f32.mrf.mxu0
      %v680 = vadd.f32 0.0, %v679
      %681 = vmatmul.f32.gmra.mxu0 %v225
      %v682 = vpop.f32.mrf.mxu0
      %v683 = vadd.f32 0.0, %v682
      %684 = vmatmul.f32.gmra.mxu0 %v228
      %v685 = vpop.f32.mrf.mxu0
      %v686 = vadd.f32 0.0, %v685
      %687 = vmatmul.f32.gmra.mxu0 %v231
      %v688 = vpop.f32.mrf.mxu0
      %v689 = vadd.f32 0.0, %v688
      %690 = vdwg.mxu0
      %691 = vmatpush.msra.mxu0 %v640
      %692 = vmatpush.msra.mxu0 %v638
      %693 = vmatpush.msra.mxu0 %v636
      %694 = vmatpush.msra.mxu0 %v634
      %695 = vmatpush.msra.mxu0 %v632
      %696 = vmatpush.msra.mxu0 %v630
      %697 = vmatpush.msra.mxu0 %v628
      %698 = vmatpush.msra.mxu0 %v626
      %699 = vmatpush.msra.mxu0 %v624
      %700 = vmatpush.msra.mxu0 %v622
      %701 = vmatpush.msra.mxu0 %v620
      %702 = vmatpush.msra.mxu0 %v618
      %703 = vmatpush.msra.mxu0 %v616
      %704 = vmatpush.msra.mxu0 %v614
      %705 = vmatpush.msra.mxu0 %v612
      %706 = vmatpush.msra.mxu0 %v610
      %707 = vmatmul.f32.gmra.mxu0 %v211
      %v708 = vpop.f32.mrf.mxu0
      %v709 = vadd.f32 %v668, %v708
      %710 = vmatmul.f32.gmra.mxu0 %v214
      %v711 = vpop.f32.mrf.mxu0
      %v712 = vadd.f32 %v671, %v711
      %713 = vmatmul.f32.gmra.mxu0 %v217
      %v714 = vpop.f32.mrf.mxu0
      %v715 = vadd.f32 %v674, %v714
      %716 = vmatmul.f32.gmra.mxu0 %v220
      %v717 = vpop.f32.mrf.mxu0
      %v718 = vadd.f32 %v677, %v717
      %719 = vmatmul.f32.gmra.mxu0 %v223
      %v720 = vpop.f32.mrf.mxu0
      %v721 = vadd.f32 %v680, %v720
      %722 = vmatmul.f32.gmra.mxu0 %v226
      %v723 = vpop.f32.mrf.mxu0
      %v724 = vadd.f32 %v683, %v723
      %725 = vmatmul.f32.gmra.mxu0 %v229
      %v726 = vpop.f32.mrf.mxu0
      %v727 = vadd.f32 %v686, %v726
      %728 = vmatmul.f32.gmra.mxu0 %v232
      %v729 = vpop.f32.mrf.mxu0
      %v730 = vadd.f32 %v689, %v729
      %731 = vdwg.mxu0
      %732 = vmatpush.msra.mxu0 0.0
      %733 = vmatpush.msra.mxu0 0.0
      %734 = vmatpush.msra.mxu0 0.0
      %735 = vmatpush.msra.mxu0 0.0
      %736 = vmatpush.msra.mxu0 0.0
      %737 = vmatpush.msra.mxu0 0.0
      %738 = vmatpush.msra.mxu0 0.0
      %739 = vmatpush.msra.mxu0 0.0
      %740 = vmatpush.msra.mxu0 0.0
      %741 = vmatpush.msra.mxu0 0.0
      %742 = vmatpush.msra.mxu0 0.0
      %743 = vmatpush.msra.mxu0 0.0
      %744 = vmatpush.msra.mxu0 %v648
      %745 = vmatpush.msra.mxu0 %v646
      %746 = vmatpush.msra.mxu0 %v644
      %747 = vmatpush.msra.mxu0 %v642
      %748 = vmatmul.f32.gmra.mxu0 %v308
      %v749 = vpop.f32.mrf.mxu0
      %v750 = vadd.f32 %v709, %v749
      %751 = vmatmul.f32.gmra.mxu0 %v311
      %v752 = vpop.f32.mrf.mxu0
      %v753 = vadd.f32 %v712, %v752
      %754 = vmatmul.f32.gmra.mxu0 %v314
      %v755 = vpop.f32.mrf.mxu0
      %v756 = vadd.f32 %v715, %v755
      %757 = vmatmul.f32.gmra.mxu0 %v317
      %v758 = vpop.f32.mrf.mxu0
      %v759 = vadd.f32 %v718, %v758
      %760 = vmatmul.f32.gmra.mxu0 %v320
      %v761 = vpop.f32.mrf.mxu0
      %v762 = vadd.f32 %v721, %v761
      %763 = vmatmul.f32.gmra.mxu0 %v323
      %v764 = vpop.f32.mrf.mxu0
      %v765 = vadd.f32 %v724, %v764
      %766 = vmatmul.f32.gmra.mxu0 %v326
      %v767 = vpop.f32.mrf.mxu0
      %v768 = vadd.f32 %v727, %v767
      %769 = vmatmul.f32.gmra.mxu0 %v329
      %v770 = vpop.f32.mrf.mxu0
      %v771 = vadd.f32 %v730, %v770
      %772 = vdwg.mxu0
      %773 = vmatpush.msra.mxu0 %v609
      %774 = vmatpush.msra.mxu0 %v607
      %775 = vmatpush.msra.mxu0 %v605
      %776 = vmatpush.msra.mxu0 %v603
      %777 = vmatpush.msra.mxu0 %v601
      %778 = vmatpush.msra.mxu0 %v599
      %779 = vmatpush.msra.mxu0 %v597
      %780 = vmatpush.msra.mxu0 %v595
      %781 = vmatpush.msra.mxu0 %v593
      %782 = vmatpush.msra.mxu0 %v591
      %783 = vmatpush.msra.mxu0 %v589
      %784 = vmatpush.msra.mxu0 %v587
      %785 = vmatpush.msra.mxu0 %v585
      %786 = vmatpush.msra.mxu0 %v583
      %787 = vmatpush.msra.mxu0 %v581
      %788 = vmatpush.msra.mxu0 %v579
      %789 = vmatmul.f32.gmra.mxu0 %v210
      %v790 = vpop.f32.mrf.mxu0
      %v791 = vadd.f32 0.0, %v790
      %792 = vmatmul.f32.gmra.mxu0 %v213
      %v793 = vpop.f32.mrf.mxu0
      %v794 = vadd.f32 0.0, %v793
      %795 = vmatmul.f32.gmra.mxu0 %v216
      %v796 = vpop.f32.mrf.mxu0
      %v797 = vadd.f32 0.0, %v796
      %798 = vmatmul.f32.gmra.mxu0 %v219
      %v799 = vpop.f32.mrf.mxu0
      %v800 = vadd.f32 0.0, %v799
      %801 = vmatmul.f32.gmra.mxu0 %v222
      %v802 = vpop.f32.mrf.mxu0
      %v803 = vadd.f32 0.0, %v802
      %804 = vmatmul.f32.gmra.mxu0 %v225
      %v805 = vpop.f32.mrf.mxu0
      %v806 = vadd.f32 0.0, %v805
      %807 = vmatmul.f32.gmra.mxu0 %v228
      %v808 = vpop.f32.mrf.mxu0
      %v809 = vadd.f32 0.0, %v808
      %810 = vmatmul.f32.gmra.mxu0 %v231
      %v811 = vpop.f32.mrf.mxu0
      %v812 = vadd.f32 0.0, %v811
      %813 = vdwg.mxu0
      %814 = vmatpush.msra.mxu0 %v641
      %815 = vmatpush.msra.mxu0 %v639
      %816 = vmatpush.msra.mxu0 %v637
      %817 = vmatpush.msra.mxu0 %v635
      %818 = vmatpush.msra.mxu0 %v633
      %819 = vmatpush.msra.mxu0 %v631
      %820 = vmatpush.msra.mxu0 %v629
      %821 = vmatpush.msra.mxu0 %v627
      %822 = vmatpush.msra.mxu0 %v625
      %823 = vmatpush.msra.mxu0 %v623
      %824 = vmatpush.msra.mxu0 %v621
      %825 = vmatpush.msra.mxu0 %v619
      %826 = vmatpush.msra.mxu0 %v617
      %827 = vmatpush.msra.mxu0 %v615
      %828 = vmatpush.msra.mxu0 %v613
      %829 = vmatpush.msra.mxu0 %v611
      %830 = vmatmul.f32.gmra.mxu0 %v211
      %v831 = vpop.f32.mrf.mxu0
      %v832 = vadd.f32 %v791, %v831
      %833 = vmatmul.f32.gmra.mxu0 %v214
      %v834 = vpop.f32.mrf.mxu0
      %v835 = vadd.f32 %v794, %v834
      %836 = vmatmul.f32.gmra.mxu0 %v217
      %v837 = vpop.f32.mrf.mxu0
      %v838 = vadd.f32 %v797, %v837
      %839 = vmatmul.f32.gmra.mxu0 %v220
      %v840 = vpop.f32.mrf.mxu0
      %v841 = vadd.f32 %v800, %v840
      %842 = vmatmul.f32.gmra.mxu0 %v223
      %v843 = vpop.f32.mrf.mxu0
      %v844 = vadd.f32 %v803, %v843
      %845 = vmatmul.f32.gmra.mxu0 %v226
      %v846 = vpop.f32.mrf.mxu0
      %v847 = vadd.f32 %v806, %v846
      %848 = vmatmul.f32.gmra.mxu0 %v229
      %v849 = vpop.f32.mrf.mxu0
      %v850 = vadd.f32 %v809, %v849
      %851 = vmatmul.f32.gmra.mxu0 %v232
      %v852 = vpop.f32.mrf.mxu0
      %v853 = vadd.f32 %v812, %v852
      %854 = vdwg.mxu0
      %855 = vmatpush.msra.mxu0 0.0
      %856 = vmatpush.msra.mxu0 0.0
      %857 = vmatpush.msra.mxu0 0.0
      %858 = vmatpush.msra.mxu0 0.0
      %859 = vmatpush.msra.mxu0 0.0
      %860 = vmatpush.msra.mxu0 0.0
      %861 = vmatpush.msra.mxu0 0.0
      %862 = vmatpush.msra.mxu0 0.0
      %863 = vmatpush.msra.mxu0 0.0
      %864 = vmatpush.msra.mxu0 0.0
      %865 = vmatpush.msra.mxu0 0.0
      %866 = vmatpush.msra.mxu0 0.0
      %867 = vmatpush.msra.mxu0 %v649
      %868 = vmatpush.msra.mxu0 %v647
      %869 = vmatpush.msra.mxu0 %v645
      %870 = vmatpush.msra.mxu0 %v643
      %871 = vmatmul.f32.gmra.mxu0 %v308
      %v872 = vpop.f32.mrf.mxu0
      %v873 = vadd.f32 %v832, %v872
      %874 = vmatmul.f32.gmra.mxu0 %v311
      %v875 = vpop.f32.mrf.mxu0
      %v876 = vadd.f32 %v835, %v875
      %877 = vmatmul.f32.gmra.mxu0 %v314
      %v878 = vpop.f32.mrf.mxu0
      %v879 = vadd.f32 %v838, %v878
      %880 = vmatmul.f32.gmra.mxu0 %v317
      %v881 = vpop.f32.mrf.mxu0
      %v882 = vadd.f32 %v841, %v881
      %883 = vmatmul.f32.gmra.mxu0 %v320
      %v884 = vpop.f32.mrf.mxu0
      %v885 = vadd.f32 %v844, %v884
      %886 = vmatmul.f32.gmra.mxu0 %v323
      %v887 = vpop.f32.mrf.mxu0
      %v888 = vadd.f32 %v847, %v887
      %889 = vmatmul.f32.gmra.mxu0 %v326
      %v890 = vpop.f32.mrf.mxu0
      %v891 = vadd.f32 %v850, %v890
      %892 = vmatmul.f32.gmra.mxu0 %v329
      %v893 = vpop.f32.mrf.mxu0
      %v894 = vadd.f32 %v853, %v893
      %895 = vdwg.mxu0
      %v896 = vmax.f32 %v431, %v750
      %v897 = vmax.f32 %v554, %v873
      %v898 = vmax.f32 %v434, %v753
      %v899 = vmax.f32 %v557, %v876
      %v900 = vmax.f32 %v437, %v756
      %v901 = vmax.f32 %v560, %v879
      %v902 = vmax.f32 %v440, %v759
      %v903 = vmax.f32 %v563, %v882
      %v904 = vmax.f32 %v443, %v762
      %v905 = vmax.f32 %v566, %v885
      %v906 = vmax.f32 %v446, %v765
      %v907 = vmax.f32 %v569, %v888
      %v908 = vmax.f32 %v449, %v768
      %v909 = vmax.f32 %v572, %v891
      %v910 = vmax.f32 %v452, %v771
      %v911 = vmax.f32 %v575, %v894
      %s912 = scalar_lea.vmem %s198, 1152
      %v913 = vld [vmem:[%s912] sm:$0xff]
      %v914 = vld [vmem:[%s912 + $0x8] sm:$0xff]
      %v915 = vld [vmem:[%s912 + $0x10] sm:$0xff]
      %v916 = vld [vmem:[%s912 + $0x18] sm:$0xff]
      %v917 = vld [vmem:[%s912 + $0x20] sm:$0xff]
      %v918 = vld [vmem:[%s912 + $0x28] sm:$0xff]
      %v919 = vld [vmem:[%s912 + $0x30] sm:$0xff]
      %v920 = vld [vmem:[%s912 + $0x38] sm:$0xff]
      %v921 = vld [vmem:[%s912 + $0x40] sm:$0xff]
      %v922 = vld [vmem:[%s912 + $0x48] sm:$0xff]
      %v923 = vld [vmem:[%s912 + $0x50] sm:$0xff]
      %v924 = vld [vmem:[%s912 + $0x58] sm:$0xff]
      %v925 = vld [vmem:[%s912 + $0x60] sm:$0xff]
      %v926 = vld [vmem:[%s912 + $0x68] sm:$0xff]
      %v927 = vld [vmem:[%s912 + $0x70] sm:$0xff]
      %v928 = vld [vmem:[%s912 + $0x78] sm:$0xff]
      %v929 = vld [vmem:[%s912 + $0x80] sm:$0xff]
      %v930 = vld [vmem:[%s912 + $0x88] sm:$0xff]
      %v931 = vld [vmem:[%s912 + $0x90] sm:$0xff]
      %v932 = vld [vmem:[%s912 + $0x98] sm:$0xff]
      %v933 = vld [vmem:[%s912 + $0xa0] sm:$0xff]
      %v934 = vld [vmem:[%s912 + $0xa8] sm:$0xff]
      %v935 = vld [vmem:[%s912 + $0xb0] sm:$0xff]
      %v936 = vld [vmem:[%s912 + $0xb8] sm:$0xff]
      %v937 = vld [vmem:[%s912 + $0xc0] sm:$0xff]
      %v938 = vld [vmem:[%s912 + $0xc8] sm:$0xff]
      %v939 = vld [vmem:[%s912 + $0xd0] sm:$0xff]
      %v940 = vld [vmem:[%s912 + $0xd8] sm:$0xff]
      %v941 = vld [vmem:[%s912 + $0xe0] sm:$0xff]
      %v942 = vld [vmem:[%s912 + $0xe8] sm:$0xff]
      %v943 = vld [vmem:[%s912 + $0xf0] sm:$0xff]
      %v944 = vld [vmem:[%s912 + $0xf8] sm:$0xff]
      %v945 = vld [vmem:[%s912 + $0x100] sm:$0xff]
      %v946 = vld [vmem:[%s912 + $0x108] sm:$0xff]
      %v947 = vld [vmem:[%s912 + $0x110] sm:$0xff]
      %v948 = vld [vmem:[%s912 + $0x118] sm:$0xff]
      %v949 = vld [vmem:[%s912 + $0x120] sm:$0xff]
      %v950 = vld [vmem:[%s912 + $0x128] sm:$0xff]
      %v951 = vld [vmem:[%s912 + $0x130] sm:$0xff]
      %v952 = vld [vmem:[%s912 + $0x138] sm:$0xff]
      %v953 = vld [vmem:[%s912 + $0x140] sm:$0xff]
      %v954 = vld [vmem:[%s912 + $0x148] sm:$0xff]
      %v955 = vld [vmem:[%s912 + $0x150] sm:$0xff]
      %v956 = vld [vmem:[%s912 + $0x158] sm:$0xff]
      %v957 = vld [vmem:[%s912 + $0x160] sm:$0xff]
      %v958 = vld [vmem:[%s912 + $0x168] sm:$0xff]
      %v959 = vld [vmem:[%s912 + $0x170] sm:$0xff]
      %v960 = vld [vmem:[%s912 + $0x178] sm:$0xff]
      %v961 = vld [vmem:[%s912 + $0x180] sm:$0xff]
      %v962 = vld [vmem:[%s912 + $0x188] sm:$0xff]
      %v963 = vld [vmem:[%s912 + $0x190] sm:$0xff]
      %v964 = vld [vmem:[%s912 + $0x198] sm:$0xff]
      %v965 = vld [vmem:[%s912 + $0x1a0] sm:$0xff]
      %v966 = vld [vmem:[%s912 + $0x1a8] sm:$0xff]
      %v967 = vld [vmem:[%s912 + $0x1b0] sm:$0xff]
      %v968 = vld [vmem:[%s912 + $0x1b8] sm:$0xff]
      %v969 = vld [vmem:[%s912 + $0x1c0] sm:$0xff]
      %v970 = vld [vmem:[%s912 + $0x1c8] sm:$0xff]
      %v971 = vld [vmem:[%s912 + $0x1d0] sm:$0xff]
      %v972 = vld [vmem:[%s912 + $0x1d8] sm:$0xff]
      %v973 = vld [vmem:[%s912 + $0x1e0] sm:$0xff]
      %v974 = vld [vmem:[%s912 + $0x1e8] sm:$0xff]
      %v975 = vld [vmem:[%s912 + $0x1f0] sm:$0xff]
      %v976 = vld [vmem:[%s912 + $0x1f8] sm:$0xff]
      %v977 = vld [vmem:[%s912 + $0x200] sm:$0xff]
      %v978 = vld [vmem:[%s912 + $0x208] sm:$0xff]
      %v979 = vld [vmem:[%s912 + $0x210] sm:$0xff]
      %v980 = vld [vmem:[%s912 + $0x218] sm:$0xff]
      %v981 = vld [vmem:[%s912 + $0x220] sm:$0xff]
      %v982 = vld [vmem:[%s912 + $0x228] sm:$0xff]
      %v983 = vld [vmem:[%s912 + $0x230] sm:$0xff]
      %v984 = vld [vmem:[%s912 + $0x238] sm:$0xff]
      %985 = vmatpush.msra.mxu0 %v943
      %986 = vmatpush.msra.mxu0 %v941
      %987 = vmatpush.msra.mxu0 %v939
      %988 = vmatpush.msra.mxu0 %v937
      %989 = vmatpush.msra.mxu0 %v935
      %990 = vmatpush.msra.mxu0 %v933
      %991 = vmatpush.msra.mxu0 %v931
      %992 = vmatpush.msra.mxu0 %v929
      %993 = vmatpush.msra.mxu0 %v927
      %994 = vmatpush.msra.mxu0 %v925
      %995 = vmatpush.msra.mxu0 %v923
      %996 = vmatpush.msra.mxu0 %v921
      %997 = vmatpush.msra.mxu0 %v919
      %998 = vmatpush.msra.mxu0 %v917
      %999 = vmatpush.msra.mxu0 %v915
      %1000 = vmatpush.msra.mxu0 %v913
      %1001 = vmatmul.f32.gmra.mxu0 %v210
      %v1002 = vpop.f32.mrf.mxu0
      %v1003 = vadd.f32 0.0, %v1002
      %1004 = vmatmul.f32.gmra.mxu0 %v213
      %v1005 = vpop.f32.mrf.mxu0
      %v1006 = vadd.f32 0.0, %v1005
      %1007 = vmatmul.f32.gmra.mxu0 %v216
      %v1008 = vpop.f32.mrf.mxu0
      %v1009 = vadd.f32 0.0, %v1008
      %1010 = vmatmul.f32.gmra.mxu0 %v219
      %v1011 = vpop.f32.mrf.mxu0
      %v1012 = vadd.f32 0.0, %v1011
      %1013 = vmatmul.f32.gmra.mxu0 %v222
      %v1014 = vpop.f32.mrf.mxu0
      %v1015 = vadd.f32 0.0, %v1014
      %1016 = vmatmul.f32.gmra.mxu0 %v225
      %v1017 = vpop.f32.mrf.mxu0
      %v1018 = vadd.f32 0.0, %v1017
      %1019 = vmatmul.f32.gmra.mxu0 %v228
      %v1020 = vpop.f32.mrf.mxu0
      %v1021 = vadd.f32 0.0, %v1020
      %1022 = vmatmul.f32.gmra.mxu0 %v231
      %v1023 = vpop.f32.mrf.mxu0
      %v1024 = vadd.f32 0.0, %v1023
      %1025 = vdwg.mxu0
      %1026 = vmatpush.msra.mxu0 %v975
      %1027 = vmatpush.msra.mxu0 %v973
      %1028 = vmatpush.msra.mxu0 %v971
      %1029 = vmatpush.msra.mxu0 %v969
      %1030 = vmatpush.msra.mxu0 %v967
      %1031 = vmatpush.msra.mxu0 %v965
      %1032 = vmatpush.msra.mxu0 %v963
      %1033 = vmatpush.msra.mxu0 %v961
      %1034 = vmatpush.msra.mxu0 %v959
      %1035 = vmatpush.msra.mxu0 %v957
      %1036 = vmatpush.msra.mxu0 %v955
      %1037 = vmatpush.msra.mxu0 %v953
      %1038 = vmatpush.msra.mxu0 %v951
      %1039 = vmatpush.msra.mxu0 %v949
      %1040 = vmatpush.msra.mxu0 %v947
      %1041 = vmatpush.msra.mxu0 %v945
      %1042 = vmatmul.f32.gmra.mxu0 %v211
      %v1043 = vpop.f32.mrf.mxu0
      %v1044 = vadd.f32 %v1003, %v1043
      %1045 = vmatmul.f32.gmra.mxu0 %v214
      %v1046 = vpop.f32.mrf.mxu0
      %v1047 = vadd.f32 %v1006, %v1046
      %1048 = vmatmul.f32.gmra.mxu0 %v217
      %v1049 = vpop.f32.mrf.mxu0
      %v1050 = vadd.f32 %v1009, %v1049
      %1051 = vmatmul.f32.gmra.mxu0 %v220
      %v1052 = vpop.f32.mrf.mxu0
      %v1053 = vadd.f32 %v1012, %v1052
      %1054 = vmatmul.f32.gmra.mxu0 %v223
      %v1055 = vpop.f32.mrf.mxu0
      %v1056 = vadd.f32 %v1015, %v1055
      %1057 = vmatmul.f32.gmra.mxu0 %v226
      %v1058 = vpop.f32.mrf.mxu0
      %v1059 = vadd.f32 %v1018, %v1058
      %1060 = vmatmul.f32.gmra.mxu0 %v229
      %v1061 = vpop.f32.mrf.mxu0
      %v1062 = vadd.f32 %v1021, %v1061
      %1063 = vmatmul.f32.gmra.mxu0 %v232
      %v1064 = vpop.f32.mrf.mxu0
      %v1065 = vadd.f32 %v1024, %v1064
      %1066 = vdwg.mxu0
      %1067 = vmatpush.msra.mxu0 0.0
      %1068 = vmatpush.msra.mxu0 0.0
      %1069 = vmatpush.msra.mxu0 0.0
      %1070 = vmatpush.msra.mxu0 0.0
      %1071 = vmatpush.msra.mxu0 0.0
      %1072 = vmatpush.msra.mxu0 0.0
      %1073 = vmatpush.msra.mxu0 0.0
      %1074 = vmatpush.msra.mxu0 0.0
      %1075 = vmatpush.msra.mxu0 0.0
      %1076 = vmatpush.msra.mxu0 0.0
      %1077 = vmatpush.msra.mxu0 0.0
      %1078 = vmatpush.msra.mxu0 0.0
      %1079 = vmatpush.msra.mxu0 %v983
      %1080 = vmatpush.msra.mxu0 %v981
      %1081 = vmatpush.msra.mxu0 %v979
      %1082 = vmatpush.msra.mxu0 %v977
      %1083 = vmatmul.f32.gmra.mxu0 %v308
      %v1084 = vpop.f32.mrf.mxu0
      %v1085 = vadd.f32 %v1044, %v1084
      %1086 = vmatmul.f32.gmra.mxu0 %v311
      %v1087 = vpop.f32.mrf.mxu0
      %v1088 = vadd.f32 %v1047, %v1087
      %1089 = vmatmul.f32.gmra.mxu0 %v314
      %v1090 = vpop.f32.mrf.mxu0
      %v1091 = vadd.f32 %v1050, %v1090
      %1092 = vmatmul.f32.gmra.mxu0 %v317
      %v1093 = vpop.f32.mrf.mxu0
      %v1094 = vadd.f32 %v1053, %v1093
      %1095 = vmatmul.f32.gmra.mxu0 %v320
      %v1096 = vpop.f32.mrf.mxu0
      %v1097 = vadd.f32 %v1056, %v1096
      %1098 = vmatmul.f32.gmra.mxu0 %v323
      %v1099 = vpop.f32.mrf.mxu0
      %v1100 = vadd.f32 %v1059, %v1099
      %1101 = vmatmul.f32.gmra.mxu0 %v326
      %v1102 = vpop.f32.mrf.mxu0
      %v1103 = vadd.f32 %v1062, %v1102
      %1104 = vmatmul.f32.gmra.mxu0 %v329
      %v1105 = vpop.f32.mrf.mxu0
      %v1106 = vadd.f32 %v1065, %v1105
      %1107 = vdwg.mxu0
      %1108 = vmatpush.msra.mxu0 %v944
      %1109 = vmatpush.msra.mxu0 %v942
      %1110 = vmatpush.msra.mxu0 %v940
      %1111 = vmatpush.msra.mxu0 %v938
      %1112 = vmatpush.msra.mxu0 %v936
      %1113 = vmatpush.msra.mxu0 %v934
      %1114 = vmatpush.msra.mxu0 %v932
      %1115 = vmatpush.msra.mxu0 %v930
      %1116 = vmatpush.msra.mxu0 %v928
      %1117 = vmatpush.msra.mxu0 %v926
      %1118 = vmatpush.msra.mxu0 %v924
      %1119 = vmatpush.msra.mxu0 %v922
      %1120 = vmatpush.msra.mxu0 %v920
      %1121 = vmatpush.msra.mxu0 %v918
      %1122 = vmatpush.msra.mxu0 %v916
      %1123 = vmatpush.msra.mxu0 %v914
      %1124 = vmatmul.f32.gmra.mxu0 %v210
      %v1125 = vpop.f32.mrf.mxu0
      %v1126 = vadd.f32 0.0, %v1125
      %1127 = vmatmul.f32.gmra.mxu0 %v213
      %v1128 = vpop.f32.mrf.mxu0
      %v1129 = vadd.f32 0.0, %v1128
      %1130 = vmatmul.f32.gmra.mxu0 %v216
      %v1131 = vpop.f32.mrf.mxu0
      %v1132 = vadd.f32 0.0, %v1131
      %1133 = vmatmul.f32.gmra.mxu0 %v219
      %v1134 = vpop.f32.mrf.mxu0
      %v1135 = vadd.f32 0.0, %v1134
      %1136 = vmatmul.f32.gmra.mxu0 %v222
      %v1137 = vpop.f32.mrf.mxu0
      %v1138 = vadd.f32 0.0, %v1137
      %1139 = vmatmul.f32.gmra.mxu0 %v225
      %v1140 = vpop.f32.mrf.mxu0
      %v1141 = vadd.f32 0.0, %v1140
      %1142 = vmatmul.f32.gmra.mxu0 %v228
      %v1143 = vpop.f32.mrf.mxu0
      %v1144 = vadd.f32 0.0, %v1143
      %1145 = vmatmul.f32.gmra.mxu0 %v231
      %v1146 = vpop.f32.mrf.mxu0
      %v1147 = vadd.f32 0.0, %v1146
      %1148 = vdwg.mxu0
      %1149 = vmatpush.msra.mxu0 %v976
      %1150 = vmatpush.msra.mxu0 %v974
      %1151 = vmatpush.msra.mxu0 %v972
      %1152 = vmatpush.msra.mxu0 %v970
      %1153 = vmatpush.msra.mxu0 %v968
      %1154 = vmatpush.msra.mxu0 %v966
      %1155 = vmatpush.msra.mxu0 %v964
      %1156 = vmatpush.msra.mxu0 %v962
      %1157 = vmatpush.msra.mxu0 %v960
      %1158 = vmatpush.msra.mxu0 %v958
      %1159 = vmatpush.msra.mxu0 %v956
      %1160 = vmatpush.msra.mxu0 %v954
      %1161 = vmatpush.msra.mxu0 %v952
      %1162 = vmatpush.msra.mxu0 %v950
      %1163 = vmatpush.msra.mxu0 %v948
      %1164 = vmatpush.msra.mxu0 %v946
      %1165 = vmatmul.f32.gmra.mxu0 %v211
      %v1166 = vpop.f32.mrf.mxu0
      %v1167 = vadd.f32 %v1126, %v1166
      %1168 = vmatmul.f32.gmra.mxu0 %v214
      %v1169 = vpop.f32.mrf.mxu0
      %v1170 = vadd.f32 %v1129, %v1169
      %1171 = vmatmul.f32.gmra.mxu0 %v217
      %v1172 = vpop.f32.mrf.mxu0
      %v1173 = vadd.f32 %v1132, %v1172
      %1174 = vmatmul.f32.gmra.mxu0 %v220
      %v1175 = vpop.f32.mrf.mxu0
      %v1176 = vadd.f32 %v1135, %v1175
      %1177 = vmatmul.f32.gmra.mxu0 %v223
      %v1178 = vpop.f32.mrf.mxu0
      %v1179 = vadd.f32 %v1138, %v1178
      %1180 = vmatmul.f32.gmra.mxu0 %v226
      %v1181 = vpop.f32.mrf.mxu0
      %v1182 = vadd.f32 %v1141, %v1181
      %1183 = vmatmul.f32.gmra.mxu0 %v229
      %v1184 = vpop.f32.mrf.mxu0
      %v1185 = vadd.f32 %v1144, %v1184
      %1186 = vmatmul.f32.gmra.mxu0 %v232
      %v1187 = vpop.f32.mrf.mxu0
      %v1188 = vadd.f32 %v1147, %v1187
      %1189 = vdwg.mxu0
      %1190 = vmatpush.msra.mxu0 0.0
      %1191 = vmatpush.msra.mxu0 0.0
      %1192 = vmatpush.msra.mxu0 0.0
      %1193 = vmatpush.msra.mxu0 0.0
      %1194 = vmatpush.msra.mxu0 0.0
      %1195 = vmatpush.msra.mxu0 0.0
      %1196 = vmatpush.msra.mxu0 0.0
      %1197 = vmatpush.msra.mxu0 0.0
      %1198 = vmatpush.msra.mxu0 0.0
      %1199 = vmatpush.msra.mxu0 0.0
      %1200 = vmatpush.msra.mxu0 0.0
      %1201 = vmatpush.msra.mxu0 0.0
      %1202 = vmatpush.msra.mxu0 %v984
      %1203 = vmatpush.msra.mxu0 %v982
      %1204 = vmatpush.msra.mxu0 %v980
      %1205 = vmatpush.msra.mxu0 %v978
      %1206 = vmatmul.f32.gmra.mxu0 %v308
      %v1207 = vpop.f32.mrf.mxu0
      %v1208 = vadd.f32 %v1167, %v1207
      %1209 = vmatmul.f32.gmra.mxu0 %v311
      %v1210 = vpop.f32.mrf.mxu0
      %v1211 = vadd.f32 %v1170, %v1210
      %1212 = vmatmul.f32.gmra.mxu0 %v314
      %v1213 = vpop.f32.mrf.mxu0
      %v1214 = vadd.f32 %v1173, %v1213
      %1215 = vmatmul.f32.gmra.mxu0 %v317
      %v1216 = vpop.f32.mrf.mxu0
      %v1217 = vadd.f32 %v1176, %v1216
      %1218 = vmatmul.f32.gmra.mxu0 %v320
      %v1219 = vpop.f32.mrf.mxu0
      %v1220 = vadd.f32 %v1179, %v1219
      %1221 = vmatmul.f32.gmra.mxu0 %v323
      %v1222 = vpop.f32.mrf.mxu0
      %v1223 = vadd.f32 %v1182, %v1222
      %1224 = vmatmul.f32.gmra.mxu0 %v326
      %v1225 = vpop.f32.mrf.mxu0
      %v1226 = vadd.f32 %v1185, %v1225
      %1227 = vmatmul.f32.gmra.mxu0 %v329
      %v1228 = vpop.f32.mrf.mxu0
      %v1229 = vadd.f32 %v1188, %v1228
      %1230 = vdwg.mxu0
      %v1231 = vmax.f32 %v896, %v1085
      %v1232 = vmax.f32 %v897, %v1208
      %v1233 = vmax.f32 %v898, %v1088
      %v1234 = vmax.f32 %v899, %v1211
      %v1235 = vmax.f32 %v900, %v1091
      %v1236 = vmax.f32 %v901, %v1214
      %v1237 = vmax.f32 %v902, %v1094
      %v1238 = vmax.f32 %v903, %v1217
      %v1239 = vmax.f32 %v904, %v1097
      %v1240 = vmax.f32 %v905, %v1220
      %v1241 = vmax.f32 %v906, %v1100
      %v1242 = vmax.f32 %v907, %v1223
      %v1243 = vmax.f32 %v908, %v1103
      %v1244 = vmax.f32 %v909, %v1226
      %v1245 = vmax.f32 %v910, %v1106
      %v1246 = vmax.f32 %v911, %v1229
      %s1247 = scalar_lea.vmem %s198, 1728
      %v1248 = vld [vmem:[%s1247] sm:$0xff]
      %v1249 = vld [vmem:[%s1247 + $0x8] sm:$0xff]
      %v1250 = vld [vmem:[%s1247 + $0x10] sm:$0xff]
      %v1251 = vld [vmem:[%s1247 + $0x18] sm:$0xff]
      %v1252 = vld [vmem:[%s1247 + $0x20] sm:$0xff]
      %v1253 = vld [vmem:[%s1247 + $0x28] sm:$0xff]
      %v1254 = vld [vmem:[%s1247 + $0x30] sm:$0xff]
      %v1255 = vld [vmem:[%s1247 + $0x38] sm:$0xff]
      %v1256 = vld [vmem:[%s1247 + $0x40] sm:$0xff]
      %v1257 = vld [vmem:[%s1247 + $0x48] sm:$0xff]
      %v1258 = vld [vmem:[%s1247 + $0x50] sm:$0xff]
      %v1259 = vld [vmem:[%s1247 + $0x58] sm:$0xff]
      %v1260 = vld [vmem:[%s1247 + $0x60] sm:$0xff]
      %v1261 = vld [vmem:[%s1247 + $0x68] sm:$0xff]
      %v1262 = vld [vmem:[%s1247 + $0x70] sm:$0xff]
      %v1263 = vld [vmem:[%s1247 + $0x78] sm:$0xff]
      %v1264 = vld [vmem:[%s1247 + $0x80] sm:$0xff]
      %v1265 = vld [vmem:[%s1247 + $0x88] sm:$0xff]
      %v1266 = vld [vmem:[%s1247 + $0x90] sm:$0xff]
      %v1267 = vld [vmem:[%s1247 + $0x98] sm:$0xff]
      %v1268 = vld [vmem:[%s1247 + $0xa0] sm:$0xff]
      %v1269 = vld [vmem:[%s1247 + $0xa8] sm:$0xff]
      %v1270 = vld [vmem:[%s1247 + $0xb0] sm:$0xff]
      %v1271 = vld [vmem:[%s1247 + $0xb8] sm:$0xff]
      %v1272 = vld [vmem:[%s1247 + $0xc0] sm:$0xff]
      %v1273 = vld [vmem:[%s1247 + $0xc8] sm:$0xff]
      %v1274 = vld [vmem:[%s1247 + $0xd0] sm:$0xff]
      %v1275 = vld [vmem:[%s1247 + $0xd8] sm:$0xff]
      %v1276 = vld [vmem:[%s1247 + $0xe0] sm:$0xff]
      %v1277 = vld [vmem:[%s1247 + $0xe8] sm:$0xff]
      %v1278 = vld [vmem:[%s1247 + $0xf0] sm:$0xff]
      %v1279 = vld [vmem:[%s1247 + $0xf8] sm:$0xff]
      %v1280 = vld [vmem:[%s1247 + $0x100] sm:$0xff]
      %v1281 = vld [vmem:[%s1247 + $0x108] sm:$0xff]
      %v1282 = vld [vmem:[%s1247 + $0x110] sm:$0xff]
      %v1283 = vld [vmem:[%s1247 + $0x118] sm:$0xff]
      %v1284 = vld [vmem:[%s1247 + $0x120] sm:$0xff]
      %v1285 = vld [vmem:[%s1247 + $0x128] sm:$0xff]
      %v1286 = vld [vmem:[%s1247 + $0x130] sm:$0xff]
      %v1287 = vld [vmem:[%s1247 + $0x138] sm:$0xff]
      %v1288 = vld [vmem:[%s1247 + $0x140] sm:$0xff]
      %v1289 = vld [vmem:[%s1247 + $0x148] sm:$0xff]
      %v1290 = vld [vmem:[%s1247 + $0x150] sm:$0xff]
      %v1291 = vld [vmem:[%s1247 + $0x158] sm:$0xff]
      %v1292 = vld [vmem:[%s1247 + $0x160] sm:$0xff]
      %v1293 = vld [vmem:[%s1247 + $0x168] sm:$0xff]
      %v1294 = vld [vmem:[%s1247 + $0x170] sm:$0xff]
      %v1295 = vld [vmem:[%s1247 + $0x178] sm:$0xff]
      %v1296 = vld [vmem:[%s1247 + $0x180] sm:$0xff]
      %v1297 = vld [vmem:[%s1247 + $0x188] sm:$0xff]
      %v1298 = vld [vmem:[%s1247 + $0x190] sm:$0xff]
      %v1299 = vld [vmem:[%s1247 + $0x198] sm:$0xff]
      %v1300 = vld [vmem:[%s1247 + $0x1a0] sm:$0xff]
      %v1301 = vld [vmem:[%s1247 + $0x1a8] sm:$0xff]
      %v1302 = vld [vmem:[%s1247 + $0x1b0] sm:$0xff]
      %v1303 = vld [vmem:[%s1247 + $0x1b8] sm:$0xff]
      %v1304 = vld [vmem:[%s1247 + $0x1c0] sm:$0xff]
      %v1305 = vld [vmem:[%s1247 + $0x1c8] sm:$0xff]
      %v1306 = vld [vmem:[%s1247 + $0x1d0] sm:$0xff]
      %v1307 = vld [vmem:[%s1247 + $0x1d8] sm:$0xff]
      %v1308 = vld [vmem:[%s1247 + $0x1e0] sm:$0xff]
      %v1309 = vld [vmem:[%s1247 + $0x1e8] sm:$0xff]
      %v1310 = vld [vmem:[%s1247 + $0x1f0] sm:$0xff]
      %v1311 = vld [vmem:[%s1247 + $0x1f8] sm:$0xff]
      %v1312 = vld [vmem:[%s1247 + $0x200] sm:$0xff]
      %v1313 = vld [vmem:[%s1247 + $0x208] sm:$0xff]
      %v1314 = vld [vmem:[%s1247 + $0x210] sm:$0xff]
      %v1315 = vld [vmem:[%s1247 + $0x218] sm:$0xff]
      %v1316 = vld [vmem:[%s1247 + $0x220] sm:$0xff]
      %v1317 = vld [vmem:[%s1247 + $0x228] sm:$0xff]
      %v1318 = vld [vmem:[%s1247 + $0x230] sm:$0xff]
      %v1319 = vld [vmem:[%s1247 + $0x238] sm:$0xff]
      %1320 = vmatpush.msra.mxu0 %v1278
      %1321 = vmatpush.msra.mxu0 %v1276
      %1322 = vmatpush.msra.mxu0 %v1274
      %1323 = vmatpush.msra.mxu0 %v1272
      %1324 = vmatpush.msra.mxu0 %v1270
      %1325 = vmatpush.msra.mxu0 %v1268
      %1326 = vmatpush.msra.mxu0 %v1266
      %1327 = vmatpush.msra.mxu0 %v1264
      %1328 = vmatpush.msra.mxu0 %v1262
      %1329 = vmatpush.msra.mxu0 %v1260
      %1330 = vmatpush.msra.mxu0 %v1258
      %1331 = vmatpush.msra.mxu0 %v1256
      %1332 = vmatpush.msra.mxu0 %v1254
      %1333 = vmatpush.msra.mxu0 %v1252
      %1334 = vmatpush.msra.mxu0 %v1250
      %1335 = vmatpush.msra.mxu0 %v1248
      %1336 = vmatmul.f32.gmra.mxu0 %v210
      %v1337 = vpop.f32.mrf.mxu0
      %v1338 = vadd.f32 0.0, %v1337
      %1339 = vmatmul.f32.gmra.mxu0 %v213
      %v1340 = vpop.f32.mrf.mxu0
      %v1341 = vadd.f32 0.0, %v1340
      %1342 = vmatmul.f32.gmra.mxu0 %v216
      %v1343 = vpop.f32.mrf.mxu0
      %v1344 = vadd.f32 0.0, %v1343
      %1345 = vmatmul.f32.gmra.mxu0 %v219
      %v1346 = vpop.f32.mrf.mxu0
      %v1347 = vadd.f32 0.0, %v1346
      %1348 = vmatmul.f32.gmra.mxu0 %v222
      %v1349 = vpop.f32.mrf.mxu0
      %v1350 = vadd.f32 0.0, %v1349
      %1351 = vmatmul.f32.gmra.mxu0 %v225
      %v1352 = vpop.f32.mrf.mxu0
      %v1353 = vadd.f32 0.0, %v1352
      %1354 = vmatmul.f32.gmra.mxu0 %v228
      %v1355 = vpop.f32.mrf.mxu0
      %v1356 = vadd.f32 0.0, %v1355
      %1357 = vmatmul.f32.gmra.mxu0 %v231
      %v1358 = vpop.f32.mrf.mxu0
      %v1359 = vadd.f32 0.0, %v1358
      %1360 = vdwg.mxu0
      %1361 = vmatpush.msra.mxu0 %v1310
      %1362 = vmatpush.msra.mxu0 %v1308
      %1363 = vmatpush.msra.mxu0 %v1306
      %1364 = vmatpush.msra.mxu0 %v1304
      %1365 = vmatpush.msra.mxu0 %v1302
      %1366 = vmatpush.msra.mxu0 %v1300
      %1367 = vmatpush.msra.mxu0 %v1298
      %1368 = vmatpush.msra.mxu0 %v1296
      %1369 = vmatpush.msra.mxu0 %v1294
      %1370 = vmatpush.msra.mxu0 %v1292
      %1371 = vmatpush.msra.mxu0 %v1290
      %1372 = vmatpush.msra.mxu0 %v1288
      %1373 = vmatpush.msra.mxu0 %v1286
      %1374 = vmatpush.msra.mxu0 %v1284
      %1375 = vmatpush.msra.mxu0 %v1282
      %1376 = vmatpush.msra.mxu0 %v1280
      %1377 = vmatmul.f32.gmra.mxu0 %v211
      %v1378 = vpop.f32.mrf.mxu0
      %v1379 = vadd.f32 %v1338, %v1378
      %1380 = vmatmul.f32.gmra.mxu0 %v214
      %v1381 = vpop.f32.mrf.mxu0
      %v1382 = vadd.f32 %v1341, %v1381
      %1383 = vmatmul.f32.gmra.mxu0 %v217
      %v1384 = vpop.f32.mrf.mxu0
      %v1385 = vadd.f32 %v1344, %v1384
      %1386 = vmatmul.f32.gmra.mxu0 %v220
      %v1387 = vpop.f32.mrf.mxu0
      %v1388 = vadd.f32 %v1347, %v1387
      %1389 = vmatmul.f32.gmra.mxu0 %v223
      %v1390 = vpop.f32.mrf.mxu0
      %v1391 = vadd.f32 %v1350, %v1390
      %1392 = vmatmul.f32.gmra.mxu0 %v226
      %v1393 = vpop.f32.mrf.mxu0
      %v1394 = vadd.f32 %v1353, %v1393
      %1395 = vmatmul.f32.gmra.mxu0 %v229
      %v1396 = vpop.f32.mrf.mxu0
      %v1397 = vadd.f32 %v1356, %v1396
      %1398 = vmatmul.f32.gmra.mxu0 %v232
      %v1399 = vpop.f32.mrf.mxu0
      %v1400 = vadd.f32 %v1359, %v1399
      %1401 = vdwg.mxu0
      %1402 = vmatpush.msra.mxu0 0.0
      %1403 = vmatpush.msra.mxu0 0.0
      %1404 = vmatpush.msra.mxu0 0.0
      %1405 = vmatpush.msra.mxu0 0.0
      %1406 = vmatpush.msra.mxu0 0.0
      %1407 = vmatpush.msra.mxu0 0.0
      %1408 = vmatpush.msra.mxu0 0.0
      %1409 = vmatpush.msra.mxu0 0.0
      %1410 = vmatpush.msra.mxu0 0.0
      %1411 = vmatpush.msra.mxu0 0.0
      %1412 = vmatpush.msra.mxu0 0.0
      %1413 = vmatpush.msra.mxu0 0.0
      %1414 = vmatpush.msra.mxu0 %v1318
      %1415 = vmatpush.msra.mxu0 %v1316
      %1416 = vmatpush.msra.mxu0 %v1314
      %1417 = vmatpush.msra.mxu0 %v1312
      %1418 = vmatmul.f32.gmra.mxu0 %v308
      %v1419 = vpop.f32.mrf.mxu0
      %v1420 = vadd.f32 %v1379, %v1419
      %1421 = vmatmul.f32.gmra.mxu0 %v311
      %v1422 = vpop.f32.mrf.mxu0
      %v1423 = vadd.f32 %v1382, %v1422
      %1424 = vmatmul.f32.gmra.mxu0 %v314
      %v1425 = vpop.f32.mrf.mxu0
      %v1426 = vadd.f32 %v1385, %v1425
      %1427 = vmatmul.f32.gmra.mxu0 %v317
      %v1428 = vpop.f32.mrf.mxu0
      %v1429 = vadd.f32 %v1388, %v1428
      %1430 = vmatmul.f32.gmra.mxu0 %v320
      %v1431 = vpop.f32.mrf.mxu0
      %v1432 = vadd.f32 %v1391, %v1431
      %1433 = vmatmul.f32.gmra.mxu0 %v323
      %v1434 = vpop.f32.mrf.mxu0
      %v1435 = vadd.f32 %v1394, %v1434
      %1436 = vmatmul.f32.gmra.mxu0 %v326
      %v1437 = vpop.f32.mrf.mxu0
      %v1438 = vadd.f32 %v1397, %v1437
      %1439 = vmatmul.f32.gmra.mxu0 %v329
      %v1440 = vpop.f32.mrf.mxu0
      %v1441 = vadd.f32 %v1400, %v1440
      %1442 = vdwg.mxu0
      %1443 = vmatpush.msra.mxu0 %v1279
      %1444 = vmatpush.msra.mxu0 %v1277
      %1445 = vmatpush.msra.mxu0 %v1275
      %1446 = vmatpush.msra.mxu0 %v1273
      %1447 = vmatpush.msra.mxu0 %v1271
      %1448 = vmatpush.msra.mxu0 %v1269
      %1449 = vmatpush.msra.mxu0 %v1267
      %1450 = vmatpush.msra.mxu0 %v1265
      %1451 = vmatpush.msra.mxu0 %v1263
      %1452 = vmatpush.msra.mxu0 %v1261
      %1453 = vmatpush.msra.mxu0 %v1259
      %1454 = vmatpush.msra.mxu0 %v1257
      %1455 = vmatpush.msra.mxu0 %v1255
      %1456 = vmatpush.msra.mxu0 %v1253
      %1457 = vmatpush.msra.mxu0 %v1251
      %1458 = vmatpush.msra.mxu0 %v1249
      %1459 = vmatmul.f32.gmra.mxu0 %v210
      %v1460 = vpop.f32.mrf.mxu0
      %v1461 = vadd.f32 0.0, %v1460
      %1462 = vmatmul.f32.gmra.mxu0 %v213
      %v1463 = vpop.f32.mrf.mxu0
      %v1464 = vadd.f32 0.0, %v1463
      %1465 = vmatmul.f32.gmra.mxu0 %v216
      %v1466 = vpop.f32.mrf.mxu0
      %v1467 = vadd.f32 0.0, %v1466
      %1468 = vmatmul.f32.gmra.mxu0 %v219
      %v1469 = vpop.f32.mrf.mxu0
      %v1470 = vadd.f32 0.0, %v1469
      %1471 = vmatmul.f32.gmra.mxu0 %v222
      %v1472 = vpop.f32.mrf.mxu0
      %v1473 = vadd.f32 0.0, %v1472
      %1474 = vmatmul.f32.gmra.mxu0 %v225
      %v1475 = vpop.f32.mrf.mxu0
      %v1476 = vadd.f32 0.0, %v1475
      %1477 = vmatmul.f32.gmra.mxu0 %v228
      %v1478 = vpop.f32.mrf.mxu0
      %v1479 = vadd.f32 0.0, %v1478
      %1480 = vmatmul.f32.gmra.mxu0 %v231
      %v1481 = vpop.f32.mrf.mxu0
      %v1482 = vadd.f32 0.0, %v1481
      %1483 = vdwg.mxu0
      %1484 = vmatpush.msra.mxu0 %v1311
      %1485 = vmatpush.msra.mxu0 %v1309
      %1486 = vmatpush.msra.mxu0 %v1307
      %1487 = vmatpush.msra.mxu0 %v1305
      %1488 = vmatpush.msra.mxu0 %v1303
      %1489 = vmatpush.msra.mxu0 %v1301
      %1490 = vmatpush.msra.mxu0 %v1299
      %1491 = vmatpush.msra.mxu0 %v1297
      %1492 = vmatpush.msra.mxu0 %v1295
      %1493 = vmatpush.msra.mxu0 %v1293
      %1494 = vmatpush.msra.mxu0 %v1291
      %1495 = vmatpush.msra.mxu0 %v1289
      %1496 = vmatpush.msra.mxu0 %v1287
      %1497 = vmatpush.msra.mxu0 %v1285
      %1498 = vmatpush.msra.mxu0 %v1283
      %1499 = vmatpush.msra.mxu0 %v1281
      %1500 = vmatmul.f32.gmra.mxu0 %v211
      %v1501 = vpop.f32.mrf.mxu0
      %v1502 = vadd.f32 %v1461, %v1501
      %1503 = vmatmul.f32.gmra.mxu0 %v214
      %v1504 = vpop.f32.mrf.mxu0
      %v1505 = vadd.f32 %v1464, %v1504
      %1506 = vmatmul.f32.gmra.mxu0 %v217
      %v1507 = vpop.f32.mrf.mxu0
      %v1508 = vadd.f32 %v1467, %v1507
      %1509 = vmatmul.f32.gmra.mxu0 %v220
      %v1510 = vpop.f32.mrf.mxu0
      %v1511 = vadd.f32 %v1470, %v1510
      %1512 = vmatmul.f32.gmra.mxu0 %v223
      %v1513 = vpop.f32.mrf.mxu0
      %v1514 = vadd.f32 %v1473, %v1513
      %1515 = vmatmul.f32.gmra.mxu0 %v226
      %v1516 = vpop.f32.mrf.mxu0
      %v1517 = vadd.f32 %v1476, %v1516
      %1518 = vmatmul.f32.gmra.mxu0 %v229
      %v1519 = vpop.f32.mrf.mxu0
      %v1520 = vadd.f32 %v1479, %v1519
      %1521 = vmatmul.f32.gmra.mxu0 %v232
      %v1522 = vpop.f32.mrf.mxu0
      %v1523 = vadd.f32 %v1482, %v1522
      %1524 = vdwg.mxu0
      %1525 = vmatpush.msra.mxu0 0.0
      %1526 = vmatpush.msra.mxu0 0.0
      %1527 = vmatpush.msra.mxu0 0.0
      %1528 = vmatpush.msra.mxu0 0.0
      %1529 = vmatpush.msra.mxu0 0.0
      %1530 = vmatpush.msra.mxu0 0.0
      %1531 = vmatpush.msra.mxu0 0.0
      %1532 = vmatpush.msra.mxu0 0.0
      %1533 = vmatpush.msra.mxu0 0.0
      %1534 = vmatpush.msra.mxu0 0.0
      %1535 = vmatpush.msra.mxu0 0.0
      %1536 = vmatpush.msra.mxu0 0.0
      %1537 = vmatpush.msra.mxu0 %v1319
      %1538 = vmatpush.msra.mxu0 %v1317
      %1539 = vmatpush.msra.mxu0 %v1315
      %1540 = vmatpush.msra.mxu0 %v1313
      %1541 = vmatmul.f32.gmra.mxu0 %v308
      %v1542 = vpop.f32.mrf.mxu0
      %v1543 = vadd.f32 %v1502, %v1542
      %1544 = vmatmul.f32.gmra.mxu0 %v311
      %v1545 = vpop.f32.mrf.mxu0
      %v1546 = vadd.f32 %v1505, %v1545
      %1547 = vmatmul.f32.gmra.mxu0 %v314
      %v1548 = vpop.f32.mrf.mxu0
      %v1549 = vadd.f32 %v1508, %v1548
      %1550 = vmatmul.f32.gmra.mxu0 %v317
      %v1551 = vpop.f32.mrf.mxu0
      %v1552 = vadd.f32 %v1511, %v1551
      %1553 = vmatmul.f32.gmra.mxu0 %v320
      %v1554 = vpop.f32.mrf.mxu0
      %v1555 = vadd.f32 %v1514, %v1554
      %1556 = vmatmul.f32.gmra.mxu0 %v323
      %v1557 = vpop.f32.mrf.mxu0
      %v1558 = vadd.f32 %v1517, %v1557
      %1559 = vmatmul.f32.gmra.mxu0 %v326
      %v1560 = vpop.f32.mrf.mxu0
      %v1561 = vadd.f32 %v1520, %v1560
      %1562 = vmatmul.f32.gmra.mxu0 %v329
      %v1563 = vpop.f32.mrf.mxu0
      %v1564 = vadd.f32 %v1523, %v1563
      %1565 = vdwg.mxu0
      %v1566 = vmax.f32 %v1231, %v1420
      %v1567 = vmax.f32 %v1232, %v1543
      %v1568 = vmax.f32 %v1233, %v1423
      %v1569 = vmax.f32 %v1234, %v1546
      %v1570 = vmax.f32 %v1235, %v1426
      %v1571 = vmax.f32 %v1236, %v1549
      %v1572 = vmax.f32 %v1237, %v1429
      %v1573 = vmax.f32 %v1238, %v1552
      %v1574 = vmax.f32 %v1239, %v1432
      %v1575 = vmax.f32 %v1240, %v1555
      %v1576 = vmax.f32 %v1241, %v1435
      %v1577 = vmax.f32 %v1242, %v1558
      %v1578 = vmax.f32 %v1243, %v1438
      %v1579 = vmax.f32 %v1244, %v1561
      %v1580 = vmax.f32 %v1245, %v1441
      %v1581 = vmax.f32 %v1246, %v1564
      %v1582 = vld [vmem:[%s2] sm:$0xff]
      %v1583 = vld [vmem:[%s2 + $0x8] sm:$0xff]
      %v1584 = vld [vmem:[%s2 + $0x10] sm:$0xff]
      %v1585 = vld [vmem:[%s2 + $0x18] sm:$0xff]
      %v1586 = vld [vmem:[%s2 + $0x20] sm:$0xff]
      %v1587 = vld [vmem:[%s2 + $0x28] sm:$0xff]
      %v1588 = vld [vmem:[%s2 + $0x30] sm:$0xff]
      %v1589 = vld [vmem:[%s2 + $0x38] sm:$0xff]
      %1591 = vset.pattern.permute.xlu0 0
      %1592 = vperm.xlu0 %1591, %v1582
      %v1593 = vpop.permute.xlu0 %1592
      %1596 = vset.pattern.permute.xlu0 0
      %1597 = vperm.xlu0 %1596, %v1583
      %v1598 = vpop.permute.xlu0 %1597
      %1601 = vset.pattern.permute.xlu0 0
      %1602 = vperm.xlu0 %1601, %v1584
      %v1603 = vpop.permute.xlu0 %1602
      %1606 = vset.pattern.permute.xlu0 0
      %1607 = vperm.xlu0 %1606, %v1585
      %v1608 = vpop.permute.xlu0 %1607
      %1611 = vset.pattern.permute.xlu0 0
      %1612 = vperm.xlu0 %1611, %v1586
      %v1613 = vpop.permute.xlu0 %1612
      %1616 = vset.pattern.permute.xlu0 0
      %1617 = vperm.xlu0 %1616, %v1587
      %v1618 = vpop.permute.xlu0 %1617
      %1621 = vset.pattern.permute.xlu0 0
      %1622 = vperm.xlu0 %1621, %v1588
      %v1623 = vpop.permute.xlu0 %1622
      %1626 = vset.pattern.permute.xlu0 0
      %1627 = vperm.xlu0 %1626, %v1589
      %v1628 = vpop.permute.xlu0 %1627
      %v1630 = vadd.f32 %v1566, %v1593
      %v1631 = vadd.f32 %v1567, %v1593
      %v1632 = vadd.f32 %v1568, %v1598
      %v1633 = vadd.f32 %v1569, %v1598
      %v1634 = vadd.f32 %v1570, %v1603
      %v1635 = vadd.f32 %v1571, %v1603
      %v1636 = vadd.f32 %v1572, %v1608
      %v1637 = vadd.f32 %v1573, %v1608
      %v1638 = vadd.f32 %v1574, %v1613
      %v1639 = vadd.f32 %v1575, %v1613
      %v1640 = vadd.f32 %v1576, %v1618
      %v1641 = vadd.f32 %v1577, %v1618
      %v1642 = vadd.f32 %v1578, %v1623
      %v1643 = vadd.f32 %v1579, %v1623
      %v1644 = vadd.f32 %v1580, %v1628
      %v1645 = vadd.f32 %v1581, %v1628
      %v1646 = vmax.f32 %v1630, 0.0
      %v1647 = vmax.f32 %v1631, 0.0
      %v1648 = vmax.f32 %v1632, 0.0
      %v1649 = vmax.f32 %v1633, 0.0
      %v1650 = vmax.f32 %v1634, 0.0
      %v1651 = vmax.f32 %v1635, 0.0
      %v1652 = vmax.f32 %v1636, 0.0
      %v1653 = vmax.f32 %v1637, 0.0
      %v1654 = vmax.f32 %v1638, 0.0
      %v1655 = vmax.f32 %v1639, 0.0
      %v1656 = vmax.f32 %v1640, 0.0
      %v1657 = vmax.f32 %v1641, 0.0
      %v1658 = vmax.f32 %v1642, 0.0
      %v1659 = vmax.f32 %v1643, 0.0
      %v1660 = vmax.f32 %v1644, 0.0
      %v1661 = vmax.f32 %v1645, 0.0
      %1662 = vst [vmem:[%s208] sm:$0xff] %v1646
      %1663 = vst [vmem:[%s208 + $0x8] sm:$0xff] %v1647
      %1664 = vst [vmem:[%s208 + $0x10] sm:$0xff] %v1648
      %1665 = vst [vmem:[%s208 + $0x18] sm:$0xff] %v1649
      %1666 = vst [vmem:[%s208 + $0x20] sm:$0xff] %v1650
      %1667 = vst [vmem:[%s208 + $0x28] sm:$0xff] %v1651
      %1668 = vst [vmem:[%s208 + $0x30] sm:$0xff] %v1652
      %1669 = vst [vmem:[%s208 + $0x38] sm:$0xff] %v1653
      %1670 = vst [vmem:[%s208 + $0x40] sm:$0xff] %v1654
      %1671 = vst [vmem:[%s208 + $0x48] sm:$0xff] %v1655
      %1672 = vst [vmem:[%s208 + $0x50] sm:$0xff] %v1656
      %1673 = vst [vmem:[%s208 + $0x58] sm:$0xff] %v1657
      %1674 = vst [vmem:[%s208 + $0x60] sm:$0xff] %v1658
      %1675 = vst [vmem:[%s208 + $0x68] sm:$0xff] %v1659
      %1676 = vst [vmem:[%s208 + $0x70] sm:$0xff] %v1660
      %1677 = vst [vmem:[%s208 + $0x78] sm:$0xff] %v1661
      %s1678 = smul.u32 2, %s19
      %p1679 = scmp.lt.s32.totalorder %s18, 1
      %s1680 = scalar_select %p1679, %s18, 1
      %p1681 = scmp.lt.s32.totalorder %s1678, 1
      %s1682 = scalar_select %p1681, %s1678, 1
      %s1683 = smul.addr %s1680, 16
      %s1684 = sadd.s32 %s1682, %s1683
      %s1685 = smul.addr %s1684, 8
      %s1686 = scalar_lea.vmem %s3, %s1685
      // Predicated region
      $region33: #{qnetwork_forward.6} parent=31 // pred_check
        %p1687 = pneg %p116
      $region34: #{qnetwork_forward.6} parent=31 // pred_check_branch
        %1689 = sbr.rel (%p1687) target = $region36
      $region35: #{qnetwork_forward.6} parent=31 // pred_region
        %s1690 = smul.u32 2, %s19
      $region36: #{qnetwork_forward.6} parent=31 // pred_fallthru
        _
    $region32: #{qnetwork_forward.6} parent=5 // pred_fallthru
      _
    %p1691 = scmp.le.s32.totalorder 2, %s9
    // Predicated region
    $region37: #{qnetwork_forward.6} parent=5 // pred_check
      %p1692 = pneg %p1691
    $region38: #{qnetwork_forward.6} parent=5 // pred_check_branch
      %1694 = sbr.rel (%p1692) target = $region40
    $region39: #{qnetwork_forward.6} parent=5 // pred_region
      %s1695 = ssub.s32 %s9, 2
      // Predicated region
      $region41: #{qnetwork_forward.6} parent=39 // pred_check
        %p1696 = pneg %p122
      $region42: #{qnetwork_forward.6} parent=39 // pred_check_branch
        %1698 = sbr.rel (%p1696) target = $region44
      $region43: #{qnetwork_forward.6} parent=39 // pred_region
        %s1699 = smul.u32 2, %s21
        %p1700 = scmp.lt.s32.totalorder %s20, 1
        %s1701 = scalar_select %p1700, %s20, 1
        %p1702 = scmp.lt.s32.totalorder %s1699, 1
        %s1703 = scalar_select %p1702, %s1699, 1
        %s1704 = smul.addr %s1701, 16
        %s1705 = sadd.s32 %s1703, %s1704
        %s1706 = smul.addr %s1705, 8
        %s1707 = scalar_lea.vmem %s3, %s1706
      $region44: #{qnetwork_forward.6} parent=39 // pred_fallthru
        _
    $region40: #{qnetwork_forward.6} parent=5 // pred_fallthru
      _
  $region6: #{qnetwork_forward.6} parent=0 // loop_footer
    %s13 = sadd.s32 1, %s9
  $region7: #{qnetwork_forward.6} parent=0 // loop_footer_branch
    %8 = sbr.rel target = $region3
  $region8: #{qnetwork_forward.6} parent=0 // loop_exit
    _

// kernel: qnetwork_forward.7
$region0: #{qnetwork_forward.7}
  #allocation0 [shape = 'u32[]', space=smem, size = 0x4, offset = 0x4, fixed_abs, tag = 'smem constant byte address 0x4 - core index']
  #allocation1 [shape = 'u32[72,128]{1,0:T(1,128)}', space=vmem, size = 0x9000, scoped, tag = 'internal scratch']
  #allocation2 [shape = 'f32[2,256]{1,0:T(2,128)}', space=vmem, size = 0x800, scoped, tag = 'scratch operand']
  %s0 = inlined_call_operand.vmem [shape: f32[2,16384], index: 0, kind: input, shape index: {}]
  %s1 = inlined_call_operand.vmem [shape: bf16[16384,256], index: 1, kind: input, shape index: {}]
  %s2 = inlined_call_operand.vmem [shape: f32[1,256], index: 2, kind: input, shape index: {}]
  %s3 = inlined_call_operand.vmem [shape: f32[256,128], index: 3, kind: input, shape index: {}]
  %s4 = inlined_call_operand.vmem [shape: f32[1,128], index: 4, kind: input, shape index: {}]
  %s5 = inlined_call_operand.vmem [shape: f32[128,64], index: 5, kind: input, shape index: {}]
  %s6 = inlined_call_operand.vmem [shape: f32[1,64], index: 6, kind: input, shape index: {}]
  %s7 = inlined_call_operand.vmem [shape: f32[64,4], index: 7, kind: input, shape index: {}]
  %s8 = inlined_call_operand.vmem [shape: f32[1,4], index: 8, kind: input, shape index: {}]
  %s9 = inlined_call_operand.hbm [shape: f32[2,4], index: 9, kind: output, shape index: {}]
  %s10 = sld [smem:[#allocation0]]
  $region77: #{qnetwork_forward.7} parent=0
    _
  %s12 = ssub.s32 1, %s10
  %s13 = scalar_select 0, %s12, %s10
  $region1: #{qnetwork_forward.7} parent=0
    #allocation3 [shape = 'u8[1024]{0}', space=vmem, size = 0x400, scoped, tag = 'output window, operand 0, single buffered']
    #allocation4 [shape = 's32[2]{0}', space=sflag, size = 0x8, scoped, tag = 'scoped memory for qnetwork_forward.7']
    %14 = vsyncpa [#allocation4], 0
    loop: start=0, step=1, limit=6
    $region2: #{qnetwork_forward.7} parent=1 // loop_pre_header
      _
    $region3: #{qnetwork_forward.7} parent=1 // loop_header
      %s16 = sphi 0, %s20
      %p17 = scmp.ge.s32.totalorder %s16, 6
      %s26 = sphi 0, %s28
      %s29 = sphi 0, %s26
      %s30 = sphi 0, %s29
      %s46 = sphi 0, %s30
      %s52 = sphi 0, %s54
      %s55 = sphi 0, %s52
      %s56 = sphi 0, %s55
      %s72 = sphi 0, %s56
      %s76 = sphi 0, %s76
      %s78 = sphi 0, %s76
      %s79 = sphi 0, %s78
      %s93 = sphi 0, %s79
      %s97 = sphi 0, %s97
      %s99 = sphi 0, %s97
      %s100 = sphi 0, %s99
      %s114 = sphi 0, %s100
      %s118 = sphi 0, %s118
      %s120 = sphi 0, %s118
      %s121 = sphi 0, %s120
      %s135 = sphi 0, %s121
      %s139 = sphi 0, %s139
      %s141 = sphi 0, %s139
      %s142 = sphi 0, %s141
      %s156 = sphi 0, %s142
      %s160 = sphi 0, %s160
      %s162 = sphi 0, %s160
      %s163 = sphi 0, %s162
      %s177 = sphi 0, %s163
      %s181 = sphi 0, %s181
      %s183 = sphi 0, %s181
      %s184 = sphi 0, %s183
      %s198 = sphi 0, %s184
      %s202 = sphi 0, %s202
      %s204 = sphi 0, %s202
      %s205 = sphi 0, %s204
      %s219 = sphi 0, %s205
      %s223 = sphi 0, %s223
      %s225 = sphi 0, %s223
      %s226 = sphi 0, %s225
      %s240 = sphi 0, %s226
    $region4: #{qnetwork_forward.7} parent=1 // loop_header_branch
      %19 = sbr.rel (%p17) target = $region8
    $region5: #{qnetwork_forward.7} parent=1 // loop_body
      %s21 = ssub.s32 %s16, 1
      %s22 = ssub.s32 %s16, 2
      %s23 = sadd.s32 %s16, 1
      %s24 = ssub.s32 %s16, %s23
      %p25 = scmp.eq.s32.totalorder %s24, 0
      %s27 = sadd.s32 %s26, 1
      %s28 = scalar_select %p25, %s26, %s27
      %p31 = pneg %p25
      %p32 = scmp.eq.s32.totalorder %s16, 3
      %p33 = por %p31, %p32
      %p34 = scmp.ne.s32.totalorder %s26, %s29
      %p35 = scmp.eq.s32.totalorder %s16, 0
      %p36 = por %p34, %p35
      %p37 = scmp.ne.s32.totalorder %s26, %s29
      %p38 = scmp.eq.s32.totalorder %s21, 3
      %p39 = por %p37, %p38
      %p40 = scmp.ne.s32.totalorder %s29, %s30
      %p41 = scmp.eq.s32.totalorder %s21, 0
      %p42 = por %p40, %p41
      %p43 = scmp.ne.s32.totalorder %s29, %s30
      %p44 = scmp.eq.s32.totalorder %s22, 3
      %p45 = por %p43, %p44
      %p47 = scmp.ne.s32.totalorder %s30, %s46
      %p48 = scmp.eq.s32.totalorder %s22, 0
      %p49 = por %p47, %p48
      %s50 = ssub.s32 %s16, %s23
      %p51 = scmp.eq.s32.totalorder %s50, 0
      %s53 = sadd.s32 %s52, 1
      %s54 = scalar_select %p51, %s52, %s53
      %p57 = pneg %p51
      %p58 = scmp.eq.s32.totalorder %s16, 3
      %p59 = por %p57, %p58
      %p60 = scmp.ne.s32.totalorder %s52, %s55
      %p61 = scmp.eq.s32.totalorder %s16, 0
      %p62 = por %p60, %p61
      %p63 = scmp.ne.s32.totalorder %s52, %s55
      %p64 = scmp.eq.s32.totalorder %s21, 3
      %p65 = por %p63, %p64
      %p66 = scmp.ne.s32.totalorder %s55, %s56
      %p67 = scmp.eq.s32.totalorder %s21, 0
      %p68 = por %p66, %p67
      %p69 = scmp.ne.s32.totalorder %s55, %s56
      %p70 = scmp.eq.s32.totalorder %s22, 3
      %p71 = por %p69, %p70
      %p73 = scmp.ne.s32.totalorder %s56, %s72
      %p74 = scmp.eq.s32.totalorder %s22, 0
      %p75 = por %p73, %p74
      %s77 = sadd.s32 %s76, 1
      %p80 = scmp.eq.s32.totalorder %s16, 3
      %p81 = scmp.ne.s32.totalorder %s76, %s78
      %p82 = scmp.eq.s32.totalorder %s16, 0
      %p83 = por %p81, %p82
      %p84 = scmp.ne.s32.totalorder %s76, %s78
      %p85 = scmp.eq.s32.totalorder %s21, 3
      %p86 = por %p84, %p85
      %p87 = scmp.ne.s32.totalorder %s78, %s79
      %p88 = scmp.eq.s32.totalorder %s21, 0
      %p89 = por %p87, %p88
      %p90 = scmp.ne.s32.totalorder %s78, %s79
      %p91 = scmp.eq.s32.totalorder %s22, 3
      %p92 = por %p90, %p91
      %p94 = scmp.ne.s32.totalorder %s79, %s93
      %p95 = scmp.eq.s32.totalorder %s22, 0
      %p96 = por %p94, %p95
      %s98 = sadd.s32 %s97, 1
      %p101 = scmp.eq.s32.totalorder %s16, 3
      %p102 = scmp.ne.s32.totalorder %s97, %s99
      %p103 = scmp.eq.s32.totalorder %s16, 0
      %p104 = por %p102, %p103
      %p105 = scmp.ne.s32.totalorder %s97, %s99
      %p106 = scmp.eq.s32.totalorder %s21, 3
      %p107 = por %p105, %p106
      %p108 = scmp.ne.s32.totalorder %s99, %s100
      %p109 = scmp.eq.s32.totalorder %s21, 0
      %p110 = por %p108, %p109
      %p111 = scmp.ne.s32.totalorder %s99, %s100
      %p112 = scmp.eq.s32.totalorder %s22, 3
      %p113 = por %p111, %p112
      %p115 = scmp.ne.s32.totalorder %s100, %s114
      %p116 = scmp.eq.s32.totalorder %s22, 0
      %p117 = por %p115, %p116
      %s119 = sadd.s32 %s118, 1
      %p122 = scmp.eq.s32.totalorder %s16, 3
      %p123 = scmp.ne.s32.totalorder %s118, %s120
      %p124 = scmp.eq.s32.totalorder %s16, 0
      %p125 = por %p123, %p124
      %p126 = scmp.ne.s32.totalorder %s118, %s120
      %p127 = scmp.eq.s32.totalorder %s21, 3
      %p128 = por %p126, %p127
      %p129 = scmp.ne.s32.totalorder %s120, %s121
      %p130 = scmp.eq.s32.totalorder %s21, 0
      %p131 = por %p129, %p130
      %p132 = scmp.ne.s32.totalorder %s120, %s121
      %p133 = scmp.eq.s32.totalorder %s22, 3
      %p134 = por %p132, %p133
      %p136 = scmp.ne.s32.totalorder %s121, %s135
      %p137 = scmp.eq.s32.totalorder %s22, 0
      %p138 = por %p136, %p137
      %s140 = sadd.s32 %s139, 1
      %p143 = scmp.eq.s32.totalorder %s16, 3
      %p144 = scmp.ne.s32.totalorder %s139, %s141
      %p145 = scmp.eq.s32.totalorder %s16, 0
      %p146 = por %p144, %p145
      %p147 = scmp.ne.s32.totalorder %s139, %s141
      %p148 = scmp.eq.s32.totalorder %s21, 3
      %p149 = por %p147, %p148
      %p150 = scmp.ne.s32.totalorder %s141, %s142
      %p151 = scmp.eq.s32.totalorder %s21, 0
      %p152 = por %p150, %p151
      %p153 = scmp.ne.s32.totalorder %s141, %s142
      %p154 = scmp.eq.s32.totalorder %s22, 3
      %p155 = por %p153, %p154
      %p157 = scmp.ne.s32.totalorder %s142, %s156
      %p158 = scmp.eq.s32.totalorder %s22, 0
      %p159 = por %p157, %p158
      %s161 = sadd.s32 %s160, 1
      %p164 = scmp.eq.s32.totalorder %s16, 3
      %p165 = scmp.ne.s32.totalorder %s160, %s162
      %p166 = scmp.eq.s32.totalorder %s16, 0
      %p167 = por %p165, %p166
      %p168 = scmp.ne.s32.totalorder %s160, %s162
      %p169 = scmp.eq.s32.totalorder %s21, 3
      %p170 = por %p168, %p169
      %p171 = scmp.ne.s32.totalorder %s162, %s163
      %p172 = scmp.eq.s32.totalorder %s21, 0
      %p173 = por %p171, %p172
      %p174 = scmp.ne.s32.totalorder %s162, %s163
      %p175 = scmp.eq.s32.totalorder %s22, 3
      %p176 = por %p174, %p175
      %p178 = scmp.ne.s32.totalorder %s163, %s177
      %p179 = scmp.eq.s32.totalorder %s22, 0
      %p180 = por %p178, %p179
      %s182 = sadd.s32 %s181, 1
      %p185 = scmp.eq.s32.totalorder %s16, 3
      %p186 = scmp.ne.s32.totalorder %s181, %s183
      %p187 = scmp.eq.s32.totalorder %s16, 0
      %p188 = por %p186, %p187
      %p189 = scmp.ne.s32.totalorder %s181, %s183
      %p190 = scmp.eq.s32.totalorder %s21, 3
      %p191 = por %p189, %p190
      %p192 = scmp.ne.s32.totalorder %s183, %s184
      %p193 = scmp.eq.s32.totalorder %s21, 0
      %p194 = por %p192, %p193
      %p195 = scmp.ne.s32.totalorder %s183, %s184
      %p196 = scmp.eq.s32.totalorder %s22, 3
      %p197 = por %p195, %p196
      %p199 = scmp.ne.s32.totalorder %s184, %s198
      %p200 = scmp.eq.s32.totalorder %s22, 0
      %p201 = por %p199, %p200
      %s203 = sadd.s32 %s202, 1
      %p206 = scmp.eq.s32.totalorder %s16, 3
      %p207 = scmp.ne.s32.totalorder %s202, %s204
      %p208 = scmp.eq.s32.totalorder %s16, 0
      %p209 = por %p207, %p208
      %p210 = scmp.ne.s32.totalorder %s202, %s204
      %p211 = scmp.eq.s32.totalorder %s21, 3
      %p212 = por %p210, %p211
      %p213 = scmp.ne.s32.totalorder %s204, %s205
      %p214 = scmp.eq.s32.totalorder %s21, 0
      %p215 = por %p213, %p214
      %p216 = scmp.ne.s32.totalorder %s204, %s205
      %p217 = scmp.eq.s32.totalorder %s22, 3
      %p218 = por %p216, %p217
      %p220 = scmp.ne.s32.totalorder %s205, %s219
      %p221 = scmp.eq.s32.totalorder %s22, 0
      %p222 = por %p220, %p221
      %s224 = sadd.s32 %s223, 1
      %p227 = scmp.eq.s32.totalorder %s16, 3
      %p228 = scmp.ne.s32.totalorder %s223, %s225
      %p229 = scmp.eq.s32.totalorder %s16, 0
      %p230 = por %p228, %p229
      %p231 = scmp.ne.s32.totalorder %s223, %s225
      %p232 = scmp.eq.s32.totalorder %s21, 3
      %p233 = por %p231, %p232
      %p234 = scmp.ne.s32.totalorder %s225, %s226
      %p235 = scmp.eq.s32.totalorder %s21, 0
      %p236 = por %p234, %p235
      %p237 = scmp.ne.s32.totalorder %s225, %s226
      %p238 = scmp.eq.s32.totalorder %s22, 3
      %p239 = por %p237, %p238
      %p241 = scmp.ne.s32.totalorder %s226, %s240
      %p242 = scmp.eq.s32.totalorder %s22, 0
      %p243 = por %p241, %p242
      %p244 = scmp.le.s32.totalorder 1, %s16
      %p245 = scmp.lt.s32.totalorder %s16, 5
      %p246 = pnand %p244, %p245
      %p247 = pneg %p246
      // Predicated region
      $region9: #{qnetwork_forward.7} parent=5 // pred_check
        _
      $region10: #{qnetwork_forward.7} parent=5 // pred_check_branch
        %249 = sbr.rel (%p246) target = $region12
      $region11: #{qnetwork_forward.7} parent=5 // pred_region
        %s250 = ssub.s32 %s16, 1
        // Predicated region
        $region13: #{qnetwork_forward.7} parent=11 // pred_check
          %p251 = pneg %p89
        $region14: #{qnetwork_forward.7} parent=11 // pred_check_branch
          %253 = sbr.rel (%p251) target = $region16
        $region15: #{qnetwork_forward.7} parent=11 // pred_region
          _
        $region16: #{qnetwork_forward.7} parent=11 // pred_fallthru
          _
        // Predicated region
        $region17: #{qnetwork_forward.7} parent=11 // pred_check
          %p254 = pneg %p110
        $region18: #{qnetwork_forward.7} parent=11 // pred_check_branch
          %256 = sbr.rel (%p254) target = $region20
        $region19: #{qnetwork_forward.7} parent=11 // pred_region
          _
        $region20: #{qnetwork_forward.7} parent=11 // pred_fallthru
          _
        // Predicated region
        $region21: #{qnetwork_forward.7} parent=11 // pred_check
          %p257 = pneg %p131
        $region22: #{qnetwork_forward.7} parent=11 // pred_check_branch
          %259 = sbr.rel (%p257) target = $region24
        $region23: #{qnetwork_forward.7} parent=11 // pred_region
          _
        $region24: #{qnetwork_forward.7} parent=11 // pred_fallthru
          _
        // Predicated region
        $region25: #{qnetwork_forward.7} parent=11 // pred_check
          %p260 = pneg %p152
        $region26: #{qnetwork_forward.7} parent=11 // pred_check_branch
          %262 = sbr.rel (%p260) target = $region28
        $region27: #{qnetwork_forward.7} parent=11 // pred_region
          _
        $region28: #{qnetwork_forward.7} parent=11 // pred_fallthru
          _
        // Predicated region
        $region29: #{qnetwork_forward.7} parent=11 // pred_check
          %p263 = pneg %p173
        $region30: #{qnetwork_forward.7} parent=11 // pred_check_branch
          %265 = sbr.rel (%p263) target = $region32
        $region31: #{qnetwork_forward.7} parent=11 // pred_region
          _
        $region32: #{qnetwork_forward.7} parent=11 // pred_fallthru
          _
        // Predicated region
        $region33: #{qnetwork_forward.7} parent=11 // pred_check
          %p266 = pneg %p194
        $region34: #{qnetwork_forward.7} parent=11 // pred_check_branch
          %268 = sbr.rel (%p266) target = $region36
        $region35: #{qnetwork_forward.7} parent=11 // pred_region
          _
        $region36: #{qnetwork_forward.7} parent=11 // pred_fallthru
          _
        // Predicated region
        $region37: #{qnetwork_forward.7} parent=11 // pred_check
          %p269 = pneg %p215
        $region38: #{qnetwork_forward.7} parent=11 // pred_check_branch
          %271 = sbr.rel (%p269) target = $region40
        $region39: #{qnetwork_forward.7} parent=11 // pred_region
          _
        $region40: #{qnetwork_forward.7} parent=11 // pred_fallthru
          _
      $region12: #{qnetwork_forward.7} parent=5 // pred_fallthru
        _
      %p272 = scmp.lt.s32.totalorder %s16, 4
      // Predicated region
      $region41: #{qnetwork_forward.7} parent=5 // pred_check
        %p273 = pneg %p272
      $region42: #{qnetwork_forward.7} parent=5 // pred_check_branch
        %275 = sbr.rel (%p273) target = $region44
      $region43: #{qnetwork_forward.7} parent=5 // pred_region
        // Predicated region
        $region45: #{qnetwork_forward.7} parent=43 // pred_check
          %p276 = pneg %p36
        $region46: #{qnetwork_forward.7} parent=43 // pred_check_branch
          %278 = sbr.rel (%p276) target = $region48
        $region47: #{qnetwork_forward.7} parent=43 // pred_region
          %s279 = smul.u32 32, %s16
          %p280 = scmp.lt.s32.totalorder %s279, 127
          %s281 = scalar_select %p280, %s279, 127
          %s282 = smul.addr %s281, 2
          %s283 = scalar_lea.vmem %s0, %s282
          %s284 = smul.u32 32, %s16
        $region48: #{qnetwork_forward.7} parent=43 // pred_fallthru
          _
        // Predicated region
        $region49: #{qnetwork_forward.7} parent=43 // pred_check
          %p285 = pneg %p62
        $region50: #{qnetwork_forward.7} parent=43 // pred_check_branch
          %287 = sbr.rel (%p285) target = $region52
        $region51: #{qnetwork_forward.7} parent=43 // pred_region
          %s288 = smul.u32 512, %s16
          %p289 = scmp.lt.s32.totalorder %s288, 2047
          %s290 = scalar_select %p289, %s288, 2047
          %s291 = smul.addr %s290, 2
          %s292 = smul.addr %s291, 4
          %s293 = scalar_lea.vmem %s1, %s292
          %s294 = smul.u32 512, %s16
        $region52: #{qnetwork_forward.7} parent=43 // pred_fallthru
          _
      $region44: #{qnetwork_forward.7} parent=5 // pred_fallthru
        _
      %p295 = scmp.le.s32.totalorder 1, %s16
      %p296 = scmp.lt.s32.totalorder %s16, 5
      %p297 = pnand %p295, %p296
      %p298 = pneg %p297
      // Predicated region
      $region53: #{qnetwork_forward.7} parent=5 // pred_check
        _
      $region54: #{qnetwork_forward.7} parent=5 // pred_check_branch
        %300 = sbr.rel (%p297) target = $region56
      $region55: #{qnetwork_forward.7} parent=5 // pred_region
        %s301 = ssub.s32 %s16, 1
        %s302 = smul.u32 32, %s21
        %p303 = scmp.lt.s32.totalorder %s302, 127
        %s304 = scalar_select %p303, %s302, 127
        %s305 = smul.addr %s304, 2
        %s306 = scalar_lea.vmem %s0, %s305
        %p307 = pneg %p42
        %p308 = pneg %p39
        %s309 = smul.u32 512, %s21
        %p310 = scmp.lt.s32.totalorder %s309, 2047
        %s311 = scalar_select %p310, %s309, 2047
        %s312 = smul.addr %s311, 2
        %s313 = smul.addr %s312, 4
        %s314 = scalar_lea.vmem %s1, %s313
        %p315 = pneg %p68
        %p316 = pneg %p65
        %p317 = pneg %p89
        %p318 = pneg %p86
        %p319 = pneg %p110
        %p320 = pneg %p107
        %p321 = pneg %p131
        %p322 = pneg %p128
        %p323 = pneg %p152
        %p324 = pneg %p149
        %p325 = pneg %p173
        %p326 = pneg %p170
        %p327 = pneg %p194
        %p328 = pneg %p191
        %p329 = pneg %p215
        %p330 = pneg %p212
        %p331 = pneg %p236
        %p332 = pneg %p233
        %s333 = smul.u32 32, %s21
        %p334 = scmp.lt.s32.totalorder %s333, 127
        %s335 = scalar_select %p334, %s333, 127
        %s336 = smul.addr %s335, 2
        %s337 = scalar_lea.vmem %s0, %s336
        %s338 = smul.u32 32, %s21
        %s339 = smul.u32 512, %s21
        %p340 = scmp.lt.s32.totalorder %s339, 2047
        %s341 = scalar_select %p340, %s339, 2047
        %s342 = smul.addr %s341, 2
        %s343 = smul.addr %s342, 4
        %s344 = scalar_lea.vmem %s1, %s343
        %s345 = smul.u32 512, %s21
        %p346 = scmp.eq.s32.totalorder %s21, 0
        // Predicated region
        $region57: #{qnetwork_forward.7} parent=55 // pred_check
          %p347 = pneg %p346
        $region58: #{qnetwork_forward.7} parent=55 // pred_check_branch
          %349 = sbr.rel (%p347) target = $region60
        $region59: #{qnetwork_forward.7} parent=55 // pred_region
          %350 = vst [vmem:[#allocation2] sm:$0xf] 0.0
        $region60: #{qnetwork_forward.7} parent=55 // pred_fallthru
          _
        %v351 = vld [vmem:[#allocation2] sm:$0xf]
        %v352 = vld [vmem:[%s337] sm:$0xff]
        %v353 = vld [vmem:[%s337 + $0x8] sm:$0xff]
        %v354 = vld [vmem:[%s337 + $0x10] sm:$0xff]
        %v355 = vld [vmem:[%s337 + $0x18] sm:$0xff]
        %v356 = vld [vmem:[%s337 + $0x20] sm:$0xff]
        %v357 = vld [vmem:[%s337 + $0x28] sm:$0xff]
        %v358 = vld [vmem:[%s337 + $0x30] sm:$0xff]
        %v359 = vld [vmem:[%s337 + $0x38] sm:$0xff]
        %368 = vst [vmem:[#allocation1] ss:$4 sm:$0xff] %v352
        %s369 = scalar_lea.vmem [#allocation1], 32
        %370 = vst [vmem:[%s369] ss:$4 sm:$0xff] %v353
        %v371 = vld.sshfl [vmem:[#allocation1] sm:$0xff pattern:$0x73625140]
        %v372 = vld.sshfl [vmem:[#allocation1 + $0x8] sm:$0xff pattern:$0x73625140]
        %v373 = vld.sshfl [vmem:[#allocation1 + $0x10] sm:$0xff pattern:$0x73625140]
        %v374 = vld.sshfl [vmem:[#allocation1 + $0x18] sm:$0xff pattern:$0x73625140]
        %v375 = vld.sshfl [vmem:[#allocation1 + $0x20] sm:$0xff pattern:$0x73625140]
        %v376 = vld.sshfl [vmem:[#allocation1 + $0x28] sm:$0xff pattern:$0x73625140]
        %v377 = vld.sshfl [vmem:[#allocation1 + $0x30] sm:$0xff pattern:$0x73625140]
        %v378 = vld.sshfl [vmem:[#allocation1 + $0x38] sm:$0xff pattern:$0x73625140]
        %379 = vst [vmem:[#allocation1] ss:$4 sm:$0xff] %v354
        %380 = vst [vmem:[%s369] ss:$4 sm:$0xff] %v355
        %v381 = vld.sshfl [vmem:[#allocation1] sm:$0xff pattern:$0x73625140]
        %v382 = vld.sshfl [vmem:[#allocation1 + $0x8] sm:$0xff pattern:$0x73625140]
        %v383 = vld.sshfl [vmem:[#allocation1 + $0x10] sm:$0xff pattern:$0x73625140]
        %v384 = vld.sshfl [vmem:[#allocation1 + $0x18] sm:$0xff pattern:$0x73625140]
        %v385 = vld.sshfl [vmem:[#allocation1 + $0x20] sm:$0xff pattern:$0x73625140]
        %v386 = vld.sshfl [vmem:[#allocation1 + $0x28] sm:$0xff pattern:$0x73625140]
        %v387 = vld.sshfl [vmem:[#allocation1 + $0x30] sm:$0xff pattern:$0x73625140]
        %v388 = vld.sshfl [vmem:[#allocation1 + $0x38] sm:$0xff pattern:$0x73625140]
        %389 = vst [vmem:[#allocation1] ss:$4 sm:$0xff] %v356
        %390 = vst [vmem:[%s369] ss:$4 sm:$0xff] %v357
        %v391 = vld.sshfl [vmem:[#allocation1] sm:$0xff pattern:$0x73625140]
        %v392 = vld.sshfl [vmem:[#allocation1 + $0x8] sm:$0xff pattern:$0x73625140]
        %v393 = vld.sshfl [vmem:[#allocation1 + $0x10] sm:$0xff pattern:$0x73625140]
        %v394 = vld.sshfl [vmem:[#allocation1 + $0x18] sm:$0xff pattern:$0x73625140]
        %v395 = vld.sshfl [vmem:[#allocation1 + $0x20] sm:$0xff pattern:$0x73625140]
        %v396 = vld.sshfl [vmem:[#allocation1 + $0x28] sm:$0xff pattern:$0x73625140]
        %v397 = vld.sshfl [vmem:[#allocation1 + $0x30] sm:$0xff pattern:$0x73625140]
        %v398 = vld.sshfl [vmem:[#allocation1 + $0x38] sm:$0xff pattern:$0x73625140]
        %399 = vst [vmem:[#allocation1] ss:$4 sm:$0xff] %v358
        %400 = vst [vmem:[%s369] ss:$4 sm:$0xff] %v359
        %v401 = vld.sshfl [vmem:[#allocation1] sm:$0xff pattern:$0x73625140]
        %v402 = vld.sshfl [vmem:[#allocation1 + $0x8] sm:$0xff pattern:$0x73625140]
        %v403 = vld.sshfl [vmem:[#allocation1 + $0x10] sm:$0xff pattern:$0x73625140]
        %v404 = vld.sshfl [vmem:[#allocation1 + $0x18] sm:$0xff pattern:$0x73625140]
        %v405 = vld.sshfl [vmem:[#allocation1 + $0x20] sm:$0xff pattern:$0x73625140]
        %v406 = vld.sshfl [vmem:[#allocation1 + $0x28] sm:$0xff pattern:$0x73625140]
        %v407 = vld.sshfl [vmem:[#allocation1 + $0x30] sm:$0xff pattern:$0x73625140]
        %v408 = vld.sshfl [vmem:[#allocation1 + $0x38] sm:$0xff pattern:$0x73625140]
        %v441 = vpack.c.bf16 %v371, %v371
        %v442 = vpack.c.bf16 %v372, %v372
        %v443 = vpack.c.bf16 %v373, %v373
        %v444 = vpack.c.bf16 %v374, %v374
        %v445 = vpack.c.bf16 %v375, %v375
        %v446 = vpack.c.bf16 %v376, %v376
        %v447 = vpack.c.bf16 %v377, %v377
        %v448 = vpack.c.bf16 %v378, %v378
        %v449 = vpack.c.bf16 %v381, %v381
        %v450 = vpack.c.bf16 %v382, %v382
        %v451 = vpack.c.bf16 %v383, %v383
        %v452 = vpack.c.bf16 %v384, %v384
        %v453 = vpack.c.bf16 %v385, %v385
        %v454 = vpack.c.bf16 %v386, %v386
        %v455 = vpack.c.bf16 %v387, %v387
        %v456 = vpack.c.bf16 %v388, %v388
        %v457 = vpack.c.bf16 %v391, %v391
        %v458 = vpack.c.bf16 %v392, %v392
        %v459 = vpack.c.bf16 %v393, %v393
        %v460 = vpack.c.bf16 %v394, %v394
        %v461 = vpack.c.bf16 %v395, %v395
        %v462 = vpack.c.bf16 %v396, %v396
        %v463 = vpack.c.bf16 %v397, %v397
        %v464 = vpack.c.bf16 %v398, %v398
        %v465 = vpack.c.bf16 %v401, %v401
        %v466 = vpack.c.bf16 %v402, %v402
        %v467 = vpack.c.bf16 %v403, %v403
        %v468 = vpack.c.bf16 %v404, %v404
        %v469 = vpack.c.bf16 %v405, %v405
        %v470 = vpack.c.bf16 %v406, %v406
        %v471 = vpack.c.bf16 %v407, %v407
        %v472 = vpack.c.bf16 %v408, %v408
        %v473 = vld [vmem:[%s344] sm:$0xff]
        %v474 = vld [vmem:[%s344 + $0x8] sm:$0xff]
        %v475 = vld [vmem:[%s344 + $0x10] sm:$0xff]
        %v476 = vld [vmem:[%s344 + $0x18] sm:$0xff]
        %v477 = vld [vmem:[%s344 + $0x20] sm:$0xff]
        %v478 = vld [vmem:[%s344 + $0x28] sm:$0xff]
        %v479 = vld [vmem:[%s344 + $0x30] sm:$0xff]
        %v480 = vld [vmem:[%s344 + $0x38] sm:$0xff]
        %v481 = vld [vmem:[%s344 + $0x40] sm:$0xff]
        %v482 = vld [vmem:[%s344 + $0x48] sm:$0xff]
        %v483 = vld [vmem:[%s344 + $0x50] sm:$0xff]
        %v484 = vld [vmem:[%s344 + $0x58] sm:$0xff]
        %v485 = vld [vmem:[%s344 + $0x60] sm:$0xff]
        %v486 = vld [vmem:[%s344 + $0x68] sm:$0xff]
        %v487 = vld [vmem:[%s344 + $0x70] sm:$0xff]
        %v488 = vld [vmem:[%s344 + $0x78] sm:$0xff]
        %v489 = vld [vmem:[%s344 + $0x80] sm:$0xff]
        %v490 = vld [vmem:[%s344 + $0x88] sm:$0xff]
        %v491 = vld [vmem:[%s344 + $0x90] sm:$0xff]
        %v492 = vld [vmem:[%s344 + $0x98] sm:$0xff]
        %v493 = vld [vmem:[%s344 + $0xa0] sm:$0xff]
        %v494 = vld [vmem:[%s344 + $0xa8] sm:$0xff]
        %v495 = vld [vmem:[%s344 + $0xb0] sm:$0xff]
        %v496 = vld [vmem:[%s344 + $0xb8] sm:$0xff]
        %v497 = vld [vmem:[%s344 + $0xc0] sm:$0xff]
        %v498 = vld [vmem:[%s344 + $0xc8] sm:$0xff]
        %v499 = vld [vmem:[%s344 + $0xd0] sm:$0xff]
        %v500 = vld [vmem:[%s344 + $0xd8] sm:$0xff]
        %v501 = vld [vmem:[%s344 + $0xe0] sm:$0xff]
        %v502 = vld [vmem:[%s344 + $0xe8] sm:$0xff]
        %v503 = vld [vmem:[%s344 + $0xf0] sm:$0xff]
        %v504 = vld [vmem:[%s344 + $0xf8] sm:$0xff]
        %v505 = vld [vmem:[%s344 + $0x100] sm:$0xff]
        %v506 = vld [vmem:[%s344 + $0x108] sm:$0xff]
        %v507 = vld [vmem:[%s344 + $0x110] sm:$0xff]
        %v508 = vld [vmem:[%s344 + $0x118] sm:$0xff]
        %v509 = vld [vmem:[%s344 + $0x120] sm:$0xff]
        %v510 = vld [vmem:[%s344 + $0x128] sm:$0xff]
        %v511 = vld [vmem:[%s344 + $0x130] sm:$0xff]
        %v512 = vld [vmem:[%s344 + $0x138] sm:$0xff]
        %v513 = vld [vmem:[%s344 + $0x140] sm:$0xff]
        %v514 = vld [vmem:[%s344 + $0x148] sm:$0xff]
        %v515 = vld [vmem:[%s344 + $0x150] sm:$0xff]
        %v516 = vld [vmem:[%s344 + $0x158] sm:$0xff]
        %v517 = vld [vmem:[%s344 + $0x160] sm:$0xff]
        %v518 = vld [vmem:[%s344 + $0x168] sm:$0xff]
        %v519 = vld [vmem:[%s344 + $0x170] sm:$0xff]
        %v520 = vld [vmem:[%s344 + $0x178] sm:$0xff]
        %v521 = vld [vmem:[%s344 + $0x180] sm:$0xff]
        %v522 = vld [vmem:[%s344 + $0x188] sm:$0xff]
        %v523 = vld [vmem:[%s344 + $0x190] sm:$0xff]
        %v524 = vld [vmem:[%s344 + $0x198] sm:$0xff]
        %v525 = vld [vmem:[%s344 + $0x1a0] sm:$0xff]
        %v526 = vld [vmem:[%s344 + $0x1a8] sm:$0xff]
        %v527 = vld [vmem:[%s344 + $0x1b0] sm:$0xff]
        %v528 = vld [vmem:[%s344 + $0x1b8] sm:$0xff]
        %v529 = vld [vmem:[%s344 + $0x1c0] sm:$0xff]
        %v530 = vld [vmem:[%s344 + $0x1c8] sm:$0xff]
        %v531 = vld [vmem:[%s344 + $0x1d0] sm:$0xff]
        %v532 = vld [vmem:[%s344 + $0x1d8] sm:$0xff]
        %v533 = vld [vmem:[%s344 + $0x1e0] sm:$0xff]
        %v534 = vld [vmem:[%s344 + $0x1e8] sm:$0xff]
        %v535 = vld [vmem:[%s344 + $0x1f0] sm:$0xff]
        %v536 = vld [vmem:[%s344 + $0x1f8] sm:$0xff]
        %v537 = vld [vmem:[%s344 + $0x200] sm:$0xff]
        %v538 = vld [vmem:[%s344 + $0x208] sm:$0xff]
        %v539 = vld [vmem:[%s344 + $0x210] sm:$0xff]
        %v540 = vld [vmem:[%s344 + $0x218] sm:$0xff]
        %v541 = vld [vmem:[%s344 + $0x220] sm:$0xff]
        %v542 = vld [vmem:[%s344 + $0x228] sm:$0xff]
        %v543 = vld [vmem:[%s344 + $0x230] sm:$0xff]
        %v544 = vld [vmem:[%s344 + $0x238] sm:$0xff]
        %v545 = vld [vmem:[%s344 + $0x240] sm:$0xff]
        %v546 = vld [vmem:[%s344 + $0x248] sm:$0xff]
        %v547 = vld [vmem:[%s344 + $0x250] sm:$0xff]
        %v548 = vld [vmem:[%s344 + $0x258] sm:$0xff]
        %v549 = vld [vmem:[%s344 + $0x260] sm:$0xff]
        %v550 = vld [vmem:[%s344 + $0x268] sm:$0xff]
        %v551 = vld [vmem:[%s344 + $0x270] sm:$0xff]
        %v552 = vld [vmem:[%s344 + $0x278] sm:$0xff]
        %v553 = vld [vmem:[%s344 + $0x280] sm:$0xff]
        %v554 = vld [vmem:[%s344 + $0x288] sm:$0xff]
        %v555 = vld [vmem:[%s344 + $0x290] sm:$0xff]
        %v556 = vld [vmem:[%s344 + $0x298] sm:$0xff]
        %v557 = vld [vmem:[%s344 + $0x2a0] sm:$0xff]
        %v558 = vld [vmem:[%s344 + $0x2a8] sm:$0xff]
        %v559 = vld [vmem:[%s344 + $0x2b0] sm:$0xff]
        %v560 = vld [vmem:[%s344 + $0x2b8] sm:$0xff]
        %v561 = vld [vmem:[%s344 + $0x2c0] sm:$0xff]
        %v562 = vld [vmem:[%s344 + $0x2c8] sm:$0xff]
        %v563 = vld [vmem:[%s344 + $0x2d0] sm:$0xff]
        %v564 = vld [vmem:[%s344 + $0x2d8] sm:$0xff]
        %v565 = vld [vmem:[%s344 + $0x2e0] sm:$0xff]
        %v566 = vld [vmem:[%s344 + $0x2e8] sm:$0xff]
        %v567 = vld [vmem:[%s344 + $0x2f0] sm:$0xff]
        %v568 = vld [vmem:[%s344 + $0x2f8] sm:$0xff]
        %v569 = vld [vmem:[%s344 + $0x300] sm:$0xff]
        %v570 = vld [vmem:[%s344 + $0x308] sm:$0xff]
        %v571 = vld [vmem:[%s344 + $0x310] sm:$0xff]
        %v572 = vld [vmem:[%s344 + $0x318] sm:$0xff]
        %v573 = vld [vmem:[%s344 + $0x320] sm:$0xff]
        %v574 = vld [vmem:[%s344 + $0x328] sm:$0xff]
        %v575 = vld [vmem:[%s344 + $0x330] sm:$0xff]
        %v576 = vld [vmem:[%s344 + $0x338] sm:$0xff]
        %v577 = vld [vmem:[%s344 + $0x340] sm:$0xff]
        %v578 = vld [vmem:[%s344 + $0x348] sm:$0xff]
        %v579 = vld [vmem:[%s344 + $0x350] sm:$0xff]
        %v580 = vld [vmem:[%s344 + $0x358] sm:$0xff]
        %v581 = vld [vmem:[%s344 + $0x360] sm:$0xff]
        %v582 = vld [vmem:[%s344 + $0x368] sm:$0xff]
        %v583 = vld [vmem:[%s344 + $0x370] sm:$0xff]
        %v584 = vld [vmem:[%s344 + $0x378] sm:$0xff]
        %v585 = vld [vmem:[%s344 + $0x380] sm:$0xff]
        %v586 = vld [vmem:[%s344 + $0x388] sm:$0xff]
        %v587 = vld [vmem:[%s344 + $0x390] sm:$0xff]
        %v588 = vld [vmem:[%s344 + $0x398] sm:$0xff]
        %v589 = vld [vmem:[%s344 + $0x3a0] sm:$0xff]
        %v590 = vld [vmem:[%s344 + $0x3a8] sm:$0xff]
        %v591 = vld [vmem:[%s344 + $0x3b0] sm:$0xff]
        %v592 = vld [vmem:[%s344 + $0x3b8] sm:$0xff]
        %v593 = vld [vmem:[%s344 + $0x3c0] sm:$0xff]
        %v594 = vld [vmem:[%s344 + $0x3c8] sm:$0xff]
        %v595 = vld [vmem:[%s344 + $0x3d0] sm:$0xff]
        %v596 = vld [vmem:[%s344 + $0x3d8] sm:$0xff]
        %v597 = vld [vmem:[%s344 + $0x3e0] sm:$0xff]
        %v598 = vld [vmem:[%s344 + $0x3e8] sm:$0xff]
        %v599 = vld [vmem:[%s344 + $0x3f0] sm:$0xff]
        %v600 = vld [vmem:[%s344 + $0x3f8] sm:$0xff]
        %v601 = vld [vmem:[%s344 + $0x400] sm:$0xff]
        %v602 = vld [vmem:[%s344 + $0x408] sm:$0xff]
        %v603 = vld [vmem:[%s344 + $0x410] sm:$0xff]
        %v604 = vld [vmem:[%s344 + $0x418] sm:$0xff]
        %v605 = vld [vmem:[%s344 + $0x420] sm:$0xff]
        %v606 = vld [vmem:[%s344 + $0x428] sm:$0xff]
        %v607 = vld [vmem:[%s344 + $0x430] sm:$0xff]
        %v608 = vld [vmem:[%s344 + $0x438] sm:$0xff]
        %v609 = vld [vmem:[%s344 + $0x440] sm:$0xff]
        %v610 = vld [vmem:[%s344 + $0x448] sm:$0xff]
        %v611 = vld [vmem:[%s344 + $0x450] sm:$0xff]
        %v612 = vld [vmem:[%s344 + $0x458] sm:$0xff]
        %v613 = vld [vmem:[%s344 + $0x460] sm:$0xff]
        %v614 = vld [vmem:[%s344 + $0x468] sm:$0xff]
        %v615 = vld [vmem:[%s344 + $0x470] sm:$0xff]
        %v616 = vld [vmem:[%s344 + $0x478] sm:$0xff]
        %v617 = vld [vmem:[%s344 + $0x480] sm:$0xff]
        %v618 = vld [vmem:[%s344 + $0x488] sm:$0xff]
        %v619 = vld [vmem:[%s344 + $0x490] sm:$0xff]
        %v620 = vld [vmem:[%s344 + $0x498] sm:$0xff]
        %v621 = vld [vmem:[%s344 + $0x4a0] sm:$0xff]
        %v622 = vld [vmem:[%s344 + $0x4a8] sm:$0xff]
        %v623 = vld [vmem:[%s344 + $0x4b0] sm:$0xff]
        %v624 = vld [vmem:[%s344 + $0x4b8] sm:$0xff]
        %v625 = vld [vmem:[%s344 + $0x4c0] sm:$0xff]
        %v626 = vld [vmem:[%s344 + $0x4c8] sm:$0xff]
        %v627 = vld [vmem:[%s344 + $0x4d0] sm:$0xff]
        %v628 = vld [vmem:[%s344 + $0x4d8] sm:$0xff]
        %v629 = vld [vmem:[%s344 + $0x4e0] sm:$0xff]
        %v630 = vld [vmem:[%s344 + $0x4e8] sm:$0xff]
        %v631 = vld [vmem:[%s344 + $0x4f0] sm:$0xff]
        %v632 = vld [vmem:[%s344 + $0x4f8] sm:$0xff]
        %v633 = vld [vmem:[%s344 + $0x500] sm:$0xff]
        %v634 = vld [vmem:[%s344 + $0x508] sm:$0xff]
        %v635 = vld [vmem:[%s344 + $0x510] sm:$0xff]
        %v636 = vld [vmem:[%s344 + $0x518] sm:$0xff]
        %v637 = vld [vmem:[%s344 + $0x520] sm:$0xff]
        %v638 = vld [vmem:[%s344 + $0x528] sm:$0xff]
        %v639 = vld [vmem:[%s344 + $0x530] sm:$0xff]
        %v640 = vld [vmem:[%s344 + $0x538] sm:$0xff]
        %v641 = vld [vmem:[%s344 + $0x540] sm:$0xff]
        %v642 = vld [vmem:[%s344 + $0x548] sm:$0xff]
        %v643 = vld [vmem:[%s344 + $0x550] sm:$0xff]
        %v644 = vld [vmem:[%s344 + $0x558] sm:$0xff]
        %v645 = vld [vmem:[%s344 + $0x560] sm:$0xff]
        %v646 = vld [vmem:[%s344 + $0x568] sm:$0xff]
        %v647 = vld [vmem:[%s344 + $0x570] sm:$0xff]
        %v648 = vld [vmem:[%s344 + $0x578] sm:$0xff]
        %v649 = vld [vmem:[%s344 + $0x580] sm:$0xff]
        %v650 = vld [vmem:[%s344 + $0x588] sm:$0xff]
        %v651 = vld [vmem:[%s344 + $0x590] sm:$0xff]
        %v652 = vld [vmem:[%s344 + $0x598] sm:$0xff]
        %v653 = vld [vmem:[%s344 + $0x5a0] sm:$0xff]
        %v654 = vld [vmem:[%s344 + $0x5a8] sm:$0xff]
        %v655 = vld [vmem:[%s344 + $0x5b0] sm:$0xff]
        %v656 = vld [vmem:[%s344 + $0x5b8] sm:$0xff]
        %v657 = vld [vmem:[%s344 + $0x5c0] sm:$0xff]
        %v658 = vld [vmem:[%s344 + $0x5c8] sm:$0xff]
        %v659 = vld [vmem:[%s344 + $0x5d0] sm:$0xff]
        %v660 = vld [vmem:[%s344 + $0x5d8] sm:$0xff]
        %v661 = vld [vmem:[%s344 + $0x5e0] sm:$0xff]
        %v662 = vld [vmem:[%s344 + $0x5e8] sm:$0xff]
        %v663 = vld [vmem:[%s344 + $0x5f0] sm:$0xff]
        %v664 = vld [vmem:[%s344 + $0x5f8] sm:$0xff]
        %v665 = vld [vmem:[%s344 + $0x600] sm:$0xff]
        %v666 = vld [vmem:[%s344 + $0x608] sm:$0xff]
        %v667 = vld [vmem:[%s344 + $0x610] sm:$0xff]
        %v668 = vld [vmem:[%s344 + $0x618] sm:$0xff]
        %v669 = vld [vmem:[%s344 + $0x620] sm:$0xff]
        %v670 = vld [vmem:[%s344 + $0x628] sm:$0xff]
        %v671 = vld [vmem:[%s344 + $0x630] sm:$0xff]
        %v672 = vld [vmem:[%s344 + $0x638] sm:$0xff]
        %v673 = vld [vmem:[%s344 + $0x640] sm:$0xff]
        %v674 = vld [vmem:[%s344 + $0x648] sm:$0xff]
        %v675 = vld [vmem:[%s344 + $0x650] sm:$0xff]
        %v676 = vld [vmem:[%s344 + $0x658] sm:$0xff]
        %v677 = vld [vmem:[%s344 + $0x660] sm:$0xff]
        %v678 = vld [vmem:[%s344 + $0x668] sm:$0xff]
        %v679 = vld [vmem:[%s344 + $0x670] sm:$0xff]
        %v680 = vld [vmem:[%s344 + $0x678] sm:$0xff]
        %v681 = vld [vmem:[%s344 + $0x680] sm:$0xff]
        %v682 = vld [vmem:[%s344 + $0x688] sm:$0xff]
        %v683 = vld [vmem:[%s344 + $0x690] sm:$0xff]
        %v684 = vld [vmem:[%s344 + $0x698] sm:$0xff]
        %v685 = vld [vmem:[%s344 + $0x6a0] sm:$0xff]
        %v686 = vld [vmem:[%s344 + $0x6a8] sm:$0xff]
        %v687 = vld [vmem:[%s344 + $0x6b0] sm:$0xff]
        %v688 = vld [vmem:[%s344 + $0x6b8] sm:$0xff]
        %v689 = vld [vmem:[%s344 + $0x6c0] sm:$0xff]
        %v690 = vld [vmem:[%s344 + $0x6c8] sm:$0xff]
        %v691 = vld [vmem:[%s344 + $0x6d0] sm:$0xff]
        %v692 = vld [vmem:[%s344 + $0x6d8] sm:$0xff]
        %v693 = vld [vmem:[%s344 + $0x6e0] sm:$0xff]
        %v694 = vld [vmem:[%s344 + $0x6e8] sm:$0xff]
        %v695 = vld [vmem:[%s344 + $0x6f0] sm:$0xff]
        %v696 = vld [vmem:[%s344 + $0x6f8] sm:$0xff]
        %v697 = vld [vmem:[%s344 + $0x700] sm:$0xff]
        %v698 = vld [vmem:[%s344 + $0x708] sm:$0xff]
        %v699 = vld [vmem:[%s344 + $0x710] sm:$0xff]
        %v700 = vld [vmem:[%s344 + $0x718] sm:$0xff]
        %v701 = vld [vmem:[%s344 + $0x720] sm:$0xff]
        %v702 = vld [vmem:[%s344 + $0x728] sm:$0xff]
        %v703 = vld [vmem:[%s344 + $0x730] sm:$0xff]
        %v704 = vld [vmem:[%s344 + $0x738] sm:$0xff]
        %v705 = vld [vmem:[%s344 + $0x740] sm:$0xff]
        %v706 = vld [vmem:[%s344 + $0x748] sm:$0xff]
        %v707 = vld [vmem:[%s344 + $0x750] sm:$0xff]
        %v708 = vld [vmem:[%s344 + $0x758] sm:$0xff]
        %v709 = vld [vmem:[%s344 + $0x760] sm:$0xff]
        %v710 = vld [vmem:[%s344 + $0x768] sm:$0xff]
        %v711 = vld [vmem:[%s344 + $0x770] sm:$0xff]
        %v712 = vld [vmem:[%s344 + $0x778] sm:$0xff]
        %v713 = vld [vmem:[%s344 + $0x780] sm:$0xff]
        %v714 = vld [vmem:[%s344 + $0x788] sm:$0xff]
        %v715 = vld [vmem:[%s344 + $0x790] sm:$0xff]
        %v716 = vld [vmem:[%s344 + $0x798] sm:$0xff]
        %v717 = vld [vmem:[%s344 + $0x7a0] sm:$0xff]
        %v718 = vld [vmem:[%s344 + $0x7a8] sm:$0xff]
        %v719 = vld [vmem:[%s344 + $0x7b0] sm:$0xff]
        %v720 = vld [vmem:[%s344 + $0x7b8] sm:$0xff]
        %v721 = vld [vmem:[%s344 + $0x7c0] sm:$0xff]
        %v722 = vld [vmem:[%s344 + $0x7c8] sm:$0xff]
        %v723 = vld [vmem:[%s344 + $0x7d0] sm:$0xff]
        %v724 = vld [vmem:[%s344 + $0x7d8] sm:$0xff]
        %v725 = vld [vmem:[%s344 + $0x7e0] sm:$0xff]
        %v726 = vld [vmem:[%s344 + $0x7e8] sm:$0xff]
        %v727 = vld [vmem:[%s344 + $0x7f0] sm:$0xff]
        %v728 = vld [vmem:[%s344 + $0x7f8] sm:$0xff]
        %v729 = vld [vmem:[%s344 + $0x800] sm:$0xff]
        %v730 = vld [vmem:[%s344 + $0x808] sm:$0xff]
        %v731 = vld [vmem:[%s344 + $0x810] sm:$0xff]
        %v732 = vld [vmem:[%s344 + $0x818] sm:$0xff]
        %v733 = vld [vmem:[%s344 + $0x820] sm:$0xff]
        %v734 = vld [vmem:[%s344 + $0x828] sm:$0xff]
        %v735 = vld [vmem:[%s344 + $0x830] sm:$0xff]
        %v736 = vld [vmem:[%s344 + $0x838] sm:$0xff]
        %v737 = vld [vmem:[%s344 + $0x840] sm:$0xff]
        %v738 = vld [vmem:[%s344 + $0x848] sm:$0xff]
        %v739 = vld [vmem:[%s344 + $0x850] sm:$0xff]
        %v740 = vld [vmem:[%s344 + $0x858] sm:$0xff]
        %v741 = vld [vmem:[%s344 + $0x860] sm:$0xff]
        %v742 = vld [vmem:[%s344 + $0x868] sm:$0xff]
        %v743 = vld [vmem:[%s344 + $0x870] sm:$0xff]
        %v744 = vld [vmem:[%s344 + $0x878] sm:$0xff]
        %v745 = vld [vmem:[%s344 + $0x880] sm:$0xff]
        %v746 = vld [vmem:[%s344 + $0x888] sm:$0xff]
        %v747 = vld [vmem:[%s344 + $0x890] sm:$0xff]
        %v748 = vld [vmem:[%s344 + $0x898] sm:$0xff]
        %v749 = vld [vmem:[%s344 + $0x8a0] sm:$0xff]
        %v750 = vld [vmem:[%s344 + $0x8a8] sm:$0xff]
        %v751 = vld [vmem:[%s344 + $0x8b0] sm:$0xff]
        %v752 = vld [vmem:[%s344 + $0x8b8] sm:$0xff]
        %v753 = vld [vmem:[%s344 + $0x8c0] sm:$0xff]
        %v754 = vld [vmem:[%s344 + $0x8c8] sm:$0xff]
        %v755 = vld [vmem:[%s344 + $0x8d0] sm:$0xff]
        %v756 = vld [vmem:[%s344 + $0x8d8] sm:$0xff]
        %v757 = vld [vmem:[%s344 + $0x8e0] sm:$0xff]
        %v758 = vld [vmem:[%s344 + $0x8e8] sm:$0xff]
        %v759 = vld [vmem:[%s344 + $0x8f0] sm:$0xff]
        %v760 = vld [vmem:[%s344 + $0x8f8] sm:$0xff]
        %v761 = vld [vmem:[%s344 + $0x900] sm:$0xff]
        %v762 = vld [vmem:[%s344 + $0x908] sm:$0xff]
        %v763 = vld [vmem:[%s344 + $0x910] sm:$0xff]
        %v764 = vld [vmem:[%s344 + $0x918] sm:$0xff]
        %v765 = vld [vmem:[%s344 + $0x920] sm:$0xff]
        %v766 = vld [vmem:[%s344 + $0x928] sm:$0xff]
        %v767 = vld [vmem:[%s344 + $0x930] sm:$0xff]
        %v768 = vld [vmem:[%s344 + $0x938] sm:$0xff]
        %v769 = vld [vmem:[%s344 + $0x940] sm:$0xff]
        %v770 = vld [vmem:[%s344 + $0x948] sm:$0xff]
        %v771 = vld [vmem:[%s344 + $0x950] sm:$0xff]
        %v772 = vld [vmem:[%s344 + $0x958] sm:$0xff]
        %v773 = vld [vmem:[%s344 + $0x960] sm:$0xff]
        %v774 = vld [vmem:[%s344 + $0x968] sm:$0xff]
        %v775 = vld [vmem:[%s344 + $0x970] sm:$0xff]
        %v776 = vld [vmem:[%s344 + $0x978] sm:$0xff]
        %v777 = vld [vmem:[%s344 + $0x980] sm:$0xff]
        %v778 = vld [vmem:[%s344 + $0x988] sm:$0xff]
        %v779 = vld [vmem:[%s344 + $0x990] sm:$0xff]
        %v780 = vld [vmem:[%s344 + $0x998] sm:$0xff]
        %v781 = vld [vmem:[%s344 + $0x9a0] sm:$0xff]
        %v782 = vld [vmem:[%s344 + $0x9a8] sm:$0xff]
        %v783 = vld [vmem:[%s344 + $0x9b0] sm:$0xff]
        %v784 = vld [vmem:[%s344 + $0x9b8] sm:$0xff]
        %v785 = vld [vmem:[%s344 + $0x9c0] sm:$0xff]
        %v786 = vld [vmem:[%s344 + $0x9c8] sm:$0xff]
        %v787 = vld [vmem:[%s344 + $0x9d0] sm:$0xff]
        %v788 = vld [vmem:[%s344 + $0x9d8] sm:$0xff]
        %v789 = vld [vmem:[%s344 + $0x9e0] sm:$0xff]
        %v790 = vld [vmem:[%s344 + $0x9e8] sm:$0xff]
        %v791 = vld [vmem:[%s344 + $0x9f0] sm:$0xff]
        %v792 = vld [vmem:[%s344 + $0x9f8] sm:$0xff]
        %v793 = vld [vmem:[%s344 + $0xa00] sm:$0xff]
        %v794 = vld [vmem:[%s344 + $0xa08] sm:$0xff]
        %v795 = vld [vmem:[%s344 + $0xa10] sm:$0xff]
        %v796 = vld [vmem:[%s344 + $0xa18] sm:$0xff]
        %v797 = vld [vmem:[%s344 + $0xa20] sm:$0xff]
        %v798 = vld [vmem:[%s344 + $0xa28] sm:$0xff]
        %v799 = vld [vmem:[%s344 + $0xa30] sm:$0xff]
        %v800 = vld [vmem:[%s344 + $0xa38] sm:$0xff]
        %v801 = vld [vmem:[%s344 + $0xa40] sm:$0xff]
        %v802 = vld [vmem:[%s344 + $0xa48] sm:$0xff]
        %v803 = vld [vmem:[%s344 + $0xa50] sm:$0xff]
        %v804 = vld [vmem:[%s344 + $0xa58] sm:$0xff]
        %v805 = vld [vmem:[%s344 + $0xa60] sm:$0xff]
        %v806 = vld [vmem:[%s344 + $0xa68] sm:$0xff]
        %v807 = vld [vmem:[%s344 + $0xa70] sm:$0xff]
        %v808 = vld [vmem:[%s344 + $0xa78] sm:$0xff]
        %v809 = vld [vmem:[%s344 + $0xa80] sm:$0xff]
        %v810 = vld [vmem:[%s344 + $0xa88] sm:$0xff]
        %v811 = vld [vmem:[%s344 + $0xa90] sm:$0xff]
        %v812 = vld [vmem:[%s344 + $0xa98] sm:$0xff]
        %v813 = vld [vmem:[%s344 + $0xaa0] sm:$0xff]
        %v814 = vld [vmem:[%s344 + $0xaa8] sm:$0xff]
        %v815 = vld [vmem:[%s344 + $0xab0] sm:$0xff]
        %v816 = vld [vmem:[%s344 + $0xab8] sm:$0xff]
        %v817 = vld [vmem:[%s344 + $0xac0] sm:$0xff]
        %v818 = vld [vmem:[%s344 + $0xac8] sm:$0xff]
        %v819 = vld [vmem:[%s344 + $0xad0] sm:$0xff]
        %v820 = vld [vmem:[%s344 + $0xad8] sm:$0xff]
        %v821 = vld [vmem:[%s344 + $0xae0] sm:$0xff]
        %v822 = vld [vmem:[%s344 + $0xae8] sm:$0xff]
        %v823 = vld [vmem:[%s344 + $0xaf0] sm:$0xff]
        %v824 = vld [vmem:[%s344 + $0xaf8] sm:$0xff]
        %v825 = vld [vmem:[%s344 + $0xb00] sm:$0xff]
        %v826 = vld [vmem:[%s344 + $0xb08] sm:$0xff]
        %v827 = vld [vmem:[%s344 + $0xb10] sm:$0xff]
        %v828 = vld [vmem:[%s344 + $0xb18] sm:$0xff]
        %v829 = vld [vmem:[%s344 + $0xb20] sm:$0xff]
        %v830 = vld [vmem:[%s344 + $0xb28] sm:$0xff]
        %v831 = vld [vmem:[%s344 + $0xb30] sm:$0xff]
        %v832 = vld [vmem:[%s344 + $0xb38] sm:$0xff]
        %v833 = vld [vmem:[%s344 + $0xb40] sm:$0xff]
        %v834 = vld [vmem:[%s344 + $0xb48] sm:$0xff]
        %v835 = vld [vmem:[%s344 + $0xb50] sm:$0xff]
        %v836 = vld [vmem:[%s344 + $0xb58] sm:$0xff]
        %v837 = vld [vmem:[%s344 + $0xb60] sm:$0xff]
        %v838 = vld [vmem:[%s344 + $0xb68] sm:$0xff]
        %v839 = vld [vmem:[%s344 + $0xb70] sm:$0xff]
        %v840 = vld [vmem:[%s344 + $0xb78] sm:$0xff]
        %v841 = vld [vmem:[%s344 + $0xb80] sm:$0xff]
        %v842 = vld [vmem:[%s344 + $0xb88] sm:$0xff]
        %v843 = vld [vmem:[%s344 + $0xb90] sm:$0xff]
        %v844 = vld [vmem:[%s344 + $0xb98] sm:$0xff]
        %v845 = vld [vmem:[%s344 + $0xba0] sm:$0xff]
        %v846 = vld [vmem:[%s344 + $0xba8] sm:$0xff]
        %v847 = vld [vmem:[%s344 + $0xbb0] sm:$0xff]
        %v848 = vld [vmem:[%s344 + $0xbb8] sm:$0xff]
        %v849 = vld [vmem:[%s344 + $0xbc0] sm:$0xff]
        %v850 = vld [vmem:[%s344 + $0xbc8] sm:$0xff]
        %v851 = vld [vmem:[%s344 + $0xbd0] sm:$0xff]
        %v852 = vld [vmem:[%s344 + $0xbd8] sm:$0xff]
        %v853 = vld [vmem:[%s344 + $0xbe0] sm:$0xff]
        %v854 = vld [vmem:[%s344 + $0xbe8] sm:$0xff]
        %v855 = vld [vmem:[%s344 + $0xbf0] sm:$0xff]
        %v856 = vld [vmem:[%s344 + $0xbf8] sm:$0xff]
        %v857 = vld [vmem:[%s344 + $0xc00] sm:$0xff]
        %v858 = vld [vmem:[%s344 + $0xc08] sm:$0xff]
        %v859 = vld [vmem:[%s344 + $0xc10] sm:$0xff]
        %v860 = vld [vmem:[%s344 + $0xc18] sm:$0xff]
        %v861 = vld [vmem:[%s344 + $0xc20] sm:$0xff]
        %v862 = vld [vmem:[%s344 + $0xc28] sm:$0xff]
        %v863 = vld [vmem:[%s344 + $0xc30] sm:$0xff]
        %v864 = vld [vmem:[%s344 + $0xc38] sm:$0xff]
        %v865 = vld [vmem:[%s344 + $0xc40] sm:$0xff]
        %v866 = vld [vmem:[%s344 + $0xc48] sm:$0xff]
        %v867 = vld [vmem:[%s344 + $0xc50] sm:$0xff]
        %v868 = vld [vmem:[%s344 + $0xc58] sm:$0xff]
        %v869 = vld [vmem:[%s344 + $0xc60] sm:$0xff]
        %v870 = vld [vmem:[%s344 + $0xc68] sm:$0xff]
        %v871 = vld [vmem:[%s344 + $0xc70] sm:$0xff]
        %v872 = vld [vmem:[%s344 + $0xc78] sm:$0xff]
        %v873 = vld [vmem:[%s344 + $0xc80] sm:$0xff]
        %v874 = vld [vmem:[%s344 + $0xc88] sm:$0xff]
        %v875 = vld [vmem:[%s344 + $0xc90] sm:$0xff]
        %v876 = vld [vmem:[%s344 + $0xc98] sm:$0xff]
        %v877 = vld [vmem:[%s344 + $0xca0] sm:$0xff]
        %v878 = vld [vmem:[%s344 + $0xca8] sm:$0xff]
        %v879 = vld [vmem:[%s344 + $0xcb0] sm:$0xff]
        %v880 = vld [vmem:[%s344 + $0xcb8] sm:$0xff]
        %v881 = vld [vmem:[%s344 + $0xcc0] sm:$0xff]
        %v882 = vld [vmem:[%s344 + $0xcc8] sm:$0xff]
        %v883 = vld [vmem:[%s344 + $0xcd0] sm:$0xff]
        %v884 = vld [vmem:[%s344 + $0xcd8] sm:$0xff]
        %v885 = vld [vmem:[%s344 + $0xce0] sm:$0xff]
        %v886 = vld [vmem:[%s344 + $0xce8] sm:$0xff]
        %v887 = vld [vmem:[%s344 + $0xcf0] sm:$0xff]
        %v888 = vld [vmem:[%s344 + $0xcf8] sm:$0xff]
        %v889 = vld [vmem:[%s344 + $0xd00] sm:$0xff]
        %v890 = vld [vmem:[%s344 + $0xd08] sm:$0xff]
        %v891 = vld [vmem:[%s344 + $0xd10] sm:$0xff]
        %v892 = vld [vmem:[%s344 + $0xd18] sm:$0xff]
        %v893 = vld [vmem:[%s344 + $0xd20] sm:$0xff]
        %v894 = vld [vmem:[%s344 + $0xd28] sm:$0xff]
        %v895 = vld [vmem:[%s344 + $0xd30] sm:$0xff]
        %v896 = vld [vmem:[%s344 + $0xd38] sm:$0xff]
        %v897 = vld [vmem:[%s344 + $0xd40] sm:$0xff]
        %v898 = vld [vmem:[%s344 + $0xd48] sm:$0xff]
        %v899 = vld [vmem:[%s344 + $0xd50] sm:$0xff]
        %v900 = vld [vmem:[%s344 + $0xd58] sm:$0xff]
        %v901 = vld [vmem:[%s344 + $0xd60] sm:$0xff]
        %v902 = vld [vmem:[%s344 + $0xd68] sm:$0xff]
        %v903 = vld [vmem:[%s344 + $0xd70] sm:$0xff]
        %v904 = vld [vmem:[%s344 + $0xd78] sm:$0xff]
        %v905 = vld [vmem:[%s344 + $0xd80] sm:$0xff]
        %v906 = vld [vmem:[%s344 + $0xd88] sm:$0xff]
        %v907 = vld [vmem:[%s344 + $0xd90] sm:$0xff]
        %v908 = vld [vmem:[%s344 + $0xd98] sm:$0xff]
        %v909 = vld [vmem:[%s344 + $0xda0] sm:$0xff]
        %v910 = vld [vmem:[%s344 + $0xda8] sm:$0xff]
        %v911 = vld [vmem:[%s344 + $0xdb0] sm:$0xff]
        %v912 = vld [vmem:[%s344 + $0xdb8] sm:$0xff]
        %v913 = vld [vmem:[%s344 + $0xdc0] sm:$0xff]
        %v914 = vld [vmem:[%s344 + $0xdc8] sm:$0xff]
        %v915 = vld [vmem:[%s344 + $0xdd0] sm:$0xff]
        %v916 = vld [vmem:[%s344 + $0xdd8] sm:$0xff]
        %v917 = vld [vmem:[%s344 + $0xde0] sm:$0xff]
        %v918 = vld [vmem:[%s344 + $0xde8] sm:$0xff]
        %v919 = vld [vmem:[%s344 + $0xdf0] sm:$0xff]
        %v920 = vld [vmem:[%s344 + $0xdf8] sm:$0xff]
        %v921 = vld [vmem:[%s344 + $0xe00] sm:$0xff]
        %v922 = vld [vmem:[%s344 + $0xe08] sm:$0xff]
        %v923 = vld [vmem:[%s344 + $0xe10] sm:$0xff]
        %v924 = vld [vmem:[%s344 + $0xe18] sm:$0xff]
        %v925 = vld [vmem:[%s344 + $0xe20] sm:$0xff]
        %v926 = vld [vmem:[%s344 + $0xe28] sm:$0xff]
        %v927 = vld [vmem:[%s344 + $0xe30] sm:$0xff]
        %v928 = vld [vmem:[%s344 + $0xe38] sm:$0xff]
        %v929 = vld [vmem:[%s344 + $0xe40] sm:$0xff]
        %v930 = vld [vmem:[%s344 + $0xe48] sm:$0xff]
        %v931 = vld [vmem:[%s344 + $0xe50] sm:$0xff]
        %v932 = vld [vmem:[%s344 + $0xe58] sm:$0xff]
        %v933 = vld [vmem:[%s344 + $0xe60] sm:$0xff]
        %v934 = vld [vmem:[%s344 + $0xe68] sm:$0xff]
        %v935 = vld [vmem:[%s344 + $0xe70] sm:$0xff]
        %v936 = vld [vmem:[%s344 + $0xe78] sm:$0xff]
        %v937 = vld [vmem:[%s344 + $0xe80] sm:$0xff]
        %v938 = vld [vmem:[%s344 + $0xe88] sm:$0xff]
        %v939 = vld [vmem:[%s344 + $0xe90] sm:$0xff]
        %v940 = vld [vmem:[%s344 + $0xe98] sm:$0xff]
        %v941 = vld [vmem:[%s344 + $0xea0] sm:$0xff]
        %v942 = vld [vmem:[%s344 + $0xea8] sm:$0xff]
        %v943 = vld [vmem:[%s344 + $0xeb0] sm:$0xff]
        %v944 = vld [vmem:[%s344 + $0xeb8] sm:$0xff]
        %v945 = vld [vmem:[%s344 + $0xec0] sm:$0xff]
        %v946 = vld [vmem:[%s344 + $0xec8] sm:$0xff]
        %v947 = vld [vmem:[%s344 + $0xed0] sm:$0xff]
        %v948 = vld [vmem:[%s344 + $0xed8] sm:$0xff]
        %v949 = vld [vmem:[%s344 + $0xee0] sm:$0xff]
        %v950 = vld [vmem:[%s344 + $0xee8] sm:$0xff]
        %v951 = vld [vmem:[%s344 + $0xef0] sm:$0xff]
        %v952 = vld [vmem:[%s344 + $0xef8] sm:$0xff]
        %v953 = vld [vmem:[%s344 + $0xf00] sm:$0xff]
        %v954 = vld [vmem:[%s344 + $0xf08] sm:$0xff]
        %v955 = vld [vmem:[%s344 + $0xf10] sm:$0xff]
        %v956 = vld [vmem:[%s344 + $0xf18] sm:$0xff]
        %v957 = vld [vmem:[%s344 + $0xf20] sm:$0xff]
        %v958 = vld [vmem:[%s344 + $0xf28] sm:$0xff]
        %v959 = vld [vmem:[%s344 + $0xf30] sm:$0xff]
        %v960 = vld [vmem:[%s344 + $0xf38] sm:$0xff]
        %v961 = vld [vmem:[%s344 + $0xf40] sm:$0xff]
        %v962 = vld [vmem:[%s344 + $0xf48] sm:$0xff]
        %v963 = vld [vmem:[%s344 + $0xf50] sm:$0xff]
        %v964 = vld [vmem:[%s344 + $0xf58] sm:$0xff]
        %v965 = vld [vmem:[%s344 + $0xf60] sm:$0xff]
        %v966 = vld [vmem:[%s344 + $0xf68] sm:$0xff]
        %v967 = vld [vmem:[%s344 + $0xf70] sm:$0xff]
        %v968 = vld [vmem:[%s344 + $0xf78] sm:$0xff]
        %v969 = vld [vmem:[%s344 + $0xf80] sm:$0xff]
        %v970 = vld [vmem:[%s344 + $0xf88] sm:$0xff]
        %v971 = vld [vmem:[%s344 + $0xf90] sm:$0xff]
        %v972 = vld [vmem:[%s344 + $0xf98] sm:$0xff]
        %v973 = vld [vmem:[%s344 + $0xfa0] sm:$0xff]
        %v974 = vld [vmem:[%s344 + $0xfa8] sm:$0xff]
        %v975 = vld [vmem:[%s344 + $0xfb0] sm:$0xff]
        %v976 = vld [vmem:[%s344 + $0xfb8] sm:$0xff]
        %v977 = vld [vmem:[%s344 + $0xfc0] sm:$0xff]
        %v978 = vld [vmem:[%s344 + $0xfc8] sm:$0xff]
        %v979 = vld [vmem:[%s344 + $0xfd0] sm:$0xff]
        %v980 = vld [vmem:[%s344 + $0xfd8] sm:$0xff]
        %v981 = vld [vmem:[%s344 + $0xfe0] sm:$0xff]
        %v982 = vld [vmem:[%s344 + $0xfe8] sm:$0xff]
        %v983 = vld [vmem:[%s344 + $0xff0] sm:$0xff]
        %v984 = vld [vmem:[%s344 + $0xff8] sm:$0xff]
        %v1497 = vunpack.c.l.b16 %v473
        %v1498 = vunpack.c.h.b16 %v473
        %v1499 = vunpack.c.l.b16 %v474
        %v1500 = vunpack.c.h.b16 %v474
        %v1501 = vunpack.c.l.b16 %v475
        %v1502 = vunpack.c.h.b16 %v475
        %v1503 = vunpack.c.l.b16 %v476
        %v1504 = vunpack.c.h.b16 %v476
        %v1505 = vunpack.c.l.b16 %v477
        %v1506 = vunpack.c.h.b16 %v477
        %v1507 = vunpack.c.l.b16 %v478
        %v1508 = vunpack.c.h.b16 %v478
        %v1509 = vunpack.c.l.b16 %v479
        %v1510 = vunpack.c.h.b16 %v479
        %v1511 = vunpack.c.l.b16 %v480
        %v1512 = vunpack.c.h.b16 %v480
        %v1513 = vunpack.c.l.b16 %v481
        %v1514 = vunpack.c.h.b16 %v481
        %v1515 = vunpack.c.l.b16 %v482
        %v1516 = vunpack.c.h.b16 %v482
        %v1517 = vunpack.c.l.b16 %v483
        %v1518 = vunpack.c.h.b16 %v483
        %v1519 = vunpack.c.l.b16 %v484
        %v1520 = vunpack.c.h.b16 %v484
        %v1521 = vunpack.c.l.b16 %v485
        %v1522 = vunpack.c.h.b16 %v485
        %v1523 = vunpack.c.l.b16 %v486
        %v1524 = vunpack.c.h.b16 %v486
        %v1525 = vunpack.c.l.b16 %v487
        %v1526 = vunpack.c.h.b16 %v487
        %v1527 = vunpack.c.l.b16 %v488
        %v1528 = vunpack.c.h.b16 %v488
        %v1529 = vunpack.c.l.b16 %v489
        %v1530 = vunpack.c.h.b16 %v489
        %v1531 = vunpack.c.l.b16 %v490
        %v1532 = vunpack.c.h.b16 %v490
        %v1533 = vunpack.c.l.b16 %v491
        %v1534 = vunpack.c.h.b16 %v491
        %v1535 = vunpack.c.l.b16 %v492
        %v1536 = vunpack.c.h.b16 %v492
        %v1537 = vunpack.c.l.b16 %v493
        %v1538 = vunpack.c.h.b16 %v493
        %v1539 = vunpack.c.l.b16 %v494
        %v1540 = vunpack.c.h.b16 %v494
        %v1541 = vunpack.c.l.b16 %v495
        %v1542 = vunpack.c.h.b16 %v495
        %v1543 = vunpack.c.l.b16 %v496
        %v1544 = vunpack.c.h.b16 %v496
        %v1545 = vunpack.c.l.b16 %v497
        %v1546 = vunpack.c.h.b16 %v497
        %v1547 = vunpack.c.l.b16 %v498
        %v1548 = vunpack.c.h.b16 %v498
        %v1549 = vunpack.c.l.b16 %v499
        %v1550 = vunpack.c.h.b16 %v499
        %v1551 = vunpack.c.l.b16 %v500
        %v1552 = vunpack.c.h.b16 %v500
        %v1553 = vunpack.c.l.b16 %v501
        %v1554 = vunpack.c.h.b16 %v501
        %v1555 = vunpack.c.l.b16 %v502
        %v1556 = vunpack.c.h.b16 %v502
        %v1557 = vunpack.c.l.b16 %v503
        %v1558 = vunpack.c.h.b16 %v503
        %v1559 = vunpack.c.l.b16 %v504
        %v1560 = vunpack.c.h.b16 %v504
        %v1561 = vunpack.c.l.b16 %v505
        %v1562 = vunpack.c.h.b16 %v505
        %v1563 = vunpack.c.l.b16 %v506
        %v1564 = vunpack.c.h.b16 %v506
        %v1565 = vunpack.c.l.b16 %v507
        %v1566 = vunpack.c.h.b16 %v507
        %v1567 = vunpack.c.l.b16 %v508
        %v1568 = vunpack.c.h.b16 %v508
        %v1569 = vunpack.c.l.b16 %v509
        %v1570 = vunpack.c.h.b16 %v509
        %v1571 = vunpack.c.l.b16 %v510
        %v1572 = vunpack.c.h.b16 %v510
        %v1573 = vunpack.c.l.b16 %v511
        %v1574 = vunpack.c.h.b16 %v511
        %v1575 = vunpack.c.l.b16 %v512
        %v1576 = vunpack.c.h.b16 %v512
        %v1577 = vunpack.c.l.b16 %v513
        %v1578 = vunpack.c.h.b16 %v513
        %v1579 = vunpack.c.l.b16 %v514
        %v1580 = vunpack.c.h.b16 %v514
        %v1581 = vunpack.c.l.b16 %v515
        %v1582 = vunpack.c.h.b16 %v515
        %v1583 = vunpack.c.l.b16 %v516
        %v1584 = vunpack.c.h.b16 %v516
        %v1585 = vunpack.c.l.b16 %v517
        %v1586 = vunpack.c.h.b16 %v517
        %v1587 = vunpack.c.l.b16 %v518
        %v1588 = vunpack.c.h.b16 %v518
        %v1589 = vunpack.c.l.b16 %v519
        %v1590 = vunpack.c.h.b16 %v519
        %v1591 = vunpack.c.l.b16 %v520
        %v1592 = vunpack.c.h.b16 %v520
        %v1593 = vunpack.c.l.b16 %v521
        %v1594 = vunpack.c.h.b16 %v521
        %v1595 = vunpack.c.l.b16 %v522
        %v1596 = vunpack.c.h.b16 %v522
        %v1597 = vunpack.c.l.b16 %v523
        %v1598 = vunpack.c.h.b16 %v523
        %v1599 = vunpack.c.l.b16 %v524
        %v1600 = vunpack.c.h.b16 %v524
        %v1601 = vunpack.c.l.b16 %v525
        %v1602 = vunpack.c.h.b16 %v525
        %v1603 = vunpack.c.l.b16 %v526
        %v1604 = vunpack.c.h.b16 %v526
        %v1605 = vunpack.c.l.b16 %v527
        %v1606 = vunpack.c.h.b16 %v527
        %v1607 = vunpack.c.l.b16 %v528
        %v1608 = vunpack.c.h.b16 %v528
        %v1609 = vunpack.c.l.b16 %v529
        %v1610 = vunpack.c.h.b16 %v529
        %v1611 = vunpack.c.l.b16 %v530
        %v1612 = vunpack.c.h.b16 %v530
        %v1613 = vunpack.c.l.b16 %v531
        %v1614 = vunpack.c.h.b16 %v531
        %v1615 = vunpack.c.l.b16 %v532
        %v1616 = vunpack.c.h.b16 %v532
        %v1617 = vunpack.c.l.b16 %v533
        %v1618 = vunpack.c.h.b16 %v533
        %v1619 = vunpack.c.l.b16 %v534
        %v1620 = vunpack.c.h.b16 %v534
        %v1621 = vunpack.c.l.b16 %v535
        %v1622 = vunpack.c.h.b16 %v535
        %v1623 = vunpack.c.l.b16 %v536
        %v1624 = vunpack.c.h.b16 %v536
        %v1625 = vunpack.c.l.b16 %v537
        %v1626 = vunpack.c.h.b16 %v537
        %v1627 = vunpack.c.l.b16 %v538
        %v1628 = vunpack.c.h.b16 %v538
        %v1629 = vunpack.c.l.b16 %v539
        %v1630 = vunpack.c.h.b16 %v539
        %v1631 = vunpack.c.l.b16 %v540
        %v1632 = vunpack.c.h.b16 %v540
        %v1633 = vunpack.c.l.b16 %v541
        %v1634 = vunpack.c.h.b16 %v541
        %v1635 = vunpack.c.l.b16 %v542
        %v1636 = vunpack.c.h.b16 %v542
        %v1637 = vunpack.c.l.b16 %v543
        %v1638 = vunpack.c.h.b16 %v543
        %v1639 = vunpack.c.l.b16 %v544
        %v1640 = vunpack.c.h.b16 %v544
        %v1641 = vunpack.c.l.b16 %v545
        %v1642 = vunpack.c.h.b16 %v545
        %v1643 = vunpack.c.l.b16 %v546
        %v1644 = vunpack.c.h.b16 %v546
        %v1645 = vunpack.c.l.b16 %v547
        %v1646 = vunpack.c.h.b16 %v547
        %v1647 = vunpack.c.l.b16 %v548
        %v1648 = vunpack.c.h.b16 %v548
        %v1649 = vunpack.c.l.b16 %v549
        %v1650 = vunpack.c.h.b16 %v549
        %v1651 = vunpack.c.l.b16 %v550
        %v1652 = vunpack.c.h.b16 %v550
        %v1653 = vunpack.c.l.b16 %v551
        %v1654 = vunpack.c.h.b16 %v551
        %v1655 = vunpack.c.l.b16 %v552
        %v1656 = vunpack.c.h.b16 %v552
        %v1657 = vunpack.c.l.b16 %v553
        %v1658 = vunpack.c.h.b16 %v553
        %v1659 = vunpack.c.l.b16 %v554
        %v1660 = vunpack.c.h.b16 %v554
        %v1661 = vunpack.c.l.b16 %v555
        %v1662 = vunpack.c.h.b16 %v555
        %v1663 = vunpack.c.l.b16 %v556
        %v1664 = vunpack.c.h.b16 %v556
        %v1665 = vunpack.c.l.b16 %v557
        %v1666 = vunpack.c.h.b16 %v557
        %v1667 = vunpack.c.l.b16 %v558
        %v1668 = vunpack.c.h.b16 %v558
        %v1669 = vunpack.c.l.b16 %v559
        %v1670 = vunpack.c.h.b16 %v559
        %v1671 = vunpack.c.l.b16 %v560
        %v1672 = vunpack.c.h.b16 %v560
        %v1673 = vunpack.c.l.b16 %v561
        %v1674 = vunpack.c.h.b16 %v561
        %v1675 = vunpack.c.l.b16 %v562
        %v1676 = vunpack.c.h.b16 %v562
        %v1677 = vunpack.c.l.b16 %v563
        %v1678 = vunpack.c.h.b16 %v563
        %v1679 = vunpack.c.l.b16 %v564
        %v1680 = vunpack.c.h.b16 %v564
        %v1681 = vunpack.c.l.b16 %v565
        %v1682 = vunpack.c.h.b16 %v565
        %v1683 = vunpack.c.l.b16 %v566
        %v1684 = vunpack.c.h.b16 %v566
        %v1685 = vunpack.c.l.b16 %v567
        %v1686 = vunpack.c.h.b16 %v567
        %v1687 = vunpack.c.l.b16 %v568
        %v1688 = vunpack.c.h.b16 %v568
        %v1689 = vunpack.c.l.b16 %v569
        %v1690 = vunpack.c.h.b16 %v569
        %v1691 = vunpack.c.l.b16 %v570
        %v1692 = vunpack.c.h.b16 %v570
        %v1693 = vunpack.c.l.b16 %v571
        %v1694 = vunpack.c.h.b16 %v571
        %v1695 = vunpack.c.l.b16 %v572
        %v1696 = vunpack.c.h.b16 %v572
        %v1697 = vunpack.c.l.b16 %v573
        %v1698 = vunpack.c.h.b16 %v573
        %v1699 = vunpack.c.l.b16 %v574
        %v1700 = vunpack.c.h.b16 %v574
        %v1701 = vunpack.c.l.b16 %v575
        %v1702 = vunpack.c.h.b16 %v575
        %v1703 = vunpack.c.l.b16 %v576
        %v1704 = vunpack.c.h.b16 %v576
        %v1705 = vunpack.c.l.b16 %v577
        %v1706 = vunpack.c.h.b16 %v577
        %v1707 = vunpack.c.l.b16 %v578
        %v1708 = vunpack.c.h.b16 %v578
        %v1709 = vunpack.c.l.b16 %v579
        %v1710 = vunpack.c.h.b16 %v579
        %v1711 = vunpack.c.l.b16 %v580
        %v1712 = vunpack.c.h.b16 %v580
        %v1713 = vunpack.c.l.b16 %v581
        %v1714 = vunpack.c.h.b16 %v581
        %v1715 = vunpack.c.l.b16 %v582
        %v1716 = vunpack.c.h.b16 %v582
        %v1717 = vunpack.c.l.b16 %v583
        %v1718 = vunpack.c.h.b16 %v583
        %v1719 = vunpack.c.l.b16 %v584
        %v1720 = vunpack.c.h.b16 %v584
        %v1721 = vunpack.c.l.b16 %v585
        %v1722 = vunpack.c.h.b16 %v585
        %v1723 = vunpack.c.l.b16 %v586
        %v1724 = vunpack.c.h.b16 %v586
        %v1725 = vunpack.c.l.b16 %v587
        %v1726 = vunpack.c.h.b16 %v587
        %v1727 = vunpack.c.l.b16 %v588
        %v1728 = vunpack.c.h.b16 %v588
        %v1729 = vunpack.c.l.b16 %v589
        %v1730 = vunpack.c.h.b16 %v589
        %v1731 = vunpack.c.l.b16 %v590
        %v1732 = vunpack.c.h.b16 %v590
        %v1733 = vunpack.c.l.b16 %v591
        %v1734 = vunpack.c.h.b16 %v591
        %v1735 = vunpack.c.l.b16 %v592
        %v1736 = vunpack.c.h.b16 %v592
        %v1737 = vunpack.c.l.b16 %v593
        %v1738 = vunpack.c.h.b16 %v593
        %v1739 = vunpack.c.l.b16 %v594
        %v1740 = vunpack.c.h.b16 %v594
        %v1741 = vunpack.c.l.b16 %v595
        %v1742 = vunpack.c.h.b16 %v595
        %v1743 = vunpack.c.l.b16 %v596
        %v1744 = vunpack.c.h.b16 %v596
        %v1745 = vunpack.c.l.b16 %v597
        %v1746 = vunpack.c.h.b16 %v597
        %v1747 = vunpack.c.l.b16 %v598
        %v1748 = vunpack.c.h.b16 %v598
        %v1749 = vunpack.c.l.b16 %v599
        %v1750 = vunpack.c.h.b16 %v599
        %v1751 = vunpack.c.l.b16 %v600
        %v1752 = vunpack.c.h.b16 %v600
        %v1753 = vunpack.c.l.b16 %v601
        %v1754 = vunpack.c.h.b16 %v601
        %v1755 = vunpack.c.l.b16 %v602
        %v1756 = vunpack.c.h.b16 %v602
        %v1757 = vunpack.c.l.b16 %v603
        %v1758 = vunpack.c.h.b16 %v603
        %v1759 = vunpack.c.l.b16 %v604
        %v1760 = vunpack.c.h.b16 %v604
        %v1761 = vunpack.c.l.b16 %v605
        %v1762 = vunpack.c.h.b16 %v605
        %v1763 = vunpack.c.l.b16 %v606
        %v1764 = vunpack.c.h.b16 %v606
        %v1765 = vunpack.c.l.b16 %v607
        %v1766 = vunpack.c.h.b16 %v607
        %v1767 = vunpack.c.l.b16 %v608
        %v1768 = vunpack.c.h.b16 %v608
        %v1769 = vunpack.c.l.b16 %v609
        %v1770 = vunpack.c.h.b16 %v609
        %v1771 = vunpack.c.l.b16 %v610
        %v1772 = vunpack.c.h.b16 %v610
        %v1773 = vunpack.c.l.b16 %v611
        %v1774 = vunpack.c.h.b16 %v611
        %v1775 = vunpack.c.l.b16 %v612
        %v1776 = vunpack.c.h.b16 %v612
        %v1777 = vunpack.c.l.b16 %v613
        %v1778 = vunpack.c.h.b16 %v613
        %v1779 = vunpack.c.l.b16 %v614
        %v1780 = vunpack.c.h.b16 %v614
        %v1781 = vunpack.c.l.b16 %v615
        %v1782 = vunpack.c.h.b16 %v615
        %v1783 = vunpack.c.l.b16 %v616
        %v1784 = vunpack.c.h.b16 %v616
        %v1785 = vunpack.c.l.b16 %v617
        %v1786 = vunpack.c.h.b16 %v617
        %v1787 = vunpack.c.l.b16 %v618
        %v1788 = vunpack.c.h.b16 %v618
        %v1789 = vunpack.c.l.b16 %v619
        %v1790 = vunpack.c.h.b16 %v619
        %v1791 = vunpack.c.l.b16 %v620
        %v1792 = vunpack.c.h.b16 %v620
        %v1793 = vunpack.c.l.b16 %v621
        %v1794 = vunpack.c.h.b16 %v621
        %v1795 = vunpack.c.l.b16 %v622
        %v1796 = vunpack.c.h.b16 %v622
        %v1797 = vunpack.c.l.b16 %v623
        %v1798 = vunpack.c.h.b16 %v623
        %v1799 = vunpack.c.l.b16 %v624
        %v1800 = vunpack.c.h.b16 %v624
        %v1801 = vunpack.c.l.b16 %v625
        %v1802 = vunpack.c.h.b16 %v625
        %v1803 = vunpack.c.l.b16 %v626
        %v1804 = vunpack.c.h.b16 %v626
        %v1805 = vunpack.c.l.b16 %v627
        %v1806 = vunpack.c.h.b16 %v627
        %v1807 = vunpack.c.l.b16 %v628
        %v1808 = vunpack.c.h.b16 %v628
        %v1809 = vunpack.c.l.b16 %v629
        %v1810 = vunpack.c.h.b16 %v629
        %v1811 = vunpack.c.l.b16 %v630
        %v1812 = vunpack.c.h.b16 %v630
        %v1813 = vunpack.c.l.b16 %v631
        %v1814 = vunpack.c.h.b16 %v631
        %v1815 = vunpack.c.l.b16 %v632
        %v1816 = vunpack.c.h.b16 %v632
        %v1817 = vunpack.c.l.b16 %v633
        %v1818 = vunpack.c.h.b16 %v633
        %v1819 = vunpack.c.l.b16 %v634
        %v1820 = vunpack.c.h.b16 %v634
        %v1821 = vunpack.c.l.b16 %v635
        %v1822 = vunpack.c.h.b16 %v635
        %v1823 = vunpack.c.l.b16 %v636
        %v1824 = vunpack.c.h.b16 %v636
        %v1825 = vunpack.c.l.b16 %v637
        %v1826 = vunpack.c.h.b16 %v637
        %v1827 = vunpack.c.l.b16 %v638
        %v1828 = vunpack.c.h.b16 %v638
        %v1829 = vunpack.c.l.b16 %v639
        %v1830 = vunpack.c.h.b16 %v639
        %v1831 = vunpack.c.l.b16 %v640
        %v1832 = vunpack.c.h.b16 %v640
        %v1833 = vunpack.c.l.b16 %v641
        %v1834 = vunpack.c.h.b16 %v641
        %v1835 = vunpack.c.l.b16 %v642
        %v1836 = vunpack.c.h.b16 %v642
        %v1837 = vunpack.c.l.b16 %v643
        %v1838 = vunpack.c.h.b16 %v643
        %v1839 = vunpack.c.l.b16 %v644
        %v1840 = vunpack.c.h.b16 %v644
        %v1841 = vunpack.c.l.b16 %v645
        %v1842 = vunpack.c.h.b16 %v645
        %v1843 = vunpack.c.l.b16 %v646
        %v1844 = vunpack.c.h.b16 %v646
        %v1845 = vunpack.c.l.b16 %v647
        %v1846 = vunpack.c.h.b16 %v647
        %v1847 = vunpack.c.l.b16 %v648
        %v1848 = vunpack.c.h.b16 %v648
        %v1849 = vunpack.c.l.b16 %v649
        %v1850 = vunpack.c.h.b16 %v649
        %v1851 = vunpack.c.l.b16 %v650
        %v1852 = vunpack.c.h.b16 %v650
        %v1853 = vunpack.c.l.b16 %v651
        %v1854 = vunpack.c.h.b16 %v651
        %v1855 = vunpack.c.l.b16 %v652
        %v1856 = vunpack.c.h.b16 %v652
        %v1857 = vunpack.c.l.b16 %v653
        %v1858 = vunpack.c.h.b16 %v653
        %v1859 = vunpack.c.l.b16 %v654
        %v1860 = vunpack.c.h.b16 %v654
        %v1861 = vunpack.c.l.b16 %v655
        %v1862 = vunpack.c.h.b16 %v655
        %v1863 = vunpack.c.l.b16 %v656
        %v1864 = vunpack.c.h.b16 %v656
        %v1865 = vunpack.c.l.b16 %v657
        %v1866 = vunpack.c.h.b16 %v657
        %v1867 = vunpack.c.l.b16 %v658
        %v1868 = vunpack.c.h.b16 %v658
        %v1869 = vunpack.c.l.b16 %v659
        %v1870 = vunpack.c.h.b16 %v659
        %v1871 = vunpack.c.l.b16 %v660
        %v1872 = vunpack.c.h.b16 %v660
        %v1873 = vunpack.c.l.b16 %v661
        %v1874 = vunpack.c.h.b16 %v661
        %v1875 = vunpack.c.l.b16 %v662
        %v1876 = vunpack.c.h.b16 %v662
        %v1877 = vunpack.c.l.b16 %v663
        %v1878 = vunpack.c.h.b16 %v663
        %v1879 = vunpack.c.l.b16 %v664
        %v1880 = vunpack.c.h.b16 %v664
        %v1881 = vunpack.c.l.b16 %v665
        %v1882 = vunpack.c.h.b16 %v665
        %v1883 = vunpack.c.l.b16 %v666
        %v1884 = vunpack.c.h.b16 %v666
        %v1885 = vunpack.c.l.b16 %v667
        %v1886 = vunpack.c.h.b16 %v667
        %v1887 = vunpack.c.l.b16 %v668
        %v1888 = vunpack.c.h.b16 %v668
        %v1889 = vunpack.c.l.b16 %v669
        %v1890 = vunpack.c.h.b16 %v669
        %v1891 = vunpack.c.l.b16 %v670
        %v1892 = vunpack.c.h.b16 %v670
        %v1893 = vunpack.c.l.b16 %v671
        %v1894 = vunpack.c.h.b16 %v671
        %v1895 = vunpack.c.l.b16 %v672
        %v1896 = vunpack.c.h.b16 %v672
        %v1897 = vunpack.c.l.b16 %v673
        %v1898 = vunpack.c.h.b16 %v673
        %v1899 = vunpack.c.l.b16 %v674
        %v1900 = vunpack.c.h.b16 %v674
        %v1901 = vunpack.c.l.b16 %v675
        %v1902 = vunpack.c.h.b16 %v675
        %v1903 = vunpack.c.l.b16 %v676
        %v1904 = vunpack.c.h.b16 %v676
        %v1905 = vunpack.c.l.b16 %v677
        %v1906 = vunpack.c.h.b16 %v677
        %v1907 = vunpack.c.l.b16 %v678
        %v1908 = vunpack.c.h.b16 %v678
        %v1909 = vunpack.c.l.b16 %v679
        %v1910 = vunpack.c.h.b16 %v679
        %v1911 = vunpack.c.l.b16 %v680
        %v1912 = vunpack.c.h.b16 %v680
        %v1913 = vunpack.c.l.b16 %v681
        %v1914 = vunpack.c.h.b16 %v681
        %v1915 = vunpack.c.l.b16 %v682
        %v1916 = vunpack.c.h.b16 %v682
        %v1917 = vunpack.c.l.b16 %v683
        %v1918 = vunpack.c.h.b16 %v683
        %v1919 = vunpack.c.l.b16 %v684
        %v1920 = vunpack.c.h.b16 %v684
        %v1921 = vunpack.c.l.b16 %v685
        %v1922 = vunpack.c.h.b16 %v685
        %v1923 = vunpack.c.l.b16 %v686
        %v1924 = vunpack.c.h.b16 %v686
        %v1925 = vunpack.c.l.b16 %v687
        %v1926 = vunpack.c.h.b16 %v687
        %v1927 = vunpack.c.l.b16 %v688
        %v1928 = vunpack.c.h.b16 %v688
        %v1929 = vunpack.c.l.b16 %v689
        %v1930 = vunpack.c.h.b16 %v689
        %v1931 = vunpack.c.l.b16 %v690
        %v1932 = vunpack.c.h.b16 %v690
        %v1933 = vunpack.c.l.b16 %v691
        %v1934 = vunpack.c.h.b16 %v691
        %v1935 = vunpack.c.l.b16 %v692
        %v1936 = vunpack.c.h.b16 %v692
        %v1937 = vunpack.c.l.b16 %v693
        %v1938 = vunpack.c.h.b16 %v693
        %v1939 = vunpack.c.l.b16 %v694
        %v1940 = vunpack.c.h.b16 %v694
        %v1941 = vunpack.c.l.b16 %v695
        %v1942 = vunpack.c.h.b16 %v695
        %v1943 = vunpack.c.l.b16 %v696
        %v1944 = vunpack.c.h.b16 %v696
        %v1945 = vunpack.c.l.b16 %v697
        %v1946 = vunpack.c.h.b16 %v697
        %v1947 = vunpack.c.l.b16 %v698
        %v1948 = vunpack.c.h.b16 %v698
        %v1949 = vunpack.c.l.b16 %v699
        %v1950 = vunpack.c.h.b16 %v699
        %v1951 = vunpack.c.l.b16 %v700
        %v1952 = vunpack.c.h.b16 %v700
        %v1953 = vunpack.c.l.b16 %v701
        %v1954 = vunpack.c.h.b16 %v701
        %v1955 = vunpack.c.l.b16 %v702
        %v1956 = vunpack.c.h.b16 %v702
        %v1957 = vunpack.c.l.b16 %v703
        %v1958 = vunpack.c.h.b16 %v703
        %v1959 = vunpack.c.l.b16 %v704
        %v1960 = vunpack.c.h.b16 %v704
        %v1961 = vunpack.c.l.b16 %v705
        %v1962 = vunpack.c.h.b16 %v705
        %v1963 = vunpack.c.l.b16 %v706
        %v1964 = vunpack.c.h.b16 %v706
        %v1965 = vunpack.c.l.b16 %v707
        %v1966 = vunpack.c.h.b16 %v707
        %v1967 = vunpack.c.l.b16 %v708
        %v1968 = vunpack.c.h.b16 %v708
        %v1969 = vunpack.c.l.b16 %v709
        %v1970 = vunpack.c.h.b16 %v709
        %v1971 = vunpack.c.l.b16 %v710
        %v1972 = vunpack.c.h.b16 %v710
        %v1973 = vunpack.c.l.b16 %v711
        %v1974 = vunpack.c.h.b16 %v711
        %v1975 = vunpack.c.l.b16 %v712
        %v1976 = vunpack.c.h.b16 %v712
        %v1977 = vunpack.c.l.b16 %v713
        %v1978 = vunpack.c.h.b16 %v713
        %v1979 = vunpack.c.l.b16 %v714
        %v1980 = vunpack.c.h.b16 %v714
        %v1981 = vunpack.c.l.b16 %v715
        %v1982 = vunpack.c.h.b16 %v715
        %v1983 = vunpack.c.l.b16 %v716
        %v1984 = vunpack.c.h.b16 %v716
        %v1985 = vunpack.c.l.b16 %v717
        %v1986 = vunpack.c.h.b16 %v717
        %v1987 = vunpack.c.l.b16 %v718
        %v1988 = vunpack.c.h.b16 %v718
        %v1989 = vunpack.c.l.b16 %v719
        %v1990 = vunpack.c.h.b16 %v719
        %v1991 = vunpack.c.l.b16 %v720
        %v1992 = vunpack.c.h.b16 %v720
        %v1993 = vunpack.c.l.b16 %v721
        %v1994 = vunpack.c.h.b16 %v721
        %v1995 = vunpack.c.l.b16 %v722
        %v1996 = vunpack.c.h.b16 %v722
        %v1997 = vunpack.c.l.b16 %v723
        %v1998 = vunpack.c.h.b16 %v723
        %v1999 = vunpack.c.l.b16 %v724
        %v2000 = vunpack.c.h.b16 %v724
        %v2001 = vunpack.c.l.b16 %v725
        %v2002 = vunpack.c.h.b16 %v725
        %v2003 = vunpack.c.l.b16 %v726
        %v2004 = vunpack.c.h.b16 %v726
        %v2005 = vunpack.c.l.b16 %v727
        %v2006 = vunpack.c.h.b16 %v727
        %v2007 = vunpack.c.l.b16 %v728
        %v2008 = vunpack.c.h.b16 %v728
        %v2009 = vunpack.c.l.b16 %v729
        %v2010 = vunpack.c.h.b16 %v729
        %v2011 = vunpack.c.l.b16 %v730
        %v2012 = vunpack.c.h.b16 %v730
        %v2013 = vunpack.c.l.b16 %v731
        %v2014 = vunpack.c.h.b16 %v731
        %v2015 = vunpack.c.l.b16 %v732
        %v2016 = vunpack.c.h.b16 %v732
        %v2017 = vunpack.c.l.b16 %v733
        %v2018 = vunpack.c.h.b16 %v733
        %v2019 = vunpack.c.l.b16 %v734
        %v2020 = vunpack.c.h.b16 %v734
        %v2021 = vunpack.c.l.b16 %v735
        %v2022 = vunpack.c.h.b16 %v735
        %v2023 = vunpack.c.l.b16 %v736
        %v2024 = vunpack.c.h.b16 %v736
        %v2025 = vunpack.c.l.b16 %v737
        %v2026 = vunpack.c.h.b16 %v737
        %v2027 = vunpack.c.l.b16 %v738
        %v2028 = vunpack.c.h.b16 %v738
        %v2029 = vunpack.c.l.b16 %v739
        %v2030 = vunpack.c.h.b16 %v739
        %v2031 = vunpack.c.l.b16 %v740
        %v2032 = vunpack.c.h.b16 %v740
        %v2033 = vunpack.c.l.b16 %v741
        %v2034 = vunpack.c.h.b16 %v741
        %v2035 = vunpack.c.l.b16 %v742
        %v2036 = vunpack.c.h.b16 %v742
        %v2037 = vunpack.c.l.b16 %v743
        %v2038 = vunpack.c.h.b16 %v743
        %v2039 = vunpack.c.l.b16 %v744
        %v2040 = vunpack.c.h.b16 %v744
        %v2041 = vunpack.c.l.b16 %v745
        %v2042 = vunpack.c.h.b16 %v745
        %v2043 = vunpack.c.l.b16 %v746
        %v2044 = vunpack.c.h.b16 %v746
        %v2045 = vunpack.c.l.b16 %v747
        %v2046 = vunpack.c.h.b16 %v747
        %v2047 = vunpack.c.l.b16 %v748
        %v2048 = vunpack.c.h.b16 %v748
        %v2049 = vunpack.c.l.b16 %v749
        %v2050 = vunpack.c.h.b16 %v749
        %v2051 = vunpack.c.l.b16 %v750
        %v2052 = vunpack.c.h.b16 %v750
        %v2053 = vunpack.c.l.b16 %v751
        %v2054 = vunpack.c.h.b16 %v751
        %v2055 = vunpack.c.l.b16 %v752
        %v2056 = vunpack.c.h.b16 %v752
        %v2057 = vunpack.c.l.b16 %v753
        %v2058 = vunpack.c.h.b16 %v753
        %v2059 = vunpack.c.l.b16 %v754
        %v2060 = vunpack.c.h.b16 %v754
        %v2061 = vunpack.c.l.b16 %v755
        %v2062 = vunpack.c.h.b16 %v755
        %v2063 = vunpack.c.l.b16 %v756
        %v2064 = vunpack.c.h.b16 %v756
        %v2065 = vunpack.c.l.b16 %v757
        %v2066 = vunpack.c.h.b16 %v757
        %v2067 = vunpack.c.l.b16 %v758
        %v2068 = vunpack.c.h.b16 %v758
        %v2069 = vunpack.c.l.b16 %v759
        %v2070 = vunpack.c.h.b16 %v759
        %v2071 = vunpack.c.l.b16 %v760
        %v2072 = vunpack.c.h.b16 %v760
        %v2073 = vunpack.c.l.b16 %v761
        %v2074 = vunpack.c.h.b16 %v761
        %v2075 = vunpack.c.l.b16 %v762
        %v2076 = vunpack.c.h.b16 %v762
        %v2077 = vunpack.c.l.b16 %v763
        %v2078 = vunpack.c.h.b16 %v763
        %v2079 = vunpack.c.l.b16 %v764
        %v2080 = vunpack.c.h.b16 %v764
        %v2081 = vunpack.c.l.b16 %v765
        %v2082 = vunpack.c.h.b16 %v765
        %v2083 = vunpack.c.l.b16 %v766
        %v2084 = vunpack.c.h.b16 %v766
        %v2085 = vunpack.c.l.b16 %v767
        %v2086 = vunpack.c.h.b16 %v767
        %v2087 = vunpack.c.l.b16 %v768
        %v2088 = vunpack.c.h.b16 %v768
        %v2089 = vunpack.c.l.b16 %v769
        %v2090 = vunpack.c.h.b16 %v769
        %v2091 = vunpack.c.l.b16 %v770
        %v2092 = vunpack.c.h.b16 %v770
        %v2093 = vunpack.c.l.b16 %v771
        %v2094 = vunpack.c.h.b16 %v771
        %v2095 = vunpack.c.l.b16 %v772
        %v2096 = vunpack.c.h.b16 %v772
        %v2097 = vunpack.c.l.b16 %v773
        %v2098 = vunpack.c.h.b16 %v773
        %v2099 = vunpack.c.l.b16 %v774
        %v2100 = vunpack.c.h.b16 %v774
        %v2101 = vunpack.c.l.b16 %v775
        %v2102 = vunpack.c.h.b16 %v775
        %v2103 = vunpack.c.l.b16 %v776
        %v2104 = vunpack.c.h.b16 %v776
        %v2105 = vunpack.c.l.b16 %v777
        %v2106 = vunpack.c.h.b16 %v777
        %v2107 = vunpack.c.l.b16 %v778
        %v2108 = vunpack.c.h.b16 %v778
        %v2109 = vunpack.c.l.b16 %v779
        %v2110 = vunpack.c.h.b16 %v779
        %v2111 = vunpack.c.l.b16 %v780
        %v2112 = vunpack.c.h.b16 %v780
        %v2113 = vunpack.c.l.b16 %v781
        %v2114 = vunpack.c.h.b16 %v781
        %v2115 = vunpack.c.l.b16 %v782
        %v2116 = vunpack.c.h.b16 %v782
        %v2117 = vunpack.c.l.b16 %v783
        %v2118 = vunpack.c.h.b16 %v783
        %v2119 = vunpack.c.l.b16 %v784
        %v2120 = vunpack.c.h.b16 %v784
        %v2121 = vunpack.c.l.b16 %v785
        %v2122 = vunpack.c.h.b16 %v785
        %v2123 = vunpack.c.l.b16 %v786
        %v2124 = vunpack.c.h.b16 %v786
        %v2125 = vunpack.c.l.b16 %v787
        %v2126 = vunpack.c.h.b16 %v787
        %v2127 = vunpack.c.l.b16 %v788
        %v2128 = vunpack.c.h.b16 %v788
        %v2129 = vunpack.c.l.b16 %v789
        %v2130 = vunpack.c.h.b16 %v789
        %v2131 = vunpack.c.l.b16 %v790
        %v2132 = vunpack.c.h.b16 %v790
        %v2133 = vunpack.c.l.b16 %v791
        %v2134 = vunpack.c.h.b16 %v791
        %v2135 = vunpack.c.l.b16 %v792
        %v2136 = vunpack.c.h.b16 %v792
        %v2137 = vunpack.c.l.b16 %v793
        %v2138 = vunpack.c.h.b16 %v793
        %v2139 = vunpack.c.l.b16 %v794
        %v2140 = vunpack.c.h.b16 %v794
        %v2141 = vunpack.c.l.b16 %v795
        %v2142 = vunpack.c.h.b16 %v795
        %v2143 = vunpack.c.l.b16 %v796
        %v2144 = vunpack.c.h.b16 %v796
        %v2145 = vunpack.c.l.b16 %v797
        %v2146 = vunpack.c.h.b16 %v797
        %v2147 = vunpack.c.l.b16 %v798
        %v2148 = vunpack.c.h.b16 %v798
        %v2149 = vunpack.c.l.b16 %v799
        %v2150 = vunpack.c.h.b16 %v799
        %v2151 = vunpack.c.l.b16 %v800
        %v2152 = vunpack.c.h.b16 %v800
        %v2153 = vunpack.c.l.b16 %v801
        %v2154 = vunpack.c.h.b16 %v801
        %v2155 = vunpack.c.l.b16 %v802
        %v2156 = vunpack.c.h.b16 %v802
        %v2157 = vunpack.c.l.b16 %v803
        %v2158 = vunpack.c.h.b16 %v803
        %v2159 = vunpack.c.l.b16 %v804
        %v2160 = vunpack.c.h.b16 %v804
        %v2161 = vunpack.c.l.b16 %v805
        %v2162 = vunpack.c.h.b16 %v805
        %v2163 = vunpack.c.l.b16 %v806
        %v2164 = vunpack.c.h.b16 %v806
        %v2165 = vunpack.c.l.b16 %v807
        %v2166 = vunpack.c.h.b16 %v807
        %v2167 = vunpack.c.l.b16 %v808
        %v2168 = vunpack.c.h.b16 %v808
        %v2169 = vunpack.c.l.b16 %v809
        %v2170 = vunpack.c.h.b16 %v809
        %v2171 = vunpack.c.l.b16 %v810
        %v2172 = vunpack.c.h.b16 %v810
        %v2173 = vunpack.c.l.b16 %v811
        %v2174 = vunpack.c.h.b16 %v811
        %v2175 = vunpack.c.l.b16 %v812
        %v2176 = vunpack.c.h.b16 %v812
        %v2177 = vunpack.c.l.b16 %v813
        %v2178 = vunpack.c.h.b16 %v813
        %v2179 = vunpack.c.l.b16 %v814
        %v2180 = vunpack.c.h.b16 %v814
        %v2181 = vunpack.c.l.b16 %v815
        %v2182 = vunpack.c.h.b16 %v815
        %v2183 = vunpack.c.l.b16 %v816
        %v2184 = vunpack.c.h.b16 %v816
        %v2185 = vunpack.c.l.b16 %v817
        %v2186 = vunpack.c.h.b16 %v817
        %v2187 = vunpack.c.l.b16 %v818
        %v2188 = vunpack.c.h.b16 %v818
        %v2189 = vunpack.c.l.b16 %v819
        %v2190 = vunpack.c.h.b16 %v819
        %v2191 = vunpack.c.l.b16 %v820
        %v2192 = vunpack.c.h.b16 %v820
        %v2193 = vunpack.c.l.b16 %v821
        %v2194 = vunpack.c.h.b16 %v821
        %v2195 = vunpack.c.l.b16 %v822
        %v2196 = vunpack.c.h.b16 %v822
        %v2197 = vunpack.c.l.b16 %v823
        %v2198 = vunpack.c.h.b16 %v823
        %v2199 = vunpack.c.l.b16 %v824
        %v2200 = vunpack.c.h.b16 %v824
        %v2201 = vunpack.c.l.b16 %v825
        %v2202 = vunpack.c.h.b16 %v825
        %v2203 = vunpack.c.l.b16 %v826
        %v2204 = vunpack.c.h.b16 %v826
        %v2205 = vunpack.c.l.b16 %v827
        %v2206 = vunpack.c.h.b16 %v827
        %v2207 = vunpack.c.l.b16 %v828
        %v2208 = vunpack.c.h.b16 %v828
        %v2209 = vunpack.c.l.b16 %v829
        %v2210 = vunpack.c.h.b16 %v829
        %v2211 = vunpack.c.l.b16 %v830
        %v2212 = vunpack.c.h.b16 %v830
        %v2213 = vunpack.c.l.b16 %v831
        %v2214 = vunpack.c.h.b16 %v831
        %v2215 = vunpack.c.l.b16 %v832
        %v2216 = vunpack.c.h.b16 %v832
        %v2217 = vunpack.c.l.b16 %v833
        %v2218 = vunpack.c.h.b16 %v833
        %v2219 = vunpack.c.l.b16 %v834
        %v2220 = vunpack.c.h.b16 %v834
        %v2221 = vunpack.c.l.b16 %v835
        %v2222 = vunpack.c.h.b16 %v835
        %v2223 = vunpack.c.l.b16 %v836
        %v2224 = vunpack.c.h.b16 %v836
        %v2225 = vunpack.c.l.b16 %v837
        %v2226 = vunpack.c.h.b16 %v837
        %v2227 = vunpack.c.l.b16 %v838
        %v2228 = vunpack.c.h.b16 %v838
        %v2229 = vunpack.c.l.b16 %v839
        %v2230 = vunpack.c.h.b16 %v839
        %v2231 = vunpack.c.l.b16 %v840
        %v2232 = vunpack.c.h.b16 %v840
        %v2233 = vunpack.c.l.b16 %v841
        %v2234 = vunpack.c.h.b16 %v841
        %v2235 = vunpack.c.l.b16 %v842
        %v2236 = vunpack.c.h.b16 %v842
        %v2237 = vunpack.c.l.b16 %v843
        %v2238 = vunpack.c.h.b16 %v843
        %v2239 = vunpack.c.l.b16 %v844
        %v2240 = vunpack.c.h.b16 %v844
        %v2241 = vunpack.c.l.b16 %v845
        %v2242 = vunpack.c.h.b16 %v845
        %v2243 = vunpack.c.l.b16 %v846
        %v2244 = vunpack.c.h.b16 %v846
        %v2245 = vunpack.c.l.b16 %v847
        %v2246 = vunpack.c.h.b16 %v847
        %v2247 = vunpack.c.l.b16 %v848
        %v2248 = vunpack.c.h.b16 %v848
        %v2249 = vunpack.c.l.b16 %v849
        %v2250 = vunpack.c.h.b16 %v849
        %v2251 = vunpack.c.l.b16 %v850
        %v2252 = vunpack.c.h.b16 %v850
        %v2253 = vunpack.c.l.b16 %v851
        %v2254 = vunpack.c.h.b16 %v851
        %v2255 = vunpack.c.l.b16 %v852
        %v2256 = vunpack.c.h.b16 %v852
        %v2257 = vunpack.c.l.b16 %v853
        %v2258 = vunpack.c.h.b16 %v853
        %v2259 = vunpack.c.l.b16 %v854
        %v2260 = vunpack.c.h.b16 %v854
        %v2261 = vunpack.c.l.b16 %v855
        %v2262 = vunpack.c.h.b16 %v855
        %v2263 = vunpack.c.l.b16 %v856
        %v2264 = vunpack.c.h.b16 %v856
        %v2265 = vunpack.c.l.b16 %v857
        %v2266 = vunpack.c.h.b16 %v857
        %v2267 = vunpack.c.l.b16 %v858
        %v2268 = vunpack.c.h.b16 %v858
        %v2269 = vunpack.c.l.b16 %v859
        %v2270 = vunpack.c.h.b16 %v859
        %v2271 = vunpack.c.l.b16 %v860
        %v2272 = vunpack.c.h.b16 %v860
        %v2273 = vunpack.c.l.b16 %v861
        %v2274 = vunpack.c.h.b16 %v861
        %v2275 = vunpack.c.l.b16 %v862
        %v2276 = vunpack.c.h.b16 %v862
        %v2277 = vunpack.c.l.b16 %v863
        %v2278 = vunpack.c.h.b16 %v863
        %v2279 = vunpack.c.l.b16 %v864
        %v2280 = vunpack.c.h.b16 %v864
        %v2281 = vunpack.c.l.b16 %v865
        %v2282 = vunpack.c.h.b16 %v865
        %v2283 = vunpack.c.l.b16 %v866
        %v2284 = vunpack.c.h.b16 %v866
        %v2285 = vunpack.c.l.b16 %v867
        %v2286 = vunpack.c.h.b16 %v867
        %v2287 = vunpack.c.l.b16 %v868
        %v2288 = vunpack.c.h.b16 %v868
        %v2289 = vunpack.c.l.b16 %v869
        %v2290 = vunpack.c.h.b16 %v869
        %v2291 = vunpack.c.l.b16 %v870
        %v2292 = vunpack.c.h.b16 %v870
        %v2293 = vunpack.c.l.b16 %v871
        %v2294 = vunpack.c.h.b16 %v871
        %v2295 = vunpack.c.l.b16 %v872
        %v2296 = vunpack.c.h.b16 %v872
        %v2297 = vunpack.c.l.b16 %v873
        %v2298 = vunpack.c.h.b16 %v873
        %v2299 = vunpack.c.l.b16 %v874
        %v2300 = vunpack.c.h.b16 %v874
        %v2301 = vunpack.c.l.b16 %v875
        %v2302 = vunpack.c.h.b16 %v875
        %v2303 = vunpack.c.l.b16 %v876
        %v2304 = vunpack.c.h.b16 %v876
        %v2305 = vunpack.c.l.b16 %v877
        %v2306 = vunpack.c.h.b16 %v877
        %v2307 = vunpack.c.l.b16 %v878
        %v2308 = vunpack.c.h.b16 %v878
        %v2309 = vunpack.c.l.b16 %v879
        %v2310 = vunpack.c.h.b16 %v879
        %v2311 = vunpack.c.l.b16 %v880
        %v2312 = vunpack.c.h.b16 %v880
        %v2313 = vunpack.c.l.b16 %v881
        %v2314 = vunpack.c.h.b16 %v881
        %v2315 = vunpack.c.l.b16 %v882
        %v2316 = vunpack.c.h.b16 %v882
        %v2317 = vunpack.c.l.b16 %v883
        %v2318 = vunpack.c.h.b16 %v883
        %v2319 = vunpack.c.l.b16 %v884
        %v2320 = vunpack.c.h.b16 %v884
        %v2321 = vunpack.c.l.b16 %v885
        %v2322 = vunpack.c.h.b16 %v885
        %v2323 = vunpack.c.l.b16 %v886
        %v2324 = vunpack.c.h.b16 %v886
        %v2325 = vunpack.c.l.b16 %v887
        %v2326 = vunpack.c.h.b16 %v887
        %v2327 = vunpack.c.l.b16 %v888
        %v2328 = vunpack.c.h.b16 %v888
        %v2329 = vunpack.c.l.b16 %v889
        %v2330 = vunpack.c.h.b16 %v889
        %v2331 = vunpack.c.l.b16 %v890
        %v2332 = vunpack.c.h.b16 %v890
        %v2333 = vunpack.c.l.b16 %v891
        %v2334 = vunpack.c.h.b16 %v891
        %v2335 = vunpack.c.l.b16 %v892
        %v2336 = vunpack.c.h.b16 %v892
        %v2337 = vunpack.c.l.b16 %v893
        %v2338 = vunpack.c.h.b16 %v893
        %v2339 = vunpack.c.l.b16 %v894
        %v2340 = vunpack.c.h.b16 %v894
        %v2341 = vunpack.c.l.b16 %v895
        %v2342 = vunpack.c.h.b16 %v895
        %v2343 = vunpack.c.l.b16 %v896
        %v2344 = vunpack.c.h.b16 %v896
        %v2345 = vunpack.c.l.b16 %v897
        %v2346 = vunpack.c.h.b16 %v897
        %v2347 = vunpack.c.l.b16 %v898
        %v2348 = vunpack.c.h.b16 %v898
        %v2349 = vunpack.c.l.b16 %v899
        %v2350 = vunpack.c.h.b16 %v899
        %v2351 = vunpack.c.l.b16 %v900
        %v2352 = vunpack.c.h.b16 %v900
        %v2353 = vunpack.c.l.b16 %v901
        %v2354 = vunpack.c.h.b16 %v901
        %v2355 = vunpack.c.l.b16 %v902
        %v2356 = vunpack.c.h.b16 %v902
        %v2357 = vunpack.c.l.b16 %v903
        %v2358 = vunpack.c.h.b16 %v903
        %v2359 = vunpack.c.l.b16 %v904
        %v2360 = vunpack.c.h.b16 %v904
        %v2361 = vunpack.c.l.b16 %v905
        %v2362 = vunpack.c.h.b16 %v905
        %v2363 = vunpack.c.l.b16 %v906
        %v2364 = vunpack.c.h.b16 %v906
        %v2365 = vunpack.c.l.b16 %v907
        %v2366 = vunpack.c.h.b16 %v907
        %v2367 = vunpack.c.l.b16 %v908
        %v2368 = vunpack.c.h.b16 %v908
        %v2369 = vunpack.c.l.b16 %v909
        %v2370 = vunpack.c.h.b16 %v909
        %v2371 = vunpack.c.l.b16 %v910
        %v2372 = vunpack.c.h.b16 %v910
        %v2373 = vunpack.c.l.b16 %v911
        %v2374 = vunpack.c.h.b16 %v911
        %v2375 = vunpack.c.l.b16 %v912
        %v2376 = vunpack.c.h.b16 %v912
        %v2377 = vunpack.c.l.b16 %v913
        %v2378 = vunpack.c.h.b16 %v913
        %v2379 = vunpack.c.l.b16 %v914
        %v2380 = vunpack.c.h.b16 %v914
        %v2381 = vunpack.c.l.b16 %v915
        %v2382 = vunpack.c.h.b16 %v915
        %v2383 = vunpack.c.l.b16 %v916
        %v2384 = vunpack.c.h.b16 %v916
        %v2385 = vunpack.c.l.b16 %v917
        %v2386 = vunpack.c.h.b16 %v917
        %v2387 = vunpack.c.l.b16 %v918
        %v2388 = vunpack.c.h.b16 %v918
        %v2389 = vunpack.c.l.b16 %v919
        %v2390 = vunpack.c.h.b16 %v919
        %v2391 = vunpack.c.l.b16 %v920
        %v2392 = vunpack.c.h.b16 %v920
        %v2393 = vunpack.c.l.b16 %v921
        %v2394 = vunpack.c.h.b16 %v921
        %v2395 = vunpack.c.l.b16 %v922
        %v2396 = vunpack.c.h.b16 %v922
        %v2397 = vunpack.c.l.b16 %v923
        %v2398 = vunpack.c.h.b16 %v923
        %v2399 = vunpack.c.l.b16 %v924
        %v2400 = vunpack.c.h.b16 %v924
        %v2401 = vunpack.c.l.b16 %v925
        %v2402 = vunpack.c.h.b16 %v925
        %v2403 = vunpack.c.l.b16 %v926
        %v2404 = vunpack.c.h.b16 %v926
        %v2405 = vunpack.c.l.b16 %v927
        %v2406 = vunpack.c.h.b16 %v927
        %v2407 = vunpack.c.l.b16 %v928
        %v2408 = vunpack.c.h.b16 %v928
        %v2409 = vunpack.c.l.b16 %v929
        %v2410 = vunpack.c.h.b16 %v929
        %v2411 = vunpack.c.l.b16 %v930
        %v2412 = vunpack.c.h.b16 %v930
        %v2413 = vunpack.c.l.b16 %v931
        %v2414 = vunpack.c.h.b16 %v931
        %v2415 = vunpack.c.l.b16 %v932
        %v2416 = vunpack.c.h.b16 %v932
        %v2417 = vunpack.c.l.b16 %v933
        %v2418 = vunpack.c.h.b16 %v933
        %v2419 = vunpack.c.l.b16 %v934
        %v2420 = vunpack.c.h.b16 %v934
        %v2421 = vunpack.c.l.b16 %v935
        %v2422 = vunpack.c.h.b16 %v935
        %v2423 = vunpack.c.l.b16 %v936
        %v2424 = vunpack.c.h.b16 %v936
        %v2425 = vunpack.c.l.b16 %v937
        %v2426 = vunpack.c.h.b16 %v937
        %v2427 = vunpack.c.l.b16 %v938
        %v2428 = vunpack.c.h.b16 %v938
        %v2429 = vunpack.c.l.b16 %v939
        %v2430 = vunpack.c.h.b16 %v939
        %v2431 = vunpack.c.l.b16 %v940
        %v2432 = vunpack.c.h.b16 %v940
        %v2433 = vunpack.c.l.b16 %v941
        %v2434 = vunpack.c.h.b16 %v941
        %v2435 = vunpack.c.l.b16 %v942
        %v2436 = vunpack.c.h.b16 %v942
        %v2437 = vunpack.c.l.b16 %v943
        %v2438 = vunpack.c.h.b16 %v943
        %v2439 = vunpack.c.l.b16 %v944
        %v2440 = vunpack.c.h.b16 %v944
        %v2441 = vunpack.c.l.b16 %v945
        %v2442 = vunpack.c.h.b16 %v945
        %v2443 = vunpack.c.l.b16 %v946
        %v2444 = vunpack.c.h.b16 %v946
        %v2445 = vunpack.c.l.b16 %v947
        %v2446 = vunpack.c.h.b16 %v947
        %v2447 = vunpack.c.l.b16 %v948
        %v2448 = vunpack.c.h.b16 %v948
        %v2449 = vunpack.c.l.b16 %v949
        %v2450 = vunpack.c.h.b16 %v949
        %v2451 = vunpack.c.l.b16 %v950
        %v2452 = vunpack.c.h.b16 %v950
        %v2453 = vunpack.c.l.b16 %v951
        %v2454 = vunpack.c.h.b16 %v951
        %v2455 = vunpack.c.l.b16 %v952
        %v2456 = vunpack.c.h.b16 %v952
        %v2457 = vunpack.c.l.b16 %v953
        %v2458 = vunpack.c.h.b16 %v953
        %v2459 = vunpack.c.l.b16 %v954
        %v2460 = vunpack.c.h.b16 %v954
        %v2461 = vunpack.c.l.b16 %v955
        %v2462 = vunpack.c.h.b16 %v955
        %v2463 = vunpack.c.l.b16 %v956
        %v2464 = vunpack.c.h.b16 %v956
        %v2465 = vunpack.c.l.b16 %v957
        %v2466 = vunpack.c.h.b16 %v957
        %v2467 = vunpack.c.l.b16 %v958
        %v2468 = vunpack.c.h.b16 %v958
        %v2469 = vunpack.c.l.b16 %v959
        %v2470 = vunpack.c.h.b16 %v959
        %v2471 = vunpack.c.l.b16 %v960
        %v2472 = vunpack.c.h.b16 %v960
        %v2473 = vunpack.c.l.b16 %v961
        %v2474 = vunpack.c.h.b16 %v961
        %v2475 = vunpack.c.l.b16 %v962
        %v2476 = vunpack.c.h.b16 %v962
        %v2477 = vunpack.c.l.b16 %v963
        %v2478 = vunpack.c.h.b16 %v963
        %v2479 = vunpack.c.l.b16 %v964
        %v2480 = vunpack.c.h.b16 %v964
        %v2481 = vunpack.c.l.b16 %v965
        %v2482 = vunpack.c.h.b16 %v965
        %v2483 = vunpack.c.l.b16 %v966
        %v2484 = vunpack.c.h.b16 %v966
        %v2485 = vunpack.c.l.b16 %v967
        %v2486 = vunpack.c.h.b16 %v967
        %v2487 = vunpack.c.l.b16 %v968
        %v2488 = vunpack.c.h.b16 %v968
        %v2489 = vunpack.c.l.b16 %v969
        %v2490 = vunpack.c.h.b16 %v969
        %v2491 = vunpack.c.l.b16 %v970
        %v2492 = vunpack.c.h.b16 %v970
        %v2493 = vunpack.c.l.b16 %v971
        %v2494 = vunpack.c.h.b16 %v971
        %v2495 = vunpack.c.l.b16 %v972
        %v2496 = vunpack.c.h.b16 %v972
        %v2497 = vunpack.c.l.b16 %v973
        %v2498 = vunpack.c.h.b16 %v973
        %v2499 = vunpack.c.l.b16 %v974
        %v2500 = vunpack.c.h.b16 %v974
        %v2501 = vunpack.c.l.b16 %v975
        %v2502 = vunpack.c.h.b16 %v975
        %v2503 = vunpack.c.l.b16 %v976
        %v2504 = vunpack.c.h.b16 %v976
        %v2505 = vunpack.c.l.b16 %v977
        %v2506 = vunpack.c.h.b16 %v977
        %v2507 = vunpack.c.l.b16 %v978
        %v2508 = vunpack.c.h.b16 %v978
        %v2509 = vunpack.c.l.b16 %v979
        %v2510 = vunpack.c.h.b16 %v979
        %v2511 = vunpack.c.l.b16 %v980
        %v2512 = vunpack.c.h.b16 %v980
        %v2513 = vunpack.c.l.b16 %v981
        %v2514 = vunpack.c.h.b16 %v981
        %v2515 = vunpack.c.l.b16 %v982
        %v2516 = vunpack.c.h.b16 %v982
        %v2517 = vunpack.c.l.b16 %v983
        %v2518 = vunpack.c.h.b16 %v983
        %v2519 = vunpack.c.l.b16 %v984
        %v2520 = vunpack.c.h.b16 %v984
        %v2521 = vpack.c.b16 %v1499, %v1497
        %v2522 = vpack.c.b16 %v1500, %v1498
        %v2523 = vpack.c.b16 %v1503, %v1501
        %v2524 = vpack.c.b16 %v1504, %v1502
        %v2525 = vpack.c.b16 %v1507, %v1505
        %v2526 = vpack.c.b16 %v1508, %v1506
        %v2527 = vpack.c.b16 %v1511, %v1509
        %v2528 = vpack.c.b16 %v1512, %v1510
        %v2529 = vpack.c.b16 %v1515, %v1513
        %v2530 = vpack.c.b16 %v1516, %v1514
        %v2531 = vpack.c.b16 %v1519, %v1517
        %v2532 = vpack.c.b16 %v1520, %v1518
        %v2533 = vpack.c.b16 %v1523, %v1521
        %v2534 = vpack.c.b16 %v1524, %v1522
        %v2535 = vpack.c.b16 %v1527, %v1525
        %v2536 = vpack.c.b16 %v1528, %v1526
        %v2537 = vpack.c.b16 %v1531, %v1529
        %v2538 = vpack.c.b16 %v1532, %v1530
        %v2539 = vpack.c.b16 %v1535, %v1533
        %v2540 = vpack.c.b16 %v1536, %v1534
        %v2541 = vpack.c.b16 %v1539, %v1537
        %v2542 = vpack.c.b16 %v1540, %v1538
        %v2543 = vpack.c.b16 %v1543, %v1541
        %v2544 = vpack.c.b16 %v1544, %v1542
        %v2545 = vpack.c.b16 %v1547, %v1545
        %v2546 = vpack.c.b16 %v1548, %v1546
        %v2547 = vpack.c.b16 %v1551, %v1549
        %v2548 = vpack.c.b16 %v1552, %v1550
        %v2549 = vpack.c.b16 %v1555, %v1553
        %v2550 = vpack.c.b16 %v1556, %v1554
        %v2551 = vpack.c.b16 %v1559, %v1557
        %v2552 = vpack.c.b16 %v1560, %v1558
        %v2553 = vpack.c.b16 %v1563, %v1561
        %v2554 = vpack.c.b16 %v1564, %v1562
        %v2555 = vpack.c.b16 %v1567, %v1565
        %v2556 = vpack.c.b16 %v1568, %v1566
        %v2557 = vpack.c.b16 %v1571, %v1569
        %v2558 = vpack.c.b16 %v1572, %v1570
        %v2559 = vpack.c.b16 %v1575, %v1573
        %v2560 = vpack.c.b16 %v1576, %v1574
        %v2561 = vpack.c.b16 %v1579, %v1577
        %v2562 = vpack.c.b16 %v1580, %v1578
        %v2563 = vpack.c.b16 %v1583, %v1581
        %v2564 = vpack.c.b16 %v1584, %v1582
        %v2565 = vpack.c.b16 %v1587, %v1585
        %v2566 = vpack.c.b16 %v1588, %v1586
        %v2567 = vpack.c.b16 %v1591, %v1589
        %v2568 = vpack.c.b16 %v1592, %v1590
        %v2569 = vpack.c.b16 %v1595, %v1593
        %v2570 = vpack.c.b16 %v1596, %v1594
        %v2571 = vpack.c.b16 %v1599, %v1597
        %v2572 = vpack.c.b16 %v1600, %v1598
        %v2573 = vpack.c.b16 %v1603, %v1601
        %v2574 = vpack.c.b16 %v1604, %v1602
        %v2575 = vpack.c.b16 %v1607, %v1605
        %v2576 = vpack.c.b16 %v1608, %v1606
        %v2577 = vpack.c.b16 %v1611, %v1609
        %v2578 = vpack.c.b16 %v1612, %v1610
        %v2579 = vpack.c.b16 %v1615, %v1613
        %v2580 = vpack.c.b16 %v1616, %v1614
        %v2581 = vpack.c.b16 %v1619, %v1617
        %v2582 = vpack.c.b16 %v1620, %v1618
        %v2583 = vpack.c.b16 %v1623, %v1621
        %v2584 = vpack.c.b16 %v1624, %v1622
        %v2585 = vpack.c.b16 %v1627, %v1625
        %v2586 = vpack.c.b16 %v1628, %v1626
        %v2587 = vpack.c.b16 %v1631, %v1629
        %v2588 = vpack.c.b16 %v1632, %v1630
        %v2589 = vpack.c.b16 %v1635, %v1633
        %v2590 = vpack.c.b16 %v1636, %v1634
        %v2591 = vpack.c.b16 %v1639, %v1637
        %v2592 = vpack.c.b16 %v1640, %v1638
        %v2593 = vpack.c.b16 %v1643, %v1641
        %v2594 = vpack.c.b16 %v1644, %v1642
        %v2595 = vpack.c.b16 %v1647, %v1645
        %v2596 = vpack.c.b16 %v1648, %v1646
        %v2597 = vpack.c.b16 %v1651, %v1649
        %v2598 = vpack.c.b16 %v1652, %v1650
        %v2599 = vpack.c.b16 %v1655, %v1653
        %v2600 = vpack.c.b16 %v1656, %v1654
        %v2601 = vpack.c.b16 %v1659, %v1657
        %v2602 = vpack.c.b16 %v1660, %v1658
        %v2603 = vpack.c.b16 %v1663, %v1661
        %v2604 = vpack.c.b16 %v1664, %v1662
        %v2605 = vpack.c.b16 %v1667, %v1665
        %v2606 = vpack.c.b16 %v1668, %v1666
        %v2607 = vpack.c.b16 %v1671, %v1669
        %v2608 = vpack.c.b16 %v1672, %v1670
        %v2609 = vpack.c.b16 %v1675, %v1673
        %v2610 = vpack.c.b16 %v1676, %v1674
        %v2611 = vpack.c.b16 %v1679, %v1677
        %v2612 = vpack.c.b16 %v1680, %v1678
        %v2613 = vpack.c.b16 %v1683, %v1681
        %v2614 = vpack.c.b16 %v1684, %v1682
        %v2615 = vpack.c.b16 %v1687, %v1685
        %v2616 = vpack.c.b16 %v1688, %v1686
        %v2617 = vpack.c.b16 %v1691, %v1689
        %v2618 = vpack.c.b16 %v1692, %v1690
        %v2619 = vpack.c.b16 %v1695, %v1693
        %v2620 = vpack.c.b16 %v1696, %v1694
        %v2621 = vpack.c.b16 %v1699, %v1697
        %v2622 = vpack.c.b16 %v1700, %v1698
        %v2623 = vpack.c.b16 %v1703, %v1701
        %v2624 = vpack.c.b16 %v1704, %v1702
        %v2625 = vpack.c.b16 %v1707, %v1705
        %v2626 = vpack.c.b16 %v1708, %v1706
        %v2627 = vpack.c.b16 %v1711, %v1709
        %v2628 = vpack.c.b16 %v1712, %v1710
        %v2629 = vpack.c.b16 %v1715, %v1713
        %v2630 = vpack.c.b16 %v1716, %v1714
        %v2631 = vpack.c.b16 %v1719, %v1717
        %v2632 = vpack.c.b16 %v1720, %v1718
        %v2633 = vpack.c.b16 %v1723, %v1721
        %v2634 = vpack.c.b16 %v1724, %v1722
        %v2635 = vpack.c.b16 %v1727, %v1725
        %v2636 = vpack.c.b16 %v1728, %v1726
        %v2637 = vpack.c.b16 %v1731, %v1729
        %v2638 = vpack.c.b16 %v1732, %v1730
        %v2639 = vpack.c.b16 %v1735, %v1733
        %v2640 = vpack.c.b16 %v1736, %v1734
        %v2641 = vpack.c.b16 %v1739, %v1737
        %v2642 = vpack.c.b16 %v1740, %v1738
        %v2643 = vpack.c.b16 %v1743, %v1741
        %v2644 = vpack.c.b16 %v1744, %v1742
        %v2645 = vpack.c.b16 %v1747, %v1745
        %v2646 = vpack.c.b16 %v1748, %v1746
        %v2647 = vpack.c.b16 %v1751, %v1749
        %v2648 = vpack.c.b16 %v1752, %v1750
        %v2649 = vpack.c.b16 %v1755, %v1753
        %v2650 = vpack.c.b16 %v1756, %v1754
        %v2651 = vpack.c.b16 %v1759, %v1757
        %v2652 = vpack.c.b16 %v1760, %v1758
        %v2653 = vpack.c.b16 %v1763, %v1761
        %v2654 = vpack.c.b16 %v1764, %v1762
        %v2655 = vpack.c.b16 %v1767, %v1765
        %v2656 = vpack.c.b16 %v1768, %v1766
        %v2657 = vpack.c.b16 %v1771, %v1769
        %v2658 = vpack.c.b16 %v1772, %v1770
        %v2659 = vpack.c.b16 %v1775, %v1773
        %v2660 = vpack.c.b16 %v1776, %v1774
        %v2661 = vpack.c.b16 %v1779, %v1777
        %v2662 = vpack.c.b16 %v1780, %v1778
        %v2663 = vpack.c.b16 %v1783, %v1781
        %v2664 = vpack.c.b16 %v1784, %v1782
        %v2665 = vpack.c.b16 %v1787, %v1785
        %v2666 = vpack.c.b16 %v1788, %v1786
        %v2667 = vpack.c.b16 %v1791, %v1789
        %v2668 = vpack.c.b16 %v1792, %v1790
        %v2669 = vpack.c.b16 %v1795, %v1793
        %v2670 = vpack.c.b16 %v1796, %v1794
        %v2671 = vpack.c.b16 %v1799, %v1797
        %v2672 = vpack.c.b16 %v1800, %v1798
        %v2673 = vpack.c.b16 %v1803, %v1801
        %v2674 = vpack.c.b16 %v1804, %v1802
        %v2675 = vpack.c.b16 %v1807, %v1805
        %v2676 = vpack.c.b16 %v1808, %v1806
        %v2677 = vpack.c.b16 %v1811, %v1809
        %v2678 = vpack.c.b16 %v1812, %v1810
        %v2679 = vpack.c.b16 %v1815, %v1813
        %v2680 = vpack.c.b16 %v1816, %v1814
        %v2681 = vpack.c.b16 %v1819, %v1817
        %v2682 = vpack.c.b16 %v1820, %v1818
        %v2683 = vpack.c.b16 %v1823, %v1821
        %v2684 = vpack.c.b16 %v1824, %v1822
        %v2685 = vpack.c.b16 %v1827, %v1825
        %v2686 = vpack.c.b16 %v1828, %v1826
        %v2687 = vpack.c.b16 %v1831, %v1829
        %v2688 = vpack.c.b16 %v1832, %v1830
        %v2689 = vpack.c.b16 %v1835, %v1833
        %v2690 = vpack.c.b16 %v1836, %v1834
        %v2691 = vpack.c.b16 %v1839, %v1837
        %v2692 = vpack.c.b16 %v1840, %v1838
        %v2693 = vpack.c.b16 %v1843, %v1841
        %v2694 = vpack.c.b16 %v1844, %v1842
        %v2695 = vpack.c.b16 %v1847, %v1845
        %v2696 = vpack.c.b16 %v1848, %v1846
        %v2697 = vpack.c.b16 %v1851, %v1849
        %v2698 = vpack.c.b16 %v1852, %v1850
        %v2699 = vpack.c.b16 %v1855, %v1853
        %v2700 = vpack.c.b16 %v1856, %v1854
        %v2701 = vpack.c.b16 %v1859, %v1857
        %v2702 = vpack.c.b16 %v1860, %v1858
        %v2703 = vpack.c.b16 %v1863, %v1861
        %v2704 = vpack.c.b16 %v1864, %v1862
        %v2705 = vpack.c.b16 %v1867, %v1865
        %v2706 = vpack.c.b16 %v1868, %v1866
        %v2707 = vpack.c.b16 %v1871, %v1869
        %v2708 = vpack.c.b16 %v1872, %v1870
        %v2709 = vpack.c.b16 %v1875, %v1873
        %v2710 = vpack.c.b16 %v1876, %v1874
        %v2711 = vpack.c.b16 %v1879, %v1877
        %v2712 = vpack.c.b16 %v1880, %v1878
        %v2713 = vpack.c.b16 %v1883, %v1881
        %v2714 = vpack.c.b16 %v1884, %v1882
        %v2715 = vpack.c.b16 %v1887, %v1885
        %v2716 = vpack.c.b16 %v1888, %v1886
        %v2717 = vpack.c.b16 %v1891, %v1889
        %v2718 = vpack.c.b16 %v1892, %v1890
        %v2719 = vpack.c.b16 %v1895, %v1893
        %v2720 = vpack.c.b16 %v1896, %v1894
        %v2721 = vpack.c.b16 %v1899, %v1897
        %v2722 = vpack.c.b16 %v1900, %v1898
        %v2723 = vpack.c.b16 %v1903, %v1901
        %v2724 = vpack.c.b16 %v1904, %v1902
        %v2725 = vpack.c.b16 %v1907, %v1905
        %v2726 = vpack.c.b16 %v1908, %v1906
        %v2727 = vpack.c.b16 %v1911, %v1909
        %v2728 = vpack.c.b16 %v1912, %v1910
        %v2729 = vpack.c.b16 %v1915, %v1913
        %v2730 = vpack.c.b16 %v1916, %v1914
        %v2731 = vpack.c.b16 %v1919, %v1917
        %v2732 = vpack.c.b16 %v1920, %v1918
        %v2733 = vpack.c.b16 %v1923, %v1921
        %v2734 = vpack.c.b16 %v1924, %v1922
        %v2735 = vpack.c.b16 %v1927, %v1925
        %v2736 = vpack.c.b16 %v1928, %v1926
        %v2737 = vpack.c.b16 %v1931, %v1929
        %v2738 = vpack.c.b16 %v1932, %v1930
        %v2739 = vpack.c.b16 %v1935, %v1933
        %v2740 = vpack.c.b16 %v1936, %v1934
        %v2741 = vpack.c.b16 %v1939, %v1937
        %v2742 = vpack.c.b16 %v1940, %v1938
        %v2743 = vpack.c.b16 %v1943, %v1941
        %v2744 = vpack.c.b16 %v1944, %v1942
        %v2745 = vpack.c.b16 %v1947, %v1945
        %v2746 = vpack.c.b16 %v1948, %v1946
        %v2747 = vpack.c.b16 %v1951, %v1949
        %v2748 = vpack.c.b16 %v1952, %v1950
        %v2749 = vpack.c.b16 %v1955, %v1953
        %v2750 = vpack.c.b16 %v1956, %v1954
        %v2751 = vpack.c.b16 %v1959, %v1957
        %v2752 = vpack.c.b16 %v1960, %v1958
        %v2753 = vpack.c.b16 %v1963, %v1961
        %v2754 = vpack.c.b16 %v1964, %v1962
        %v2755 = vpack.c.b16 %v1967, %v1965
        %v2756 = vpack.c.b16 %v1968, %v1966
        %v2757 = vpack.c.b16 %v1971, %v1969
        %v2758 = vpack.c.b16 %v1972, %v1970
        %v2759 = vpack.c.b16 %v1975, %v1973
        %v2760 = vpack.c.b16 %v1976, %v1974
        %v2761 = vpack.c.b16 %v1979, %v1977
        %v2762 = vpack.c.b16 %v1980, %v1978
        %v2763 = vpack.c.b16 %v1983, %v1981
        %v2764 = vpack.c.b16 %v1984, %v1982
        %v2765 = vpack.c.b16 %v1987, %v1985
        %v2766 = vpack.c.b16 %v1988, %v1986
        %v2767 = vpack.c.b16 %v1991, %v1989
        %v2768 = vpack.c.b16 %v1992, %v1990
        %v2769 = vpack.c.b16 %v1995, %v1993
        %v2770 = vpack.c.b16 %v1996, %v1994
        %v2771 = vpack.c.b16 %v1999, %v1997
        %v2772 = vpack.c.b16 %v2000, %v1998
        %v2773 = vpack.c.b16 %v2003, %v2001
        %v2774 = vpack.c.b16 %v2004, %v2002
        %v2775 = vpack.c.b16 %v2007, %v2005
        %v2776 = vpack.c.b16 %v2008, %v2006
        %v2777 = vpack.c.b16 %v2011, %v2009
        %v2778 = vpack.c.b16 %v2012, %v2010
        %v2779 = vpack.c.b16 %v2015, %v2013
        %v2780 = vpack.c.b16 %v2016, %v2014
        %v2781 = vpack.c.b16 %v2019, %v2017
        %v2782 = vpack.c.b16 %v2020, %v2018
        %v2783 = vpack.c.b16 %v2023, %v2021
        %v2784 = vpack.c.b16 %v2024, %v2022
        %v2785 = vpack.c.b16 %v2027, %v2025
        %v2786 = vpack.c.b16 %v2028, %v2026
        %v2787 = vpack.c.b16 %v2031, %v2029
        %v2788 = vpack.c.b16 %v2032, %v2030
        %v2789 = vpack.c.b16 %v2035, %v2033
        %v2790 = vpack.c.b16 %v2036, %v2034
        %v2791 = vpack.c.b16 %v2039, %v2037
        %v2792 = vpack.c.b16 %v2040, %v2038
        %v2793 = vpack.c.b16 %v2043, %v2041
        %v2794 = vpack.c.b16 %v2044, %v2042
        %v2795 = vpack.c.b16 %v2047, %v2045
        %v2796 = vpack.c.b16 %v2048, %v2046
        %v2797 = vpack.c.b16 %v2051, %v2049
        %v2798 = vpack.c.b16 %v2052, %v2050
        %v2799 = vpack.c.b16 %v2055, %v2053
        %v2800 = vpack.c.b16 %v2056, %v2054
        %v2801 = vpack.c.b16 %v2059, %v2057
        %v2802 = vpack.c.b16 %v2060, %v2058
        %v2803 = vpack.c.b16 %v2063, %v2061
        %v2804 = vpack.c.b16 %v2064, %v2062
        %v2805 = vpack.c.b16 %v2067, %v2065
        %v2806 = vpack.c.b16 %v2068, %v2066
        %v2807 = vpack.c.b16 %v2071, %v2069
        %v2808 = vpack.c.b16 %v2072, %v2070
        %v2809 = vpack.c.b16 %v2075, %v2073
        %v2810 = vpack.c.b16 %v2076, %v2074
        %v2811 = vpack.c.b16 %v2079, %v2077
        %v2812 = vpack.c.b16 %v2080, %v2078
        %v2813 = vpack.c.b16 %v2083, %v2081
        %v2814 = vpack.c.b16 %v2084, %v2082
        %v2815 = vpack.c.b16 %v2087, %v2085
        %v2816 = vpack.c.b16 %v2088, %v2086
        %v2817 = vpack.c.b16 %v2091, %v2089
        %v2818 = vpack.c.b16 %v2092, %v2090
        %v2819 = vpack.c.b16 %v2095, %v2093
        %v2820 = vpack.c.b16 %v2096, %v2094
        %v2821 = vpack.c.b16 %v2099, %v2097
        %v2822 = vpack.c.b16 %v2100, %v2098
        %v2823 = vpack.c.b16 %v2103, %v2101
        %v2824 = vpack.c.b16 %v2104, %v2102
        %v2825 = vpack.c.b16 %v2107, %v2105
        %v2826 = vpack.c.b16 %v2108, %v2106
        %v2827 = vpack.c.b16 %v2111, %v2109
        %v2828 = vpack.c.b16 %v2112, %v2110
        %v2829 = vpack.c.b16 %v2115, %v2113
        %v2830 = vpack.c.b16 %v2116, %v2114
        %v2831 = vpack.c.b16 %v2119, %v2117
        %v2832 = vpack.c.b16 %v2120, %v2118
        %v2833 = vpack.c.b16 %v2123, %v2121
        %v2834 = vpack.c.b16 %v2124, %v2122
        %v2835 = vpack.c.b16 %v2127, %v2125
        %v2836 = vpack.c.b16 %v2128, %v2126
        %v2837 = vpack.c.b16 %v2131, %v2129
        %v2838 = vpack.c.b16 %v2132, %v2130
        %v2839 = vpack.c.b16 %v2135, %v2133
        %v2840 = vpack.c.b16 %v2136, %v2134
        %v2841 = vpack.c.b16 %v2139, %v2137
        %v2842 = vpack.c.b16 %v2140, %v2138
        %v2843 = vpack.c.b16 %v2143, %v2141
        %v2844 = vpack.c.b16 %v2144, %v2142
        %v2845 = vpack.c.b16 %v2147, %v2145
        %v2846 = vpack.c.b16 %v2148, %v2146
        %v2847 = vpack.c.b16 %v2151, %v2149
        %v2848 = vpack.c.b16 %v2152, %v2150
        %v2849 = vpack.c.b16 %v2155, %v2153
        %v2850 = vpack.c.b16 %v2156, %v2154
        %v2851 = vpack.c.b16 %v2159, %v2157
        %v2852 = vpack.c.b16 %v2160, %v2158
        %v2853 = vpack.c.b16 %v2163, %v2161
        %v2854 = vpack.c.b16 %v2164, %v2162
        %v2855 = vpack.c.b16 %v2167, %v2165
        %v2856 = vpack.c.b16 %v2168, %v2166
        %v2857 = vpack.c.b16 %v2171, %v2169
        %v2858 = vpack.c.b16 %v2172, %v2170
        %v2859 = vpack.c.b16 %v2175, %v2173
        %v2860 = vpack.c.b16 %v2176, %v2174
        %v2861 = vpack.c.b16 %v2179, %v2177
        %v2862 = vpack.c.b16 %v2180, %v2178
        %v2863 = vpack.c.b16 %v2183, %v2181
        %v2864 = vpack.c.b16 %v2184, %v2182
        %v2865 = vpack.c.b16 %v2187, %v2185
        %v2866 = vpack.c.b16 %v2188, %v2186
        %v2867 = vpack.c.b16 %v2191, %v2189
        %v2868 = vpack.c.b16 %v2192, %v2190
        %v2869 = vpack.c.b16 %v2195, %v2193
        %v2870 = vpack.c.b16 %v2196, %v2194
        %v2871 = vpack.c.b16 %v2199, %v2197
        %v2872 = vpack.c.b16 %v2200, %v2198
        %v2873 = vpack.c.b16 %v2203, %v2201
        %v2874 = vpack.c.b16 %v2204, %v2202
        %v2875 = vpack.c.b16 %v2207, %v2205
        %v2876 = vpack.c.b16 %v2208, %v2206
        %v2877 = vpack.c.b16 %v2211, %v2209
        %v2878 = vpack.c.b16 %v2212, %v2210
        %v2879 = vpack.c.b16 %v2215, %v2213
        %v2880 = vpack.c.b16 %v2216, %v2214
        %v2881 = vpack.c.b16 %v2219, %v2217
        %v2882 = vpack.c.b16 %v2220, %v2218
        %v2883 = vpack.c.b16 %v2223, %v2221
        %v2884 = vpack.c.b16 %v2224, %v2222
        %v2885 = vpack.c.b16 %v2227, %v2225
        %v2886 = vpack.c.b16 %v2228, %v2226
        %v2887 = vpack.c.b16 %v2231, %v2229
        %v2888 = vpack.c.b16 %v2232, %v2230
        %v2889 = vpack.c.b16 %v2235, %v2233
        %v2890 = vpack.c.b16 %v2236, %v2234
        %v2891 = vpack.c.b16 %v2239, %v2237
        %v2892 = vpack.c.b16 %v2240, %v2238
        %v2893 = vpack.c.b16 %v2243, %v2241
        %v2894 = vpack.c.b16 %v2244, %v2242
        %v2895 = vpack.c.b16 %v2247, %v2245
        %v2896 = vpack.c.b16 %v2248, %v2246
        %v2897 = vpack.c.b16 %v2251, %v2249
        %v2898 = vpack.c.b16 %v2252, %v2250
        %v2899 = vpack.c.b16 %v2255, %v2253
        %v2900 = vpack.c.b16 %v2256, %v2254
        %v2901 = vpack.c.b16 %v2259, %v2257
        %v2902 = vpack.c.b16 %v2260, %v2258
        %v2903 = vpack.c.b16 %v2263, %v2261
        %v2904 = vpack.c.b16 %v2264, %v2262
        %v2905 = vpack.c.b16 %v2267, %v2265
        %v2906 = vpack.c.b16 %v2268, %v2266
        %v2907 = vpack.c.b16 %v2271, %v2269
        %v2908 = vpack.c.b16 %v2272, %v2270
        %v2909 = vpack.c.b16 %v2275, %v2273
        %v2910 = vpack.c.b16 %v2276, %v2274
        %v2911 = vpack.c.b16 %v2279, %v2277
        %v2912 = vpack.c.b16 %v2280, %v2278
        %v2913 = vpack.c.b16 %v2283, %v2281
        %v2914 = vpack.c.b16 %v2284, %v2282
        %v2915 = vpack.c.b16 %v2287, %v2285
        %v2916 = vpack.c.b16 %v2288, %v2286
        %v2917 = vpack.c.b16 %v2291, %v2289
        %v2918 = vpack.c.b16 %v2292, %v2290
        %v2919 = vpack.c.b16 %v2295, %v2293
        %v2920 = vpack.c.b16 %v2296, %v2294
        %v2921 = vpack.c.b16 %v2299, %v2297
        %v2922 = vpack.c.b16 %v2300, %v2298
        %v2923 = vpack.c.b16 %v2303, %v2301
        %v2924 = vpack.c.b16 %v2304, %v2302
        %v2925 = vpack.c.b16 %v2307, %v2305
        %v2926 = vpack.c.b16 %v2308, %v2306
        %v2927 = vpack.c.b16 %v2311, %v2309
        %v2928 = vpack.c.b16 %v2312, %v2310
        %v2929 = vpack.c.b16 %v2315, %v2313
        %v2930 = vpack.c.b16 %v2316, %v2314
        %v2931 = vpack.c.b16 %v2319, %v2317
        %v2932 = vpack.c.b16 %v2320, %v2318
        %v2933 = vpack.c.b16 %v2323, %v2321
        %v2934 = vpack.c.b16 %v2324, %v2322
        %v2935 = vpack.c.b16 %v2327, %v2325
        %v2936 = vpack.c.b16 %v2328, %v2326
        %v2937 = vpack.c.b16 %v2331, %v2329
        %v2938 = vpack.c.b16 %v2332, %v2330
        %v2939 = vpack.c.b16 %v2335, %v2333
        %v2940 = vpack.c.b16 %v2336, %v2334
        %v2941 = vpack.c.b16 %v2339, %v2337
        %v2942 = vpack.c.b16 %v2340, %v2338
        %v2943 = vpack.c.b16 %v2343, %v2341
        %v2944 = vpack.c.b16 %v2344, %v2342
        %v2945 = vpack.c.b16 %v2347, %v2345
        %v2946 = vpack.c.b16 %v2348, %v2346
        %v2947 = vpack.c.b16 %v2351, %v2349
        %v2948 = vpack.c.b16 %v2352, %v2350
        %v2949 = vpack.c.b16 %v2355, %v2353
        %v2950 = vpack.c.b16 %v2356, %v2354
        %v2951 = vpack.c.b16 %v2359, %v2357
        %v2952 = vpack.c.b16 %v2360, %v2358
        %v2953 = vpack.c.b16 %v2363, %v2361
        %v2954 = vpack.c.b16 %v2364, %v2362
        %v2955 = vpack.c.b16 %v2367, %v2365
        %v2956 = vpack.c.b16 %v2368, %v2366
        %v2957 = vpack.c.b16 %v2371, %v2369
        %v2958 = vpack.c.b16 %v2372, %v2370
        %v2959 = vpack.c.b16 %v2375, %v2373
        %v2960 = vpack.c.b16 %v2376, %v2374
        %v2961 = vpack.c.b16 %v2379, %v2377
        %v2962 = vpack.c.b16 %v2380, %v2378
        %v2963 = vpack.c.b16 %v2383, %v2381
        %v2964 = vpack.c.b16 %v2384, %v2382
        %v2965 = vpack.c.b16 %v2387, %v2385
        %v2966 = vpack.c.b16 %v2388, %v2386
        %v2967 = vpack.c.b16 %v2391, %v2389
        %v2968 = vpack.c.b16 %v2392, %v2390
        %v2969 = vpack.c.b16 %v2395, %v2393
        %v2970 = vpack.c.b16 %v2396, %v2394
        %v2971 = vpack.c.b16 %v2399, %v2397
        %v2972 = vpack.c.b16 %v2400, %v2398
        %v2973 = vpack.c.b16 %v2403, %v2401
        %v2974 = vpack.c.b16 %v2404, %v2402
        %v2975 = vpack.c.b16 %v2407, %v2405
        %v2976 = vpack.c.b16 %v2408, %v2406
        %v2977 = vpack.c.b16 %v2411, %v2409
        %v2978 = vpack.c.b16 %v2412, %v2410
        %v2979 = vpack.c.b16 %v2415, %v2413
        %v2980 = vpack.c.b16 %v2416, %v2414
        %v2981 = vpack.c.b16 %v2419, %v2417
        %v2982 = vpack.c.b16 %v2420, %v2418
        %v2983 = vpack.c.b16 %v2423, %v2421
        %v2984 = vpack.c.b16 %v2424, %v2422
        %v2985 = vpack.c.b16 %v2427, %v2425
        %v2986 = vpack.c.b16 %v2428, %v2426
        %v2987 = vpack.c.b16 %v2431, %v2429
        %v2988 = vpack.c.b16 %v2432, %v2430
        %v2989 = vpack.c.b16 %v2435, %v2433
        %v2990 = vpack.c.b16 %v2436, %v2434
        %v2991 = vpack.c.b16 %v2439, %v2437
        %v2992 = vpack.c.b16 %v2440, %v2438
        %v2993 = vpack.c.b16 %v2443, %v2441
        %v2994 = vpack.c.b16 %v2444, %v2442
        %v2995 = vpack.c.b16 %v2447, %v2445
        %v2996 = vpack.c.b16 %v2448, %v2446
        %v2997 = vpack.c.b16 %v2451, %v2449
        %v2998 = vpack.c.b16 %v2452, %v2450
        %v2999 = vpack.c.b16 %v2455, %v2453
        %v3000 = vpack.c.b16 %v2456, %v2454
        %v3001 = vpack.c.b16 %v2459, %v2457
        %v3002 = vpack.c.b16 %v2460, %v2458
        %v3003 = vpack.c.b16 %v2463, %v2461
        %v3004 = vpack.c.b16 %v2464, %v2462
        %v3005 = vpack.c.b16 %v2467, %v2465
        %v3006 = vpack.c.b16 %v2468, %v2466
        %v3007 = vpack.c.b16 %v2471, %v2469
        %v3008 = vpack.c.b16 %v2472, %v2470
        %v3009 = vpack.c.b16 %v2475, %v2473
        %v3010 = vpack.c.b16 %v2476, %v2474
        %v3011 = vpack.c.b16 %v2479, %v2477
        %v3012 = vpack.c.b16 %v2480, %v2478
        %v3013 = vpack.c.b16 %v2483, %v2481
        %v3014 = vpack.c.b16 %v2484, %v2482
        %v3015 = vpack.c.b16 %v2487, %v2485
        %v3016 = vpack.c.b16 %v2488, %v2486
        %v3017 = vpack.c.b16 %v2491, %v2489
        %v3018 = vpack.c.b16 %v2492, %v2490
        %v3019 = vpack.c.b16 %v2495, %v2493
        %v3020 = vpack.c.b16 %v2496, %v2494
        %v3021 = vpack.c.b16 %v2499, %v2497
        %v3022 = vpack.c.b16 %v2500, %v2498
        %v3023 = vpack.c.b16 %v2503, %v2501
        %v3024 = vpack.c.b16 %v2504, %v2502
        %v3025 = vpack.c.b16 %v2507, %v2505
        %v3026 = vpack.c.b16 %v2508, %v2506
        %v3027 = vpack.c.b16 %v2511, %v2509
        %v3028 = vpack.c.b16 %v2512, %v2510
        %v3029 = vpack.c.b16 %v2515, %v2513
        %v3030 = vpack.c.b16 %v2516, %v2514
        %v3031 = vpack.c.b16 %v2519, %v2517
        %v3032 = vpack.c.b16 %v2520, %v2518
        %3545 = vmatpush.bf16.msra.mxu0 %v2535
        %3546 = vmatpush.bf16.msra.mxu0 %v2533
        %3547 = vmatpush.bf16.msra.mxu0 %v2531
        %3548 = vmatpush.bf16.msra.mxu0 %v2529
        %3549 = vmatpush.bf16.msra.mxu0 %v2527
        %3550 = vmatpush.bf16.msra.mxu0 %v2525
        %3551 = vmatpush.bf16.msra.mxu0 %v2523
        %3552 = vmatpush.bf16.msra.mxu0 %v2521
        %3553 = vmatmul.bf16.gmra.mxu0 %v441
        %v3554 = vpop.f32.mrf.mxu0
        %v3555 = vadd.f32 0.0, %v3554
        %v3556 = vpop.f32.mrf.mxu0
        %3557 = vdwg.mxu0
        %3558 = vmatpush.bf16.msra.mxu0 %v2551
        %3559 = vmatpush.bf16.msra.mxu0 %v2549
        %3560 = vmatpush.bf16.msra.mxu0 %v2547
        %3561 = vmatpush.bf16.msra.mxu0 %v2545
        %3562 = vmatpush.bf16.msra.mxu0 %v2543
        %3563 = vmatpush.bf16.msra.mxu0 %v2541
        %3564 = vmatpush.bf16.msra.mxu0 %v2539
        %3565 = vmatpush.bf16.msra.mxu0 %v2537
        %3566 = vmatmul.bf16.gmra.mxu0 %v442
        %v3567 = vpop.f32.mrf.mxu0
        %v3568 = vadd.f32 %v3555, %v3567
        %v3569 = vpop.f32.mrf.mxu0
        %3570 = vdwg.mxu0
        %3571 = vmatpush.bf16.msra.mxu0 %v2567
        %3572 = vmatpush.bf16.msra.mxu0 %v2565
        %3573 = vmatpush.bf16.msra.mxu0 %v2563
        %3574 = vmatpush.bf16.msra.mxu0 %v2561
        %3575 = vmatpush.bf16.msra.mxu0 %v2559
        %3576 = vmatpush.bf16.msra.mxu0 %v2557
        %3577 = vmatpush.bf16.msra.mxu0 %v2555
        %3578 = vmatpush.bf16.msra.mxu0 %v2553
        %3579 = vmatmul.bf16.gmra.mxu0 %v443
        %v3580 = vpop.f32.mrf.mxu0
        %v3581 = vadd.f32 %v3568, %v3580
        %v3582 = vpop.f32.mrf.mxu0
        %3583 = vdwg.mxu0
        %3584 = vmatpush.bf16.msra.mxu0 %v2583
        %3585 = vmatpush.bf16.msra.mxu0 %v2581
        %3586 = vmatpush.bf16.msra.mxu0 %v2579
        %3587 = vmatpush.bf16.msra.mxu0 %v2577
        %3588 = vmatpush.bf16.msra.mxu0 %v2575
        %3589 = vmatpush.bf16.msra.mxu0 %v2573
        %3590 = vmatpush.bf16.msra.mxu0 %v2571
        %3591 = vmatpush.bf16.msra.mxu0 %v2569
        %3592 = vmatmul.bf16.gmra.mxu0 %v444
        %v3593 = vpop.f32.mrf.mxu0
        %v3594 = vadd.f32 %v3581, %v3593
        %v3595 = vpop.f32.mrf.mxu0
        %3596 = vdwg.mxu0
        %3597 = vmatpush.bf16.msra.mxu0 %v2599
        %3598 = vmatpush.bf16.msra.mxu0 %v2597
        %3599 = vmatpush.bf16.msra.mxu0 %v2595
        %3600 = vmatpush.bf16.msra.mxu0 %v2593
        %3601 = vmatpush.bf16.msra.mxu0 %v2591
        %3602 = vmatpush.bf16.msra.mxu0 %v2589
        %3603 = vmatpush.bf16.msra.mxu0 %v2587
        %3604 = vmatpush.bf16.msra.mxu0 %v2585
        %3605 = vmatmul.bf16.gmra.mxu0 %v445
        %v3606 = vpop.f32.mrf.mxu0
        %v3607 = vadd.f32 %v3594, %v3606
        %v3608 = vpop.f32.mrf.mxu0
        %3609 = vdwg.mxu0
        %3610 = vmatpush.bf16.msra.mxu0 %v2615
        %3611 = vmatpush.bf16.msra.mxu0 %v2613
        %3612 = vmatpush.bf16.msra.mxu0 %v2611
        %3613 = vmatpush.bf16.msra.mxu0 %v2609
        %3614 = vmatpush.bf16.msra.mxu0 %v2607
        %3615 = vmatpush.bf16.msra.mxu0 %v2605
        %3616 = vmatpush.bf16.msra.mxu0 %v2603
        %3617 = vmatpush.bf16.msra.mxu0 %v2601
        %3618 = vmatmul.bf16.gmra.mxu0 %v446
        %v3619 = vpop.f32.mrf.mxu0
        %v3620 = vadd.f32 %v3607, %v3619
        %v3621 = vpop.f32.mrf.mxu0
        %3622 = vdwg.mxu0
        %3623 = vmatpush.bf16.msra.mxu0 %v2631
        %3624 = vmatpush.bf16.msra.mxu0 %v2629
        %3625 = vmatpush.bf16.msra.mxu0 %v2627
        %3626 = vmatpush.bf16.msra.mxu0 %v2625
        %3627 = vmatpush.bf16.msra.mxu0 %v2623
        %3628 = vmatpush.bf16.msra.mxu0 %v2621
        %3629 = vmatpush.bf16.msra.mxu0 %v2619
        %3630 = vmatpush.bf16.msra.mxu0 %v2617
        %3631 = vmatmul.bf16.gmra.mxu0 %v447
        %v3632 = vpop.f32.mrf.mxu0
        %v3633 = vadd.f32 %v3620, %v3632
        %v3634 = vpop.f32.mrf.mxu0
        %3635 = vdwg.mxu0
        %3636 = vmatpush.bf16.msra.mxu0 %v2647
        %3637 = vmatpush.bf16.msra.mxu0 %v2645
        %3638 = vmatpush.bf16.msra.mxu0 %v2643
        %3639 = vmatpush.bf16.msra.mxu0 %v2641
        %3640 = vmatpush.bf16.msra.mxu0 %v2639
        %3641 = vmatpush.bf16.msra.mxu0 %v2637
        %3642 = vmatpush.bf16.msra.mxu0 %v2635
        %3643 = vmatpush.bf16.msra.mxu0 %v2633
        %3644 = vmatmul.bf16.gmra.mxu0 %v448
        %v3645 = vpop.f32.mrf.mxu0
        %v3646 = vadd.f32 %v3633, %v3645
        %v3647 = vpop.f32.mrf.mxu0
        %3648 = vdwg.mxu0
        %3649 = vmatpush.bf16.msra.mxu0 %v2663
        %3650 = vmatpush.bf16.msra.mxu0 %v2661
        %3651 = vmatpush.bf16.msra.mxu0 %v2659
        %3652 = vmatpush.bf16.msra.mxu0 %v2657
        %3653 = vmatpush.bf16.msra.mxu0 %v2655
        %3654 = vmatpush.bf16.msra.mxu0 %v2653
        %3655 = vmatpush.bf16.msra.mxu0 %v2651
        %3656 = vmatpush.bf16.msra.mxu0 %v2649
        %3657 = vmatmul.bf16.gmra.mxu0 %v449
        %v3658 = vpop.f32.mrf.mxu0
        %v3659 = vadd.f32 %v3646, %v3658
        %v3660 = vpop.f32.mrf.mxu0
        %3661 = vdwg.mxu0
        %3662 = vmatpush.bf16.msra.mxu0 %v2679
        %3663 = vmatpush.bf16.msra.mxu0 %v2677
        %3664 = vmatpush.bf16.msra.mxu0 %v2675
        %3665 = vmatpush.bf16.msra.mxu0 %v2673
        %3666 = vmatpush.bf16.msra.mxu0 %v2671
        %3667 = vmatpush.bf16.msra.mxu0 %v2669
        %3668 = vmatpush.bf16.msra.mxu0 %v2667
        %3669 = vmatpush.bf16.msra.mxu0 %v2665
        %3670 = vmatmul.bf16.gmra.mxu0 %v450
        %v3671 = vpop.f32.mrf.mxu0
        %v3672 = vadd.f32 %v3659, %v3671
        %v3673 = vpop.f32.mrf.mxu0
        %3674 = vdwg.mxu0
        %3675 = vmatpush.bf16.msra.mxu0 %v2695
        %3676 = vmatpush.bf16.msra.mxu0 %v2693
        %3677 = vmatpush.bf16.msra.mxu0 %v2691
        %3678 = vmatpush.bf16.msra.mxu0 %v2689
        %3679 = vmatpush.bf16.msra.mxu0 %v2687
        %3680 = vmatpush.bf16.msra.mxu0 %v2685
        %3681 = vmatpush.bf16.msra.mxu0 %v2683
        %3682 = vmatpush.bf16.msra.mxu0 %v2681
        %3683 = vmatmul.bf16.gmra.mxu0 %v451
        %v3684 = vpop.f32.mrf.mxu0
        %v3685 = vadd.f32 %v3672, %v3684
        %v3686 = vpop.f32.mrf.mxu0
        %3687 = vdwg.mxu0
        %3688 = vmatpush.bf16.msra.mxu0 %v2711
        %3689 = vmatpush.bf16.msra.mxu0 %v2709
        %3690 = vmatpush.bf16.msra.mxu0 %v2707
        %3691 = vmatpush.bf16.msra.mxu0 %v2705
        %3692 = vmatpush.bf16.msra.mxu0 %v2703
        %3693 = vmatpush.bf16.msra.mxu0 %v2701
        %3694 = vmatpush.bf16.msra.mxu0 %v2699
        %3695 = vmatpush.bf16.msra.mxu0 %v2697
        %3696 = vmatmul.bf16.gmra.mxu0 %v452
        %v3697 = vpop.f32.mrf.mxu0
        %v3698 = vadd.f32 %v3685, %v3697
        %v3699 = vpop.f32.mrf.mxu0
        %3700 = vdwg.mxu0
        %3701 = vmatpush.bf16.msra.mxu0 %v2727
        %3702 = vmatpush.bf16.msra.mxu0 %v2725
        %3703 = vmatpush.bf16.msra.mxu0 %v2723
        %3704 = vmatpush.bf16.msra.mxu0 %v2721
        %3705 = vmatpush.bf16.msra.mxu0 %v2719
        %3706 = vmatpush.bf16.msra.mxu0 %v2717
        %3707 = vmatpush.bf16.msra.mxu0 %v2715
        %3708 = vmatpush.bf16.msra.mxu0 %v2713
        %3709 = vmatmul.bf16.gmra.mxu0 %v453
        %v3710 = vpop.f32.mrf.mxu0
        %v3711 = vadd.f32 %v3698, %v3710
        %v3712 = vpop.f32.mrf.mxu0
        %3713 = vdwg.mxu0
        %3714 = vmatpush.bf16.msra.mxu0 %v2743
        %3715 = vmatpush.bf16.msra.mxu0 %v2741
        %3716 = vmatpush.bf16.msra.mxu0 %v2739
        %3717 = vmatpush.bf16.msra.mxu0 %v2737
        %3718 = vmatpush.bf16.msra.mxu0 %v2735
        %3719 = vmatpush.bf16.msra.mxu0 %v2733
        %3720 = vmatpush.bf16.msra.mxu0 %v2731
        %3721 = vmatpush.bf16.msra.mxu0 %v2729
        %3722 = vmatmul.bf16.gmra.mxu0 %v454
        %v3723 = vpop.f32.mrf.mxu0
        %v3724 = vadd.f32 %v3711, %v3723
        %v3725 = vpop.f32.mrf.mxu0
        %3726 = vdwg.mxu0
        %3727 = vmatpush.bf16.msra.mxu0 %v2759
        %3728 = vmatpush.bf16.msra.mxu0 %v2757
        %3729 = vmatpush.bf16.msra.mxu0 %v2755
        %3730 = vmatpush.bf16.msra.mxu0 %v2753
        %3731 = vmatpush.bf16.msra.mxu0 %v2751
        %3732 = vmatpush.bf16.msra.mxu0 %v2749
        %3733 = vmatpush.bf16.msra.mxu0 %v2747
        %3734 = vmatpush.bf16.msra.mxu0 %v2745
        %3735 = vmatmul.bf16.gmra.mxu0 %v455
        %v3736 = vpop.f32.mrf.mxu0
        %v3737 = vadd.f32 %v3724, %v3736
        %v3738 = vpop.f32.mrf.mxu0
        %3739 = vdwg.mxu0
        %3740 = vmatpush.bf16.msra.mxu0 %v2775
        %3741 = vmatpush.bf16.msra.mxu0 %v2773
        %3742 = vmatpush.bf16.msra.mxu0 %v2771
        %3743 = vmatpush.bf16.msra.mxu0 %v2769
        %3744 = vmatpush.bf16.msra.mxu0 %v2767
        %3745 = vmatpush.bf16.msra.mxu0 %v2765
        %3746 = vmatpush.bf16.msra.mxu0 %v2763
        %3747 = vmatpush.bf16.msra.mxu0 %v2761
        %3748 = vmatmul.bf16.gmra.mxu0 %v456
        %v3749 = vpop.f32.mrf.mxu0
        %v3750 = vadd.f32 %v3737, %v3749
        %v3751 = vpop.f32.mrf.mxu0
        %3752 = vdwg.mxu0
        %3753 = vmatpush.bf16.msra.mxu0 %v2791
        %3754 = vmatpush.bf16.msra.mxu0 %v2789
        %3755 = vmatpush.bf16.msra.mxu0 %v2787
        %3756 = vmatpush.bf16.msra.mxu0 %v2785
        %3757 = vmatpush.bf16.msra.mxu0 %v2783
        %3758 = vmatpush.bf16.msra.mxu0 %v2781
        %3759 = vmatpush.bf16.msra.mxu0 %v2779
        %3760 = vmatpush.bf16.msra.mxu0 %v2777
        %3761 = vmatmul.bf16.gmra.mxu0 %v457
        %v3762 = vpop.f32.mrf.mxu0
        %v3763 = vadd.f32 %v3750, %v3762
        %v3764 = vpop.f32.mrf.mxu0
        %3765 = vdwg.mxu0
        %3766 = vmatpush.bf16.msra.mxu0 %v2807
        %3767 = vmatpush.bf16.msra.mxu0 %v2805
        %3768 = vmatpush.bf16.msra.mxu0 %v2803
        %3769 = vmatpush.bf16.msra.mxu0 %v2801
        %3770 = vmatpush.bf16.msra.mxu0 %v2799
        %3771 = vmatpush.bf16.msra.mxu0 %v2797
        %3772 = vmatpush.bf16.msra.mxu0 %v2795
        %3773 = vmatpush.bf16.msra.mxu0 %v2793
        %3774 = vmatmul.bf16.gmra.mxu0 %v458
        %v3775 = vpop.f32.mrf.mxu0
        %v3776 = vadd.f32 %v3763, %v3775
        %v3777 = vpop.f32.mrf.mxu0
        %3778 = vdwg.mxu0
        %3779 = vmatpush.bf16.msra.mxu0 %v2823
        %3780 = vmatpush.bf16.msra.mxu0 %v2821
        %3781 = vmatpush.bf16.msra.mxu0 %v2819
        %3782 = vmatpush.bf16.msra.mxu0 %v2817
        %3783 = vmatpush.bf16.msra.mxu0 %v2815
        %3784 = vmatpush.bf16.msra.mxu0 %v2813
        %3785 = vmatpush.bf16.msra.mxu0 %v2811
        %3786 = vmatpush.bf16.msra.mxu0 %v2809
        %3787 = vmatmul.bf16.gmra.mxu0 %v459
        %v3788 = vpop.f32.mrf.mxu0
        %v3789 = vadd.f32 %v3776, %v3788
        %v3790 = vpop.f32.mrf.mxu0
        %3791 = vdwg.mxu0
        %3792 = vmatpush.bf16.msra.mxu0 %v2839
        %3793 = vmatpush.bf16.msra.mxu0 %v2837
        %3794 = vmatpush.bf16.msra.mxu0 %v2835
        %3795 = vmatpush.bf16.msra.mxu0 %v2833
        %3796 = vmatpush.bf16.msra.mxu0 %v2831
        %3797 = vmatpush.bf16.msra.mxu0 %v2829
        %3798 = vmatpush.bf16.msra.mxu0 %v2827
        %3799 = vmatpush.bf16.msra.mxu0 %v2825
        %3800 = vmatmul.bf16.gmra.mxu0 %v460
        %v3801 = vpop.f32.mrf.mxu0
        %v3802 = vadd.f32 %v3789, %v3801
        %v3803 = vpop.f32.mrf.mxu0
        %3804 = vdwg.mxu0
        %3805 = vmatpush.bf16.msra.mxu0 %v2855
        %3806 = vmatpush.bf16.msra.mxu0 %v2853
        %3807 = vmatpush.bf16.msra.mxu0 %v2851
        %3808 = vmatpush.bf16.msra.mxu0 %v2849
        %3809 = vmatpush.bf16.msra.mxu0 %v2847
        %3810 = vmatpush.bf16.msra.mxu0 %v2845
        %3811 = vmatpush.bf16.msra.mxu0 %v2843
        %3812 = vmatpush.bf16.msra.mxu0 %v2841
        %3813 = vmatmul.bf16.gmra.mxu0 %v461
        %v3814 = vpop.f32.mrf.mxu0
        %v3815 = vadd.f32 %v3802, %v3814
        %v3816 = vpop.f32.mrf.mxu0
        %3817 = vdwg.mxu0
        %3818 = vmatpush.bf16.msra.mxu0 %v2871
        %3819 = vmatpush.bf16.msra.mxu0 %v2869
        %3820 = vmatpush.bf16.msra.mxu0 %v2867
        %3821 = vmatpush.bf16.msra.mxu0 %v2865
        %3822 = vmatpush.bf16.msra.mxu0 %v2863
        %3823 = vmatpush.bf16.msra.mxu0 %v2861
        %3824 = vmatpush.bf16.msra.mxu0 %v2859
        %3825 = vmatpush.bf16.msra.mxu0 %v2857
        %3826 = vmatmul.bf16.gmra.mxu0 %v462
        %v3827 = vpop.f32.mrf.mxu0
        %v3828 = vadd.f32 %v3815, %v3827
        %v3829 = vpop.f32.mrf.mxu0
        %3830 = vdwg.mxu0
        %3831 = vmatpush.bf16.msra.mxu0 %v2887
        %3832 = vmatpush.bf16.msra.mxu0 %v2885
        %3833 = vmatpush.bf16.msra.mxu0 %v2883
        %3834 = vmatpush.bf16.msra.mxu0 %v2881
        %3835 = vmatpush.bf16.msra.mxu0 %v2879
        %3836 = vmatpush.bf16.msra.mxu0 %v2877
        %3837 = vmatpush.bf16.msra.mxu0 %v2875
        %3838 = vmatpush.bf16.msra.mxu0 %v2873
        %3839 = vmatmul.bf16.gmra.mxu0 %v463
        %v3840 = vpop.f32.mrf.mxu0
        %v3841 = vadd.f32 %v3828, %v3840
        %v3842 = vpop.f32.mrf.mxu0
        %3843 = vdwg.mxu0
        %3844 = vmatpush.bf16.msra.mxu0 %v2903
        %3845 = vmatpush.bf16.msra.mxu0 %v2901
        %3846 = vmatpush.bf16.msra.mxu0 %v2899
        %3847 = vmatpush.bf16.msra.mxu0 %v2897
        %3848 = vmatpush.bf16.msra.mxu0 %v2895
        %3849 = vmatpush.bf16.msra.mxu0 %v2893
        %3850 = vmatpush.bf16.msra.mxu0 %v2891
        %3851 = vmatpush.bf16.msra.mxu0 %v2889
        %3852 = vmatmul.bf16.gmra.mxu0 %v464
        %v3853 = vpop.f32.mrf.mxu0
        %v3854 = vadd.f32 %v3841, %v3853
        %v3855 = vpop.f32.mrf.mxu0
        %3856 = vdwg.mxu0
        %3857 = vmatpush.bf16.msra.mxu0 %v2919
        %3858 = vmatpush.bf16.msra.mxu0 %v2917
        %3859 = vmatpush.bf16.msra.mxu0 %v2915
        %3860 = vmatpush.bf16.msra.mxu0 %v2913
        %3861 = vmatpush.bf16.msra.mxu0 %v2911
        %3862 = vmatpush.bf16.msra.mxu0 %v2909
        %3863 = vmatpush.bf16.msra.mxu0 %v2907
        %3864 = vmatpush.bf16.msra.mxu0 %v2905
        %3865 = vmatmul.bf16.gmra.mxu0 %v465
        %v3866 = vpop.f32.mrf.mxu0
        %v3867 = vadd.f32 %v3854, %v3866
        %v3868 = vpop.f32.mrf.mxu0
        %3869 = vdwg.mxu0
        %3870 = vmatpush.bf16.msra.mxu0 %v2935
        %3871 = vmatpush.bf16.msra.mxu0 %v2933
        %3872 = vmatpush.bf16.msra.mxu0 %v2931
        %3873 = vmatpush.bf16.msra.mxu0 %v2929
        %3874 = vmatpush.bf16.msra.mxu0 %v2927
        %3875 = vmatpush.bf16.msra.mxu0 %v2925
        %3876 = vmatpush.bf16.msra.mxu0 %v2923
        %3877 = vmatpush.bf16.msra.mxu0 %v2921
        %3878 = vmatmul.bf16.gmra.mxu0 %v466
        %v3879 = vpop.f32.mrf.mxu0
        %v3880 = vadd.f32 %v3867, %v3879
        %v3881 = vpop.f32.mrf.mxu0
        %3882 = vdwg.mxu0
        %3883 = vmatpush.bf16.msra.mxu0 %v2951
        %3884 = vmatpush.bf16.msra.mxu0 %v2949
        %3885 = vmatpush.bf16.msra.mxu0 %v2947
        %3886 = vmatpush.bf16.msra.mxu0 %v2945
        %3887 = vmatpush.bf16.msra.mxu0 %v2943
        %3888 = vmatpush.bf16.msra.mxu0 %v2941
        %3889 = vmatpush.bf16.msra.mxu0 %v2939
        %3890 = vmatpush.bf16.msra.mxu0 %v2937
        %3891 = vmatmul.bf16.gmra.mxu0 %v467
        %v3892 = vpop.f32.mrf.mxu0
        %v3893 = vadd.f32 %v3880, %v3892
        %v3894 = vpop.f32.mrf.mxu0
        %3895 = vdwg.mxu0
        %3896 = vmatpush.bf16.msra.mxu0 %v2967
        %3897 = vmatpush.bf16.msra.mxu0 %v2965
        %3898 = vmatpush.bf16.msra.mxu0 %v2963
        %3899 = vmatpush.bf16.msra.mxu0 %v2961
        %3900 = vmatpush.bf16.msra.mxu0 %v2959
        %3901 = vmatpush.bf16.msra.mxu0 %v2957
        %3902 = vmatpush.bf16.msra.mxu0 %v2955
        %3903 = vmatpush.bf16.msra.mxu0 %v2953
        %3904 = vmatmul.bf16.gmra.mxu0 %v468
        %v3905 = vpop.f32.mrf.mxu0
        %v3906 = vadd.f32 %v3893, %v3905
        %v3907 = vpop.f32.mrf.mxu0
        %3908 = vdwg.mxu0
        %3909 = vmatpush.bf16.msra.mxu0 %v2983
        %3910 = vmatpush.bf16.msra.mxu0 %v2981
        %3911 = vmatpush.bf16.msra.mxu0 %v2979
        %3912 = vmatpush.bf16.msra.mxu0 %v2977
        %3913 = vmatpush.bf16.msra.mxu0 %v2975
        %3914 = vmatpush.bf16.msra.mxu0 %v2973
        %3915 = vmatpush.bf16.msra.mxu0 %v2971
        %3916 = vmatpush.bf16.msra.mxu0 %v2969
        %3917 = vmatmul.bf16.gmra.mxu0 %v469
        %v3918 = vpop.f32.mrf.mxu0
        %v3919 = vadd.f32 %v3906, %v3918
        %v3920 = vpop.f32.mrf.mxu0
        %3921 = vdwg.mxu0
        %3922 = vmatpush.bf16.msra.mxu0 %v2999
        %3923 = vmatpush.bf16.msra.mxu0 %v2997
        %3924 = vmatpush.bf16.msra.mxu0 %v2995
        %3925 = vmatpush.bf16.msra.mxu0 %v2993
        %3926 = vmatpush.bf16.msra.mxu0 %v2991
        %3927 = vmatpush.bf16.msra.mxu0 %v2989
        %3928 = vmatpush.bf16.msra.mxu0 %v2987
        %3929 = vmatpush.bf16.msra.mxu0 %v2985
        %3930 = vmatmul.bf16.gmra.mxu0 %v470
        %v3931 = vpop.f32.mrf.mxu0
        %v3932 = vadd.f32 %v3919, %v3931
        %v3933 = vpop.f32.mrf.mxu0
        %3934 = vdwg.mxu0
        %3935 = vmatpush.bf16.msra.mxu0 %v3015
        %3936 = vmatpush.bf16.msra.mxu0 %v3013
        %3937 = vmatpush.bf16.msra.mxu0 %v3011
        %3938 = vmatpush.bf16.msra.mxu0 %v3009
        %3939 = vmatpush.bf16.msra.mxu0 %v3007
        %3940 = vmatpush.bf16.msra.mxu0 %v3005
        %3941 = vmatpush.bf16.msra.mxu0 %v3003
        %3942 = vmatpush.bf16.msra.mxu0 %v3001
        %3943 = vmatmul.bf16.gmra.mxu0 %v471
        %v3944 = vpop.f32.mrf.mxu0
        %v3945 = vadd.f32 %v3932, %v3944
        %v3946 = vpop.f32.mrf.mxu0
        %3947 = vdwg.mxu0
        %3948 = vmatpush.bf16.msra.mxu0 %v3031
        %3949 = vmatpush.bf16.msra.mxu0 %v3029
        %3950 = vmatpush.bf16.msra.mxu0 %v3027
        %3951 = vmatpush.bf16.msra.mxu0 %v3025
        %3952 = vmatpush.bf16.msra.mxu0 %v3023
        %3953 = vmatpush.bf16.msra.mxu0 %v3021
        %3954 = vmatpush.bf16.msra.mxu0 %v3019
        %3955 = vmatpush.bf16.msra.mxu0 %v3017
        %3956 = vmatmul.bf16.gmra.mxu0 %v472
        %v3957 = vpop.f32.mrf.mxu0
        %v3958 = vadd.f32 %v3945, %v3957
        %v3959 = vpop.f32.mrf.mxu0
        %3960 = vdwg.mxu0
        %3961 = vmatpush.bf16.msra.mxu0 %v2536
        %3962 = vmatpush.bf16.msra.mxu0 %v2534
        %3963 = vmatpush.bf16.msra.mxu0 %v2532
        %3964 = vmatpush.bf16.msra.mxu0 %v2530
        %3965 = vmatpush.bf16.msra.mxu0 %v2528
        %3966 = vmatpush.bf16.msra.mxu0 %v2526
        %3967 = vmatpush.bf16.msra.mxu0 %v2524
        %3968 = vmatpush.bf16.msra.mxu0 %v2522
        %3969 = vmatmul.bf16.gmra.mxu0 %v441
        %v3970 = vpop.f32.mrf.mxu0
        %v3971 = vadd.f32 0.0, %v3970
        %v3972 = vpop.f32.mrf.mxu0
        %3973 = vdwg.mxu0
        %3974 = vmatpush.bf16.msra.mxu0 %v2552
        %3975 = vmatpush.bf16.msra.mxu0 %v2550
        %3976 = vmatpush.bf16.msra.mxu0 %v2548
        %3977 = vmatpush.bf16.msra.mxu0 %v2546
        %3978 = vmatpush.bf16.msra.mxu0 %v2544
        %3979 = vmatpush.bf16.msra.mxu0 %v2542
        %3980 = vmatpush.bf16.msra.mxu0 %v2540
        %3981 = vmatpush.bf16.msra.mxu0 %v2538
        %3982 = vmatmul.bf16.gmra.mxu0 %v442
        %v3983 = vpop.f32.mrf.mxu0
        %v3984 = vadd.f32 %v3971, %v3983
        %v3985 = vpop.f32.mrf.mxu0
        %3986 = vdwg.mxu0
        %3987 = vmatpush.bf16.msra.mxu0 %v2568
        %3988 = vmatpush.bf16.msra.mxu0 %v2566
        %3989 = vmatpush.bf16.msra.mxu0 %v2564
        %3990 = vmatpush.bf16.msra.mxu0 %v2562
        %3991 = vmatpush.bf16.msra.mxu0 %v2560
        %3992 = vmatpush.bf16.msra.mxu0 %v2558
        %3993 = vmatpush.bf16.msra.mxu0 %v2556
        %3994 = vmatpush.bf16.msra.mxu0 %v2554
        %3995 = vmatmul.bf16.gmra.mxu0 %v443
        %v3996 = vpop.f32.mrf.mxu0
        %v3997 = vadd.f32 %v3984, %v3996
        %v3998 = vpop.f32.mrf.mxu0
        %3999 = vdwg.mxu0
        %4000 = vmatpush.bf16.msra.mxu0 %v2584
        %4001 = vmatpush.bf16.msra.mxu0 %v2582
        %4002 = vmatpush.bf16.msra.mxu0 %v2580
        %4003 = vmatpush.bf16.msra.mxu0 %v2578
        %4004 = vmatpush.bf16.msra.mxu0 %v2576
        %4005 = vmatpush.bf16.msra.mxu0 %v2574
        %4006 = vmatpush.bf16.msra.mxu0 %v2572
        %4007 = vmatpush.bf16.msra.mxu0 %v2570
        %4008 = vmatmul.bf16.gmra.mxu0 %v444
        %v4009 = vpop.f32.mrf.mxu0
        %v4010 = vadd.f32 %v3997, %v4009
        %v4011 = vpop.f32.mrf.mxu0
        %4012 = vdwg.mxu0
        %4013 = vmatpush.bf16.msra.mxu0 %v2600
        %4014 = vmatpush.bf16.msra.mxu0 %v2598
        %4015 = vmatpush.bf16.msra.mxu0 %v2596
        %4016 = vmatpush.bf16.msra.mxu0 %v2594
        %4017 = vmatpush.bf16.msra.mxu0 %v2592
        %4018 = vmatpush.bf16.msra.mxu0 %v2590
        %4019 = vmatpush.bf16.msra.mxu0 %v2588
        %4020 = vmatpush.bf16.msra.mxu0 %v2586
        %4021 = vmatmul.bf16.gmra.mxu0 %v445
        %v4022 = vpop.f32.mrf.mxu0
        %v4023 = vadd.f32 %v4010, %v4022
        %v4024 = vpop.f32.mrf.mxu0
        %4025 = vdwg.mxu0
        %4026 = vmatpush.bf16.msra.mxu0 %v2616
        %4027 = vmatpush.bf16.msra.mxu0 %v2614
        %4028 = vmatpush.bf16.msra.mxu0 %v2612
        %4029 = vmatpush.bf16.msra.mxu0 %v2610
        %4030 = vmatpush.bf16.msra.mxu0 %v2608
        %4031 = vmatpush.bf16.msra.mxu0 %v2606
        %4032 = vmatpush.bf16.msra.mxu0 %v2604
        %4033 = vmatpush.bf16.msra.mxu0 %v2602
        %4034 = vmatmul.bf16.gmra.mxu0 %v446
        %v4035 = vpop.f32.mrf.mxu0
        %v4036 = vadd.f32 %v4023, %v4035
        %v4037 = vpop.f32.mrf.mxu0
        %4038 = vdwg.mxu0
        %4039 = vmatpush.bf16.msra.mxu0 %v2632
        %4040 = vmatpush.bf16.msra.mxu0 %v2630
        %4041 = vmatpush.bf16.msra.mxu0 %v2628
        %4042 = vmatpush.bf16.msra.mxu0 %v2626
        %4043 = vmatpush.bf16.msra.mxu0 %v2624
        %4044 = vmatpush.bf16.msra.mxu0 %v2622
        %4045 = vmatpush.bf16.msra.mxu0 %v2620
        %4046 = vmatpush.bf16.msra.mxu0 %v2618
        %4047 = vmatmul.bf16.gmra.mxu0 %v447
        %v4048 = vpop.f32.mrf.mxu0
        %v4049 = vadd.f32 %v4036, %v4048
        %v4050 = vpop.f32.mrf.mxu0
        %4051 = vdwg.mxu0
        %4052 = vmatpush.bf16.msra.mxu0 %v2648
        %4053 = vmatpush.bf16.msra.mxu0 %v2646
        %4054 = vmatpush.bf16.msra.mxu0 %v2644
        %4055 = vmatpush.bf16.msra.mxu0 %v2642
        %4056 = vmatpush.bf16.msra.mxu0 %v2640
        %4057 = vmatpush.bf16.msra.mxu0 %v2638
        %4058 = vmatpush.bf16.msra.mxu0 %v2636
        %4059 = vmatpush.bf16.msra.mxu0 %v2634
        %4060 = vmatmul.bf16.gmra.mxu0 %v448
        %v4061 = vpop.f32.mrf.mxu0
        %v4062 = vadd.f32 %v4049, %v4061
        %v4063 = vpop.f32.mrf.mxu0
        %4064 = vdwg.mxu0
        %4065 = vmatpush.bf16.msra.mxu0 %v2664
        %4066 = vmatpush.bf16.msra.mxu0 %v2662
        %4067 = vmatpush.bf16.msra.mxu0 %v2660
        %4068 = vmatpush.bf16.msra.mxu0 %v2658
        %4069 = vmatpush.bf16.msra.mxu0 %v2656
        %4070 = vmatpush.bf16.msra.mxu0 %v2654
        %4071 = vmatpush.bf16.msra.mxu0 %v2652
        %4072 = vmatpush.bf16.msra.mxu0 %v2650
        %4073 = vmatmul.bf16.gmra.mxu0 %v449
        %v4074 = vpop.f32.mrf.mxu0
        %v4075 = vadd.f32 %v4062, %v4074
        %v4076 = vpop.f32.mrf.mxu0
        %4077 = vdwg.mxu0
        %4078 = vmatpush.bf16.msra.mxu0 %v2680
        %4079 = vmatpush.bf16.msra.mxu0 %v2678
        %4080 = vmatpush.bf16.msra.mxu0 %v2676
        %4081 = vmatpush.bf16.msra.mxu0 %v2674
        %4082 = vmatpush.bf16.msra.mxu0 %v2672
        %4083 = vmatpush.bf16.msra.mxu0 %v2670
        %4084 = vmatpush.bf16.msra.mxu0 %v2668
        %4085 = vmatpush.bf16.msra.mxu0 %v2666
        %4086 = vmatmul.bf16.gmra.mxu0 %v450
        %v4087 = vpop.f32.mrf.mxu0
        %v4088 = vadd.f32 %v4075, %v4087
        %v4089 = vpop.f32.mrf.mxu0
        %4090 = vdwg.mxu0
        %4091 = vmatpush.bf16.msra.mxu0 %v2696
        %4092 = vmatpush.bf16.msra.mxu0 %v2694
        %4093 = vmatpush.bf16.msra.mxu0 %v2692
        %4094 = vmatpush.bf16.msra.mxu0 %v2690
        %4095 = vmatpush.bf16.msra.mxu0 %v2688
        %4096 = vmatpush.bf16.msra.mxu0 %v2686
        %4097 = vmatpush.bf16.msra.mxu0 %v2684
        %4098 = vmatpush.bf16.msra.mxu0 %v2682
        %4099 = vmatmul.bf16.gmra.mxu0 %v451
        %v4100 = vpop.f32.mrf.mxu0
        %v4101 = vadd.f32 %v4088, %v4100
        %v4102 = vpop.f32.mrf.mxu0
        %4103 = vdwg.mxu0
        %4104 = vmatpush.bf16.msra.mxu0 %v2712
        %4105 = vmatpush.bf16.msra.mxu0 %v2710
        %4106 = vmatpush.bf16.msra.mxu0 %v2708
        %4107 = vmatpush.bf16.msra.mxu0 %v2706
        %4108 = vmatpush.bf16.msra.mxu0 %v2704
        %4109 = vmatpush.bf16.msra.mxu0 %v2702
        %4110 = vmatpush.bf16.msra.mxu0 %v2700
        %4111 = vmatpush.bf16.msra.mxu0 %v2698
        %4112 = vmatmul.bf16.gmra.mxu0 %v452
        %v4113 = vpop.f32.mrf.mxu0
        %v4114 = vadd.f32 %v4101, %v4113
        %v4115 = vpop.f32.mrf.mxu0
        %4116 = vdwg.mxu0
        %4117 = vmatpush.bf16.msra.mxu0 %v2728
        %4118 = vmatpush.bf16.msra.mxu0 %v2726
        %4119 = vmatpush.bf16.msra.mxu0 %v2724
        %4120 = vmatpush.bf16.msra.mxu0 %v2722
        %4121 = vmatpush.bf16.msra.mxu0 %v2720
        %4122 = vmatpush.bf16.msra.mxu0 %v2718
        %4123 = vmatpush.bf16.msra.mxu0 %v2716
        %4124 = vmatpush.bf16.msra.mxu0 %v2714
        %4125 = vmatmul.bf16.gmra.mxu0 %v453
        %v4126 = vpop.f32.mrf.mxu0
        %v4127 = vadd.f32 %v4114, %v4126
        %v4128 = vpop.f32.mrf.mxu0
        %4129 = vdwg.mxu0
        %4130 = vmatpush.bf16.msra.mxu0 %v2744
        %4131 = vmatpush.bf16.msra.mxu0 %v2742
        %4132 = vmatpush.bf16.msra.mxu0 %v2740
        %4133 = vmatpush.bf16.msra.mxu0 %v2738
        %4134 = vmatpush.bf16.msra.mxu0 %v2736
        %4135 = vmatpush.bf16.msra.mxu0 %v2734
        %4136 = vmatpush.bf16.msra.mxu0 %v2732
        %4137 = vmatpush.bf16.msra.mxu0 %v2730
        %4138 = vmatmul.bf16.gmra.mxu0 %v454
        %v4139 = vpop.f32.mrf.mxu0
        %v4140 = vadd.f32 %v4127, %v4139
        %v4141 = vpop.f32.mrf.mxu0
        %4142 = vdwg.mxu0
        %4143 = vmatpush.bf16.msra.mxu0 %v2760
        %4144 = vmatpush.bf16.msra.mxu0 %v2758
        %4145 = vmatpush.bf16.msra.mxu0 %v2756
        %4146 = vmatpush.bf16.msra.mxu0 %v2754
        %4147 = vmatpush.bf16.msra.mxu0 %v2752
        %4148 = vmatpush.bf16.msra.mxu0 %v2750
        %4149 = vmatpush.bf16.msra.mxu0 %v2748
        %4150 = vmatpush.bf16.msra.mxu0 %v2746
        %4151 = vmatmul.bf16.gmra.mxu0 %v455
        %v4152 = vpop.f32.mrf.mxu0
        %v4153 = vadd.f32 %v4140, %v4152
        %v4154 = vpop.f32.mrf.mxu0
        %4155 = vdwg.mxu0
        %4156 = vmatpush.bf16.msra.mxu0 %v2776
        %4157 = vmatpush.bf16.msra.mxu0 %v2774
        %4158 = vmatpush.bf16.msra.mxu0 %v2772
        %4159 = vmatpush.bf16.msra.mxu0 %v2770
        %4160 = vmatpush.bf16.msra.mxu0 %v2768
        %4161 = vmatpush.bf16.msra.mxu0 %v2766
        %4162 = vmatpush.bf16.msra.mxu0 %v2764
        %4163 = vmatpush.bf16.msra.mxu0 %v2762
        %4164 = vmatmul.bf16.gmra.mxu0 %v456
        %v4165 = vpop.f32.mrf.mxu0
        %v4166 = vadd.f32 %v4153, %v4165
        %v4167 = vpop.f32.mrf.mxu0
        %4168 = vdwg.mxu0
        %4169 = vmatpush.bf16.msra.mxu0 %v2792
        %4170 = vmatpush.bf16.msra.mxu0 %v2790
        %4171 = vmatpush.bf16.msra.mxu0 %v2788
        %4172 = vmatpush.bf16.msra.mxu0 %v2786
        %4173 = vmatpush.bf16.msra.mxu0 %v2784
        %4174 = vmatpush.bf16.msra.mxu0 %v2782
        %4175 = vmatpush.bf16.msra.mxu0 %v2780
        %4176 = vmatpush.bf16.msra.mxu0 %v2778
        %4177 = vmatmul.bf16.gmra.mxu0 %v457
        %v4178 = vpop.f32.mrf.mxu0
        %v4179 = vadd.f32 %v4166, %v4178
        %v4180 = vpop.f32.mrf.mxu0
        %4181 = vdwg.mxu0
        %4182 = vmatpush.bf16.msra.mxu0 %v2808
        %4183 = vmatpush.bf16.msra.mxu0 %v2806
        %4184 = vmatpush.bf16.msra.mxu0 %v2804
        %4185 = vmatpush.bf16.msra.mxu0 %v2802
        %4186 = vmatpush.bf16.msra.mxu0 %v2800
        %4187 = vmatpush.bf16.msra.mxu0 %v2798
        %4188 = vmatpush.bf16.msra.mxu0 %v2796
        %4189 = vmatpush.bf16.msra.mxu0 %v2794
        %4190 = vmatmul.bf16.gmra.mxu0 %v458
        %v4191 = vpop.f32.mrf.mxu0
        %v4192 = vadd.f32 %v4179, %v4191
        %v4193 = vpop.f32.mrf.mxu0
        %4194 = vdwg.mxu0
        %4195 = vmatpush.bf16.msra.mxu0 %v2824
        %4196 = vmatpush.bf16.msra.mxu0 %v2822
        %4197 = vmatpush.bf16.msra.mxu0 %v2820
        %4198 = vmatpush.bf16.msra.mxu0 %v2818
        %4199 = vmatpush.bf16.msra.mxu0 %v2816
        %4200 = vmatpush.bf16.msra.mxu0 %v2814
        %4201 = vmatpush.bf16.msra.mxu0 %v2812
        %4202 = vmatpush.bf16.msra.mxu0 %v2810
        %4203 = vmatmul.bf16.gmra.mxu0 %v459
        %v4204 = vpop.f32.mrf.mxu0
        %v4205 = vadd.f32 %v4192, %v4204
        %v4206 = vpop.f32.mrf.mxu0
        %4207 = vdwg.mxu0
        %4208 = vmatpush.bf16.msra.mxu0 %v2840
        %4209 = vmatpush.bf16.msra.mxu0 %v2838
        %4210 = vmatpush.bf16.msra.mxu0 %v2836
        %4211 = vmatpush.bf16.msra.mxu0 %v2834
        %4212 = vmatpush.bf16.msra.mxu0 %v2832
        %4213 = vmatpush.bf16.msra.mxu0 %v2830
        %4214 = vmatpush.bf16.msra.mxu0 %v2828
        %4215 = vmatpush.bf16.msra.mxu0 %v2826
        %4216 = vmatmul.bf16.gmra.mxu0 %v460
        %v4217 = vpop.f32.mrf.mxu0
        %v4218 = vadd.f32 %v4205, %v4217
        %v4219 = vpop.f32.mrf.mxu0
        %4220 = vdwg.mxu0
        %4221 = vmatpush.bf16.msra.mxu0 %v2856
        %4222 = vmatpush.bf16.msra.mxu0 %v2854
        %4223 = vmatpush.bf16.msra.mxu0 %v2852
        %4224 = vmatpush.bf16.msra.mxu0 %v2850
        %4225 = vmatpush.bf16.msra.mxu0 %v2848
        %4226 = vmatpush.bf16.msra.mxu0 %v2846
        %4227 = vmatpush.bf16.msra.mxu0 %v2844
        %4228 = vmatpush.bf16.msra.mxu0 %v2842
        %4229 = vmatmul.bf16.gmra.mxu0 %v461
        %v4230 = vpop.f32.mrf.mxu0
        %v4231 = vadd.f32 %v4218, %v4230
        %v4232 = vpop.f32.mrf.mxu0
        %4233 = vdwg.mxu0
        %4234 = vmatpush.bf16.msra.mxu0 %v2872
        %4235 = vmatpush.bf16.msra.mxu0 %v2870
        %4236 = vmatpush.bf16.msra.mxu0 %v2868
        %4237 = vmatpush.bf16.msra.mxu0 %v2866
        %4238 = vmatpush.bf16.msra.mxu0 %v2864
        %4239 = vmatpush.bf16.msra.mxu0 %v2862
        %4240 = vmatpush.bf16.msra.mxu0 %v2860
        %4241 = vmatpush.bf16.msra.mxu0 %v2858
        %4242 = vmatmul.bf16.gmra.mxu0 %v462
        %v4243 = vpop.f32.mrf.mxu0
        %v4244 = vadd.f32 %v4231, %v4243
        %v4245 = vpop.f32.mrf.mxu0
        %4246 = vdwg.mxu0
        %4247 = vmatpush.bf16.msra.mxu0 %v2888
        %4248 = vmatpush.bf16.msra.mxu0 %v2886
        %4249 = vmatpush.bf16.msra.mxu0 %v2884
        %4250 = vmatpush.bf16.msra.mxu0 %v2882
        %4251 = vmatpush.bf16.msra.mxu0 %v2880
        %4252 = vmatpush.bf16.msra.mxu0 %v2878
        %4253 = vmatpush.bf16.msra.mxu0 %v2876
        %4254 = vmatpush.bf16.msra.mxu0 %v2874
        %4255 = vmatmul.bf16.gmra.mxu0 %v463
        %v4256 = vpop.f32.mrf.mxu0
        %v4257 = vadd.f32 %v4244, %v4256
        %v4258 = vpop.f32.mrf.mxu0
        %4259 = vdwg.mxu0
        %4260 = vmatpush.bf16.msra.mxu0 %v2904
        %4261 = vmatpush.bf16.msra.mxu0 %v2902
        %4262 = vmatpush.bf16.msra.mxu0 %v2900
        %4263 = vmatpush.bf16.msra.mxu0 %v2898
        %4264 = vmatpush.bf16.msra.mxu0 %v2896
        %4265 = vmatpush.bf16.msra.mxu0 %v2894
        %4266 = vmatpush.bf16.msra.mxu0 %v2892
        %4267 = vmatpush.bf16.msra.mxu0 %v2890
        %4268 = vmatmul.bf16.gmra.mxu0 %v464
        %v4269 = vpop.f32.mrf.mxu0
        %v4270 = vadd.f32 %v4257, %v4269
        %v4271 = vpop.f32.mrf.mxu0
        %4272 = vdwg.mxu0
        %4273 = vmatpush.bf16.msra.mxu0 %v2920
        %4274 = vmatpush.bf16.msra.mxu0 %v2918
        %4275 = vmatpush.bf16.msra.mxu0 %v2916
        %4276 = vmatpush.bf16.msra.mxu0 %v2914
        %4277 = vmatpush.bf16.msra.mxu0 %v2912
        %4278 = vmatpush.bf16.msra.mxu0 %v2910
        %4279 = vmatpush.bf16.msra.mxu0 %v2908
        %4280 = vmatpush.bf16.msra.mxu0 %v2906
        %4281 = vmatmul.bf16.gmra.mxu0 %v465
        %v4282 = vpop.f32.mrf.mxu0
        %v4283 = vadd.f32 %v4270, %v4282
        %v4284 = vpop.f32.mrf.mxu0
        %4285 = vdwg.mxu0
        %4286 = vmatpush.bf16.msra.mxu0 %v2936
        %4287 = vmatpush.bf16.msra.mxu0 %v2934
        %4288 = vmatpush.bf16.msra.mxu0 %v2932
        %4289 = vmatpush.bf16.msra.mxu0 %v2930
        %4290 = vmatpush.bf16.msra.mxu0 %v2928
        %4291 = vmatpush.bf16.msra.mxu0 %v2926
        %4292 = vmatpush.bf16.msra.mxu0 %v2924
        %4293 = vmatpush.bf16.msra.mxu0 %v2922
        %4294 = vmatmul.bf16.gmra.mxu0 %v466
        %v4295 = vpop.f32.mrf.mxu0
        %v4296 = vadd.f32 %v4283, %v4295
        %v4297 = vpop.f32.mrf.mxu0
        %4298 = vdwg.mxu0
        %4299 = vmatpush.bf16.msra.mxu0 %v2952
        %4300 = vmatpush.bf16.msra.mxu0 %v2950
        %4301 = vmatpush.bf16.msra.mxu0 %v2948
        %4302 = vmatpush.bf16.msra.mxu0 %v2946
        %4303 = vmatpush.bf16.msra.mxu0 %v2944
        %4304 = vmatpush.bf16.msra.mxu0 %v2942
        %4305 = vmatpush.bf16.msra.mxu0 %v2940
        %4306 = vmatpush.bf16.msra.mxu0 %v2938
        %4307 = vmatmul.bf16.gmra.mxu0 %v467
        %v4308 = vpop.f32.mrf.mxu0
        %v4309 = vadd.f32 %v4296, %v4308
        %v4310 = vpop.f32.mrf.mxu0
        %4311 = vdwg.mxu0
        %4312 = vmatpush.bf16.msra.mxu0 %v2968
        %4313 = vmatpush.bf16.msra.mxu0 %v2966
        %4314 = vmatpush.bf16.msra.mxu0 %v2964
        %4315 = vmatpush.bf16.msra.mxu0 %v2962
        %4316 = vmatpush.bf16.msra.mxu0 %v2960
        %4317 = vmatpush.bf16.msra.mxu0 %v2958
        %4318 = vmatpush.bf16.msra.mxu0 %v2956
        %4319 = vmatpush.bf16.msra.mxu0 %v2954
        %4320 = vmatmul.bf16.gmra.mxu0 %v468
        %v4321 = vpop.f32.mrf.mxu0
        %v4322 = vadd.f32 %v4309, %v4321
        %v4323 = vpop.f32.mrf.mxu0
        %4324 = vdwg.mxu0
        %4325 = vmatpush.bf16.msra.mxu0 %v2984
        %4326 = vmatpush.bf16.msra.mxu0 %v2982
        %4327 = vmatpush.bf16.msra.mxu0 %v2980
        %4328 = vmatpush.bf16.msra.mxu0 %v2978
        %4329 = vmatpush.bf16.msra.mxu0 %v2976
        %4330 = vmatpush.bf16.msra.mxu0 %v2974
        %4331 = vmatpush.bf16.msra.mxu0 %v2972
        %4332 = vmatpush.bf16.msra.mxu0 %v2970
        %4333 = vmatmul.bf16.gmra.mxu0 %v469
        %v4334 = vpop.f32.mrf.mxu0
        %v4335 = vadd.f32 %v4322, %v4334
        %v4336 = vpop.f32.mrf.mxu0
        %4337 = vdwg.mxu0
        %4338 = vmatpush.bf16.msra.mxu0 %v3000
        %4339 = vmatpush.bf16.msra.mxu0 %v2998
        %4340 = vmatpush.bf16.msra.mxu0 %v2996
        %4341 = vmatpush.bf16.msra.mxu0 %v2994
        %4342 = vmatpush.bf16.msra.mxu0 %v2992
        %4343 = vmatpush.bf16.msra.mxu0 %v2990
        %4344 = vmatpush.bf16.msra.mxu0 %v2988
        %4345 = vmatpush.bf16.msra.mxu0 %v2986
        %4346 = vmatmul.bf16.gmra.mxu0 %v470
        %v4347 = vpop.f32.mrf.mxu0
        %v4348 = vadd.f32 %v4335, %v4347
        %v4349 = vpop.f32.mrf.mxu0
        %4350 = vdwg.mxu0
        %4351 = vmatpush.bf16.msra.mxu0 %v3016
        %4352 = vmatpush.bf16.msra.mxu0 %v3014
        %4353 = vmatpush.bf16.msra.mxu0 %v3012
        %4354 = vmatpush.bf16.msra.mxu0 %v3010
        %4355 = vmatpush.bf16.msra.mxu0 %v3008
        %4356 = vmatpush.bf16.msra.mxu0 %v3006
        %4357 = vmatpush.bf16.msra.mxu0 %v3004
        %4358 = vmatpush.bf16.msra.mxu0 %v3002
        %4359 = vmatmul.bf16.gmra.mxu0 %v471
        %v4360 = vpop.f32.mrf.mxu0
        %v4361 = vadd.f32 %v4348, %v4360
        %v4362 = vpop.f32.mrf.mxu0
        %4363 = vdwg.mxu0
        %4364 = vmatpush.bf16.msra.mxu0 %v3032
        %4365 = vmatpush.bf16.msra.mxu0 %v3030
        %4366 = vmatpush.bf16.msra.mxu0 %v3028
        %4367 = vmatpush.bf16.msra.mxu0 %v3026
        %4368 = vmatpush.bf16.msra.mxu0 %v3024
        %4369 = vmatpush.bf16.msra.mxu0 %v3022
        %4370 = vmatpush.bf16.msra.mxu0 %v3020
        %4371 = vmatpush.bf16.msra.mxu0 %v3018
        %4372 = vmatmul.bf16.gmra.mxu0 %v472
        %v4373 = vpop.f32.mrf.mxu0
        %v4374 = vadd.f32 %v4361, %v4373
        %v4375 = vpop.f32.mrf.mxu0
        %4376 = vdwg.mxu0
        %v4379 = vrot.slane %v4374, 6
        %vm4380 = vcmask 1041408
        %v4381 = vsel %vm4380, %v3958, %v4379
        %v4383 = vadd.f32 %v351, %v4381
        %4384 = vst [vmem:[#allocation2] sm:$0xf] %v4383
        %p4385 = scmp.eq.s32.totalorder %s21, 3
        // Predicated region
        $region61: #{qnetwork_forward.7} parent=55 // pred_check
          %p4386 = pneg %p4385
        $region62: #{qnetwork_forward.7} parent=55 // pred_check_branch
          %4388 = sbr.rel (%p4386) target = $region64
        $region63: #{qnetwork_forward.7} parent=55 // pred_region
          %v4389 = vld [vmem:[#allocation2] sm:$0xf]
          %v4390 = vld [vmem:[%s2] sm:$0x3]
          %v4392 = vperm.slane %v4390, 0
          %v4393 = vperm.slane %v4390, 1
          %v4394 = vrot.slane %v4393, 6
          %v4395 = vsel %vm4380, %v4392, %v4394
          %v4397 = vadd.f32 %v4389, %v4395
          %v4398 = vmax.f32 %v4397, 0.0
          %v4399 = vld [vmem:[%s3] sm:$0xff]
          %v4400 = vld [vmem:[%s3 + $0x8] sm:$0xff]
          %v4401 = vld [vmem:[%s3 + $0x10] sm:$0xff]
          %v4402 = vld [vmem:[%s3 + $0x18] sm:$0xff]
          %v4403 = vld [vmem:[%s3 + $0x20] sm:$0xff]
          %v4404 = vld [vmem:[%s3 + $0x28] sm:$0xff]
          %v4405 = vld [vmem:[%s3 + $0x30] sm:$0xff]
          %v4406 = vld [vmem:[%s3 + $0x38] sm:$0xff]
          %v4407 = vld [vmem:[%s3 + $0x40] sm:$0xff]
          %v4408 = vld [vmem:[%s3 + $0x48] sm:$0xff]
          %v4409 = vld [vmem:[%s3 + $0x50] sm:$0xff]
          %v4410 = vld [vmem:[%s3 + $0x58] sm:$0xff]
          %v4411 = vld [vmem:[%s3 + $0x60] sm:$0xff]
          %v4412 = vld [vmem:[%s3 + $0x68] sm:$0xff]
          %v4413 = vld [vmem:[%s3 + $0x70] sm:$0xff]
          %v4414 = vld [vmem:[%s3 + $0x78] sm:$0xff]
          %v4415 = vld [vmem:[%s3 + $0x80] sm:$0xff]
          %v4416 = vld [vmem:[%s3 + $0x88] sm:$0xff]
          %v4417 = vld [vmem:[%s3 + $0x90] sm:$0xff]
          %v4418 = vld [vmem:[%s3 + $0x98] sm:$0xff]
          %v4419 = vld [vmem:[%s3 + $0xa0] sm:$0xff]
          %v4420 = vld [vmem:[%s3 + $0xa8] sm:$0xff]
          %v4421 = vld [vmem:[%s3 + $0xb0] sm:$0xff]
          %v4422 = vld [vmem:[%s3 + $0xb8] sm:$0xff]
          %v4423 = vld [vmem:[%s3 + $0xc0] sm:$0xff]
          %v4424 = vld [vmem:[%s3 + $0xc8] sm:$0xff]
          %v4425 = vld [vmem:[%s3 + $0xd0] sm:$0xff]
          %v4426 = vld [vmem:[%s3 + $0xd8] sm:$0xff]
          %v4427 = vld [vmem:[%s3 + $0xe0] sm:$0xff]
          %v4428 = vld [vmem:[%s3 + $0xe8] sm:$0xff]
          %v4429 = vld [vmem:[%s3 + $0xf0] sm:$0xff]
          %v4430 = vld [vmem:[%s3 + $0xf8] sm:$0xff]
          %v4431 = vld [vmem:[%s4] sm:$0x1]
          %v4433 = vperm.slane %v4431, 0
          %4436 = vst [vmem:[#allocation1] ss:$4 sm:$0xff] %v4398
          %v4437 = vld.sshfl [vmem:[#allocation1] sm:$0xff pattern:$0x73625140]
          %v4438 = vld.sshfl [vmem:[#allocation1 + $0x8] sm:$0xff pattern:$0x73625140]
          %4441 = vmatpush.msra.mxu0 %v4414
          %4442 = vmatpush.msra.mxu0 %v4413
          %4443 = vmatpush.msra.mxu0 %v4412
          %4444 = vmatpush.msra.mxu0 %v4411
          %4445 = vmatpush.msra.mxu0 %v4410
          %4446 = vmatpush.msra.mxu0 %v4409
          %4447 = vmatpush.msra.mxu0 %v4408
          %4448 = vmatpush.msra.mxu0 %v4407
          %4449 = vmatpush.msra.mxu0 %v4406
          %4450 = vmatpush.msra.mxu0 %v4405
          %4451 = vmatpush.msra.mxu0 %v4404
          %4452 = vmatpush.msra.mxu0 %v4403
          %4453 = vmatpush.msra.mxu0 %v4402
          %4454 = vmatpush.msra.mxu0 %v4401
          %4455 = vmatpush.msra.mxu0 %v4400
          %4456 = vmatpush.msra.mxu0 %v4399
          %4457 = vmatmul.f32.gmra.mxu0 %v4437
          %v4458 = vpop.f32.mrf.mxu0
          %v4459 = vadd.f32 %v4433, %v4458
          %4460 = vdwg.mxu0
          %4461 = vmatpush.msra.mxu0 %v4430
          %4462 = vmatpush.msra.mxu0 %v4429
          %4463 = vmatpush.msra.mxu0 %v4428
          %4464 = vmatpush.msra.mxu0 %v4427
          %4465 = vmatpush.msra.mxu0 %v4426
          %4466 = vmatpush.msra.mxu0 %v4425
          %4467 = vmatpush.msra.mxu0 %v4424
          %4468 = vmatpush.msra.mxu0 %v4423
          %4469 = vmatpush.msra.mxu0 %v4422
          %4470 = vmatpush.msra.mxu0 %v4421
          %4471 = vmatpush.msra.mxu0 %v4420
          %4472 = vmatpush.msra.mxu0 %v4419
          %4473 = vmatpush.msra.mxu0 %v4418
          %4474 = vmatpush.msra.mxu0 %v4417
          %4475 = vmatpush.msra.mxu0 %v4416
          %4476 = vmatpush.msra.mxu0 %v4415
          %4477 = vmatmul.f32.gmra.mxu0 %v4438
          %v4478 = vpop.f32.mrf.mxu0
          %v4479 = vadd.f32 %v4459, %v4478
          %4480 = vdwg.mxu0
          %v4481 = vmax.f32 %v4479, 0.0
          %v4482 = vld [vmem:[%s5] sm:$0xff]
          %v4483 = vld [vmem:[%s5 + $0x8] sm:$0xff]
          %v4484 = vld [vmem:[%s5 + $0x10] sm:$0xff]
          %v4485 = vld [vmem:[%s5 + $0x18] sm:$0xff]
          %v4486 = vld [vmem:[%s5 + $0x20] sm:$0xff]
          %v4487 = vld [vmem:[%s5 + $0x28] sm:$0xff]
          %v4488 = vld [vmem:[%s5 + $0x30] sm:$0xff]
          %v4489 = vld [vmem:[%s5 + $0x38] sm:$0xff]
          %v4490 = vld [vmem:[%s5 + $0x40] sm:$0xff]
          %v4491 = vld [vmem:[%s5 + $0x48] sm:$0xff]
          %v4492 = vld [vmem:[%s5 + $0x50] sm:$0xff]
          %v4493 = vld [vmem:[%s5 + $0x58] sm:$0xff]
          %v4494 = vld [vmem:[%s5 + $0x60] sm:$0xff]
          %v4495 = vld [vmem:[%s5 + $0x68] sm:$0xff]
          %v4496 = vld [vmem:[%s5 + $0x70] sm:$0xff]
          %v4497 = vld [vmem:[%s5 + $0x78] sm:$0xff]
          %v4498 = vld [vmem:[%s6] sm:$0x1]
          %v4500 = vperm.slane %v4498, 0
          %4502 = vmatpush.msra.mxu0 %v4497
          %4503 = vmatpush.msra.mxu0 %v4496
          %4504 = vmatpush.msra.mxu0 %v4495
          %4505 = vmatpush.msra.mxu0 %v4494
          %4506 = vmatpush.msra.mxu0 %v4493
          %4507 = vmatpush.msra.mxu0 %v4492
          %4508 = vmatpush.msra.mxu0 %v4491
          %4509 = vmatpush.msra.mxu0 %v4490
          %4510 = vmatpush.msra.mxu0 %v4489
          %4511 = vmatpush.msra.mxu0 %v4488
          %4512 = vmatpush.msra.mxu0 %v4487
          %4513 = vmatpush.msra.mxu0 %v4486
          %4514 = vmatpush.msra.mxu0 %v4485
          %4515 = vmatpush.msra.mxu0 %v4484
          %4516 = vmatpush.msra.mxu0 %v4483
          %4517 = vmatpush.msra.mxu0 %v4482
          %4518 = vmatmul.f32.gmra.mxu0 %v4481
          %v4519 = vpop.f32.mrf.mxu0
          %v4520 = vadd.f32 %v4500, %v4519
          %4521 = vdwg.mxu0
          %v4522 = vmax.f32 %v4520, 0.0
          %v4523 = vld [vmem:[%s7] sm:$0xff]
          %v4524 = vld [vmem:[%s7 + $0x8] sm:$0xff]
          %v4525 = vld [vmem:[%s7 + $0x10] sm:$0xff]
          %v4526 = vld [vmem:[%s7 + $0x18] sm:$0xff]
          %v4527 = vld [vmem:[%s7 + $0x20] sm:$0xff]
          %v4528 = vld [vmem:[%s7 + $0x28] sm:$0xff]
          %v4529 = vld [vmem:[%s7 + $0x30] sm:$0xff]
          %v4530 = vld [vmem:[%s7 + $0x38] sm:$0xff]
          %v4531 = vld [vmem:[%s8] sm:$0x1]
          %v4533 = vperm.slane %v4531, 0
          %vm4535 = vcmask 523264
          %v4537 = vsel %vm4535, %v4522, 0
          %4539 = vmatpush.msra.mxu0 0.0
          %4540 = vmatpush.msra.mxu0 0.0
          %4541 = vmatpush.msra.mxu0 0.0
          %4542 = vmatpush.msra.mxu0 0.0
          %4543 = vmatpush.msra.mxu0 0.0
          %4544 = vmatpush.msra.mxu0 0.0
          %4545 = vmatpush.msra.mxu0 0.0
          %4546 = vmatpush.msra.mxu0 0.0
          %4547 = vmatpush.msra.mxu0 %v4530
          %4548 = vmatpush.msra.mxu0 %v4529
          %4549 = vmatpush.msra.mxu0 %v4528
          %4550 = vmatpush.msra.mxu0 %v4527
          %4551 = vmatpush.msra.mxu0 %v4526
          %4552 = vmatpush.msra.mxu0 %v4525
          %4553 = vmatpush.msra.mxu0 %v4524
          %4554 = vmatpush.msra.mxu0 %v4523
          %4555 = vmatmul.f32.gmra.mxu0 %v4537
          %v4556 = vpop.f32.mrf.mxu0
          %v4557 = vadd.f32 %v4533, %v4556
          %4558 = vdwg.mxu0
          %vm4559 = vcmask 25600
          %4560 = vst.msk [vmem:[#allocation3] sm:$0x3] %vm4559, %v4557
        $region64: #{qnetwork_forward.7} parent=55 // pred_fallthru
          _
        // Predicated region
        $region65: #{qnetwork_forward.7} parent=55 // pred_check
          %p4561 = pneg %p233
        $region66: #{qnetwork_forward.7} parent=55 // pred_check_branch
          %4563 = sbr.rel (%p4561) target = $region68
        $region67: #{qnetwork_forward.7} parent=55 // pred_region
          %4565 = vsyncadd [#allocation4], 0
          %s4567 = sshll.u32 [#allocation3], 4
          %s4568 = int_to_ptr.vmem [resolvable:$true] %s4567
          %s4569 = sshll.u32 %s9, 4
          %s4570 = int_to_ptr.hbm [resolvable:$true] %s4569
          %4572 = dma.vmem_to_hbm [thread:$0]  %s4568, 32, %s4570, [#allocation4]
        $region68: #{qnetwork_forward.7} parent=55 // pred_fallthru
          _
        // Predicated region
        $region69: #{qnetwork_forward.7} parent=55 // pred_check
          %p4573 = pneg %p233
        $region70: #{qnetwork_forward.7} parent=55 // pred_check_branch
          %4575 = sbr.rel (%p4573) target = $region72
        $region71: #{qnetwork_forward.7} parent=55 // pred_region
          %4577 = dma.done [#allocation4], 32
        $region72: #{qnetwork_forward.7} parent=55 // pred_fallthru
          _
      $region56: #{qnetwork_forward.7} parent=5 // pred_fallthru
        _
      %p4578 = scmp.le.s32.totalorder 2, %s16
      // Predicated region
      $region73: #{qnetwork_forward.7} parent=5 // pred_check
        %p4579 = pneg %p4578
      $region74: #{qnetwork_forward.7} parent=5 // pred_check_branch
        %4581 = sbr.rel (%p4579) target = $region76
      $region75: #{qnetwork_forward.7} parent=5 // pred_region
        %s4582 = ssub.s32 %s16, 2
      $region76: #{qnetwork_forward.7} parent=5 // pred_fallthru
        _
    $region6: #{qnetwork_forward.7} parent=1 // loop_footer
      %s20 = sadd.s32 1, %s16
    $region7: #{qnetwork_forward.7} parent=1 // loop_footer_branch
      %15 = sbr.rel target = $region3
    $region8: #{qnetwork_forward.7} parent=1 // loop_exit
      _
    %4583 = vsyncpa [#allocation4], 1
    %s4584 = scalar_lea.sflag [#allocation4], 1
    %4585 = vsyncpa %s4584, 1

</llo_original>
